<compile_context>
chip_gen: v6e
topology: v6e:2x2x1
jax: 0.10.0
libtpu: 0.0.40
codegen_flags: <defaults>
</compile_context>

<pallas_src>
import functools
import math

import jax
import jax.numpy as jnp
from jax.experimental import pallas as pl
from jax.experimental.pallas import tpu as pltpu

EPS = 1e-5
_LAYERS_BN = ("fc1", "fc2", "fc3", "fc4", "fc5", "fc11", "fc22")


# ------------------------------ kernel ------------------------------------- #
def _make_mct_kernel(n_valid, n_pad):
    """Build the fused kernel for a (static) valid-batch / padded-batch pair."""
    need_mask = n_pad != n_valid
    inv_n = 1.0 / float(n_valid)

    def bn_relu(x_bf16, wT_ref, g_ref, be_ref, mask):
        # Linear (bias folded out: BN's mean subtraction cancels it exactly),
        # then training-mode BatchNorm1d (biased var, eps=1e-5) + ReLU.
        y = jnp.dot(x_bf16, wT_ref[...], preferred_element_type=jnp.float32)
        if need_mask:
            mean = jnp.sum(y * mask, axis=0, keepdims=True) * inv_n
            yc = y - mean
            ycm = yc * mask
            var = jnp.sum(ycm * ycm, axis=0, keepdims=True) * inv_n
        else:
            mean = jnp.sum(y, axis=0, keepdims=True) * inv_n
            yc = y - mean
            var = jnp.sum(yc * yc, axis=0, keepdims=True) * inv_n
        scale = g_ref[...] * jax.lax.rsqrt(var + EPS)   # fold gamma into scale
        h = jnp.maximum(yc * scale + be_ref[...], 0.0)
        return h.astype(jnp.bfloat16)

    def kernel(xa_ref, xp_ref,
               w1, g1, be1, w2, g2, be2, w3, g3, be3,
               w4, g4, be4, w5, g5, be5,
               w11, g11, be11, w22, g22, be22,
               w6a, w6b, b6,
               o_ref):
        if need_mask:
            row = jax.lax.broadcasted_iota(jnp.int32, (n_pad, 1), 0)
            mask = (row < n_valid).astype(jnp.float32)
        else:
            mask = None

        # Appearance branch: fc1 -> fc2 -> fc3 -> fc4 -> fc5 (Linear+BN+ReLU).
        h = bn_relu(xa_ref[...], w1, g1, be1, mask)     # (N, 2048)
        h = bn_relu(h, w2, g2, be2, mask)               # (N, 1024)
        h = bn_relu(h, w3, g3, be3, mask)               # (N, 256)
        h = bn_relu(h, w4, g4, be4, mask)               # (N, 64)
        h = bn_relu(h, w5, g5, be5, mask)               # (N, 2)

        # Physics branch: fc11 -> fc22 (Linear+BN+ReLU).
        h2 = bn_relu(xp_ref[...], w11, g11, be11, mask)  # (N, 5)
        h2 = bn_relu(h2, w22, g22, be22, mask)           # (N, 2)

        # fc6(concat([h, h2], 1)) == h @ W6T[:2] + h2 @ W6T[2:] + b6
        out = (jnp.dot(h, w6a[...], preferred_element_type=jnp.float32)
               + jnp.dot(h2, w6b[...], preferred_element_type=jnp.float32)
               + b6[...])
        o_ref[...] = out

    return kernel


# ------------------------------ wrappers ------------------------------------ #
def prepare_params(params):
    """One-time packing: pre-transpose weights + cast to bf16, reshape BN vecs.

    Linear biases of BN-followed layers are dropped (exactly canceled by BN's
    mean subtraction in training mode).
    """
    prepped = {}
    for name in _LAYERS_BN:
        p = params[name]
        d_out = p["w"].shape[0]
        prepped[name] = {
            "wT": jnp.asarray(p["w"].T, jnp.bfloat16),                 # (in, out)
            "gamma": p["gamma"].reshape(1, d_out).astype(jnp.float32),
            "beta": p["beta"].reshape(1, d_out).astype(jnp.float32),
        }
    w6T = jnp.asarray(params["fc6"]["w"].T, jnp.bfloat16)              # (4, 2)
    prepped["fc6"] = {
        "wTa": w6T[:2, :],   # multiplies the appearance-branch output
        "wTb": w6T[2:, :],   # multiplies the physics-branch output
        "b": params["fc6"]["b"].reshape(1, 2).astype(jnp.float32),
    }
    return prepped


@functools.partial(jax.jit, static_argnames=("appearance_dim",))
def mct_forward(prepped, x, *, appearance_dim):
    n = x.shape[0]
    n_pad = max(8, ((n + 7) // 8) * 8)        # sublane-aligned batch

    xa = x[:, :appearance_dim].astype(jnp.bfloat16)
    xp = x[:, appearance_dim:].astype(jnp.bfloat16)
    if n_pad != n:
        pad = ((0, n_pad - n), (0, 0))
        xa = jnp.pad(xa, pad)
        xp = jnp.pad(xp, pad)

    args = [xa, xp]
    for name in _LAYERS_BN:
        p = prepped[name]
        args += [p["wT"], p["gamma"], p["beta"]]
    args += [prepped["fc6"]["wTa"], prepped["fc6"]["wTb"], prepped["fc6"]["b"]]

    vmem = pltpu.MemorySpace.VMEM
    out = pl.pallas_call(
        _make_mct_kernel(n, n_pad),
        out_shape=jax.ShapeDtypeStruct((n_pad, 2), jnp.float32),
        in_specs=[pl.BlockSpec(memory_space=vmem)] * len(args),
        out_specs=pl.BlockSpec(memory_space=vmem),
    )(*args)
    return out[:n]


# ------------------------------ reference ------------------------------------ #
def mct_reference(params, x, appearance_dim):
    """Pure-JAX reference mirroring the kernel's mixed precision.

    PyTorch semantics: Linear (+bias), training-mode BatchNorm1d (biased
    variance, eps=1e-5, affine), ReLU; fc6 on concat.
    """
    def layer(h, name):
        p = params[name]
        y = jnp.dot(h.astype(jnp.bfloat16), jnp.asarray(p["w"].T, jnp.bfloat16),
                    preferred_element_type=jnp.float32) + p["b"][None, :]
        mean = jnp.mean(y, axis=0, keepdims=True)
        var = jnp.mean((y - mean) ** 2, axis=0, keepdims=True)
        yn = (y - mean) * jax.lax.rsqrt(var + EPS)
        yn = yn * p["gamma"][None, :] + p["beta"][None, :]
        return jnp.maximum(yn, 0.0).astype(jnp.bfloat16)

    h = x[:, :appearance_dim]
    for name in ("fc1", "fc2", "fc3", "fc4", "fc5"):
        h = layer(h, name)
    h2 = x[:, appearance_dim:]
    for name in ("fc11", "fc22"):
        h2 = layer(h2, name)
    cat = jnp.concatenate([h, h2], axis=1)
    w6T = jnp.asarray(params["fc6"]["w"].T, jnp.bfloat16)
    return (jnp.dot(cat, w6T, preferred_element_type=jnp.float32)
            + params["fc6"]["b"][None, :])


# ------------------------------ parameters ---------------------------------- #
def _kaiming_linear(key, d_out, d_in):
    # weights_init_kaiming: kaiming_normal_(a=0, mode='fan_out') => std = sqrt(2/fan_out)
    std = math.sqrt(2.0 / d_out)
    w = jax.random.normal(key, (d_out, d_in), jnp.float32) * std
    b = jnp.zeros((d_out,), jnp.float32)
    return w, b


def init_mct_params(key, appearance_dim, physic_dim):
    dims = {
        "fc1": (2048, appearance_dim),
        "fc11": (5, physic_dim),
        "fc22": (2, 5),
        "fc2": (1024, 2048),
        "fc3": (256, 1024),
        "fc4": (64, 256),
        "fc5": (2, 64),
        "fc6": (2, 4),
    }
    params = {}
    keys = jax.random.split(key, len(dims))
    for k, (name, (do, di)) in zip(keys, dims.items()):
        w, b = _kaiming_linear(k, do, di)
        params[name] = {"w": w, "b": b}
        if name != "fc6":
            # BatchNorm affine params (gamma=1, beta=0 per weights_init_kaiming)
            params[name]["gamma"] = jnp.ones((do,), jnp.float32)
            params[name]["beta"] = jnp.zeros((do,), jnp.float32)
    return params


# ------------------------------ main ----------------------------------------- #
if __name__ == "__main__":
    appearance_dim = 32
    physic_dim = 4

    key = jax.random.PRNGKey(0)
    k_param, k_x = jax.random.split(key)
    params = init_mct_params(k_param, appearance_dim, physic_dim)
    prepped = prepare_params(params)   # transpose/cast once, not per call

    # batch=8: sublane-aligned fast path; batch=5: padded + masked-BN path.
    for batch in (8, 5):
        x = jax.random.normal(jax.random.fold_in(k_x, batch),
                              (batch, appearance_dim + physic_dim), jnp.float32)
        out = jax.block_until_ready(
            mct_forward(prepped, x, appearance_dim=appearance_dim))
        assert out.shape == (batch, 2)
        assert bool(jnp.all(jnp.isfinite(out)))
        ref = mct_reference(params, x, appearance_dim)
        assert bool(jnp.allclose(out, ref, atol=3e-2, rtol=3e-2)), (out, ref)

    print("KERNEL_OK")
</pallas_src>

<mosaic_0001>
module attributes {stable_mosaic.version = 11 : i64} {
  func.func @kernel(%arg0: memref<8x32xbf16, #tpu.memory_space<vmem>>, %arg1: memref<8x4xbf16, #tpu.memory_space<vmem>>, %arg2: memref<32x2048xbf16, #tpu.memory_space<vmem>>, %arg3: memref<1x2048xf32, #tpu.memory_space<vmem>>, %arg4: memref<1x2048xf32, #tpu.memory_space<vmem>>, %arg5: memref<2048x1024xbf16, #tpu.memory_space<vmem>>, %arg6: memref<1x1024xf32, #tpu.memory_space<vmem>>, %arg7: memref<1x1024xf32, #tpu.memory_space<vmem>>, %arg8: memref<1024x256xbf16, #tpu.memory_space<vmem>>, %arg9: memref<1x256xf32, #tpu.memory_space<vmem>>, %arg10: memref<1x256xf32, #tpu.memory_space<vmem>>, %arg11: memref<256x64xbf16, #tpu.memory_space<vmem>>, %arg12: memref<1x64xf32, #tpu.memory_space<vmem>>, %arg13: memref<1x64xf32, #tpu.memory_space<vmem>>, %arg14: memref<64x2xbf16, #tpu.memory_space<vmem>>, %arg15: memref<1x2xf32, #tpu.memory_space<vmem>>, %arg16: memref<1x2xf32, #tpu.memory_space<vmem>>, %arg17: memref<4x5xbf16, #tpu.memory_space<vmem>>, %arg18: memref<1x5xf32, #tpu.memory_space<vmem>>, %arg19: memref<1x5xf32, #tpu.memory_space<vmem>>, %arg20: memref<5x2xbf16, #tpu.memory_space<vmem>>, %arg21: memref<1x2xf32, #tpu.memory_space<vmem>>, %arg22: memref<1x2xf32, #tpu.memory_space<vmem>>, %arg23: memref<2x2xbf16, #tpu.memory_space<vmem>>, %arg24: memref<2x2xbf16, #tpu.memory_space<vmem>>, %arg25: memref<1x2xf32, #tpu.memory_space<vmem>>, %arg26: memref<8x2xf32, #tpu.memory_space<vmem>>) attributes {dimension_semantics = [], scalar_prefetch = 0 : i64, scratch_operands = 0 : i64, tpu.core_type = #tpu.core_type<tc>} {
    %c0 = arith.constant 0 : index
    %c0_0 = arith.constant 0 : index
    %0 = vector.load %arg0[%c0, %c0_0] : memref<8x32xbf16, #tpu.memory_space<vmem>>, vector<8x32xbf16>
    %c0_1 = arith.constant 0 : index
    %c0_2 = arith.constant 0 : index
    %1 = vector.load %arg2[%c0_1, %c0_2] : memref<32x2048xbf16, #tpu.memory_space<vmem>>, vector<32x2048xbf16>
    %cst = arith.constant dense<0.000000e+00> : vector<8x2048xf32>
    %2 = tpu.matmul %0, %1, %cst {dimension_numbers = #tpu.dot_dimension_numbers<[1], [0], [0], [1], [0, 0, 1, 1], [], []>} : vector<8x32xbf16>, vector<32x2048xbf16>, vector<8x2048xf32> -> vector<8x2048xf32>
    %cst_3 = arith.constant dense<0.000000e+00> : vector<2048xf32>
    %3 = vector.multi_reduction <add>, %2, %cst_3 [0] : vector<8x2048xf32> to vector<2048xf32>
    %4 = vector.shape_cast %3 : vector<2048xf32> to vector<1x2048xf32>
    %cst_4 = arith.constant 1.250000e-01 : f32
    %5 = vector.broadcast %cst_4 : f32 to vector<1x2048xf32>
    %6 = arith.mulf %4, %5 : vector<1x2048xf32>
    %7 = vector.broadcast %6 : vector<1x2048xf32> to vector<8x2048xf32>
    %8 = arith.subf %2, %7 : vector<8x2048xf32>
    %9 = arith.mulf %8, %8 : vector<8x2048xf32>
    %cst_5 = arith.constant dense<0.000000e+00> : vector<2048xf32>
    %10 = vector.multi_reduction <add>, %9, %cst_5 [0] : vector<8x2048xf32> to vector<2048xf32>
    %11 = vector.shape_cast %10 : vector<2048xf32> to vector<1x2048xf32>
    %cst_6 = arith.constant 1.250000e-01 : f32
    %12 = vector.broadcast %cst_6 : f32 to vector<1x2048xf32>
    %13 = arith.mulf %11, %12 : vector<1x2048xf32>
    %c0_7 = arith.constant 0 : index
    %c0_8 = arith.constant 0 : index
    %14 = vector.load %arg3[%c0_7, %c0_8] : memref<1x2048xf32, #tpu.memory_space<vmem>>, vector<1x2048xf32>
    %cst_9 = arith.constant 9.99999974E-6 : f32
    %15 = vector.broadcast %cst_9 : f32 to vector<1x2048xf32>
    %16 = arith.addf %13, %15 : vector<1x2048xf32>
    %17 = math.rsqrt %16 : vector<1x2048xf32>
    %18 = arith.mulf %14, %17 : vector<1x2048xf32>
    %19 = vector.broadcast %18 : vector<1x2048xf32> to vector<8x2048xf32>
    %20 = arith.mulf %8, %19 : vector<8x2048xf32>
    %c0_10 = arith.constant 0 : index
    %c0_11 = arith.constant 0 : index
    %21 = vector.load %arg4[%c0_10, %c0_11] : memref<1x2048xf32, #tpu.memory_space<vmem>>, vector<1x2048xf32>
    %22 = vector.broadcast %21 : vector<1x2048xf32> to vector<8x2048xf32>
    %23 = arith.addf %20, %22 : vector<8x2048xf32>
    %cst_12 = arith.constant 0.000000e+00 : f32
    %24 = vector.broadcast %cst_12 : f32 to vector<8x2048xf32>
    %25 = arith.maximumf %23, %24 : vector<8x2048xf32>
    %26 = arith.truncf %25 : vector<8x2048xf32> to vector<8x2048xbf16>
    %c0_13 = arith.constant 0 : index
    %c0_14 = arith.constant 0 : index
    %27 = vector.load %arg5[%c0_13, %c0_14] : memref<2048x1024xbf16, #tpu.memory_space<vmem>>, vector<2048x1024xbf16>
    %cst_15 = arith.constant dense<0.000000e+00> : vector<8x1024xf32>
    %28 = tpu.matmul %26, %27, %cst_15 {dimension_numbers = #tpu.dot_dimension_numbers<[1], [0], [0], [1], [0, 0, 1, 1], [], []>} : vector<8x2048xbf16>, vector<2048x1024xbf16>, vector<8x1024xf32> -> vector<8x1024xf32>
    %cst_16 = arith.constant dense<0.000000e+00> : vector<1024xf32>
    %29 = vector.multi_reduction <add>, %28, %cst_16 [0] : vector<8x1024xf32> to vector<1024xf32>
    %30 = vector.shape_cast %29 : vector<1024xf32> to vector<1x1024xf32>
    %cst_17 = arith.constant 1.250000e-01 : f32
    %31 = vector.broadcast %cst_17 : f32 to vector<1x1024xf32>
    %32 = arith.mulf %30, %31 : vector<1x1024xf32>
    %33 = vector.broadcast %32 : vector<1x1024xf32> to vector<8x1024xf32>
    %34 = arith.subf %28, %33 : vector<8x1024xf32>
    %35 = arith.mulf %34, %34 : vector<8x1024xf32>
    %cst_18 = arith.constant dense<0.000000e+00> : vector<1024xf32>
    %36 = vector.multi_reduction <add>, %35, %cst_18 [0] : vector<8x1024xf32> to vector<1024xf32>
    %37 = vector.shape_cast %36 : vector<1024xf32> to vector<1x1024xf32>
    %cst_19 = arith.constant 1.250000e-01 : f32
    %38 = vector.broadcast %cst_19 : f32 to vector<1x1024xf32>
    %39 = arith.mulf %37, %38 : vector<1x1024xf32>
    %c0_20 = arith.constant 0 : index
    %c0_21 = arith.constant 0 : index
    %40 = vector.load %arg6[%c0_20, %c0_21] : memref<1x1024xf32, #tpu.memory_space<vmem>>, vector<1x1024xf32>
    %cst_22 = arith.constant 9.99999974E-6 : f32
    %41 = vector.broadcast %cst_22 : f32 to vector<1x1024xf32>
    %42 = arith.addf %39, %41 : vector<1x1024xf32>
    %43 = math.rsqrt %42 : vector<1x1024xf32>
    %44 = arith.mulf %40, %43 : vector<1x1024xf32>
    %45 = vector.broadcast %44 : vector<1x1024xf32> to vector<8x1024xf32>
    %46 = arith.mulf %34, %45 : vector<8x1024xf32>
    %c0_23 = arith.constant 0 : index
    %c0_24 = arith.constant 0 : index
    %47 = vector.load %arg7[%c0_23, %c0_24] : memref<1x1024xf32, #tpu.memory_space<vmem>>, vector<1x1024xf32>
    %48 = vector.broadcast %47 : vector<1x1024xf32> to vector<8x1024xf32>
    %49 = arith.addf %46, %48 : vector<8x1024xf32>
    %cst_25 = arith.constant 0.000000e+00 : f32
    %50 = vector.broadcast %cst_25 : f32 to vector<8x1024xf32>
    %51 = arith.maximumf %49, %50 : vector<8x1024xf32>
    %52 = arith.truncf %51 : vector<8x1024xf32> to vector<8x1024xbf16>
    %c0_26 = arith.constant 0 : index
    %c0_27 = arith.constant 0 : index
    %53 = vector.load %arg8[%c0_26, %c0_27] : memref<1024x256xbf16, #tpu.memory_space<vmem>>, vector<1024x256xbf16>
    %cst_28 = arith.constant dense<0.000000e+00> : vector<8x256xf32>
    %54 = tpu.matmul %52, %53, %cst_28 {dimension_numbers = #tpu.dot_dimension_numbers<[1], [0], [0], [1], [0, 0, 1, 1], [], []>} : vector<8x1024xbf16>, vector<1024x256xbf16>, vector<8x256xf32> -> vector<8x256xf32>
    %cst_29 = arith.constant dense<0.000000e+00> : vector<256xf32>
    %55 = vector.multi_reduction <add>, %54, %cst_29 [0] : vector<8x256xf32> to vector<256xf32>
    %56 = vector.shape_cast %55 : vector<256xf32> to vector<1x256xf32>
    %cst_30 = arith.constant 1.250000e-01 : f32
    %57 = vector.broadcast %cst_30 : f32 to vector<1x256xf32>
    %58 = arith.mulf %56, %57 : vector<1x256xf32>
    %59 = vector.broadcast %58 : vector<1x256xf32> to vector<8x256xf32>
    %60 = arith.subf %54, %59 : vector<8x256xf32>
    %61 = arith.mulf %60, %60 : vector<8x256xf32>
    %cst_31 = arith.constant dense<0.000000e+00> : vector<256xf32>
    %62 = vector.multi_reduction <add>, %61, %cst_31 [0] : vector<8x256xf32> to vector<256xf32>
    %63 = vector.shape_cast %62 : vector<256xf32> to vector<1x256xf32>
    %cst_32 = arith.constant 1.250000e-01 : f32
    %64 = vector.broadcast %cst_32 : f32 to vector<1x256xf32>
    %65 = arith.mulf %63, %64 : vector<1x256xf32>
    %c0_33 = arith.constant 0 : index
    %c0_34 = arith.constant 0 : index
    %66 = vector.load %arg9[%c0_33, %c0_34] : memref<1x256xf32, #tpu.memory_space<vmem>>, vector<1x256xf32>
    %cst_35 = arith.constant 9.99999974E-6 : f32
    %67 = vector.broadcast %cst_35 : f32 to vector<1x256xf32>
    %68 = arith.addf %65, %67 : vector<1x256xf32>
    %69 = math.rsqrt %68 : vector<1x256xf32>
    %70 = arith.mulf %66, %69 : vector<1x256xf32>
    %71 = vector.broadcast %70 : vector<1x256xf32> to vector<8x256xf32>
    %72 = arith.mulf %60, %71 : vector<8x256xf32>
    %c0_36 = arith.constant 0 : index
    %c0_37 = arith.constant 0 : index
    %73 = vector.load %arg10[%c0_36, %c0_37] : memref<1x256xf32, #tpu.memory_space<vmem>>, vector<1x256xf32>
    %74 = vector.broadcast %73 : vector<1x256xf32> to vector<8x256xf32>
    %75 = arith.addf %72, %74 : vector<8x256xf32>
    %cst_38 = arith.constant 0.000000e+00 : f32
    %76 = vector.broadcast %cst_38 : f32 to vector<8x256xf32>
    %77 = arith.maximumf %75, %76 : vector<8x256xf32>
    %78 = arith.truncf %77 : vector<8x256xf32> to vector<8x256xbf16>
    %c0_39 = arith.constant 0 : index
    %c0_40 = arith.constant 0 : index
    %79 = vector.load %arg11[%c0_39, %c0_40] : memref<256x64xbf16, #tpu.memory_space<vmem>>, vector<256x64xbf16>
    %cst_41 = arith.constant dense<0.000000e+00> : vector<8x64xf32>
    %80 = tpu.matmul %78, %79, %cst_41 {dimension_numbers = #tpu.dot_dimension_numbers<[1], [0], [0], [1], [0, 0, 1, 1], [], []>} : vector<8x256xbf16>, vector<256x64xbf16>, vector<8x64xf32> -> vector<8x64xf32>
    %cst_42 = arith.constant dense<0.000000e+00> : vector<64xf32>
    %81 = vector.multi_reduction <add>, %80, %cst_42 [0] : vector<8x64xf32> to vector<64xf32>
    %82 = vector.shape_cast %81 : vector<64xf32> to vector<1x64xf32>
    %cst_43 = arith.constant 1.250000e-01 : f32
    %83 = vector.broadcast %cst_43 : f32 to vector<1x64xf32>
    %84 = arith.mulf %82, %83 : vector<1x64xf32>
    %85 = vector.broadcast %84 : vector<1x64xf32> to vector<8x64xf32>
    %86 = arith.subf %80, %85 : vector<8x64xf32>
    %87 = arith.mulf %86, %86 : vector<8x64xf32>
    %cst_44 = arith.constant dense<0.000000e+00> : vector<64xf32>
    %88 = vector.multi_reduction <add>, %87, %cst_44 [0] : vector<8x64xf32> to vector<64xf32>
    %89 = vector.shape_cast %88 : vector<64xf32> to vector<1x64xf32>
    %cst_45 = arith.constant 1.250000e-01 : f32
    %90 = vector.broadcast %cst_45 : f32 to vector<1x64xf32>
    %91 = arith.mulf %89, %90 : vector<1x64xf32>
    %c0_46 = arith.constant 0 : index
    %c0_47 = arith.constant 0 : index
    %92 = vector.load %arg12[%c0_46, %c0_47] : memref<1x64xf32, #tpu.memory_space<vmem>>, vector<1x64xf32>
    %cst_48 = arith.constant 9.99999974E-6 : f32
    %93 = vector.broadcast %cst_48 : f32 to vector<1x64xf32>
    %94 = arith.addf %91, %93 : vector<1x64xf32>
    %95 = math.rsqrt %94 : vector<1x64xf32>
    %96 = arith.mulf %92, %95 : vector<1x64xf32>
    %97 = vector.broadcast %96 : vector<1x64xf32> to vector<8x64xf32>
    %98 = arith.mulf %86, %97 : vector<8x64xf32>
    %c0_49 = arith.constant 0 : index
    %c0_50 = arith.constant 0 : index
    %99 = vector.load %arg13[%c0_49, %c0_50] : memref<1x64xf32, #tpu.memory_space<vmem>>, vector<1x64xf32>
    %100 = vector.broadcast %99 : vector<1x64xf32> to vector<8x64xf32>
    %101 = arith.addf %98, %100 : vector<8x64xf32>
    %cst_51 = arith.constant 0.000000e+00 : f32
    %102 = vector.broadcast %cst_51 : f32 to vector<8x64xf32>
    %103 = arith.maximumf %101, %102 : vector<8x64xf32>
    %104 = arith.truncf %103 : vector<8x64xf32> to vector<8x64xbf16>
    %c0_52 = arith.constant 0 : index
    %c0_53 = arith.constant 0 : index
    %105 = vector.load %arg14[%c0_52, %c0_53] : memref<64x2xbf16, #tpu.memory_space<vmem>>, vector<64x2xbf16>
    %cst_54 = arith.constant dense<0.000000e+00> : vector<8x2xf32>
    %106 = tpu.matmul %104, %105, %cst_54 {dimension_numbers = #tpu.dot_dimension_numbers<[1], [0], [0], [1], [0, 0, 1, 1], [], []>} : vector<8x64xbf16>, vector<64x2xbf16>, vector<8x2xf32> -> vector<8x2xf32>
    %cst_55 = arith.constant dense<0.000000e+00> : vector<2xf32>
    %107 = vector.multi_reduction <add>, %106, %cst_55 [0] : vector<8x2xf32> to vector<2xf32>
    %108 = vector.shape_cast %107 : vector<2xf32> to vector<1x2xf32>
    %cst_56 = arith.constant 1.250000e-01 : f32
    %109 = vector.broadcast %cst_56 : f32 to vector<1x2xf32>
    %110 = arith.mulf %108, %109 : vector<1x2xf32>
    %111 = vector.broadcast %110 : vector<1x2xf32> to vector<8x2xf32>
    %112 = arith.subf %106, %111 : vector<8x2xf32>
    %113 = arith.mulf %112, %112 : vector<8x2xf32>
    %cst_57 = arith.constant dense<0.000000e+00> : vector<2xf32>
    %114 = vector.multi_reduction <add>, %113, %cst_57 [0] : vector<8x2xf32> to vector<2xf32>
    %115 = vector.shape_cast %114 : vector<2xf32> to vector<1x2xf32>
    %cst_58 = arith.constant 1.250000e-01 : f32
    %116 = vector.broadcast %cst_58 : f32 to vector<1x2xf32>
    %117 = arith.mulf %115, %116 : vector<1x2xf32>
    %c0_59 = arith.constant 0 : index
    %c0_60 = arith.constant 0 : index
    %118 = vector.load %arg15[%c0_59, %c0_60] : memref<1x2xf32, #tpu.memory_space<vmem>>, vector<1x2xf32>
    %cst_61 = arith.constant 9.99999974E-6 : f32
    %119 = vector.broadcast %cst_61 : f32 to vector<1x2xf32>
    %120 = arith.addf %117, %119 : vector<1x2xf32>
    %121 = math.rsqrt %120 : vector<1x2xf32>
    %122 = arith.mulf %118, %121 : vector<1x2xf32>
    %123 = vector.broadcast %122 : vector<1x2xf32> to vector<8x2xf32>
    %124 = arith.mulf %112, %123 : vector<8x2xf32>
    %c0_62 = arith.constant 0 : index
    %c0_63 = arith.constant 0 : index
    %125 = vector.load %arg16[%c0_62, %c0_63] : memref<1x2xf32, #tpu.memory_space<vmem>>, vector<1x2xf32>
    %126 = vector.broadcast %125 : vector<1x2xf32> to vector<8x2xf32>
    %127 = arith.addf %124, %126 : vector<8x2xf32>
    %cst_64 = arith.constant 0.000000e+00 : f32
    %128 = vector.broadcast %cst_64 : f32 to vector<8x2xf32>
    %129 = arith.maximumf %127, %128 : vector<8x2xf32>
    %130 = arith.truncf %129 : vector<8x2xf32> to vector<8x2xbf16>
    %c0_65 = arith.constant 0 : index
    %c0_66 = arith.constant 0 : index
    %131 = vector.load %arg1[%c0_65, %c0_66] : memref<8x4xbf16, #tpu.memory_space<vmem>>, vector<8x4xbf16>
    %c0_67 = arith.constant 0 : index
    %c0_68 = arith.constant 0 : index
    %132 = vector.load %arg17[%c0_67, %c0_68] : memref<4x5xbf16, #tpu.memory_space<vmem>>, vector<4x5xbf16>
    %cst_69 = arith.constant dense<0.000000e+00> : vector<8x5xf32>
    %133 = tpu.matmul %131, %132, %cst_69 {dimension_numbers = #tpu.dot_dimension_numbers<[1], [0], [0], [1], [0, 0, 1, 1], [], []>} : vector<8x4xbf16>, vector<4x5xbf16>, vector<8x5xf32> -> vector<8x5xf32>
    %cst_70 = arith.constant dense<0.000000e+00> : vector<5xf32>
    %134 = vector.multi_reduction <add>, %133, %cst_70 [0] : vector<8x5xf32> to vector<5xf32>
    %135 = vector.shape_cast %134 : vector<5xf32> to vector<1x5xf32>
    %cst_71 = arith.constant 1.250000e-01 : f32
    %136 = vector.broadcast %cst_71 : f32 to vector<1x5xf32>
    %137 = arith.mulf %135, %136 : vector<1x5xf32>
    %138 = vector.broadcast %137 : vector<1x5xf32> to vector<8x5xf32>
    %139 = arith.subf %133, %138 : vector<8x5xf32>
    %140 = arith.mulf %139, %139 : vector<8x5xf32>
    %cst_72 = arith.constant dense<0.000000e+00> : vector<5xf32>
    %141 = vector.multi_reduction <add>, %140, %cst_72 [0] : vector<8x5xf32> to vector<5xf32>
    %142 = vector.shape_cast %141 : vector<5xf32> to vector<1x5xf32>
    %cst_73 = arith.constant 1.250000e-01 : f32
    %143 = vector.broadcast %cst_73 : f32 to vector<1x5xf32>
    %144 = arith.mulf %142, %143 : vector<1x5xf32>
    %c0_74 = arith.constant 0 : index
    %c0_75 = arith.constant 0 : index
    %145 = vector.load %arg18[%c0_74, %c0_75] : memref<1x5xf32, #tpu.memory_space<vmem>>, vector<1x5xf32>
    %cst_76 = arith.constant 9.99999974E-6 : f32
    %146 = vector.broadcast %cst_76 : f32 to vector<1x5xf32>
    %147 = arith.addf %144, %146 : vector<1x5xf32>
    %148 = math.rsqrt %147 : vector<1x5xf32>
    %149 = arith.mulf %145, %148 : vector<1x5xf32>
    %150 = vector.broadcast %149 : vector<1x5xf32> to vector<8x5xf32>
    %151 = arith.mulf %139, %150 : vector<8x5xf32>
    %c0_77 = arith.constant 0 : index
    %c0_78 = arith.constant 0 : index
    %152 = vector.load %arg19[%c0_77, %c0_78] : memref<1x5xf32, #tpu.memory_space<vmem>>, vector<1x5xf32>
    %153 = vector.broadcast %152 : vector<1x5xf32> to vector<8x5xf32>
    %154 = arith.addf %151, %153 : vector<8x5xf32>
    %cst_79 = arith.constant 0.000000e+00 : f32
    %155 = vector.broadcast %cst_79 : f32 to vector<8x5xf32>
    %156 = arith.maximumf %154, %155 : vector<8x5xf32>
    %157 = arith.truncf %156 : vector<8x5xf32> to vector<8x5xbf16>
    %c0_80 = arith.constant 0 : index
    %c0_81 = arith.constant 0 : index
    %158 = vector.load %arg20[%c0_80, %c0_81] : memref<5x2xbf16, #tpu.memory_space<vmem>>, vector<5x2xbf16>
    %cst_82 = arith.constant dense<0.000000e+00> : vector<8x2xf32>
    %159 = tpu.matmul %157, %158, %cst_82 {dimension_numbers = #tpu.dot_dimension_numbers<[1], [0], [0], [1], [0, 0, 1, 1], [], []>} : vector<8x5xbf16>, vector<5x2xbf16>, vector<8x2xf32> -> vector<8x2xf32>
    %cst_83 = arith.constant dense<0.000000e+00> : vector<2xf32>
    %160 = vector.multi_reduction <add>, %159, %cst_83 [0] : vector<8x2xf32> to vector<2xf32>
    %161 = vector.shape_cast %160 : vector<2xf32> to vector<1x2xf32>
    %cst_84 = arith.constant 1.250000e-01 : f32
    %162 = vector.broadcast %cst_84 : f32 to vector<1x2xf32>
    %163 = arith.mulf %161, %162 : vector<1x2xf32>
    %164 = vector.broadcast %163 : vector<1x2xf32> to vector<8x2xf32>
    %165 = arith.subf %159, %164 : vector<8x2xf32>
    %166 = arith.mulf %165, %165 : vector<8x2xf32>
    %cst_85 = arith.constant dense<0.000000e+00> : vector<2xf32>
    %167 = vector.multi_reduction <add>, %166, %cst_85 [0] : vector<8x2xf32> to vector<2xf32>
    %168 = vector.shape_cast %167 : vector<2xf32> to vector<1x2xf32>
    %cst_86 = arith.constant 1.250000e-01 : f32
    %169 = vector.broadcast %cst_86 : f32 to vector<1x2xf32>
    %170 = arith.mulf %168, %169 : vector<1x2xf32>
    %c0_87 = arith.constant 0 : index
    %c0_88 = arith.constant 0 : index
    %171 = vector.load %arg21[%c0_87, %c0_88] : memref<1x2xf32, #tpu.memory_space<vmem>>, vector<1x2xf32>
    %cst_89 = arith.constant 9.99999974E-6 : f32
    %172 = vector.broadcast %cst_89 : f32 to vector<1x2xf32>
    %173 = arith.addf %170, %172 : vector<1x2xf32>
    %174 = math.rsqrt %173 : vector<1x2xf32>
    %175 = arith.mulf %171, %174 : vector<1x2xf32>
    %176 = vector.broadcast %175 : vector<1x2xf32> to vector<8x2xf32>
    %177 = arith.mulf %165, %176 : vector<8x2xf32>
    %c0_90 = arith.constant 0 : index
    %c0_91 = arith.constant 0 : index
    %178 = vector.load %arg22[%c0_90, %c0_91] : memref<1x2xf32, #tpu.memory_space<vmem>>, vector<1x2xf32>
    %179 = vector.broadcast %178 : vector<1x2xf32> to vector<8x2xf32>
    %180 = arith.addf %177, %179 : vector<8x2xf32>
    %cst_92 = arith.constant 0.000000e+00 : f32
    %181 = vector.broadcast %cst_92 : f32 to vector<8x2xf32>
    %182 = arith.maximumf %180, %181 : vector<8x2xf32>
    %183 = arith.truncf %182 : vector<8x2xf32> to vector<8x2xbf16>
    %c0_93 = arith.constant 0 : index
    %c0_94 = arith.constant 0 : index
    %184 = vector.load %arg23[%c0_93, %c0_94] : memref<2x2xbf16, #tpu.memory_space<vmem>>, vector<2x2xbf16>
    %cst_95 = arith.constant dense<0.000000e+00> : vector<8x2xf32>
    %185 = tpu.matmul %130, %184, %cst_95 {dimension_numbers = #tpu.dot_dimension_numbers<[1], [0], [0], [1], [0, 0, 1, 1], [], []>} : vector<8x2xbf16>, vector<2x2xbf16>, vector<8x2xf32> -> vector<8x2xf32>
    %c0_96 = arith.constant 0 : index
    %c0_97 = arith.constant 0 : index
    %186 = vector.load %arg24[%c0_96, %c0_97] : memref<2x2xbf16, #tpu.memory_space<vmem>>, vector<2x2xbf16>
    %cst_98 = arith.constant dense<0.000000e+00> : vector<8x2xf32>
    %187 = tpu.matmul %183, %186, %cst_98 {dimension_numbers = #tpu.dot_dimension_numbers<[1], [0], [0], [1], [0, 0, 1, 1], [], []>} : vector<8x2xbf16>, vector<2x2xbf16>, vector<8x2xf32> -> vector<8x2xf32>
    %188 = arith.addf %185, %187 : vector<8x2xf32>
    %c0_99 = arith.constant 0 : index
    %c0_100 = arith.constant 0 : index
    %189 = vector.load %arg25[%c0_99, %c0_100] : memref<1x2xf32, #tpu.memory_space<vmem>>, vector<1x2xf32>
    %190 = vector.broadcast %189 : vector<1x2xf32> to vector<8x2xf32>
    %191 = arith.addf %188, %190 : vector<8x2xf32>
    %c0_101 = arith.constant 0 : index
    %c0_102 = arith.constant 0 : index
    %192 = vector.load %arg26[%c0_101, %c0_102] : memref<8x2xf32, #tpu.memory_space<vmem>>, vector<8x2xf32>
    tpu.vector_store %arg26[%c0_101, %c0_102], %191 {strides = array<i32>} : memref<8x2xf32, #tpu.memory_space<vmem>>, vector<8x2xf32>,
    return
  }
}

</mosaic_0001>

<llo_original>
// kernel: mct_forward.1
$region0: #{mct_forward.1}
  #allocation0 [shape = 'u32[]', space=smem, size = 0x4, offset = 0x4, fixed_abs, tag = 'smem constant byte address 0x4 - core index']
  #allocation1 [shape = 'u32[144,128]{1,0:T(1,128)}', space=vmem, size = 0x12000, scoped, tag = 'internal scratch']
  %s0 = inlined_call_operand.vmem [shape: bf16[8,32], index: 0, kind: input, shape index: {}]
  %s1 = inlined_call_operand.vmem [shape: bf16[8,4], index: 1, kind: input, shape index: {}]
  %s2 = inlined_call_operand.hbm [shape: bf16[32,2048], index: 2, kind: input, shape index: {}]
  %s3 = inlined_call_operand.hbm [shape: f32[1,2048], index: 3, kind: input, shape index: {}]
  %s4 = inlined_call_operand.hbm [shape: f32[1,2048], index: 4, kind: input, shape index: {}]
  %s5 = inlined_call_operand.hbm [shape: bf16[2048,1024], index: 5, kind: input, shape index: {}]
  %s6 = inlined_call_operand.hbm [shape: f32[1,1024], index: 6, kind: input, shape index: {}]
  %s7 = inlined_call_operand.hbm [shape: f32[1,1024], index: 7, kind: input, shape index: {}]
  %s8 = inlined_call_operand.hbm [shape: bf16[1024,256], index: 8, kind: input, shape index: {}]
  %s9 = inlined_call_operand.hbm [shape: f32[1,256], index: 9, kind: input, shape index: {}]
  %s10 = inlined_call_operand.hbm [shape: f32[1,256], index: 10, kind: input, shape index: {}]
  %s11 = inlined_call_operand.vmem [shape: bf16[256,64], index: 11, kind: input, shape index: {}]
  %s12 = inlined_call_operand.hbm [shape: f32[1,64], index: 12, kind: input, shape index: {}]
  %s13 = inlined_call_operand.hbm [shape: f32[1,64], index: 13, kind: input, shape index: {}]
  %s14 = inlined_call_operand.vmem [shape: bf16[64,2], index: 14, kind: input, shape index: {}]
  %s15 = inlined_call_operand.hbm [shape: f32[1,2], index: 15, kind: input, shape index: {}]
  %s16 = inlined_call_operand.hbm [shape: f32[1,2], index: 16, kind: input, shape index: {}]
  %s17 = inlined_call_operand.hbm [shape: bf16[4,5], index: 17, kind: input, shape index: {}]
  %s18 = inlined_call_operand.hbm [shape: f32[1,5], index: 18, kind: input, shape index: {}]
  %s19 = inlined_call_operand.hbm [shape: f32[1,5], index: 19, kind: input, shape index: {}]
  %s20 = inlined_call_operand.vmem [shape: bf16[5,2], index: 20, kind: input, shape index: {}]
  %s21 = inlined_call_operand.hbm [shape: f32[1,2], index: 21, kind: input, shape index: {}]
  %s22 = inlined_call_operand.hbm [shape: f32[1,2], index: 22, kind: input, shape index: {}]
  %s23 = inlined_call_operand.hbm [shape: bf16[2,2], index: 23, kind: input, shape index: {}]
  %s24 = inlined_call_operand.hbm [shape: bf16[2,2], index: 24, kind: input, shape index: {}]
  %s25 = inlined_call_operand.hbm [shape: f32[1,2], index: 25, kind: input, shape index: {}]
  %s26 = inlined_call_operand.vmem [shape: f32[8,2], index: 26, kind: output, shape index: {}]
  %s27 = sld [smem:[#allocation0]]
  $region198: #{mct_forward.1} parent=0
    _
  %s29 = ssub.s32 1, %s27
  %s30 = scalar_select 0, %s29, %s27
  $region1: #{mct_forward.1} parent=0
    #allocation2 [shape = 'u8[131072]{0}', space=vmem, size = 0x20000, scoped, tag = 'input window, operand 2, single buffered']
    #allocation3 [shape = 's32[1]{0}', space=sflag, size = 0x4, scoped, tag = 'scoped memory for mct_forward.1']
    #allocation4 [shape = 'u8[8192]{0}', space=vmem, size = 0x2000, scoped, tag = 'input window, operand 3, single buffered']
    #allocation5 [shape = 's32[1]{0}', space=sflag, size = 0x4, scoped, tag = 'scoped memory for mct_forward.1']
    #allocation6 [shape = 'u8[8192]{0}', space=vmem, size = 0x2000, scoped, tag = 'input window, operand 4, single buffered']
    #allocation7 [shape = 'u8[4194304]{0}', space=vmem, size = 0x400000, scoped, tag = 'input window, operand 5, single buffered']
    #allocation8 [shape = 's32[1]{0}', space=sflag, size = 0x4, scoped, tag = 'scoped memory for mct_forward.1']
    #allocation9 [shape = 'u8[4096]{0}', space=vmem, size = 0x1000, scoped, tag = 'input window, operand 6, single buffered']
    #allocation10 [shape = 'u8[4096]{0}', space=vmem, size = 0x1000, scoped, tag = 'input window, operand 7, single buffered']
    #allocation11 [shape = 's32[1]{0}', space=sflag, size = 0x4, scoped, tag = 'scoped memory for mct_forward.1']
    #allocation12 [shape = 'u8[524288]{0}', space=vmem, size = 0x80000, scoped, tag = 'input window, operand 8, single buffered']
    #allocation13 [shape = 'u8[1024]{0}', space=vmem, size = 0x400, scoped, tag = 'input window, operand 9, single buffered']
    #allocation14 [shape = 's32[1]{0}', space=sflag, size = 0x4, scoped, tag = 'scoped memory for mct_forward.1']
    #allocation15 [shape = 'u8[1024]{0}', space=vmem, size = 0x400, scoped, tag = 'input window, operand 10, single buffered']
    #allocation16 [shape = 'u8[512]{0}', space=vmem, size = 0x400, scoped, tag = 'input window, operand 12, single buffered']
    #allocation17 [shape = 's32[1]{0}', space=sflag, size = 0x4, scoped, tag = 'scoped memory for mct_forward.1']
    #allocation18 [shape = 'u8[512]{0}', space=vmem, size = 0x400, scoped, tag = 'input window, operand 13, single buffered']
    #allocation19 [shape = 'u8[512]{0}', space=vmem, size = 0x400, scoped, tag = 'input window, operand 15, single buffered']
    #allocation20 [shape = 's32[1]{0}', space=sflag, size = 0x4, scoped, tag = 'scoped memory for mct_forward.1']
    #allocation21 [shape = 'u8[512]{0}', space=vmem, size = 0x400, scoped, tag = 'input window, operand 16, single buffered']
    #allocation22 [shape = 'u8[1024]{0}', space=vmem, size = 0x400, scoped, tag = 'input window, operand 17, single buffered']
    #allocation23 [shape = 's32[1]{0}', space=sflag, size = 0x4, scoped, tag = 'scoped memory for mct_forward.1']
    #allocation24 [shape = 'u8[512]{0}', space=vmem, size = 0x400, scoped, tag = 'input window, operand 18, single buffered']
    #allocation25 [shape = 'u8[512]{0}', space=vmem, size = 0x400, scoped, tag = 'input window, operand 19, single buffered']
    #allocation26 [shape = 's32[1]{0}', space=sflag, size = 0x4, scoped, tag = 'scoped memory for mct_forward.1']
    #allocation27 [shape = 'u8[512]{0}', space=vmem, size = 0x400, scoped, tag = 'input window, operand 21, single buffered']
    #allocation28 [shape = 'u8[512]{0}', space=vmem, size = 0x400, scoped, tag = 'input window, operand 22, single buffered']
    #allocation29 [shape = 's32[1]{0}', space=sflag, size = 0x4, scoped, tag = 'scoped memory for mct_forward.1']
    #allocation30 [shape = 'u8[512]{0}', space=vmem, size = 0x400, scoped, tag = 'input window, operand 23, single buffered']
    #allocation31 [shape = 'u8[512]{0}', space=vmem, size = 0x400, scoped, tag = 'input window, operand 24, single buffered']
    #allocation32 [shape = 's32[1]{0}', space=sflag, size = 0x4, scoped, tag = 'scoped memory for mct_forward.1']
    #allocation33 [shape = 'u8[512]{0}', space=vmem, size = 0x400, scoped, tag = 'input window, operand 25, single buffered']
    %31 = vsyncpa [#allocation3], 0
    %32 = vsyncpa [#allocation5], 0
    %33 = vsyncpa [#allocation8], 0
    %34 = vsyncpa [#allocation11], 0
    %35 = vsyncpa [#allocation14], 0
    %36 = vsyncpa [#allocation17], 0
    %37 = vsyncpa [#allocation20], 0
    %38 = vsyncpa [#allocation23], 0
    %39 = vsyncpa [#allocation26], 0
    %40 = vsyncpa [#allocation29], 0
    %41 = vsyncpa [#allocation32], 0
    // Predicated region
    $region2: #{mct_forward.1} parent=1 // pred_check
      _
    $region3: #{mct_forward.1} parent=1 // pred_check_branch
      %43 = sbr.rel (0) target = $region5
    $region4: #{mct_forward.1} parent=1 // pred_region
      _
    $region5: #{mct_forward.1} parent=1 // pred_fallthru
      _
    // Predicated region
    $region6: #{mct_forward.1} parent=1 // pred_check
      _
    $region7: #{mct_forward.1} parent=1 // pred_check_branch
      %45 = sbr.rel (0) target = $region9
    $region8: #{mct_forward.1} parent=1 // pred_region
      _
    $region9: #{mct_forward.1} parent=1 // pred_fallthru
      _
    // Predicated region
    $region10: #{mct_forward.1} parent=1 // pred_check
      _
    $region11: #{mct_forward.1} parent=1 // pred_check_branch
      %47 = sbr.rel (0) target = $region13
    $region12: #{mct_forward.1} parent=1 // pred_region
      %s49 = ssub.s32 4096, 4096
      %50 = vsyncadd [#allocation3], %s49
      %s51 = sshll.u32 [#allocation2], 4
      %s52 = int_to_ptr.vmem [resolvable:$true] %s51
      %57 = dma.hbm_to_vmem [thread:$0]  %s2, 4096, %s52, [#allocation3], 1024, 1024, 64
    $region13: #{mct_forward.1} parent=1 // pred_fallthru
      _
    // Predicated region
    $region14: #{mct_forward.1} parent=1 // pred_check
      _
    $region15: #{mct_forward.1} parent=1 // pred_check_branch
      %59 = sbr.rel (0) target = $region17
    $region16: #{mct_forward.1} parent=1 // pred_region
      %s61 = ssub.s32 256, 256
      %62 = vsyncadd [#allocation5], %s61
      %s64 = sshll.u32 [#allocation4], 4
      %s65 = int_to_ptr.vmem [resolvable:$true] %s64
      %67 = dma.hbm_to_vmem [thread:$0]  %s3, 256, %s65, [#allocation5]
    $region17: #{mct_forward.1} parent=1 // pred_fallthru
      _
    // Predicated region
    $region18: #{mct_forward.1} parent=1 // pred_check
      _
    $region19: #{mct_forward.1} parent=1 // pred_check_branch
      %69 = sbr.rel (0) target = $region21
    $region20: #{mct_forward.1} parent=1 // pred_region
      %s71 = ssub.s32 256, 256
      %72 = vsyncadd [#allocation5], %s71
      %s74 = sshll.u32 [#allocation6], 4
      %s75 = int_to_ptr.vmem [resolvable:$true] %s74
      %77 = dma.hbm_to_vmem [thread:$0]  %s4, 256, %s75, [#allocation5]
    $region21: #{mct_forward.1} parent=1 // pred_fallthru
      _
    // Predicated region
    $region22: #{mct_forward.1} parent=1 // pred_check
      _
    $region23: #{mct_forward.1} parent=1 // pred_check_branch
      %79 = sbr.rel (0) target = $region25
    $region24: #{mct_forward.1} parent=1 // pred_region
      %s81 = ssub.s32 131072, 131072
      %82 = vsyncadd [#allocation8], %s81
      %s83 = sshll.u32 [#allocation7], 4
      %s84 = int_to_ptr.vmem [resolvable:$true] %s83
      %89 = dma.hbm_to_vmem [thread:$0]  %s5, 131072, %s84, [#allocation8], 512, 512, 32
    $region25: #{mct_forward.1} parent=1 // pred_fallthru
      _
    // Predicated region
    $region26: #{mct_forward.1} parent=1 // pred_check
      _
    $region27: #{mct_forward.1} parent=1 // pred_check_branch
      %91 = sbr.rel (0) target = $region29
    $region28: #{mct_forward.1} parent=1 // pred_region
      %s93 = ssub.s32 128, 128
      %94 = vsyncadd [#allocation8], %s93
      %s96 = sshll.u32 [#allocation9], 4
      %s97 = int_to_ptr.vmem [resolvable:$true] %s96
      %99 = dma.hbm_to_vmem [thread:$0]  %s6, 128, %s97, [#allocation8]
    $region29: #{mct_forward.1} parent=1 // pred_fallthru
      _
    // Predicated region
    $region30: #{mct_forward.1} parent=1 // pred_check
      _
    $region31: #{mct_forward.1} parent=1 // pred_check_branch
      %101 = sbr.rel (0) target = $region33
    $region32: #{mct_forward.1} parent=1 // pred_region
      %s103 = ssub.s32 128, 128
      %104 = vsyncadd [#allocation11], %s103
      %s106 = sshll.u32 [#allocation10], 4
      %s107 = int_to_ptr.vmem [resolvable:$true] %s106
      %109 = dma.hbm_to_vmem [thread:$0]  %s7, 128, %s107, [#allocation11]
    $region33: #{mct_forward.1} parent=1 // pred_fallthru
      _
    // Predicated region
    $region34: #{mct_forward.1} parent=1 // pred_check
      _
    $region35: #{mct_forward.1} parent=1 // pred_check_branch
      %111 = sbr.rel (0) target = $region37
    $region36: #{mct_forward.1} parent=1 // pred_region
      %s113 = ssub.s32 16384, 16384
      %114 = vsyncadd [#allocation11], %s113
      %s115 = sshll.u32 [#allocation12], 4
      %s116 = int_to_ptr.vmem [resolvable:$true] %s115
      %121 = dma.hbm_to_vmem [thread:$0]  %s8, 16384, %s116, [#allocation11], 128, 128, 8
    $region37: #{mct_forward.1} parent=1 // pred_fallthru
      _
    // Predicated region
    $region38: #{mct_forward.1} parent=1 // pred_check
      _
    $region39: #{mct_forward.1} parent=1 // pred_check_branch
      %123 = sbr.rel (0) target = $region41
    $region40: #{mct_forward.1} parent=1 // pred_region
      %s125 = ssub.s32 32, 32
      %126 = vsyncadd [#allocation14], %s125
      %s128 = sshll.u32 [#allocation13], 4
      %s129 = int_to_ptr.vmem [resolvable:$true] %s128
      %131 = dma.hbm_to_vmem [thread:$0]  %s9, 32, %s129, [#allocation14]
    $region41: #{mct_forward.1} parent=1 // pred_fallthru
      _
    // Predicated region
    $region42: #{mct_forward.1} parent=1 // pred_check
      _
    $region43: #{mct_forward.1} parent=1 // pred_check_branch
      %133 = sbr.rel (0) target = $region45
    $region44: #{mct_forward.1} parent=1 // pred_region
      %s135 = ssub.s32 32, 32
      %136 = vsyncadd [#allocation14], %s135
      %s138 = sshll.u32 [#allocation15], 4
      %s139 = int_to_ptr.vmem [resolvable:$true] %s138
      %141 = dma.hbm_to_vmem [thread:$0]  %s10, 32, %s139, [#allocation14]
    $region45: #{mct_forward.1} parent=1 // pred_fallthru
      _
    // Predicated region
    $region46: #{mct_forward.1} parent=1 // pred_check
      _
    $region47: #{mct_forward.1} parent=1 // pred_check_branch
      %143 = sbr.rel (0) target = $region49
    $region48: #{mct_forward.1} parent=1 // pred_region
      _
    $region49: #{mct_forward.1} parent=1 // pred_fallthru
      _
    // Predicated region
    $region50: #{mct_forward.1} parent=1 // pred_check
      _
    $region51: #{mct_forward.1} parent=1 // pred_check_branch
      %145 = sbr.rel (0) target = $region53
    $region52: #{mct_forward.1} parent=1 // pred_region
      %s147 = ssub.s32 16, 16
      %148 = vsyncadd [#allocation17], %s147
      %s150 = sshll.u32 [#allocation16], 4
      %s151 = int_to_ptr.vmem [resolvable:$true] %s150
      %153 = dma.hbm_to_vmem [thread:$0]  %s12, 16, %s151, [#allocation17]
    $region53: #{mct_forward.1} parent=1 // pred_fallthru
      _
    // Predicated region
    $region54: #{mct_forward.1} parent=1 // pred_check
      _
    $region55: #{mct_forward.1} parent=1 // pred_check_branch
      %155 = sbr.rel (0) target = $region57
    $region56: #{mct_forward.1} parent=1 // pred_region
      %s157 = ssub.s32 16, 16
      %158 = vsyncadd [#allocation17], %s157
      %s160 = sshll.u32 [#allocation18], 4
      %s161 = int_to_ptr.vmem [resolvable:$true] %s160
      %163 = dma.hbm_to_vmem [thread:$0]  %s13, 16, %s161, [#allocation17]
    $region57: #{mct_forward.1} parent=1 // pred_fallthru
      _
    // Predicated region
    $region58: #{mct_forward.1} parent=1 // pred_check
      _
    $region59: #{mct_forward.1} parent=1 // pred_check_branch
      %165 = sbr.rel (0) target = $region61
    $region60: #{mct_forward.1} parent=1 // pred_region
      _
    $region61: #{mct_forward.1} parent=1 // pred_fallthru
      _
    // Predicated region
    $region62: #{mct_forward.1} parent=1 // pred_check
      _
    $region63: #{mct_forward.1} parent=1 // pred_check_branch
      %167 = sbr.rel (0) target = $region65
    $region64: #{mct_forward.1} parent=1 // pred_region
      %s169 = ssub.s32 16, 16
      %170 = vsyncadd [#allocation20], %s169
      %s172 = sshll.u32 [#allocation19], 4
      %s173 = int_to_ptr.vmem [resolvable:$true] %s172
      %175 = dma.hbm_to_vmem [thread:$0]  %s15, 16, %s173, [#allocation20]
    $region65: #{mct_forward.1} parent=1 // pred_fallthru
      _
    // Predicated region
    $region66: #{mct_forward.1} parent=1 // pred_check
      _
    $region67: #{mct_forward.1} parent=1 // pred_check_branch
      %177 = sbr.rel (0) target = $region69
    $region68: #{mct_forward.1} parent=1 // pred_region
      %s179 = ssub.s32 16, 16
      %180 = vsyncadd [#allocation20], %s179
      %s182 = sshll.u32 [#allocation21], 4
      %s183 = int_to_ptr.vmem [resolvable:$true] %s182
      %185 = dma.hbm_to_vmem [thread:$0]  %s16, 16, %s183, [#allocation20]
    $region69: #{mct_forward.1} parent=1 // pred_fallthru
      _
    // Predicated region
    $region70: #{mct_forward.1} parent=1 // pred_check
      _
    $region71: #{mct_forward.1} parent=1 // pred_check_branch
      %187 = sbr.rel (0) target = $region73
    $region72: #{mct_forward.1} parent=1 // pred_region
      %s189 = ssub.s32 32, 32
      %190 = vsyncadd [#allocation23], %s189
      %s192 = sshll.u32 [#allocation22], 4
      %s193 = int_to_ptr.vmem [resolvable:$true] %s192
      %195 = dma.hbm_to_vmem [thread:$0]  %s17, 32, %s193, [#allocation23]
    $region73: #{mct_forward.1} parent=1 // pred_fallthru
      _
    // Predicated region
    $region74: #{mct_forward.1} parent=1 // pred_check
      _
    $region75: #{mct_forward.1} parent=1 // pred_check_branch
      %197 = sbr.rel (0) target = $region77
    $region76: #{mct_forward.1} parent=1 // pred_region
      %s199 = ssub.s32 16, 16
      %200 = vsyncadd [#allocation23], %s199
      %s202 = sshll.u32 [#allocation24], 4
      %s203 = int_to_ptr.vmem [resolvable:$true] %s202
      %205 = dma.hbm_to_vmem [thread:$0]  %s18, 16, %s203, [#allocation23]
    $region77: #{mct_forward.1} parent=1 // pred_fallthru
      _
    // Predicated region
    $region78: #{mct_forward.1} parent=1 // pred_check
      _
    $region79: #{mct_forward.1} parent=1 // pred_check_branch
      %207 = sbr.rel (0) target = $region81
    $region80: #{mct_forward.1} parent=1 // pred_region
      %s209 = ssub.s32 16, 16
      %210 = vsyncadd [#allocation26], %s209
      %s212 = sshll.u32 [#allocation25], 4
      %s213 = int_to_ptr.vmem [resolvable:$true] %s212
      %215 = dma.hbm_to_vmem [thread:$0]  %s19, 16, %s213, [#allocation26]
    $region81: #{mct_forward.1} parent=1 // pred_fallthru
      _
    // Predicated region
    $region82: #{mct_forward.1} parent=1 // pred_check
      _
    $region83: #{mct_forward.1} parent=1 // pred_check_branch
      %217 = sbr.rel (0) target = $region85
    $region84: #{mct_forward.1} parent=1 // pred_region
      _
    $region85: #{mct_forward.1} parent=1 // pred_fallthru
      _
    // Predicated region
    $region86: #{mct_forward.1} parent=1 // pred_check
      _
    $region87: #{mct_forward.1} parent=1 // pred_check_branch
      %219 = sbr.rel (0) target = $region89
    $region88: #{mct_forward.1} parent=1 // pred_region
      %s221 = ssub.s32 16, 16
      %222 = vsyncadd [#allocation26], %s221
      %s224 = sshll.u32 [#allocation27], 4
      %s225 = int_to_ptr.vmem [resolvable:$true] %s224
      %227 = dma.hbm_to_vmem [thread:$0]  %s21, 16, %s225, [#allocation26]
    $region89: #{mct_forward.1} parent=1 // pred_fallthru
      _
    // Predicated region
    $region90: #{mct_forward.1} parent=1 // pred_check
      _
    $region91: #{mct_forward.1} parent=1 // pred_check_branch
      %229 = sbr.rel (0) target = $region93
    $region92: #{mct_forward.1} parent=1 // pred_region
      %s231 = ssub.s32 16, 16
      %232 = vsyncadd [#allocation29], %s231
      %s234 = sshll.u32 [#allocation28], 4
      %s235 = int_to_ptr.vmem [resolvable:$true] %s234
      %237 = dma.hbm_to_vmem [thread:$0]  %s22, 16, %s235, [#allocation29]
    $region93: #{mct_forward.1} parent=1 // pred_fallthru
      _
    // Predicated region
    $region94: #{mct_forward.1} parent=1 // pred_check
      _
    $region95: #{mct_forward.1} parent=1 // pred_check_branch
      %239 = sbr.rel (0) target = $region97
    $region96: #{mct_forward.1} parent=1 // pred_region
      %s241 = ssub.s32 16, 16
      %242 = vsyncadd [#allocation29], %s241
      %s244 = sshll.u32 [#allocation30], 4
      %s245 = int_to_ptr.vmem [resolvable:$true] %s244
      %247 = dma.hbm_to_vmem [thread:$0]  %s23, 16, %s245, [#allocation29]
    $region97: #{mct_forward.1} parent=1 // pred_fallthru
      _
    // Predicated region
    $region98: #{mct_forward.1} parent=1 // pred_check
      _
    $region99: #{mct_forward.1} parent=1 // pred_check_branch
      %249 = sbr.rel (0) target = $region101
    $region100: #{mct_forward.1} parent=1 // pred_region
      %s251 = ssub.s32 16, 16
      %252 = vsyncadd [#allocation32], %s251
      %s254 = sshll.u32 [#allocation31], 4
      %s255 = int_to_ptr.vmem [resolvable:$true] %s254
      %257 = dma.hbm_to_vmem [thread:$0]  %s24, 16, %s255, [#allocation32]
    $region101: #{mct_forward.1} parent=1 // pred_fallthru
      _
    // Predicated region
    $region102: #{mct_forward.1} parent=1 // pred_check
      _
    $region103: #{mct_forward.1} parent=1 // pred_check_branch
      %259 = sbr.rel (0) target = $region105
    $region104: #{mct_forward.1} parent=1 // pred_region
      %s261 = ssub.s32 16, 16
      %262 = vsyncadd [#allocation32], %s261
      %s264 = sshll.u32 [#allocation33], 4
      %s265 = int_to_ptr.vmem [resolvable:$true] %s264
      %267 = dma.hbm_to_vmem [thread:$0]  %s25, 16, %s265, [#allocation32]
    $region105: #{mct_forward.1} parent=1 // pred_fallthru
      _
    // Predicated region
    $region106: #{mct_forward.1} parent=1 // pred_check
      _
    $region107: #{mct_forward.1} parent=1 // pred_check_branch
      %269 = sbr.rel (0) target = $region109
    $region108: #{mct_forward.1} parent=1 // pred_region
      %270 = dma.done [#allocation3], 4096
    $region109: #{mct_forward.1} parent=1 // pred_fallthru
      _
    // Predicated region
    $region110: #{mct_forward.1} parent=1 // pred_check
      _
    $region111: #{mct_forward.1} parent=1 // pred_check_branch
      %272 = sbr.rel (0) target = $region113
    $region112: #{mct_forward.1} parent=1 // pred_region
      %273 = dma.done [#allocation5], 256
    $region113: #{mct_forward.1} parent=1 // pred_fallthru
      _
    // Predicated region
    $region114: #{mct_forward.1} parent=1 // pred_check
      _
    $region115: #{mct_forward.1} parent=1 // pred_check_branch
      %275 = sbr.rel (0) target = $region117
    $region116: #{mct_forward.1} parent=1 // pred_region
      %276 = dma.done [#allocation5], 256
    $region117: #{mct_forward.1} parent=1 // pred_fallthru
      _
    // Predicated region
    $region118: #{mct_forward.1} parent=1 // pred_check
      _
    $region119: #{mct_forward.1} parent=1 // pred_check_branch
      %278 = sbr.rel (0) target = $region121
    $region120: #{mct_forward.1} parent=1 // pred_region
      %279 = dma.done [#allocation8], 131072
    $region121: #{mct_forward.1} parent=1 // pred_fallthru
      _
    // Predicated region
    $region122: #{mct_forward.1} parent=1 // pred_check
      _
    $region123: #{mct_forward.1} parent=1 // pred_check_branch
      %281 = sbr.rel (0) target = $region125
    $region124: #{mct_forward.1} parent=1 // pred_region
      %282 = dma.done [#allocation8], 128
    $region125: #{mct_forward.1} parent=1 // pred_fallthru
      _
    // Predicated region
    $region126: #{mct_forward.1} parent=1 // pred_check
      _
    $region127: #{mct_forward.1} parent=1 // pred_check_branch
      %284 = sbr.rel (0) target = $region129
    $region128: #{mct_forward.1} parent=1 // pred_region
      %285 = dma.done [#allocation11], 128
    $region129: #{mct_forward.1} parent=1 // pred_fallthru
      _
    // Predicated region
    $region130: #{mct_forward.1} parent=1 // pred_check
      _
    $region131: #{mct_forward.1} parent=1 // pred_check_branch
      %287 = sbr.rel (0) target = $region133
    $region132: #{mct_forward.1} parent=1 // pred_region
      %288 = dma.done [#allocation11], 16384
    $region133: #{mct_forward.1} parent=1 // pred_fallthru
      _
    // Predicated region
    $region134: #{mct_forward.1} parent=1 // pred_check
      _
    $region135: #{mct_forward.1} parent=1 // pred_check_branch
      %290 = sbr.rel (0) target = $region137
    $region136: #{mct_forward.1} parent=1 // pred_region
      %291 = dma.done [#allocation14], 32
    $region137: #{mct_forward.1} parent=1 // pred_fallthru
      _
    // Predicated region
    $region138: #{mct_forward.1} parent=1 // pred_check
      _
    $region139: #{mct_forward.1} parent=1 // pred_check_branch
      %293 = sbr.rel (0) target = $region141
    $region140: #{mct_forward.1} parent=1 // pred_region
      %294 = dma.done [#allocation14], 32
    $region141: #{mct_forward.1} parent=1 // pred_fallthru
      _
    // Predicated region
    $region142: #{mct_forward.1} parent=1 // pred_check
      _
    $region143: #{mct_forward.1} parent=1 // pred_check_branch
      %296 = sbr.rel (0) target = $region145
    $region144: #{mct_forward.1} parent=1 // pred_region
      %297 = dma.done [#allocation17], 16
    $region145: #{mct_forward.1} parent=1 // pred_fallthru
      _
    // Predicated region
    $region146: #{mct_forward.1} parent=1 // pred_check
      _
    $region147: #{mct_forward.1} parent=1 // pred_check_branch
      %299 = sbr.rel (0) target = $region149
    $region148: #{mct_forward.1} parent=1 // pred_region
      %300 = dma.done [#allocation17], 16
    $region149: #{mct_forward.1} parent=1 // pred_fallthru
      _
    // Predicated region
    $region150: #{mct_forward.1} parent=1 // pred_check
      _
    $region151: #{mct_forward.1} parent=1 // pred_check_branch
      %302 = sbr.rel (0) target = $region153
    $region152: #{mct_forward.1} parent=1 // pred_region
      %303 = dma.done [#allocation20], 16
    $region153: #{mct_forward.1} parent=1 // pred_fallthru
      _
    // Predicated region
    $region154: #{mct_forward.1} parent=1 // pred_check
      _
    $region155: #{mct_forward.1} parent=1 // pred_check_branch
      %305 = sbr.rel (0) target = $region157
    $region156: #{mct_forward.1} parent=1 // pred_region
      %306 = dma.done [#allocation20], 16
    $region157: #{mct_forward.1} parent=1 // pred_fallthru
      _
    // Predicated region
    $region158: #{mct_forward.1} parent=1 // pred_check
      _
    $region159: #{mct_forward.1} parent=1 // pred_check_branch
      %308 = sbr.rel (0) target = $region161
    $region160: #{mct_forward.1} parent=1 // pred_region
      %309 = dma.done [#allocation23], 32
    $region161: #{mct_forward.1} parent=1 // pred_fallthru
      _
    // Predicated region
    $region162: #{mct_forward.1} parent=1 // pred_check
      _
    $region163: #{mct_forward.1} parent=1 // pred_check_branch
      %311 = sbr.rel (0) target = $region165
    $region164: #{mct_forward.1} parent=1 // pred_region
      %312 = dma.done [#allocation23], 16
    $region165: #{mct_forward.1} parent=1 // pred_fallthru
      _
    // Predicated region
    $region166: #{mct_forward.1} parent=1 // pred_check
      _
    $region167: #{mct_forward.1} parent=1 // pred_check_branch
      %314 = sbr.rel (0) target = $region169
    $region168: #{mct_forward.1} parent=1 // pred_region
      %315 = dma.done [#allocation26], 16
    $region169: #{mct_forward.1} parent=1 // pred_fallthru
      _
    // Predicated region
    $region170: #{mct_forward.1} parent=1 // pred_check
      _
    $region171: #{mct_forward.1} parent=1 // pred_check_branch
      %317 = sbr.rel (0) target = $region173
    $region172: #{mct_forward.1} parent=1 // pred_region
      %318 = dma.done [#allocation26], 16
    $region173: #{mct_forward.1} parent=1 // pred_fallthru
      _
    // Predicated region
    $region174: #{mct_forward.1} parent=1 // pred_check
      _
    $region175: #{mct_forward.1} parent=1 // pred_check_branch
      %320 = sbr.rel (0) target = $region177
    $region176: #{mct_forward.1} parent=1 // pred_region
      %321 = dma.done [#allocation29], 16
    $region177: #{mct_forward.1} parent=1 // pred_fallthru
      _
    // Predicated region
    $region178: #{mct_forward.1} parent=1 // pred_check
      _
    $region179: #{mct_forward.1} parent=1 // pred_check_branch
      %323 = sbr.rel (0) target = $region181
    $region180: #{mct_forward.1} parent=1 // pred_region
      %324 = dma.done [#allocation29], 16
    $region181: #{mct_forward.1} parent=1 // pred_fallthru
      _
    // Predicated region
    $region182: #{mct_forward.1} parent=1 // pred_check
      _
    $region183: #{mct_forward.1} parent=1 // pred_check_branch
      %326 = sbr.rel (0) target = $region185
    $region184: #{mct_forward.1} parent=1 // pred_region
      %327 = dma.done [#allocation32], 16
    $region185: #{mct_forward.1} parent=1 // pred_fallthru
      _
    // Predicated region
    $region186: #{mct_forward.1} parent=1 // pred_check
      _
    $region187: #{mct_forward.1} parent=1 // pred_check_branch
      %329 = sbr.rel (0) target = $region189
    $region188: #{mct_forward.1} parent=1 // pred_region
      %330 = dma.done [#allocation32], 16
    $region189: #{mct_forward.1} parent=1 // pred_fallthru
      _
    %v332 = vld [vmem:[%s0] sm:$0xf]
    %v333 = vld [vmem:[#allocation2] sm:$0xff]
    %v334 = vld [vmem:[#allocation2 + $0x8] sm:$0xff]
    %v335 = vld [vmem:[#allocation2 + $0x10] sm:$0xff]
    %v336 = vld [vmem:[#allocation2 + $0x18] sm:$0xff]
    %v337 = vld [vmem:[#allocation2 + $0x20] sm:$0xff]
    %v338 = vld [vmem:[#allocation2 + $0x28] sm:$0xff]
    %v339 = vld [vmem:[#allocation2 + $0x30] sm:$0xff]
    %v340 = vld [vmem:[#allocation2 + $0x38] sm:$0xff]
    %v341 = vld [vmem:[#allocation2 + $0x40] sm:$0xff]
    %v342 = vld [vmem:[#allocation2 + $0x48] sm:$0xff]
    %v343 = vld [vmem:[#allocation2 + $0x50] sm:$0xff]
    %v344 = vld [vmem:[#allocation2 + $0x58] sm:$0xff]
    %v345 = vld [vmem:[#allocation2 + $0x60] sm:$0xff]
    %v346 = vld [vmem:[#allocation2 + $0x68] sm:$0xff]
    %v347 = vld [vmem:[#allocation2 + $0x70] sm:$0xff]
    %v348 = vld [vmem:[#allocation2 + $0x78] sm:$0xff]
    %v349 = vld [vmem:[#allocation2 + $0x80] sm:$0xff]
    %v350 = vld [vmem:[#allocation2 + $0x88] sm:$0xff]
    %v351 = vld [vmem:[#allocation2 + $0x90] sm:$0xff]
    %v352 = vld [vmem:[#allocation2 + $0x98] sm:$0xff]
    %v353 = vld [vmem:[#allocation2 + $0xa0] sm:$0xff]
    %v354 = vld [vmem:[#allocation2 + $0xa8] sm:$0xff]
    %v355 = vld [vmem:[#allocation2 + $0xb0] sm:$0xff]
    %v356 = vld [vmem:[#allocation2 + $0xb8] sm:$0xff]
    %v357 = vld [vmem:[#allocation2 + $0xc0] sm:$0xff]
    %v358 = vld [vmem:[#allocation2 + $0xc8] sm:$0xff]
    %v359 = vld [vmem:[#allocation2 + $0xd0] sm:$0xff]
    %v360 = vld [vmem:[#allocation2 + $0xd8] sm:$0xff]
    %v361 = vld [vmem:[#allocation2 + $0xe0] sm:$0xff]
    %v362 = vld [vmem:[#allocation2 + $0xe8] sm:$0xff]
    %v363 = vld [vmem:[#allocation2 + $0xf0] sm:$0xff]
    %v364 = vld [vmem:[#allocation2 + $0xf8] sm:$0xff]
    %v397 = vunpack.c.l.b16 %v333
    %v398 = vunpack.c.h.b16 %v333
    %v399 = vunpack.c.l.b16 %v334
    %v400 = vunpack.c.h.b16 %v334
    %v401 = vunpack.c.l.b16 %v335
    %v402 = vunpack.c.h.b16 %v335
    %v403 = vunpack.c.l.b16 %v336
    %v404 = vunpack.c.h.b16 %v336
    %v405 = vunpack.c.l.b16 %v337
    %v406 = vunpack.c.h.b16 %v337
    %v407 = vunpack.c.l.b16 %v338
    %v408 = vunpack.c.h.b16 %v338
    %v409 = vunpack.c.l.b16 %v339
    %v410 = vunpack.c.h.b16 %v339
    %v411 = vunpack.c.l.b16 %v340
    %v412 = vunpack.c.h.b16 %v340
    %v413 = vunpack.c.l.b16 %v341
    %v414 = vunpack.c.h.b16 %v341
    %v415 = vunpack.c.l.b16 %v342
    %v416 = vunpack.c.h.b16 %v342
    %v417 = vunpack.c.l.b16 %v343
    %v418 = vunpack.c.h.b16 %v343
    %v419 = vunpack.c.l.b16 %v344
    %v420 = vunpack.c.h.b16 %v344
    %v421 = vunpack.c.l.b16 %v345
    %v422 = vunpack.c.h.b16 %v345
    %v423 = vunpack.c.l.b16 %v346
    %v424 = vunpack.c.h.b16 %v346
    %v425 = vunpack.c.l.b16 %v347
    %v426 = vunpack.c.h.b16 %v347
    %v427 = vunpack.c.l.b16 %v348
    %v428 = vunpack.c.h.b16 %v348
    %v429 = vunpack.c.l.b16 %v349
    %v430 = vunpack.c.h.b16 %v349
    %v431 = vunpack.c.l.b16 %v350
    %v432 = vunpack.c.h.b16 %v350
    %v433 = vunpack.c.l.b16 %v351
    %v434 = vunpack.c.h.b16 %v351
    %v435 = vunpack.c.l.b16 %v352
    %v436 = vunpack.c.h.b16 %v352
    %v437 = vunpack.c.l.b16 %v353
    %v438 = vunpack.c.h.b16 %v353
    %v439 = vunpack.c.l.b16 %v354
    %v440 = vunpack.c.h.b16 %v354
    %v441 = vunpack.c.l.b16 %v355
    %v442 = vunpack.c.h.b16 %v355
    %v443 = vunpack.c.l.b16 %v356
    %v444 = vunpack.c.h.b16 %v356
    %v445 = vunpack.c.l.b16 %v357
    %v446 = vunpack.c.h.b16 %v357
    %v447 = vunpack.c.l.b16 %v358
    %v448 = vunpack.c.h.b16 %v358
    %v449 = vunpack.c.l.b16 %v359
    %v450 = vunpack.c.h.b16 %v359
    %v451 = vunpack.c.l.b16 %v360
    %v452 = vunpack.c.h.b16 %v360
    %v453 = vunpack.c.l.b16 %v361
    %v454 = vunpack.c.h.b16 %v361
    %v455 = vunpack.c.l.b16 %v362
    %v456 = vunpack.c.h.b16 %v362
    %v457 = vunpack.c.l.b16 %v363
    %v458 = vunpack.c.h.b16 %v363
    %v459 = vunpack.c.l.b16 %v364
    %v460 = vunpack.c.h.b16 %v364
    %v461 = vpack.c.b16 %v413, %v397
    %v462 = vpack.c.b16 %v414, %v398
    %v463 = vpack.c.b16 %v415, %v399
    %v464 = vpack.c.b16 %v416, %v400
    %v465 = vpack.c.b16 %v417, %v401
    %v466 = vpack.c.b16 %v418, %v402
    %v467 = vpack.c.b16 %v419, %v403
    %v468 = vpack.c.b16 %v420, %v404
    %v469 = vpack.c.b16 %v421, %v405
    %v470 = vpack.c.b16 %v422, %v406
    %v471 = vpack.c.b16 %v423, %v407
    %v472 = vpack.c.b16 %v424, %v408
    %v473 = vpack.c.b16 %v425, %v409
    %v474 = vpack.c.b16 %v426, %v410
    %v475 = vpack.c.b16 %v427, %v411
    %v476 = vpack.c.b16 %v428, %v412
    %v477 = vpack.c.b16 %v445, %v429
    %v478 = vpack.c.b16 %v446, %v430
    %v479 = vpack.c.b16 %v447, %v431
    %v480 = vpack.c.b16 %v448, %v432
    %v481 = vpack.c.b16 %v449, %v433
    %v482 = vpack.c.b16 %v450, %v434
    %v483 = vpack.c.b16 %v451, %v435
    %v484 = vpack.c.b16 %v452, %v436
    %v485 = vpack.c.b16 %v453, %v437
    %v486 = vpack.c.b16 %v454, %v438
    %v487 = vpack.c.b16 %v455, %v439
    %v488 = vpack.c.b16 %v456, %v440
    %v489 = vpack.c.b16 %v457, %v441
    %v490 = vpack.c.b16 %v458, %v442
    %v491 = vpack.c.b16 %v459, %v443
    %v492 = vpack.c.b16 %v460, %v444
    %vm525 = vcmask 261120
    %v527 = vsel %vm525, %v332, 0
    %529 = vmatprep.subr.bf16.mxu0 0
    %530 = vmatpush1.bf16.msra.mxu0 0
    %531 = vmatprep.subr.bf16.mxu0 0
    %532 = vmatpush1.bf16.msra.mxu0 0
    %533 = vmatprep.subr.bf16.mxu0 0
    %534 = vmatpush1.bf16.msra.mxu0 0
    %535 = vmatprep.subr.bf16.mxu0 0
    %536 = vmatpush1.bf16.msra.mxu0 0
    %537 = vmatprep.subr.bf16.mxu0 0
    %538 = vmatpush1.bf16.msra.mxu0 0
    %539 = vmatprep.subr.bf16.mxu0 0
    %540 = vmatpush1.bf16.msra.mxu0 0
    %541 = vmatprep.subr.bf16.mxu0 %v478
    %542 = vmatpush1.bf16.msra.mxu0 %v477
    %543 = vmatprep.subr.bf16.mxu0 %v462
    %544 = vmatpush1.bf16.msra.mxu0 %v461
    %545 = vmatprep.subr.bf16.mxu0 0
    %546 = vmatpush2.bf16.msra.mxu0 0
    %547 = vmatprep.subr.bf16.mxu0 0
    %548 = vmatpush2.bf16.msra.mxu0 0
    %549 = vmatprep.subr.bf16.mxu0 0
    %550 = vmatpush2.bf16.msra.mxu0 0
    %551 = vmatprep.subr.bf16.mxu0 0
    %552 = vmatpush2.bf16.msra.mxu0 0
    %553 = vmatprep.subr.bf16.mxu0 0
    %554 = vmatpush2.bf16.msra.mxu0 0
    %555 = vmatprep.subr.bf16.mxu0 0
    %556 = vmatpush2.bf16.msra.mxu0 0
    %557 = vmatprep.subr.bf16.mxu0 0
    %558 = vmatpush2.bf16.msra.mxu0 0
    %559 = vmatprep.subr.bf16.mxu0 0
    %560 = vmatpush2.bf16.msra.mxu0 0
    %561 = vmatprep.mubr.bf16.mxu0 0
    %562 = vmatmul.mubr.bf16.gmra.mxu0 %v527
    %v563 = vpop.f32.mrf.mxu0
    %v564 = vadd.f32 0.0, %v563
    %v565 = vpop.f32.mrf.mxu0
    %v566 = vadd.f32 0.0, %v565
    %v567 = vpop.f32.mrf.mxu0
    %v568 = vpop.f32.mrf.mxu0
    %569 = vdwg.mxu0
    %570 = vmatprep.subr.bf16.mxu0 0
    %571 = vmatpush1.bf16.msra.mxu0 0
    %572 = vmatprep.subr.bf16.mxu0 0
    %573 = vmatpush1.bf16.msra.mxu0 0
    %574 = vmatprep.subr.bf16.mxu0 0
    %575 = vmatpush1.bf16.msra.mxu0 0
    %576 = vmatprep.subr.bf16.mxu0 0
    %577 = vmatpush1.bf16.msra.mxu0 0
    %578 = vmatprep.subr.bf16.mxu0 0
    %579 = vmatpush1.bf16.msra.mxu0 0
    %580 = vmatprep.subr.bf16.mxu0 0
    %581 = vmatpush1.bf16.msra.mxu0 0
    %582 = vmatprep.subr.bf16.mxu0 %v480
    %583 = vmatpush1.bf16.msra.mxu0 %v479
    %584 = vmatprep.subr.bf16.mxu0 %v464
    %585 = vmatpush1.bf16.msra.mxu0 %v463
    %586 = vmatprep.subr.bf16.mxu0 0
    %587 = vmatpush2.bf16.msra.mxu0 0
    %588 = vmatprep.subr.bf16.mxu0 0
    %589 = vmatpush2.bf16.msra.mxu0 0
    %590 = vmatprep.subr.bf16.mxu0 0
    %591 = vmatpush2.bf16.msra.mxu0 0
    %592 = vmatprep.subr.bf16.mxu0 0
    %593 = vmatpush2.bf16.msra.mxu0 0
    %594 = vmatprep.subr.bf16.mxu0 0
    %595 = vmatpush2.bf16.msra.mxu0 0
    %596 = vmatprep.subr.bf16.mxu0 0
    %597 = vmatpush2.bf16.msra.mxu0 0
    %598 = vmatprep.subr.bf16.mxu0 0
    %599 = vmatpush2.bf16.msra.mxu0 0
    %600 = vmatprep.subr.bf16.mxu0 0
    %601 = vmatpush2.bf16.msra.mxu0 0
    %602 = vmatprep.mubr.bf16.mxu0 0
    %603 = vmatmul.mubr.bf16.gmra.mxu0 %v527
    %v604 = vpop.f32.mrf.mxu0
    %v605 = vadd.f32 0.0, %v604
    %v606 = vpop.f32.mrf.mxu0
    %v607 = vadd.f32 0.0, %v606
    %v608 = vpop.f32.mrf.mxu0
    %v609 = vpop.f32.mrf.mxu0
    %610 = vdwg.mxu0
    %611 = vmatprep.subr.bf16.mxu0 0
    %612 = vmatpush1.bf16.msra.mxu0 0
    %613 = vmatprep.subr.bf16.mxu0 0
    %614 = vmatpush1.bf16.msra.mxu0 0
    %615 = vmatprep.subr.bf16.mxu0 0
    %616 = vmatpush1.bf16.msra.mxu0 0
    %617 = vmatprep.subr.bf16.mxu0 0
    %618 = vmatpush1.bf16.msra.mxu0 0
    %619 = vmatprep.subr.bf16.mxu0 0
    %620 = vmatpush1.bf16.msra.mxu0 0
    %621 = vmatprep.subr.bf16.mxu0 0
    %622 = vmatpush1.bf16.msra.mxu0 0
    %623 = vmatprep.subr.bf16.mxu0 %v482
    %624 = vmatpush1.bf16.msra.mxu0 %v481
    %625 = vmatprep.subr.bf16.mxu0 %v466
    %626 = vmatpush1.bf16.msra.mxu0 %v465
    %627 = vmatprep.subr.bf16.mxu0 0
    %628 = vmatpush2.bf16.msra.mxu0 0
    %629 = vmatprep.subr.bf16.mxu0 0
    %630 = vmatpush2.bf16.msra.mxu0 0
    %631 = vmatprep.subr.bf16.mxu0 0
    %632 = vmatpush2.bf16.msra.mxu0 0
    %633 = vmatprep.subr.bf16.mxu0 0
    %634 = vmatpush2.bf16.msra.mxu0 0
    %635 = vmatprep.subr.bf16.mxu0 0
    %636 = vmatpush2.bf16.msra.mxu0 0
    %637 = vmatprep.subr.bf16.mxu0 0
    %638 = vmatpush2.bf16.msra.mxu0 0
    %639 = vmatprep.subr.bf16.mxu0 0
    %640 = vmatpush2.bf16.msra.mxu0 0
    %641 = vmatprep.subr.bf16.mxu0 0
    %642 = vmatpush2.bf16.msra.mxu0 0
    %643 = vmatprep.mubr.bf16.mxu0 0
    %644 = vmatmul.mubr.bf16.gmra.mxu0 %v527
    %v645 = vpop.f32.mrf.mxu0
    %v646 = vadd.f32 0.0, %v645
    %v647 = vpop.f32.mrf.mxu0
    %v648 = vadd.f32 0.0, %v647
    %v649 = vpop.f32.mrf.mxu0
    %v650 = vpop.f32.mrf.mxu0
    %651 = vdwg.mxu0
    %652 = vmatprep.subr.bf16.mxu0 0
    %653 = vmatpush1.bf16.msra.mxu0 0
    %654 = vmatprep.subr.bf16.mxu0 0
    %655 = vmatpush1.bf16.msra.mxu0 0
    %656 = vmatprep.subr.bf16.mxu0 0
    %657 = vmatpush1.bf16.msra.mxu0 0
    %658 = vmatprep.subr.bf16.mxu0 0
    %659 = vmatpush1.bf16.msra.mxu0 0
    %660 = vmatprep.subr.bf16.mxu0 0
    %661 = vmatpush1.bf16.msra.mxu0 0
    %662 = vmatprep.subr.bf16.mxu0 0
    %663 = vmatpush1.bf16.msra.mxu0 0
    %664 = vmatprep.subr.bf16.mxu0 %v484
    %665 = vmatpush1.bf16.msra.mxu0 %v483
    %666 = vmatprep.subr.bf16.mxu0 %v468
    %667 = vmatpush1.bf16.msra.mxu0 %v467
    %668 = vmatprep.subr.bf16.mxu0 0
    %669 = vmatpush2.bf16.msra.mxu0 0
    %670 = vmatprep.subr.bf16.mxu0 0
    %671 = vmatpush2.bf16.msra.mxu0 0
    %672 = vmatprep.subr.bf16.mxu0 0
    %673 = vmatpush2.bf16.msra.mxu0 0
    %674 = vmatprep.subr.bf16.mxu0 0
    %675 = vmatpush2.bf16.msra.mxu0 0
    %676 = vmatprep.subr.bf16.mxu0 0
    %677 = vmatpush2.bf16.msra.mxu0 0
    %678 = vmatprep.subr.bf16.mxu0 0
    %679 = vmatpush2.bf16.msra.mxu0 0
    %680 = vmatprep.subr.bf16.mxu0 0
    %681 = vmatpush2.bf16.msra.mxu0 0
    %682 = vmatprep.subr.bf16.mxu0 0
    %683 = vmatpush2.bf16.msra.mxu0 0
    %684 = vmatprep.mubr.bf16.mxu0 0
    %685 = vmatmul.mubr.bf16.gmra.mxu0 %v527
    %v686 = vpop.f32.mrf.mxu0
    %v687 = vadd.f32 0.0, %v686
    %v688 = vpop.f32.mrf.mxu0
    %v689 = vadd.f32 0.0, %v688
    %v690 = vpop.f32.mrf.mxu0
    %v691 = vpop.f32.mrf.mxu0
    %692 = vdwg.mxu0
    %693 = vmatprep.subr.bf16.mxu0 0
    %694 = vmatpush1.bf16.msra.mxu0 0
    %695 = vmatprep.subr.bf16.mxu0 0
    %696 = vmatpush1.bf16.msra.mxu0 0
    %697 = vmatprep.subr.bf16.mxu0 0
    %698 = vmatpush1.bf16.msra.mxu0 0
    %699 = vmatprep.subr.bf16.mxu0 0
    %700 = vmatpush1.bf16.msra.mxu0 0
    %701 = vmatprep.subr.bf16.mxu0 0
    %702 = vmatpush1.bf16.msra.mxu0 0
    %703 = vmatprep.subr.bf16.mxu0 0
    %704 = vmatpush1.bf16.msra.mxu0 0
    %705 = vmatprep.subr.bf16.mxu0 %v486
    %706 = vmatpush1.bf16.msra.mxu0 %v485
    %707 = vmatprep.subr.bf16.mxu0 %v470
    %708 = vmatpush1.bf16.msra.mxu0 %v469
    %709 = vmatprep.subr.bf16.mxu0 0
    %710 = vmatpush2.bf16.msra.mxu0 0
    %711 = vmatprep.subr.bf16.mxu0 0
    %712 = vmatpush2.bf16.msra.mxu0 0
    %713 = vmatprep.subr.bf16.mxu0 0
    %714 = vmatpush2.bf16.msra.mxu0 0
    %715 = vmatprep.subr.bf16.mxu0 0
    %716 = vmatpush2.bf16.msra.mxu0 0
    %717 = vmatprep.subr.bf16.mxu0 0
    %718 = vmatpush2.bf16.msra.mxu0 0
    %719 = vmatprep.subr.bf16.mxu0 0
    %720 = vmatpush2.bf16.msra.mxu0 0
    %721 = vmatprep.subr.bf16.mxu0 0
    %722 = vmatpush2.bf16.msra.mxu0 0
    %723 = vmatprep.subr.bf16.mxu0 0
    %724 = vmatpush2.bf16.msra.mxu0 0
    %725 = vmatprep.mubr.bf16.mxu0 0
    %726 = vmatmul.mubr.bf16.gmra.mxu0 %v527
    %v727 = vpop.f32.mrf.mxu0
    %v728 = vadd.f32 0.0, %v727
    %v729 = vpop.f32.mrf.mxu0
    %v730 = vadd.f32 0.0, %v729
    %v731 = vpop.f32.mrf.mxu0
    %v732 = vpop.f32.mrf.mxu0
    %733 = vdwg.mxu0
    %734 = vmatprep.subr.bf16.mxu0 0
    %735 = vmatpush1.bf16.msra.mxu0 0
    %736 = vmatprep.subr.bf16.mxu0 0
    %737 = vmatpush1.bf16.msra.mxu0 0
    %738 = vmatprep.subr.bf16.mxu0 0
    %739 = vmatpush1.bf16.msra.mxu0 0
    %740 = vmatprep.subr.bf16.mxu0 0
    %741 = vmatpush1.bf16.msra.mxu0 0
    %742 = vmatprep.subr.bf16.mxu0 0
    %743 = vmatpush1.bf16.msra.mxu0 0
    %744 = vmatprep.subr.bf16.mxu0 0
    %745 = vmatpush1.bf16.msra.mxu0 0
    %746 = vmatprep.subr.bf16.mxu0 %v488
    %747 = vmatpush1.bf16.msra.mxu0 %v487
    %748 = vmatprep.subr.bf16.mxu0 %v472
    %749 = vmatpush1.bf16.msra.mxu0 %v471
    %750 = vmatprep.subr.bf16.mxu0 0
    %751 = vmatpush2.bf16.msra.mxu0 0
    %752 = vmatprep.subr.bf16.mxu0 0
    %753 = vmatpush2.bf16.msra.mxu0 0
    %754 = vmatprep.subr.bf16.mxu0 0
    %755 = vmatpush2.bf16.msra.mxu0 0
    %756 = vmatprep.subr.bf16.mxu0 0
    %757 = vmatpush2.bf16.msra.mxu0 0
    %758 = vmatprep.subr.bf16.mxu0 0
    %759 = vmatpush2.bf16.msra.mxu0 0
    %760 = vmatprep.subr.bf16.mxu0 0
    %761 = vmatpush2.bf16.msra.mxu0 0
    %762 = vmatprep.subr.bf16.mxu0 0
    %763 = vmatpush2.bf16.msra.mxu0 0
    %764 = vmatprep.subr.bf16.mxu0 0
    %765 = vmatpush2.bf16.msra.mxu0 0
    %766 = vmatprep.mubr.bf16.mxu0 0
    %767 = vmatmul.mubr.bf16.gmra.mxu0 %v527
    %v768 = vpop.f32.mrf.mxu0
    %v769 = vadd.f32 0.0, %v768
    %v770 = vpop.f32.mrf.mxu0
    %v771 = vadd.f32 0.0, %v770
    %v772 = vpop.f32.mrf.mxu0
    %v773 = vpop.f32.mrf.mxu0
    %774 = vdwg.mxu0
    %775 = vmatprep.subr.bf16.mxu0 0
    %776 = vmatpush1.bf16.msra.mxu0 0
    %777 = vmatprep.subr.bf16.mxu0 0
    %778 = vmatpush1.bf16.msra.mxu0 0
    %779 = vmatprep.subr.bf16.mxu0 0
    %780 = vmatpush1.bf16.msra.mxu0 0
    %781 = vmatprep.subr.bf16.mxu0 0
    %782 = vmatpush1.bf16.msra.mxu0 0
    %783 = vmatprep.subr.bf16.mxu0 0
    %784 = vmatpush1.bf16.msra.mxu0 0
    %785 = vmatprep.subr.bf16.mxu0 0
    %786 = vmatpush1.bf16.msra.mxu0 0
    %787 = vmatprep.subr.bf16.mxu0 %v490
    %788 = vmatpush1.bf16.msra.mxu0 %v489
    %789 = vmatprep.subr.bf16.mxu0 %v474
    %790 = vmatpush1.bf16.msra.mxu0 %v473
    %791 = vmatprep.subr.bf16.mxu0 0
    %792 = vmatpush2.bf16.msra.mxu0 0
    %793 = vmatprep.subr.bf16.mxu0 0
    %794 = vmatpush2.bf16.msra.mxu0 0
    %795 = vmatprep.subr.bf16.mxu0 0
    %796 = vmatpush2.bf16.msra.mxu0 0
    %797 = vmatprep.subr.bf16.mxu0 0
    %798 = vmatpush2.bf16.msra.mxu0 0
    %799 = vmatprep.subr.bf16.mxu0 0
    %800 = vmatpush2.bf16.msra.mxu0 0
    %801 = vmatprep.subr.bf16.mxu0 0
    %802 = vmatpush2.bf16.msra.mxu0 0
    %803 = vmatprep.subr.bf16.mxu0 0
    %804 = vmatpush2.bf16.msra.mxu0 0
    %805 = vmatprep.subr.bf16.mxu0 0
    %806 = vmatpush2.bf16.msra.mxu0 0
    %807 = vmatprep.mubr.bf16.mxu0 0
    %808 = vmatmul.mubr.bf16.gmra.mxu0 %v527
    %v809 = vpop.f32.mrf.mxu0
    %v810 = vadd.f32 0.0, %v809
    %v811 = vpop.f32.mrf.mxu0
    %v812 = vadd.f32 0.0, %v811
    %v813 = vpop.f32.mrf.mxu0
    %v814 = vpop.f32.mrf.mxu0
    %815 = vdwg.mxu0
    %816 = vmatprep.subr.bf16.mxu0 0
    %817 = vmatpush1.bf16.msra.mxu0 0
    %818 = vmatprep.subr.bf16.mxu0 0
    %819 = vmatpush1.bf16.msra.mxu0 0
    %820 = vmatprep.subr.bf16.mxu0 0
    %821 = vmatpush1.bf16.msra.mxu0 0
    %822 = vmatprep.subr.bf16.mxu0 0
    %823 = vmatpush1.bf16.msra.mxu0 0
    %824 = vmatprep.subr.bf16.mxu0 0
    %825 = vmatpush1.bf16.msra.mxu0 0
    %826 = vmatprep.subr.bf16.mxu0 0
    %827 = vmatpush1.bf16.msra.mxu0 0
    %828 = vmatprep.subr.bf16.mxu0 %v492
    %829 = vmatpush1.bf16.msra.mxu0 %v491
    %830 = vmatprep.subr.bf16.mxu0 %v476
    %831 = vmatpush1.bf16.msra.mxu0 %v475
    %832 = vmatprep.subr.bf16.mxu0 0
    %833 = vmatpush2.bf16.msra.mxu0 0
    %834 = vmatprep.subr.bf16.mxu0 0
    %835 = vmatpush2.bf16.msra.mxu0 0
    %836 = vmatprep.subr.bf16.mxu0 0
    %837 = vmatpush2.bf16.msra.mxu0 0
    %838 = vmatprep.subr.bf16.mxu0 0
    %839 = vmatpush2.bf16.msra.mxu0 0
    %840 = vmatprep.subr.bf16.mxu0 0
    %841 = vmatpush2.bf16.msra.mxu0 0
    %842 = vmatprep.subr.bf16.mxu0 0
    %843 = vmatpush2.bf16.msra.mxu0 0
    %844 = vmatprep.subr.bf16.mxu0 0
    %845 = vmatpush2.bf16.msra.mxu0 0
    %846 = vmatprep.subr.bf16.mxu0 0
    %847 = vmatpush2.bf16.msra.mxu0 0
    %848 = vmatprep.mubr.bf16.mxu0 0
    %849 = vmatmul.mubr.bf16.gmra.mxu0 %v527
    %v850 = vpop.f32.mrf.mxu0
    %v851 = vadd.f32 0.0, %v850
    %v852 = vpop.f32.mrf.mxu0
    %v853 = vadd.f32 0.0, %v852
    %v854 = vpop.f32.mrf.mxu0
    %v855 = vpop.f32.mrf.mxu0
    %856 = vdwg.mxu0
    %v857 = vrot.slane %v564, 4
    %v858 = vadd.f32 %v564, %v857
    %v859 = vrot.slane %v858, 2
    %v860 = vadd.f32 %v858, %v859
    %v861 = vrot.slane %v860, 1
    %v862 = vadd.f32 %v860, %v861
    %v863 = vrot.slane %v566, 4
    %v864 = vadd.f32 %v566, %v863
    %v865 = vrot.slane %v864, 2
    %v866 = vadd.f32 %v864, %v865
    %v867 = vrot.slane %v866, 1
    %v868 = vadd.f32 %v866, %v867
    %v869 = vrot.slane %v605, 4
    %v870 = vadd.f32 %v605, %v869
    %v871 = vrot.slane %v870, 2
    %v872 = vadd.f32 %v870, %v871
    %v873 = vrot.slane %v872, 1
    %v874 = vadd.f32 %v872, %v873
    %v875 = vrot.slane %v607, 4
    %v876 = vadd.f32 %v607, %v875
    %v877 = vrot.slane %v876, 2
    %v878 = vadd.f32 %v876, %v877
    %v879 = vrot.slane %v878, 1
    %v880 = vadd.f32 %v878, %v879
    %v881 = vrot.slane %v646, 4
    %v882 = vadd.f32 %v646, %v881
    %v883 = vrot.slane %v882, 2
    %v884 = vadd.f32 %v882, %v883
    %v885 = vrot.slane %v884, 1
    %v886 = vadd.f32 %v884, %v885
    %v887 = vrot.slane %v648, 4
    %v888 = vadd.f32 %v648, %v887
    %v889 = vrot.slane %v888, 2
    %v890 = vadd.f32 %v888, %v889
    %v891 = vrot.slane %v890, 1
    %v892 = vadd.f32 %v890, %v891
    %v893 = vrot.slane %v687, 4
    %v894 = vadd.f32 %v687, %v893
    %v895 = vrot.slane %v894, 2
    %v896 = vadd.f32 %v894, %v895
    %v897 = vrot.slane %v896, 1
    %v898 = vadd.f32 %v896, %v897
    %v899 = vrot.slane %v689, 4
    %v900 = vadd.f32 %v689, %v899
    %v901 = vrot.slane %v900, 2
    %v902 = vadd.f32 %v900, %v901
    %v903 = vrot.slane %v902, 1
    %v904 = vadd.f32 %v902, %v903
    %v905 = vrot.slane %v728, 4
    %v906 = vadd.f32 %v728, %v905
    %v907 = vrot.slane %v906, 2
    %v908 = vadd.f32 %v906, %v907
    %v909 = vrot.slane %v908, 1
    %v910 = vadd.f32 %v908, %v909
    %v911 = vrot.slane %v730, 4
    %v912 = vadd.f32 %v730, %v911
    %v913 = vrot.slane %v912, 2
    %v914 = vadd.f32 %v912, %v913
    %v915 = vrot.slane %v914, 1
    %v916 = vadd.f32 %v914, %v915
    %v917 = vrot.slane %v769, 4
    %v918 = vadd.f32 %v769, %v917
    %v919 = vrot.slane %v918, 2
    %v920 = vadd.f32 %v918, %v919
    %v921 = vrot.slane %v920, 1
    %v922 = vadd.f32 %v920, %v921
    %v923 = vrot.slane %v771, 4
    %v924 = vadd.f32 %v771, %v923
    %v925 = vrot.slane %v924, 2
    %v926 = vadd.f32 %v924, %v925
    %v927 = vrot.slane %v926, 1
    %v928 = vadd.f32 %v926, %v927
    %v929 = vrot.slane %v810, 4
    %v930 = vadd.f32 %v810, %v929
    %v931 = vrot.slane %v930, 2
    %v932 = vadd.f32 %v930, %v931
    %v933 = vrot.slane %v932, 1
    %v934 = vadd.f32 %v932, %v933
    %v935 = vrot.slane %v812, 4
    %v936 = vadd.f32 %v812, %v935
    %v937 = vrot.slane %v936, 2
    %v938 = vadd.f32 %v936, %v937
    %v939 = vrot.slane %v938, 1
    %v940 = vadd.f32 %v938, %v939
    %v941 = vrot.slane %v851, 4
    %v942 = vadd.f32 %v851, %v941
    %v943 = vrot.slane %v942, 2
    %v944 = vadd.f32 %v942, %v943
    %v945 = vrot.slane %v944, 1
    %v946 = vadd.f32 %v944, %v945
    %v947 = vrot.slane %v853, 4
    %v948 = vadd.f32 %v853, %v947
    %v949 = vrot.slane %v948, 2
    %v950 = vadd.f32 %v948, %v949
    %v951 = vrot.slane %v950, 1
    %v952 = vadd.f32 %v950, %v951
    %v953 = vmul.f32 %v862, 0.125
    %v954 = vmul.f32 %v868, 0.125
    %v955 = vmul.f32 %v874, 0.125
    %v956 = vmul.f32 %v880, 0.125
    %v957 = vmul.f32 %v886, 0.125
    %v958 = vmul.f32 %v892, 0.125
    %v959 = vmul.f32 %v898, 0.125
    %v960 = vmul.f32 %v904, 0.125
    %v961 = vmul.f32 %v910, 0.125
    %v962 = vmul.f32 %v916, 0.125
    %v963 = vmul.f32 %v922, 0.125
    %v964 = vmul.f32 %v928, 0.125
    %v965 = vmul.f32 %v934, 0.125
    %v966 = vmul.f32 %v940, 0.125
    %v967 = vmul.f32 %v946, 0.125
    %v968 = vmul.f32 %v952, 0.125
    %v969 = vsub.f32 %v564, %v953
    %v970 = vsub.f32 %v566, %v954
    %v971 = vsub.f32 %v605, %v955
    %v972 = vsub.f32 %v607, %v956
    %v973 = vsub.f32 %v646, %v957
    %v974 = vsub.f32 %v648, %v958
    %v975 = vsub.f32 %v687, %v959
    %v976 = vsub.f32 %v689, %v960
    %v977 = vsub.f32 %v728, %v961
    %v978 = vsub.f32 %v730, %v962
    %v979 = vsub.f32 %v769, %v963
    %v980 = vsub.f32 %v771, %v964
    %v981 = vsub.f32 %v810, %v965
    %v982 = vsub.f32 %v812, %v966
    %v983 = vsub.f32 %v851, %v967
    %v984 = vsub.f32 %v853, %v968
    %v985 = vmul.f32 %v969, %v969
    %v986 = vmul.f32 %v970, %v970
    %v987 = vmul.f32 %v971, %v971
    %v988 = vmul.f32 %v972, %v972
    %v989 = vmul.f32 %v973, %v973
    %v990 = vmul.f32 %v974, %v974
    %v991 = vmul.f32 %v975, %v975
    %v992 = vmul.f32 %v976, %v976
    %v993 = vmul.f32 %v977, %v977
    %v994 = vmul.f32 %v978, %v978
    %v995 = vmul.f32 %v979, %v979
    %v996 = vmul.f32 %v980, %v980
    %v997 = vmul.f32 %v981, %v981
    %v998 = vmul.f32 %v982, %v982
    %v999 = vmul.f32 %v983, %v983
    %v1000 = vmul.f32 %v984, %v984
    %v1001 = vrot.slane %v985, 4
    %v1002 = vadd.f32 %v985, %v1001
    %v1003 = vrot.slane %v1002, 2
    %v1004 = vadd.f32 %v1002, %v1003
    %v1005 = vrot.slane %v1004, 1
    %v1006 = vadd.f32 %v1004, %v1005
    %v1007 = vrot.slane %v986, 4
    %v1008 = vadd.f32 %v986, %v1007
    %v1009 = vrot.slane %v1008, 2
    %v1010 = vadd.f32 %v1008, %v1009
    %v1011 = vrot.slane %v1010, 1
    %v1012 = vadd.f32 %v1010, %v1011
    %v1013 = vrot.slane %v987, 4
    %v1014 = vadd.f32 %v987, %v1013
    %v1015 = vrot.slane %v1014, 2
    %v1016 = vadd.f32 %v1014, %v1015
    %v1017 = vrot.slane %v1016, 1
    %v1018 = vadd.f32 %v1016, %v1017
    %v1019 = vrot.slane %v988, 4
    %v1020 = vadd.f32 %v988, %v1019
    %v1021 = vrot.slane %v1020, 2
    %v1022 = vadd.f32 %v1020, %v1021
    %v1023 = vrot.slane %v1022, 1
    %v1024 = vadd.f32 %v1022, %v1023
    %v1025 = vrot.slane %v989, 4
    %v1026 = vadd.f32 %v989, %v1025
    %v1027 = vrot.slane %v1026, 2
    %v1028 = vadd.f32 %v1026, %v1027
    %v1029 = vrot.slane %v1028, 1
    %v1030 = vadd.f32 %v1028, %v1029
    %v1031 = vrot.slane %v990, 4
    %v1032 = vadd.f32 %v990, %v1031
    %v1033 = vrot.slane %v1032, 2
    %v1034 = vadd.f32 %v1032, %v1033
    %v1035 = vrot.slane %v1034, 1
    %v1036 = vadd.f32 %v1034, %v1035
    %v1037 = vrot.slane %v991, 4
    %v1038 = vadd.f32 %v991, %v1037
    %v1039 = vrot.slane %v1038, 2
    %v1040 = vadd.f32 %v1038, %v1039
    %v1041 = vrot.slane %v1040, 1
    %v1042 = vadd.f32 %v1040, %v1041
    %v1043 = vrot.slane %v992, 4
    %v1044 = vadd.f32 %v992, %v1043
    %v1045 = vrot.slane %v1044, 2
    %v1046 = vadd.f32 %v1044, %v1045
    %v1047 = vrot.slane %v1046, 1
    %v1048 = vadd.f32 %v1046, %v1047
    %v1049 = vrot.slane %v993, 4
    %v1050 = vadd.f32 %v993, %v1049
    %v1051 = vrot.slane %v1050, 2
    %v1052 = vadd.f32 %v1050, %v1051
    %v1053 = vrot.slane %v1052, 1
    %v1054 = vadd.f32 %v1052, %v1053
    %v1055 = vrot.slane %v994, 4
    %v1056 = vadd.f32 %v994, %v1055
    %v1057 = vrot.slane %v1056, 2
    %v1058 = vadd.f32 %v1056, %v1057
    %v1059 = vrot.slane %v1058, 1
    %v1060 = vadd.f32 %v1058, %v1059
    %v1061 = vrot.slane %v995, 4
    %v1062 = vadd.f32 %v995, %v1061
    %v1063 = vrot.slane %v1062, 2
    %v1064 = vadd.f32 %v1062, %v1063
    %v1065 = vrot.slane %v1064, 1
    %v1066 = vadd.f32 %v1064, %v1065
    %v1067 = vrot.slane %v996, 4
    %v1068 = vadd.f32 %v996, %v1067
    %v1069 = vrot.slane %v1068, 2
    %v1070 = vadd.f32 %v1068, %v1069
    %v1071 = vrot.slane %v1070, 1
    %v1072 = vadd.f32 %v1070, %v1071
    %v1073 = vrot.slane %v997, 4
    %v1074 = vadd.f32 %v997, %v1073
    %v1075 = vrot.slane %v1074, 2
    %v1076 = vadd.f32 %v1074, %v1075
    %v1077 = vrot.slane %v1076, 1
    %v1078 = vadd.f32 %v1076, %v1077
    %v1079 = vrot.slane %v998, 4
    %v1080 = vadd.f32 %v998, %v1079
    %v1081 = vrot.slane %v1080, 2
    %v1082 = vadd.f32 %v1080, %v1081
    %v1083 = vrot.slane %v1082, 1
    %v1084 = vadd.f32 %v1082, %v1083
    %v1085 = vrot.slane %v999, 4
    %v1086 = vadd.f32 %v999, %v1085
    %v1087 = vrot.slane %v1086, 2
    %v1088 = vadd.f32 %v1086, %v1087
    %v1089 = vrot.slane %v1088, 1
    %v1090 = vadd.f32 %v1088, %v1089
    %v1091 = vrot.slane %v1000, 4
    %v1092 = vadd.f32 %v1000, %v1091
    %v1093 = vrot.slane %v1092, 2
    %v1094 = vadd.f32 %v1092, %v1093
    %v1095 = vrot.slane %v1094, 1
    %v1096 = vadd.f32 %v1094, %v1095
    %v1097 = vmul.f32 %v1006, 0.125
    %v1098 = vmul.f32 %v1012, 0.125
    %v1099 = vmul.f32 %v1018, 0.125
    %v1100 = vmul.f32 %v1024, 0.125
    %v1101 = vmul.f32 %v1030, 0.125
    %v1102 = vmul.f32 %v1036, 0.125
    %v1103 = vmul.f32 %v1042, 0.125
    %v1104 = vmul.f32 %v1048, 0.125
    %v1105 = vmul.f32 %v1054, 0.125
    %v1106 = vmul.f32 %v1060, 0.125
    %v1107 = vmul.f32 %v1066, 0.125
    %v1108 = vmul.f32 %v1072, 0.125
    %v1109 = vmul.f32 %v1078, 0.125
    %v1110 = vmul.f32 %v1084, 0.125
    %v1111 = vmul.f32 %v1090, 0.125
    %v1112 = vmul.f32 %v1096, 0.125
    %v1113 = vld [vmem:[#allocation4] sm:$0xff]
    %v1114 = vld [vmem:[#allocation4 + $0x8] sm:$0xff]
    %v1115 = vadd.f32 %v1097, 1e-05
    %v1116 = vadd.f32 %v1098, 1e-05
    %v1117 = vadd.f32 %v1099, 1e-05
    %v1118 = vadd.f32 %v1100, 1e-05
    %v1119 = vadd.f32 %v1101, 1e-05
    %v1120 = vadd.f32 %v1102, 1e-05
    %v1121 = vadd.f32 %v1103, 1e-05
    %v1122 = vadd.f32 %v1104, 1e-05
    %v1123 = vadd.f32 %v1105, 1e-05
    %v1124 = vadd.f32 %v1106, 1e-05
    %v1125 = vadd.f32 %v1107, 1e-05
    %v1126 = vadd.f32 %v1108, 1e-05
    %v1127 = vadd.f32 %v1109, 1e-05
    %v1128 = vadd.f32 %v1110, 1e-05
    %v1129 = vadd.f32 %v1111, 1e-05
    %v1130 = vadd.f32 %v1112, 1e-05
    %v1131 = vrsqrt.pop %v1115
    %v1132 = vrsqrt.pop %v1116
    %v1133 = vrsqrt.pop %v1117
    %v1134 = vrsqrt.pop %v1118
    %v1135 = vrsqrt.pop %v1119
    %v1136 = vrsqrt.pop %v1120
    %v1137 = vrsqrt.pop %v1121
    %v1138 = vrsqrt.pop %v1122
    %v1139 = vrsqrt.pop %v1123
    %v1140 = vrsqrt.pop %v1124
    %v1141 = vrsqrt.pop %v1125
    %v1142 = vrsqrt.pop %v1126
    %v1143 = vrsqrt.pop %v1127
    %v1144 = vrsqrt.pop %v1128
    %v1145 = vrsqrt.pop %v1129
    %v1146 = vrsqrt.pop %v1130
    %v1163 = vcombine.low %v1131, %v1132
    %v1164 = vcombine.low %v1133, %v1134
    %v1165 = vcombine.low %v1135, %v1136
    %v1166 = vcombine.low %v1137, %v1138
    %v1168 = vunpack.c.l.s4 1966171168
    %v1169 = vunpack.c.0.s8 %v1168
    %v1170 = vlaneseq
    %v1171 = vshrl.u32 %v1170, 7
    %v1172 = vsub.s32 %v1169, %v1171
    %v1173 = vrot.slane %v1163, %v1172
    %v1175 = vunpack.c.l.s4 1966171168
    %v1176 = vunpack.c.0.s8 %v1175
    %v1177 = vlaneseq
    %v1178 = vshrl.u32 %v1177, 7
    %v1179 = vsub.s32 %v1176, %v1178
    %v1180 = vrot.slane %v1164, %v1179
    %v1182 = vunpack.c.l.s4 1966171168
    %v1183 = vunpack.c.0.s8 %v1182
    %v1184 = vlaneseq
    %v1185 = vshrl.u32 %v1184, 7
    %v1186 = vsub.s32 %v1183, %v1185
    %v1187 = vrot.slane %v1165, %v1186
    %v1189 = vunpack.c.l.s4 1966171168
    %v1190 = vunpack.c.0.s8 %v1189
    %v1191 = vlaneseq
    %v1192 = vshrl.u32 %v1191, 7
    %v1193 = vsub.s32 %v1190, %v1192
    %v1194 = vrot.slane %v1166, %v1193
    %v1195 = vcombine.low %v1173, %v1180
    %v1196 = vcombine.low %v1187, %v1194
    %v1198 = vunpack.c.l.s4 1966171168
    %v1199 = vunpack.c.0.s8 %v1198
    %v1200 = vlaneseq
    %v1201 = vshrl.u32 %v1200, 7
    %v1202 = vsub.s32 %v1199, %v1201
    %v1203 = vrot.slane %v1195, %v1202
    %v1205 = vunpack.c.l.s4 1966171168
    %v1206 = vunpack.c.0.s8 %v1205
    %v1207 = vlaneseq
    %v1208 = vshrl.u32 %v1207, 7
    %v1209 = vsub.s32 %v1206, %v1208
    %v1210 = vrot.slane %v1196, %v1209
    %v1211 = vcombine.low %v1203, %v1210
    %v1212 = vcombine.low %v1139, %v1140
    %v1213 = vcombine.low %v1141, %v1142
    %v1214 = vcombine.low %v1143, %v1144
    %v1215 = vcombine.low %v1145, %v1146
    %v1217 = vunpack.c.l.s4 1966171168
    %v1218 = vunpack.c.0.s8 %v1217
    %v1219 = vlaneseq
    %v1220 = vshrl.u32 %v1219, 7
    %v1221 = vsub.s32 %v1218, %v1220
    %v1222 = vrot.slane %v1212, %v1221
    %v1224 = vunpack.c.l.s4 1966171168
    %v1225 = vunpack.c.0.s8 %v1224
    %v1226 = vlaneseq
    %v1227 = vshrl.u32 %v1226, 7
    %v1228 = vsub.s32 %v1225, %v1227
    %v1229 = vrot.slane %v1213, %v1228
    %v1231 = vunpack.c.l.s4 1966171168
    %v1232 = vunpack.c.0.s8 %v1231
    %v1233 = vlaneseq
    %v1234 = vshrl.u32 %v1233, 7
    %v1235 = vsub.s32 %v1232, %v1234
    %v1236 = vrot.slane %v1214, %v1235
    %v1238 = vunpack.c.l.s4 1966171168
    %v1239 = vunpack.c.0.s8 %v1238
    %v1240 = vlaneseq
    %v1241 = vshrl.u32 %v1240, 7
    %v1242 = vsub.s32 %v1239, %v1241
    %v1243 = vrot.slane %v1215, %v1242
    %v1244 = vcombine.low %v1222, %v1229
    %v1245 = vcombine.low %v1236, %v1243
    %v1247 = vunpack.c.l.s4 1966171168
    %v1248 = vunpack.c.0.s8 %v1247
    %v1249 = vlaneseq
    %v1250 = vshrl.u32 %v1249, 7
    %v1251 = vsub.s32 %v1248, %v1250
    %v1252 = vrot.slane %v1244, %v1251
    %v1254 = vunpack.c.l.s4 1966171168
    %v1255 = vunpack.c.0.s8 %v1254
    %v1256 = vlaneseq
    %v1257 = vshrl.u32 %v1256, 7
    %v1258 = vsub.s32 %v1255, %v1257
    %v1259 = vrot.slane %v1245, %v1258
    %v1260 = vcombine.low %v1252, %v1259
    %v1263 = vmul.f32 %v1113, %v1211
    %v1264 = vmul.f32 %v1114, %v1260
    %v1267 = vlaneseq
    %v1268 = vshrl.u32 %v1267, 7
    %v1269 = vsub.s32 0, %v1268
    %v1270 = vrot.slane %v1263, %v1269
    %v1271 = vlaneseq
    %v1272 = vshrl.u32 %v1271, 7
    %v1273 = vsub.s32 1, %v1272
    %v1274 = vrot.slane %v1263, %v1273
    %v1275 = vlaneseq
    %v1276 = vshrl.u32 %v1275, 7
    %v1277 = vsub.s32 2, %v1276
    %v1278 = vrot.slane %v1263, %v1277
    %v1279 = vlaneseq
    %v1280 = vshrl.u32 %v1279, 7
    %v1281 = vsub.s32 3, %v1280
    %v1282 = vrot.slane %v1263, %v1281
    %v1283 = vlaneseq
    %v1284 = vshrl.u32 %v1283, 7
    %v1285 = vsub.s32 4, %v1284
    %v1286 = vrot.slane %v1263, %v1285
    %v1287 = vlaneseq
    %v1288 = vshrl.u32 %v1287, 7
    %v1289 = vsub.s32 5, %v1288
    %v1290 = vrot.slane %v1263, %v1289
    %v1291 = vlaneseq
    %v1292 = vshrl.u32 %v1291, 7
    %v1293 = vsub.s32 6, %v1292
    %v1294 = vrot.slane %v1263, %v1293
    %v1295 = vlaneseq
    %v1296 = vshrl.u32 %v1295, 7
    %v1297 = vsub.s32 7, %v1296
    %v1298 = vrot.slane %v1263, %v1297
    %v1299 = vlaneseq
    %v1300 = vshrl.u32 %v1299, 7
    %v1301 = vsub.s32 0, %v1300
    %v1302 = vrot.slane %v1264, %v1301
    %v1303 = vlaneseq
    %v1304 = vshrl.u32 %v1303, 7
    %v1305 = vsub.s32 1, %v1304
    %v1306 = vrot.slane %v1264, %v1305
    %v1307 = vlaneseq
    %v1308 = vshrl.u32 %v1307, 7
    %v1309 = vsub.s32 2, %v1308
    %v1310 = vrot.slane %v1264, %v1309
    %v1311 = vlaneseq
    %v1312 = vshrl.u32 %v1311, 7
    %v1313 = vsub.s32 3, %v1312
    %v1314 = vrot.slane %v1264, %v1313
    %v1315 = vlaneseq
    %v1316 = vshrl.u32 %v1315, 7
    %v1317 = vsub.s32 4, %v1316
    %v1318 = vrot.slane %v1264, %v1317
    %v1319 = vlaneseq
    %v1320 = vshrl.u32 %v1319, 7
    %v1321 = vsub.s32 5, %v1320
    %v1322 = vrot.slane %v1264, %v1321
    %v1323 = vlaneseq
    %v1324 = vshrl.u32 %v1323, 7
    %v1325 = vsub.s32 6, %v1324
    %v1326 = vrot.slane %v1264, %v1325
    %v1327 = vlaneseq
    %v1328 = vshrl.u32 %v1327, 7
    %v1329 = vsub.s32 7, %v1328
    %v1330 = vrot.slane %v1264, %v1329
    %v1347 = vmul.f32 %v969, %v1270
    %v1348 = vmul.f32 %v970, %v1274
    %v1349 = vmul.f32 %v971, %v1278
    %v1350 = vmul.f32 %v972, %v1282
    %v1351 = vmul.f32 %v973, %v1286
    %v1352 = vmul.f32 %v974, %v1290
    %v1353 = vmul.f32 %v975, %v1294
    %v1354 = vmul.f32 %v976, %v1298
    %v1355 = vmul.f32 %v977, %v1302
    %v1356 = vmul.f32 %v978, %v1306
    %v1357 = vmul.f32 %v979, %v1310
    %v1358 = vmul.f32 %v980, %v1314
    %v1359 = vmul.f32 %v981, %v1318
    %v1360 = vmul.f32 %v982, %v1322
    %v1361 = vmul.f32 %v983, %v1326
    %v1362 = vmul.f32 %v984, %v1330
    %v1363 = vld [vmem:[#allocation6] sm:$0xff]
    %v1364 = vld [vmem:[#allocation6 + $0x8] sm:$0xff]
    %v1367 = vlaneseq
    %v1368 = vshrl.u32 %v1367, 7
    %v1369 = vsub.s32 0, %v1368
    %v1370 = vrot.slane %v1363, %v1369
    %v1371 = vlaneseq
    %v1372 = vshrl.u32 %v1371, 7
    %v1373 = vsub.s32 1, %v1372
    %v1374 = vrot.slane %v1363, %v1373
    %v1375 = vlaneseq
    %v1376 = vshrl.u32 %v1375, 7
    %v1377 = vsub.s32 2, %v1376
    %v1378 = vrot.slane %v1363, %v1377
    %v1379 = vlaneseq
    %v1380 = vshrl.u32 %v1379, 7
    %v1381 = vsub.s32 3, %v1380
    %v1382 = vrot.slane %v1363, %v1381
    %v1383 = vlaneseq
    %v1384 = vshrl.u32 %v1383, 7
    %v1385 = vsub.s32 4, %v1384
    %v1386 = vrot.slane %v1363, %v1385
    %v1387 = vlaneseq
    %v1388 = vshrl.u32 %v1387, 7
    %v1389 = vsub.s32 5, %v1388
    %v1390 = vrot.slane %v1363, %v1389
    %v1391 = vlaneseq
    %v1392 = vshrl.u32 %v1391, 7
    %v1393 = vsub.s32 6, %v1392
    %v1394 = vrot.slane %v1363, %v1393
    %v1395 = vlaneseq
    %v1396 = vshrl.u32 %v1395, 7
    %v1397 = vsub.s32 7, %v1396
    %v1398 = vrot.slane %v1363, %v1397
    %v1399 = vlaneseq
    %v1400 = vshrl.u32 %v1399, 7
    %v1401 = vsub.s32 0, %v1400
    %v1402 = vrot.slane %v1364, %v1401
    %v1403 = vlaneseq
    %v1404 = vshrl.u32 %v1403, 7
    %v1405 = vsub.s32 1, %v1404
    %v1406 = vrot.slane %v1364, %v1405
    %v1407 = vlaneseq
    %v1408 = vshrl.u32 %v1407, 7
    %v1409 = vsub.s32 2, %v1408
    %v1410 = vrot.slane %v1364, %v1409
    %v1411 = vlaneseq
    %v1412 = vshrl.u32 %v1411, 7
    %v1413 = vsub.s32 3, %v1412
    %v1414 = vrot.slane %v1364, %v1413
    %v1415 = vlaneseq
    %v1416 = vshrl.u32 %v1415, 7
    %v1417 = vsub.s32 4, %v1416
    %v1418 = vrot.slane %v1364, %v1417
    %v1419 = vlaneseq
    %v1420 = vshrl.u32 %v1419, 7
    %v1421 = vsub.s32 5, %v1420
    %v1422 = vrot.slane %v1364, %v1421
    %v1423 = vlaneseq
    %v1424 = vshrl.u32 %v1423, 7
    %v1425 = vsub.s32 6, %v1424
    %v1426 = vrot.slane %v1364, %v1425
    %v1427 = vlaneseq
    %v1428 = vshrl.u32 %v1427, 7
    %v1429 = vsub.s32 7, %v1428
    %v1430 = vrot.slane %v1364, %v1429
    %v1447 = vadd.f32 %v1347, %v1370
    %v1448 = vadd.f32 %v1348, %v1374
    %v1449 = vadd.f32 %v1349, %v1378
    %v1450 = vadd.f32 %v1350, %v1382
    %v1451 = vadd.f32 %v1351, %v1386
    %v1452 = vadd.f32 %v1352, %v1390
    %v1453 = vadd.f32 %v1353, %v1394
    %v1454 = vadd.f32 %v1354, %v1398
    %v1455 = vadd.f32 %v1355, %v1402
    %v1456 = vadd.f32 %v1356, %v1406
    %v1457 = vadd.f32 %v1357, %v1410
    %v1458 = vadd.f32 %v1358, %v1414
    %v1459 = vadd.f32 %v1359, %v1418
    %v1460 = vadd.f32 %v1360, %v1422
    %v1461 = vadd.f32 %v1361, %v1426
    %v1462 = vadd.f32 %v1362, %v1430
    %v1463 = vmax.f32 %v1447, 0.0
    %v1464 = vmax.f32 %v1448, 0.0
    %v1465 = vmax.f32 %v1449, 0.0
    %v1466 = vmax.f32 %v1450, 0.0
    %v1467 = vmax.f32 %v1451, 0.0
    %v1468 = vmax.f32 %v1452, 0.0
    %v1469 = vmax.f32 %v1453, 0.0
    %v1470 = vmax.f32 %v1454, 0.0
    %v1471 = vmax.f32 %v1455, 0.0
    %v1472 = vmax.f32 %v1456, 0.0
    %v1473 = vmax.f32 %v1457, 0.0
    %v1474 = vmax.f32 %v1458, 0.0
    %v1475 = vmax.f32 %v1459, 0.0
    %v1476 = vmax.f32 %v1460, 0.0
    %v1477 = vmax.f32 %v1461, 0.0
    %v1478 = vmax.f32 %v1462, 0.0
    %v1479 = vpack.c.bf16 %v1463, %v1463
    %v1480 = vpack.c.bf16 %v1464, %v1464
    %v1481 = vpack.c.bf16 %v1465, %v1465
    %v1482 = vpack.c.bf16 %v1466, %v1466
    %v1483 = vpack.c.bf16 %v1467, %v1467
    %v1484 = vpack.c.bf16 %v1468, %v1468
    %v1485 = vpack.c.bf16 %v1469, %v1469
    %v1486 = vpack.c.bf16 %v1470, %v1470
    %v1487 = vpack.c.bf16 %v1471, %v1471
    %v1488 = vpack.c.bf16 %v1472, %v1472
    %v1489 = vpack.c.bf16 %v1473, %v1473
    %v1490 = vpack.c.bf16 %v1474, %v1474
    %v1491 = vpack.c.bf16 %v1475, %v1475
    %v1492 = vpack.c.bf16 %v1476, %v1476
    %v1493 = vpack.c.bf16 %v1477, %v1477
    %v1494 = vpack.c.bf16 %v1478, %v1478
    %v1495 = vld [vmem:[#allocation7] sm:$0xff]
    %v1496 = vld [vmem:[#allocation7 + $0x8] sm:$0xff]
    %v1497 = vld [vmem:[#allocation7 + $0x10] sm:$0xff]
    %v1498 = vld [vmem:[#allocation7 + $0x18] sm:$0xff]
    %v1499 = vld [vmem:[#allocation7 + $0x20] sm:$0xff]
    %v1500 = vld [vmem:[#allocation7 + $0x28] sm:$0xff]
    %v1501 = vld [vmem:[#allocation7 + $0x30] sm:$0xff]
    %v1502 = vld [vmem:[#allocation7 + $0x38] sm:$0xff]
    %v1503 = vld [vmem:[#allocation7 + $0x40] sm:$0xff]
    %v1504 = vld [vmem:[#allocation7 + $0x48] sm:$0xff]
    %v1505 = vld [vmem:[#allocation7 + $0x50] sm:$0xff]
    %v1506 = vld [vmem:[#allocation7 + $0x58] sm:$0xff]
    %v1507 = vld [vmem:[#allocation7 + $0x60] sm:$0xff]
    %v1508 = vld [vmem:[#allocation7 + $0x68] sm:$0xff]
    %v1509 = vld [vmem:[#allocation7 + $0x70] sm:$0xff]
    %v1510 = vld [vmem:[#allocation7 + $0x78] sm:$0xff]
    %v1511 = vld [vmem:[#allocation7 + $0x80] sm:$0xff]
    %v1512 = vld [vmem:[#allocation7 + $0x88] sm:$0xff]
    %v1513 = vld [vmem:[#allocation7 + $0x90] sm:$0xff]
    %v1514 = vld [vmem:[#allocation7 + $0x98] sm:$0xff]
    %v1515 = vld [vmem:[#allocation7 + $0xa0] sm:$0xff]
    %v1516 = vld [vmem:[#allocation7 + $0xa8] sm:$0xff]
    %v1517 = vld [vmem:[#allocation7 + $0xb0] sm:$0xff]
    %v1518 = vld [vmem:[#allocation7 + $0xb8] sm:$0xff]
    %v1519 = vld [vmem:[#allocation7 + $0xc0] sm:$0xff]
    %v1520 = vld [vmem:[#allocation7 + $0xc8] sm:$0xff]
    %v1521 = vld [vmem:[#allocation7 + $0xd0] sm:$0xff]
    %v1522 = vld [vmem:[#allocation7 + $0xd8] sm:$0xff]
    %v1523 = vld [vmem:[#allocation7 + $0xe0] sm:$0xff]
    %v1524 = vld [vmem:[#allocation7 + $0xe8] sm:$0xff]
    %v1525 = vld [vmem:[#allocation7 + $0xf0] sm:$0xff]
    %v1526 = vld [vmem:[#allocation7 + $0xf8] sm:$0xff]
    %v1527 = vld [vmem:[#allocation7 + $0x100] sm:$0xff]
    %v1528 = vld [vmem:[#allocation7 + $0x108] sm:$0xff]
    %v1529 = vld [vmem:[#allocation7 + $0x110] sm:$0xff]
    %v1530 = vld [vmem:[#allocation7 + $0x118] sm:$0xff]
    %v1531 = vld [vmem:[#allocation7 + $0x120] sm:$0xff]
    %v1532 = vld [vmem:[#allocation7 + $0x128] sm:$0xff]
    %v1533 = vld [vmem:[#allocation7 + $0x130] sm:$0xff]
    %v1534 = vld [vmem:[#allocation7 + $0x138] sm:$0xff]
    %v1535 = vld [vmem:[#allocation7 + $0x140] sm:$0xff]
    %v1536 = vld [vmem:[#allocation7 + $0x148] sm:$0xff]
    %v1537 = vld [vmem:[#allocation7 + $0x150] sm:$0xff]
    %v1538 = vld [vmem:[#allocation7 + $0x158] sm:$0xff]
    %v1539 = vld [vmem:[#allocation7 + $0x160] sm:$0xff]
    %v1540 = vld [vmem:[#allocation7 + $0x168] sm:$0xff]
    %v1541 = vld [vmem:[#allocation7 + $0x170] sm:$0xff]
    %v1542 = vld [vmem:[#allocation7 + $0x178] sm:$0xff]
    %v1543 = vld [vmem:[#allocation7 + $0x180] sm:$0xff]
    %v1544 = vld [vmem:[#allocation7 + $0x188] sm:$0xff]
    %v1545 = vld [vmem:[#allocation7 + $0x190] sm:$0xff]
    %v1546 = vld [vmem:[#allocation7 + $0x198] sm:$0xff]
    %v1547 = vld [vmem:[#allocation7 + $0x1a0] sm:$0xff]
    %v1548 = vld [vmem:[#allocation7 + $0x1a8] sm:$0xff]
    %v1549 = vld [vmem:[#allocation7 + $0x1b0] sm:$0xff]
    %v1550 = vld [vmem:[#allocation7 + $0x1b8] sm:$0xff]
    %v1551 = vld [vmem:[#allocation7 + $0x1c0] sm:$0xff]
    %v1552 = vld [vmem:[#allocation7 + $0x1c8] sm:$0xff]
    %v1553 = vld [vmem:[#allocation7 + $0x1d0] sm:$0xff]
    %v1554 = vld [vmem:[#allocation7 + $0x1d8] sm:$0xff]
    %v1555 = vld [vmem:[#allocation7 + $0x1e0] sm:$0xff]
    %v1556 = vld [vmem:[#allocation7 + $0x1e8] sm:$0xff]
    %v1557 = vld [vmem:[#allocation7 + $0x1f0] sm:$0xff]
    %v1558 = vld [vmem:[#allocation7 + $0x1f8] sm:$0xff]
    %v1559 = vld [vmem:[#allocation7 + $0x200] sm:$0xff]
    %v1560 = vld [vmem:[#allocation7 + $0x208] sm:$0xff]
    %v1561 = vld [vmem:[#allocation7 + $0x210] sm:$0xff]
    %v1562 = vld [vmem:[#allocation7 + $0x218] sm:$0xff]
    %v1563 = vld [vmem:[#allocation7 + $0x220] sm:$0xff]
    %v1564 = vld [vmem:[#allocation7 + $0x228] sm:$0xff]
    %v1565 = vld [vmem:[#allocation7 + $0x230] sm:$0xff]
    %v1566 = vld [vmem:[#allocation7 + $0x238] sm:$0xff]
    %v1567 = vld [vmem:[#allocation7 + $0x240] sm:$0xff]
    %v1568 = vld [vmem:[#allocation7 + $0x248] sm:$0xff]
    %v1569 = vld [vmem:[#allocation7 + $0x250] sm:$0xff]
    %v1570 = vld [vmem:[#allocation7 + $0x258] sm:$0xff]
    %v1571 = vld [vmem:[#allocation7 + $0x260] sm:$0xff]
    %v1572 = vld [vmem:[#allocation7 + $0x268] sm:$0xff]
    %v1573 = vld [vmem:[#allocation7 + $0x270] sm:$0xff]
    %v1574 = vld [vmem:[#allocation7 + $0x278] sm:$0xff]
    %v1575 = vld [vmem:[#allocation7 + $0x280] sm:$0xff]
    %v1576 = vld [vmem:[#allocation7 + $0x288] sm:$0xff]
    %v1577 = vld [vmem:[#allocation7 + $0x290] sm:$0xff]
    %v1578 = vld [vmem:[#allocation7 + $0x298] sm:$0xff]
    %v1579 = vld [vmem:[#allocation7 + $0x2a0] sm:$0xff]
    %v1580 = vld [vmem:[#allocation7 + $0x2a8] sm:$0xff]
    %v1581 = vld [vmem:[#allocation7 + $0x2b0] sm:$0xff]
    %v1582 = vld [vmem:[#allocation7 + $0x2b8] sm:$0xff]
    %v1583 = vld [vmem:[#allocation7 + $0x2c0] sm:$0xff]
    %v1584 = vld [vmem:[#allocation7 + $0x2c8] sm:$0xff]
    %v1585 = vld [vmem:[#allocation7 + $0x2d0] sm:$0xff]
    %v1586 = vld [vmem:[#allocation7 + $0x2d8] sm:$0xff]
    %v1587 = vld [vmem:[#allocation7 + $0x2e0] sm:$0xff]
    %v1588 = vld [vmem:[#allocation7 + $0x2e8] sm:$0xff]
    %v1589 = vld [vmem:[#allocation7 + $0x2f0] sm:$0xff]
    %v1590 = vld [vmem:[#allocation7 + $0x2f8] sm:$0xff]
    %v1591 = vld [vmem:[#allocation7 + $0x300] sm:$0xff]
    %v1592 = vld [vmem:[#allocation7 + $0x308] sm:$0xff]
    %v1593 = vld [vmem:[#allocation7 + $0x310] sm:$0xff]
    %v1594 = vld [vmem:[#allocation7 + $0x318] sm:$0xff]
    %v1595 = vld [vmem:[#allocation7 + $0x320] sm:$0xff]
    %v1596 = vld [vmem:[#allocation7 + $0x328] sm:$0xff]
    %v1597 = vld [vmem:[#allocation7 + $0x330] sm:$0xff]
    %v1598 = vld [vmem:[#allocation7 + $0x338] sm:$0xff]
    %v1599 = vld [vmem:[#allocation7 + $0x340] sm:$0xff]
    %v1600 = vld [vmem:[#allocation7 + $0x348] sm:$0xff]
    %v1601 = vld [vmem:[#allocation7 + $0x350] sm:$0xff]
    %v1602 = vld [vmem:[#allocation7 + $0x358] sm:$0xff]
    %v1603 = vld [vmem:[#allocation7 + $0x360] sm:$0xff]
    %v1604 = vld [vmem:[#allocation7 + $0x368] sm:$0xff]
    %v1605 = vld [vmem:[#allocation7 + $0x370] sm:$0xff]
    %v1606 = vld [vmem:[#allocation7 + $0x378] sm:$0xff]
    %v1607 = vld [vmem:[#allocation7 + $0x380] sm:$0xff]
    %v1608 = vld [vmem:[#allocation7 + $0x388] sm:$0xff]
    %v1609 = vld [vmem:[#allocation7 + $0x390] sm:$0xff]
    %v1610 = vld [vmem:[#allocation7 + $0x398] sm:$0xff]
    %v1611 = vld [vmem:[#allocation7 + $0x3a0] sm:$0xff]
    %v1612 = vld [vmem:[#allocation7 + $0x3a8] sm:$0xff]
    %v1613 = vld [vmem:[#allocation7 + $0x3b0] sm:$0xff]
    %v1614 = vld [vmem:[#allocation7 + $0x3b8] sm:$0xff]
    %v1615 = vld [vmem:[#allocation7 + $0x3c0] sm:$0xff]
    %v1616 = vld [vmem:[#allocation7 + $0x3c8] sm:$0xff]
    %v1617 = vld [vmem:[#allocation7 + $0x3d0] sm:$0xff]
    %v1618 = vld [vmem:[#allocation7 + $0x3d8] sm:$0xff]
    %v1619 = vld [vmem:[#allocation7 + $0x3e0] sm:$0xff]
    %v1620 = vld [vmem:[#allocation7 + $0x3e8] sm:$0xff]
    %v1621 = vld [vmem:[#allocation7 + $0x3f0] sm:$0xff]
    %v1622 = vld [vmem:[#allocation7 + $0x3f8] sm:$0xff]
    %v1623 = vld [vmem:[#allocation7 + $0x400] sm:$0xff]
    %v1624 = vld [vmem:[#allocation7 + $0x408] sm:$0xff]
    %v1625 = vld [vmem:[#allocation7 + $0x410] sm:$0xff]
    %v1626 = vld [vmem:[#allocation7 + $0x418] sm:$0xff]
    %v1627 = vld [vmem:[#allocation7 + $0x420] sm:$0xff]
    %v1628 = vld [vmem:[#allocation7 + $0x428] sm:$0xff]
    %v1629 = vld [vmem:[#allocation7 + $0x430] sm:$0xff]
    %v1630 = vld [vmem:[#allocation7 + $0x438] sm:$0xff]
    %v1631 = vld [vmem:[#allocation7 + $0x440] sm:$0xff]
    %v1632 = vld [vmem:[#allocation7 + $0x448] sm:$0xff]
    %v1633 = vld [vmem:[#allocation7 + $0x450] sm:$0xff]
    %v1634 = vld [vmem:[#allocation7 + $0x458] sm:$0xff]
    %v1635 = vld [vmem:[#allocation7 + $0x460] sm:$0xff]
    %v1636 = vld [vmem:[#allocation7 + $0x468] sm:$0xff]
    %v1637 = vld [vmem:[#allocation7 + $0x470] sm:$0xff]
    %v1638 = vld [vmem:[#allocation7 + $0x478] sm:$0xff]
    %v1639 = vld [vmem:[#allocation7 + $0x480] sm:$0xff]
    %v1640 = vld [vmem:[#allocation7 + $0x488] sm:$0xff]
    %v1641 = vld [vmem:[#allocation7 + $0x490] sm:$0xff]
    %v1642 = vld [vmem:[#allocation7 + $0x498] sm:$0xff]
    %v1643 = vld [vmem:[#allocation7 + $0x4a0] sm:$0xff]
    %v1644 = vld [vmem:[#allocation7 + $0x4a8] sm:$0xff]
    %v1645 = vld [vmem:[#allocation7 + $0x4b0] sm:$0xff]
    %v1646 = vld [vmem:[#allocation7 + $0x4b8] sm:$0xff]
    %v1647 = vld [vmem:[#allocation7 + $0x4c0] sm:$0xff]
    %v1648 = vld [vmem:[#allocation7 + $0x4c8] sm:$0xff]
    %v1649 = vld [vmem:[#allocation7 + $0x4d0] sm:$0xff]
    %v1650 = vld [vmem:[#allocation7 + $0x4d8] sm:$0xff]
    %v1651 = vld [vmem:[#allocation7 + $0x4e0] sm:$0xff]
    %v1652 = vld [vmem:[#allocation7 + $0x4e8] sm:$0xff]
    %v1653 = vld [vmem:[#allocation7 + $0x4f0] sm:$0xff]
    %v1654 = vld [vmem:[#allocation7 + $0x4f8] sm:$0xff]
    %v1655 = vld [vmem:[#allocation7 + $0x500] sm:$0xff]
    %v1656 = vld [vmem:[#allocation7 + $0x508] sm:$0xff]
    %v1657 = vld [vmem:[#allocation7 + $0x510] sm:$0xff]
    %v1658 = vld [vmem:[#allocation7 + $0x518] sm:$0xff]
    %v1659 = vld [vmem:[#allocation7 + $0x520] sm:$0xff]
    %v1660 = vld [vmem:[#allocation7 + $0x528] sm:$0xff]
    %v1661 = vld [vmem:[#allocation7 + $0x530] sm:$0xff]
    %v1662 = vld [vmem:[#allocation7 + $0x538] sm:$0xff]
    %v1663 = vld [vmem:[#allocation7 + $0x540] sm:$0xff]
    %v1664 = vld [vmem:[#allocation7 + $0x548] sm:$0xff]
    %v1665 = vld [vmem:[#allocation7 + $0x550] sm:$0xff]
    %v1666 = vld [vmem:[#allocation7 + $0x558] sm:$0xff]
    %v1667 = vld [vmem:[#allocation7 + $0x560] sm:$0xff]
    %v1668 = vld [vmem:[#allocation7 + $0x568] sm:$0xff]
    %v1669 = vld [vmem:[#allocation7 + $0x570] sm:$0xff]
    %v1670 = vld [vmem:[#allocation7 + $0x578] sm:$0xff]
    %v1671 = vld [vmem:[#allocation7 + $0x580] sm:$0xff]
    %v1672 = vld [vmem:[#allocation7 + $0x588] sm:$0xff]
    %v1673 = vld [vmem:[#allocation7 + $0x590] sm:$0xff]
    %v1674 = vld [vmem:[#allocation7 + $0x598] sm:$0xff]
    %v1675 = vld [vmem:[#allocation7 + $0x5a0] sm:$0xff]
    %v1676 = vld [vmem:[#allocation7 + $0x5a8] sm:$0xff]
    %v1677 = vld [vmem:[#allocation7 + $0x5b0] sm:$0xff]
    %v1678 = vld [vmem:[#allocation7 + $0x5b8] sm:$0xff]
    %v1679 = vld [vmem:[#allocation7 + $0x5c0] sm:$0xff]
    %v1680 = vld [vmem:[#allocation7 + $0x5c8] sm:$0xff]
    %v1681 = vld [vmem:[#allocation7 + $0x5d0] sm:$0xff]
    %v1682 = vld [vmem:[#allocation7 + $0x5d8] sm:$0xff]
    %v1683 = vld [vmem:[#allocation7 + $0x5e0] sm:$0xff]
    %v1684 = vld [vmem:[#allocation7 + $0x5e8] sm:$0xff]
    %v1685 = vld [vmem:[#allocation7 + $0x5f0] sm:$0xff]
    %v1686 = vld [vmem:[#allocation7 + $0x5f8] sm:$0xff]
    %v1687 = vld [vmem:[#allocation7 + $0x600] sm:$0xff]
    %v1688 = vld [vmem:[#allocation7 + $0x608] sm:$0xff]
    %v1689 = vld [vmem:[#allocation7 + $0x610] sm:$0xff]
    %v1690 = vld [vmem:[#allocation7 + $0x618] sm:$0xff]
    %v1691 = vld [vmem:[#allocation7 + $0x620] sm:$0xff]
    %v1692 = vld [vmem:[#allocation7 + $0x628] sm:$0xff]
    %v1693 = vld [vmem:[#allocation7 + $0x630] sm:$0xff]
    %v1694 = vld [vmem:[#allocation7 + $0x638] sm:$0xff]
    %v1695 = vld [vmem:[#allocation7 + $0x640] sm:$0xff]
    %v1696 = vld [vmem:[#allocation7 + $0x648] sm:$0xff]
    %v1697 = vld [vmem:[#allocation7 + $0x650] sm:$0xff]
    %v1698 = vld [vmem:[#allocation7 + $0x658] sm:$0xff]
    %v1699 = vld [vmem:[#allocation7 + $0x660] sm:$0xff]
    %v1700 = vld [vmem:[#allocation7 + $0x668] sm:$0xff]
    %v1701 = vld [vmem:[#allocation7 + $0x670] sm:$0xff]
    %v1702 = vld [vmem:[#allocation7 + $0x678] sm:$0xff]
    %v1703 = vld [vmem:[#allocation7 + $0x680] sm:$0xff]
    %v1704 = vld [vmem:[#allocation7 + $0x688] sm:$0xff]
    %v1705 = vld [vmem:[#allocation7 + $0x690] sm:$0xff]
    %v1706 = vld [vmem:[#allocation7 + $0x698] sm:$0xff]
    %v1707 = vld [vmem:[#allocation7 + $0x6a0] sm:$0xff]
    %v1708 = vld [vmem:[#allocation7 + $0x6a8] sm:$0xff]
    %v1709 = vld [vmem:[#allocation7 + $0x6b0] sm:$0xff]
    %v1710 = vld [vmem:[#allocation7 + $0x6b8] sm:$0xff]
    %v1711 = vld [vmem:[#allocation7 + $0x6c0] sm:$0xff]
    %v1712 = vld [vmem:[#allocation7 + $0x6c8] sm:$0xff]
    %v1713 = vld [vmem:[#allocation7 + $0x6d0] sm:$0xff]
    %v1714 = vld [vmem:[#allocation7 + $0x6d8] sm:$0xff]
    %v1715 = vld [vmem:[#allocation7 + $0x6e0] sm:$0xff]
    %v1716 = vld [vmem:[#allocation7 + $0x6e8] sm:$0xff]
    %v1717 = vld [vmem:[#allocation7 + $0x6f0] sm:$0xff]
    %v1718 = vld [vmem:[#allocation7 + $0x6f8] sm:$0xff]
    %v1719 = vld [vmem:[#allocation7 + $0x700] sm:$0xff]
    %v1720 = vld [vmem:[#allocation7 + $0x708] sm:$0xff]
    %v1721 = vld [vmem:[#allocation7 + $0x710] sm:$0xff]
    %v1722 = vld [vmem:[#allocation7 + $0x718] sm:$0xff]
    %v1723 = vld [vmem:[#allocation7 + $0x720] sm:$0xff]
    %v1724 = vld [vmem:[#allocation7 + $0x728] sm:$0xff]
    %v1725 = vld [vmem:[#allocation7 + $0x730] sm:$0xff]
    %v1726 = vld [vmem:[#allocation7 + $0x738] sm:$0xff]
    %v1727 = vld [vmem:[#allocation7 + $0x740] sm:$0xff]
    %v1728 = vld [vmem:[#allocation7 + $0x748] sm:$0xff]
    %v1729 = vld [vmem:[#allocation7 + $0x750] sm:$0xff]
    %v1730 = vld [vmem:[#allocation7 + $0x758] sm:$0xff]
    %v1731 = vld [vmem:[#allocation7 + $0x760] sm:$0xff]
    %v1732 = vld [vmem:[#allocation7 + $0x768] sm:$0xff]
    %v1733 = vld [vmem:[#allocation7 + $0x770] sm:$0xff]
    %v1734 = vld [vmem:[#allocation7 + $0x778] sm:$0xff]
    %v1735 = vld [vmem:[#allocation7 + $0x780] sm:$0xff]
    %v1736 = vld [vmem:[#allocation7 + $0x788] sm:$0xff]
    %v1737 = vld [vmem:[#allocation7 + $0x790] sm:$0xff]
    %v1738 = vld [vmem:[#allocation7 + $0x798] sm:$0xff]
    %v1739 = vld [vmem:[#allocation7 + $0x7a0] sm:$0xff]
    %v1740 = vld [vmem:[#allocation7 + $0x7a8] sm:$0xff]
    %v1741 = vld [vmem:[#allocation7 + $0x7b0] sm:$0xff]
    %v1742 = vld [vmem:[#allocation7 + $0x7b8] sm:$0xff]
    %v1743 = vld [vmem:[#allocation7 + $0x7c0] sm:$0xff]
    %v1744 = vld [vmem:[#allocation7 + $0x7c8] sm:$0xff]
    %v1745 = vld [vmem:[#allocation7 + $0x7d0] sm:$0xff]
    %v1746 = vld [vmem:[#allocation7 + $0x7d8] sm:$0xff]
    %v1747 = vld [vmem:[#allocation7 + $0x7e0] sm:$0xff]
    %v1748 = vld [vmem:[#allocation7 + $0x7e8] sm:$0xff]
    %v1749 = vld [vmem:[#allocation7 + $0x7f0] sm:$0xff]
    %v1750 = vld [vmem:[#allocation7 + $0x7f8] sm:$0xff]
    %v1751 = vld [vmem:[#allocation7 + $0x800] sm:$0xff]
    %v1752 = vld [vmem:[#allocation7 + $0x808] sm:$0xff]
    %v1753 = vld [vmem:[#allocation7 + $0x810] sm:$0xff]
    %v1754 = vld [vmem:[#allocation7 + $0x818] sm:$0xff]
    %v1755 = vld [vmem:[#allocation7 + $0x820] sm:$0xff]
    %v1756 = vld [vmem:[#allocation7 + $0x828] sm:$0xff]
    %v1757 = vld [vmem:[#allocation7 + $0x830] sm:$0xff]
    %v1758 = vld [vmem:[#allocation7 + $0x838] sm:$0xff]
    %v1759 = vld [vmem:[#allocation7 + $0x840] sm:$0xff]
    %v1760 = vld [vmem:[#allocation7 + $0x848] sm:$0xff]
    %v1761 = vld [vmem:[#allocation7 + $0x850] sm:$0xff]
    %v1762 = vld [vmem:[#allocation7 + $0x858] sm:$0xff]
    %v1763 = vld [vmem:[#allocation7 + $0x860] sm:$0xff]
    %v1764 = vld [vmem:[#allocation7 + $0x868] sm:$0xff]
    %v1765 = vld [vmem:[#allocation7 + $0x870] sm:$0xff]
    %v1766 = vld [vmem:[#allocation7 + $0x878] sm:$0xff]
    %v1767 = vld [vmem:[#allocation7 + $0x880] sm:$0xff]
    %v1768 = vld [vmem:[#allocation7 + $0x888] sm:$0xff]
    %v1769 = vld [vmem:[#allocation7 + $0x890] sm:$0xff]
    %v1770 = vld [vmem:[#allocation7 + $0x898] sm:$0xff]
    %v1771 = vld [vmem:[#allocation7 + $0x8a0] sm:$0xff]
    %v1772 = vld [vmem:[#allocation7 + $0x8a8] sm:$0xff]
    %v1773 = vld [vmem:[#allocation7 + $0x8b0] sm:$0xff]
    %v1774 = vld [vmem:[#allocation7 + $0x8b8] sm:$0xff]
    %v1775 = vld [vmem:[#allocation7 + $0x8c0] sm:$0xff]
    %v1776 = vld [vmem:[#allocation7 + $0x8c8] sm:$0xff]
    %v1777 = vld [vmem:[#allocation7 + $0x8d0] sm:$0xff]
    %v1778 = vld [vmem:[#allocation7 + $0x8d8] sm:$0xff]
    %v1779 = vld [vmem:[#allocation7 + $0x8e0] sm:$0xff]
    %v1780 = vld [vmem:[#allocation7 + $0x8e8] sm:$0xff]
    %v1781 = vld [vmem:[#allocation7 + $0x8f0] sm:$0xff]
    %v1782 = vld [vmem:[#allocation7 + $0x8f8] sm:$0xff]
    %v1783 = vld [vmem:[#allocation7 + $0x900] sm:$0xff]
    %v1784 = vld [vmem:[#allocation7 + $0x908] sm:$0xff]
    %v1785 = vld [vmem:[#allocation7 + $0x910] sm:$0xff]
    %v1786 = vld [vmem:[#allocation7 + $0x918] sm:$0xff]
    %v1787 = vld [vmem:[#allocation7 + $0x920] sm:$0xff]
    %v1788 = vld [vmem:[#allocation7 + $0x928] sm:$0xff]
    %v1789 = vld [vmem:[#allocation7 + $0x930] sm:$0xff]
    %v1790 = vld [vmem:[#allocation7 + $0x938] sm:$0xff]
    %v1791 = vld [vmem:[#allocation7 + $0x940] sm:$0xff]
    %v1792 = vld [vmem:[#allocation7 + $0x948] sm:$0xff]
    %v1793 = vld [vmem:[#allocation7 + $0x950] sm:$0xff]
    %v1794 = vld [vmem:[#allocation7 + $0x958] sm:$0xff]
    %v1795 = vld [vmem:[#allocation7 + $0x960] sm:$0xff]
    %v1796 = vld [vmem:[#allocation7 + $0x968] sm:$0xff]
    %v1797 = vld [vmem:[#allocation7 + $0x970] sm:$0xff]
    %v1798 = vld [vmem:[#allocation7 + $0x978] sm:$0xff]
    %v1799 = vld [vmem:[#allocation7 + $0x980] sm:$0xff]
    %v1800 = vld [vmem:[#allocation7 + $0x988] sm:$0xff]
    %v1801 = vld [vmem:[#allocation7 + $0x990] sm:$0xff]
    %v1802 = vld [vmem:[#allocation7 + $0x998] sm:$0xff]
    %v1803 = vld [vmem:[#allocation7 + $0x9a0] sm:$0xff]
    %v1804 = vld [vmem:[#allocation7 + $0x9a8] sm:$0xff]
    %v1805 = vld [vmem:[#allocation7 + $0x9b0] sm:$0xff]
    %v1806 = vld [vmem:[#allocation7 + $0x9b8] sm:$0xff]
    %v1807 = vld [vmem:[#allocation7 + $0x9c0] sm:$0xff]
    %v1808 = vld [vmem:[#allocation7 + $0x9c8] sm:$0xff]
    %v1809 = vld [vmem:[#allocation7 + $0x9d0] sm:$0xff]
    %v1810 = vld [vmem:[#allocation7 + $0x9d8] sm:$0xff]
    %v1811 = vld [vmem:[#allocation7 + $0x9e0] sm:$0xff]
    %v1812 = vld [vmem:[#allocation7 + $0x9e8] sm:$0xff]
    %v1813 = vld [vmem:[#allocation7 + $0x9f0] sm:$0xff]
    %v1814 = vld [vmem:[#allocation7 + $0x9f8] sm:$0xff]
    %v1815 = vld [vmem:[#allocation7 + $0xa00] sm:$0xff]
    %v1816 = vld [vmem:[#allocation7 + $0xa08] sm:$0xff]
    %v1817 = vld [vmem:[#allocation7 + $0xa10] sm:$0xff]
    %v1818 = vld [vmem:[#allocation7 + $0xa18] sm:$0xff]
    %v1819 = vld [vmem:[#allocation7 + $0xa20] sm:$0xff]
    %v1820 = vld [vmem:[#allocation7 + $0xa28] sm:$0xff]
    %v1821 = vld [vmem:[#allocation7 + $0xa30] sm:$0xff]
    %v1822 = vld [vmem:[#allocation7 + $0xa38] sm:$0xff]
    %v1823 = vld [vmem:[#allocation7 + $0xa40] sm:$0xff]
    %v1824 = vld [vmem:[#allocation7 + $0xa48] sm:$0xff]
    %v1825 = vld [vmem:[#allocation7 + $0xa50] sm:$0xff]
    %v1826 = vld [vmem:[#allocation7 + $0xa58] sm:$0xff]
    %v1827 = vld [vmem:[#allocation7 + $0xa60] sm:$0xff]
    %v1828 = vld [vmem:[#allocation7 + $0xa68] sm:$0xff]
    %v1829 = vld [vmem:[#allocation7 + $0xa70] sm:$0xff]
    %v1830 = vld [vmem:[#allocation7 + $0xa78] sm:$0xff]
    %v1831 = vld [vmem:[#allocation7 + $0xa80] sm:$0xff]
    %v1832 = vld [vmem:[#allocation7 + $0xa88] sm:$0xff]
    %v1833 = vld [vmem:[#allocation7 + $0xa90] sm:$0xff]
    %v1834 = vld [vmem:[#allocation7 + $0xa98] sm:$0xff]
    %v1835 = vld [vmem:[#allocation7 + $0xaa0] sm:$0xff]
    %v1836 = vld [vmem:[#allocation7 + $0xaa8] sm:$0xff]
    %v1837 = vld [vmem:[#allocation7 + $0xab0] sm:$0xff]
    %v1838 = vld [vmem:[#allocation7 + $0xab8] sm:$0xff]
    %v1839 = vld [vmem:[#allocation7 + $0xac0] sm:$0xff]
    %v1840 = vld [vmem:[#allocation7 + $0xac8] sm:$0xff]
    %v1841 = vld [vmem:[#allocation7 + $0xad0] sm:$0xff]
    %v1842 = vld [vmem:[#allocation7 + $0xad8] sm:$0xff]
    %v1843 = vld [vmem:[#allocation7 + $0xae0] sm:$0xff]
    %v1844 = vld [vmem:[#allocation7 + $0xae8] sm:$0xff]
    %v1845 = vld [vmem:[#allocation7 + $0xaf0] sm:$0xff]
    %v1846 = vld [vmem:[#allocation7 + $0xaf8] sm:$0xff]
    %v1847 = vld [vmem:[#allocation7 + $0xb00] sm:$0xff]
    %v1848 = vld [vmem:[#allocation7 + $0xb08] sm:$0xff]
    %v1849 = vld [vmem:[#allocation7 + $0xb10] sm:$0xff]
    %v1850 = vld [vmem:[#allocation7 + $0xb18] sm:$0xff]
    %v1851 = vld [vmem:[#allocation7 + $0xb20] sm:$0xff]
    %v1852 = vld [vmem:[#allocation7 + $0xb28] sm:$0xff]
    %v1853 = vld [vmem:[#allocation7 + $0xb30] sm:$0xff]
    %v1854 = vld [vmem:[#allocation7 + $0xb38] sm:$0xff]
    %v1855 = vld [vmem:[#allocation7 + $0xb40] sm:$0xff]
    %v1856 = vld [vmem:[#allocation7 + $0xb48] sm:$0xff]
    %v1857 = vld [vmem:[#allocation7 + $0xb50] sm:$0xff]
    %v1858 = vld [vmem:[#allocation7 + $0xb58] sm:$0xff]
    %v1859 = vld [vmem:[#allocation7 + $0xb60] sm:$0xff]
    %v1860 = vld [vmem:[#allocation7 + $0xb68] sm:$0xff]
    %v1861 = vld [vmem:[#allocation7 + $0xb70] sm:$0xff]
    %v1862 = vld [vmem:[#allocation7 + $0xb78] sm:$0xff]
    %v1863 = vld [vmem:[#allocation7 + $0xb80] sm:$0xff]
    %v1864 = vld [vmem:[#allocation7 + $0xb88] sm:$0xff]
    %v1865 = vld [vmem:[#allocation7 + $0xb90] sm:$0xff]
    %v1866 = vld [vmem:[#allocation7 + $0xb98] sm:$0xff]
    %v1867 = vld [vmem:[#allocation7 + $0xba0] sm:$0xff]
    %v1868 = vld [vmem:[#allocation7 + $0xba8] sm:$0xff]
    %v1869 = vld [vmem:[#allocation7 + $0xbb0] sm:$0xff]
    %v1870 = vld [vmem:[#allocation7 + $0xbb8] sm:$0xff]
    %v1871 = vld [vmem:[#allocation7 + $0xbc0] sm:$0xff]
    %v1872 = vld [vmem:[#allocation7 + $0xbc8] sm:$0xff]
    %v1873 = vld [vmem:[#allocation7 + $0xbd0] sm:$0xff]
    %v1874 = vld [vmem:[#allocation7 + $0xbd8] sm:$0xff]
    %v1875 = vld [vmem:[#allocation7 + $0xbe0] sm:$0xff]
    %v1876 = vld [vmem:[#allocation7 + $0xbe8] sm:$0xff]
    %v1877 = vld [vmem:[#allocation7 + $0xbf0] sm:$0xff]
    %v1878 = vld [vmem:[#allocation7 + $0xbf8] sm:$0xff]
    %v1879 = vld [vmem:[#allocation7 + $0xc00] sm:$0xff]
    %v1880 = vld [vmem:[#allocation7 + $0xc08] sm:$0xff]
    %v1881 = vld [vmem:[#allocation7 + $0xc10] sm:$0xff]
    %v1882 = vld [vmem:[#allocation7 + $0xc18] sm:$0xff]
    %v1883 = vld [vmem:[#allocation7 + $0xc20] sm:$0xff]
    %v1884 = vld [vmem:[#allocation7 + $0xc28] sm:$0xff]
    %v1885 = vld [vmem:[#allocation7 + $0xc30] sm:$0xff]
    %v1886 = vld [vmem:[#allocation7 + $0xc38] sm:$0xff]
    %v1887 = vld [vmem:[#allocation7 + $0xc40] sm:$0xff]
    %v1888 = vld [vmem:[#allocation7 + $0xc48] sm:$0xff]
    %v1889 = vld [vmem:[#allocation7 + $0xc50] sm:$0xff]
    %v1890 = vld [vmem:[#allocation7 + $0xc58] sm:$0xff]
    %v1891 = vld [vmem:[#allocation7 + $0xc60] sm:$0xff]
    %v1892 = vld [vmem:[#allocation7 + $0xc68] sm:$0xff]
    %v1893 = vld [vmem:[#allocation7 + $0xc70] sm:$0xff]
    %v1894 = vld [vmem:[#allocation7 + $0xc78] sm:$0xff]
    %v1895 = vld [vmem:[#allocation7 + $0xc80] sm:$0xff]
    %v1896 = vld [vmem:[#allocation7 + $0xc88] sm:$0xff]
    %v1897 = vld [vmem:[#allocation7 + $0xc90] sm:$0xff]
    %v1898 = vld [vmem:[#allocation7 + $0xc98] sm:$0xff]
    %v1899 = vld [vmem:[#allocation7 + $0xca0] sm:$0xff]
    %v1900 = vld [vmem:[#allocation7 + $0xca8] sm:$0xff]
    %v1901 = vld [vmem:[#allocation7 + $0xcb0] sm:$0xff]
    %v1902 = vld [vmem:[#allocation7 + $0xcb8] sm:$0xff]
    %v1903 = vld [vmem:[#allocation7 + $0xcc0] sm:$0xff]
    %v1904 = vld [vmem:[#allocation7 + $0xcc8] sm:$0xff]
    %v1905 = vld [vmem:[#allocation7 + $0xcd0] sm:$0xff]
    %v1906 = vld [vmem:[#allocation7 + $0xcd8] sm:$0xff]
    %v1907 = vld [vmem:[#allocation7 + $0xce0] sm:$0xff]
    %v1908 = vld [vmem:[#allocation7 + $0xce8] sm:$0xff]
    %v1909 = vld [vmem:[#allocation7 + $0xcf0] sm:$0xff]
    %v1910 = vld [vmem:[#allocation7 + $0xcf8] sm:$0xff]
    %v1911 = vld [vmem:[#allocation7 + $0xd00] sm:$0xff]
    %v1912 = vld [vmem:[#allocation7 + $0xd08] sm:$0xff]
    %v1913 = vld [vmem:[#allocation7 + $0xd10] sm:$0xff]
    %v1914 = vld [vmem:[#allocation7 + $0xd18] sm:$0xff]
    %v1915 = vld [vmem:[#allocation7 + $0xd20] sm:$0xff]
    %v1916 = vld [vmem:[#allocation7 + $0xd28] sm:$0xff]
    %v1917 = vld [vmem:[#allocation7 + $0xd30] sm:$0xff]
    %v1918 = vld [vmem:[#allocation7 + $0xd38] sm:$0xff]
    %v1919 = vld [vmem:[#allocation7 + $0xd40] sm:$0xff]
    %v1920 = vld [vmem:[#allocation7 + $0xd48] sm:$0xff]
    %v1921 = vld [vmem:[#allocation7 + $0xd50] sm:$0xff]
    %v1922 = vld [vmem:[#allocation7 + $0xd58] sm:$0xff]
    %v1923 = vld [vmem:[#allocation7 + $0xd60] sm:$0xff]
    %v1924 = vld [vmem:[#allocation7 + $0xd68] sm:$0xff]
    %v1925 = vld [vmem:[#allocation7 + $0xd70] sm:$0xff]
    %v1926 = vld [vmem:[#allocation7 + $0xd78] sm:$0xff]
    %v1927 = vld [vmem:[#allocation7 + $0xd80] sm:$0xff]
    %v1928 = vld [vmem:[#allocation7 + $0xd88] sm:$0xff]
    %v1929 = vld [vmem:[#allocation7 + $0xd90] sm:$0xff]
    %v1930 = vld [vmem:[#allocation7 + $0xd98] sm:$0xff]
    %v1931 = vld [vmem:[#allocation7 + $0xda0] sm:$0xff]
    %v1932 = vld [vmem:[#allocation7 + $0xda8] sm:$0xff]
    %v1933 = vld [vmem:[#allocation7 + $0xdb0] sm:$0xff]
    %v1934 = vld [vmem:[#allocation7 + $0xdb8] sm:$0xff]
    %v1935 = vld [vmem:[#allocation7 + $0xdc0] sm:$0xff]
    %v1936 = vld [vmem:[#allocation7 + $0xdc8] sm:$0xff]
    %v1937 = vld [vmem:[#allocation7 + $0xdd0] sm:$0xff]
    %v1938 = vld [vmem:[#allocation7 + $0xdd8] sm:$0xff]
    %v1939 = vld [vmem:[#allocation7 + $0xde0] sm:$0xff]
    %v1940 = vld [vmem:[#allocation7 + $0xde8] sm:$0xff]
    %v1941 = vld [vmem:[#allocation7 + $0xdf0] sm:$0xff]
    %v1942 = vld [vmem:[#allocation7 + $0xdf8] sm:$0xff]
    %v1943 = vld [vmem:[#allocation7 + $0xe00] sm:$0xff]
    %v1944 = vld [vmem:[#allocation7 + $0xe08] sm:$0xff]
    %v1945 = vld [vmem:[#allocation7 + $0xe10] sm:$0xff]
    %v1946 = vld [vmem:[#allocation7 + $0xe18] sm:$0xff]
    %v1947 = vld [vmem:[#allocation7 + $0xe20] sm:$0xff]
    %v1948 = vld [vmem:[#allocation7 + $0xe28] sm:$0xff]
    %v1949 = vld [vmem:[#allocation7 + $0xe30] sm:$0xff]
    %v1950 = vld [vmem:[#allocation7 + $0xe38] sm:$0xff]
    %v1951 = vld [vmem:[#allocation7 + $0xe40] sm:$0xff]
    %v1952 = vld [vmem:[#allocation7 + $0xe48] sm:$0xff]
    %v1953 = vld [vmem:[#allocation7 + $0xe50] sm:$0xff]
    %v1954 = vld [vmem:[#allocation7 + $0xe58] sm:$0xff]
    %v1955 = vld [vmem:[#allocation7 + $0xe60] sm:$0xff]
    %v1956 = vld [vmem:[#allocation7 + $0xe68] sm:$0xff]
    %v1957 = vld [vmem:[#allocation7 + $0xe70] sm:$0xff]
    %v1958 = vld [vmem:[#allocation7 + $0xe78] sm:$0xff]
    %v1959 = vld [vmem:[#allocation7 + $0xe80] sm:$0xff]
    %v1960 = vld [vmem:[#allocation7 + $0xe88] sm:$0xff]
    %v1961 = vld [vmem:[#allocation7 + $0xe90] sm:$0xff]
    %v1962 = vld [vmem:[#allocation7 + $0xe98] sm:$0xff]
    %v1963 = vld [vmem:[#allocation7 + $0xea0] sm:$0xff]
    %v1964 = vld [vmem:[#allocation7 + $0xea8] sm:$0xff]
    %v1965 = vld [vmem:[#allocation7 + $0xeb0] sm:$0xff]
    %v1966 = vld [vmem:[#allocation7 + $0xeb8] sm:$0xff]
    %v1967 = vld [vmem:[#allocation7 + $0xec0] sm:$0xff]
    %v1968 = vld [vmem:[#allocation7 + $0xec8] sm:$0xff]
    %v1969 = vld [vmem:[#allocation7 + $0xed0] sm:$0xff]
    %v1970 = vld [vmem:[#allocation7 + $0xed8] sm:$0xff]
    %v1971 = vld [vmem:[#allocation7 + $0xee0] sm:$0xff]
    %v1972 = vld [vmem:[#allocation7 + $0xee8] sm:$0xff]
    %v1973 = vld [vmem:[#allocation7 + $0xef0] sm:$0xff]
    %v1974 = vld [vmem:[#allocation7 + $0xef8] sm:$0xff]
    %v1975 = vld [vmem:[#allocation7 + $0xf00] sm:$0xff]
    %v1976 = vld [vmem:[#allocation7 + $0xf08] sm:$0xff]
    %v1977 = vld [vmem:[#allocation7 + $0xf10] sm:$0xff]
    %v1978 = vld [vmem:[#allocation7 + $0xf18] sm:$0xff]
    %v1979 = vld [vmem:[#allocation7 + $0xf20] sm:$0xff]
    %v1980 = vld [vmem:[#allocation7 + $0xf28] sm:$0xff]
    %v1981 = vld [vmem:[#allocation7 + $0xf30] sm:$0xff]
    %v1982 = vld [vmem:[#allocation7 + $0xf38] sm:$0xff]
    %v1983 = vld [vmem:[#allocation7 + $0xf40] sm:$0xff]
    %v1984 = vld [vmem:[#allocation7 + $0xf48] sm:$0xff]
    %v1985 = vld [vmem:[#allocation7 + $0xf50] sm:$0xff]
    %v1986 = vld [vmem:[#allocation7 + $0xf58] sm:$0xff]
    %v1987 = vld [vmem:[#allocation7 + $0xf60] sm:$0xff]
    %v1988 = vld [vmem:[#allocation7 + $0xf68] sm:$0xff]
    %v1989 = vld [vmem:[#allocation7 + $0xf70] sm:$0xff]
    %v1990 = vld [vmem:[#allocation7 + $0xf78] sm:$0xff]
    %v1991 = vld [vmem:[#allocation7 + $0xf80] sm:$0xff]
    %v1992 = vld [vmem:[#allocation7 + $0xf88] sm:$0xff]
    %v1993 = vld [vmem:[#allocation7 + $0xf90] sm:$0xff]
    %v1994 = vld [vmem:[#allocation7 + $0xf98] sm:$0xff]
    %v1995 = vld [vmem:[#allocation7 + $0xfa0] sm:$0xff]
    %v1996 = vld [vmem:[#allocation7 + $0xfa8] sm:$0xff]
    %v1997 = vld [vmem:[#allocation7 + $0xfb0] sm:$0xff]
    %v1998 = vld [vmem:[#allocation7 + $0xfb8] sm:$0xff]
    %v1999 = vld [vmem:[#allocation7 + $0xfc0] sm:$0xff]
    %v2000 = vld [vmem:[#allocation7 + $0xfc8] sm:$0xff]
    %v2001 = vld [vmem:[#allocation7 + $0xfd0] sm:$0xff]
    %v2002 = vld [vmem:[#allocation7 + $0xfd8] sm:$0xff]
    %v2003 = vld [vmem:[#allocation7 + $0xfe0] sm:$0xff]
    %v2004 = vld [vmem:[#allocation7 + $0xfe8] sm:$0xff]
    %v2005 = vld [vmem:[#allocation7 + $0xff0] sm:$0xff]
    %v2006 = vld [vmem:[#allocation7 + $0xff8] sm:$0xff]
    %v2007 = vld [vmem:[#allocation7 + $0x1000] sm:$0xff]
    %v2008 = vld [vmem:[#allocation7 + $0x1008] sm:$0xff]
    %v2009 = vld [vmem:[#allocation7 + $0x1010] sm:$0xff]
    %v2010 = vld [vmem:[#allocation7 + $0x1018] sm:$0xff]
    %v2011 = vld [vmem:[#allocation7 + $0x1020] sm:$0xff]
    %v2012 = vld [vmem:[#allocation7 + $0x1028] sm:$0xff]
    %v2013 = vld [vmem:[#allocation7 + $0x1030] sm:$0xff]
    %v2014 = vld [vmem:[#allocation7 + $0x1038] sm:$0xff]
    %v2015 = vld [vmem:[#allocation7 + $0x1040] sm:$0xff]
    %v2016 = vld [vmem:[#allocation7 + $0x1048] sm:$0xff]
    %v2017 = vld [vmem:[#allocation7 + $0x1050] sm:$0xff]
    %v2018 = vld [vmem:[#allocation7 + $0x1058] sm:$0xff]
    %v2019 = vld [vmem:[#allocation7 + $0x1060] sm:$0xff]
    %v2020 = vld [vmem:[#allocation7 + $0x1068] sm:$0xff]
    %v2021 = vld [vmem:[#allocation7 + $0x1070] sm:$0xff]
    %v2022 = vld [vmem:[#allocation7 + $0x1078] sm:$0xff]
    %v2023 = vld [vmem:[#allocation7 + $0x1080] sm:$0xff]
    %v2024 = vld [vmem:[#allocation7 + $0x1088] sm:$0xff]
    %v2025 = vld [vmem:[#allocation7 + $0x1090] sm:$0xff]
    %v2026 = vld [vmem:[#allocation7 + $0x1098] sm:$0xff]
    %v2027 = vld [vmem:[#allocation7 + $0x10a0] sm:$0xff]
    %v2028 = vld [vmem:[#allocation7 + $0x10a8] sm:$0xff]
    %v2029 = vld [vmem:[#allocation7 + $0x10b0] sm:$0xff]
    %v2030 = vld [vmem:[#allocation7 + $0x10b8] sm:$0xff]
    %v2031 = vld [vmem:[#allocation7 + $0x10c0] sm:$0xff]
    %v2032 = vld [vmem:[#allocation7 + $0x10c8] sm:$0xff]
    %v2033 = vld [vmem:[#allocation7 + $0x10d0] sm:$0xff]
    %v2034 = vld [vmem:[#allocation7 + $0x10d8] sm:$0xff]
    %v2035 = vld [vmem:[#allocation7 + $0x10e0] sm:$0xff]
    %v2036 = vld [vmem:[#allocation7 + $0x10e8] sm:$0xff]
    %v2037 = vld [vmem:[#allocation7 + $0x10f0] sm:$0xff]
    %v2038 = vld [vmem:[#allocation7 + $0x10f8] sm:$0xff]
    %v2039 = vld [vmem:[#allocation7 + $0x1100] sm:$0xff]
    %v2040 = vld [vmem:[#allocation7 + $0x1108] sm:$0xff]
    %v2041 = vld [vmem:[#allocation7 + $0x1110] sm:$0xff]
    %v2042 = vld [vmem:[#allocation7 + $0x1118] sm:$0xff]
    %v2043 = vld [vmem:[#allocation7 + $0x1120] sm:$0xff]
    %v2044 = vld [vmem:[#allocation7 + $0x1128] sm:$0xff]
    %v2045 = vld [vmem:[#allocation7 + $0x1130] sm:$0xff]
    %v2046 = vld [vmem:[#allocation7 + $0x1138] sm:$0xff]
    %v2047 = vld [vmem:[#allocation7 + $0x1140] sm:$0xff]
    %v2048 = vld [vmem:[#allocation7 + $0x1148] sm:$0xff]
    %v2049 = vld [vmem:[#allocation7 + $0x1150] sm:$0xff]
    %v2050 = vld [vmem:[#allocation7 + $0x1158] sm:$0xff]
    %v2051 = vld [vmem:[#allocation7 + $0x1160] sm:$0xff]
    %v2052 = vld [vmem:[#allocation7 + $0x1168] sm:$0xff]
    %v2053 = vld [vmem:[#allocation7 + $0x1170] sm:$0xff]
    %v2054 = vld [vmem:[#allocation7 + $0x1178] sm:$0xff]
    %v2055 = vld [vmem:[#allocation7 + $0x1180] sm:$0xff]
    %v2056 = vld [vmem:[#allocation7 + $0x1188] sm:$0xff]
    %v2057 = vld [vmem:[#allocation7 + $0x1190] sm:$0xff]
    %v2058 = vld [vmem:[#allocation7 + $0x1198] sm:$0xff]
    %v2059 = vld [vmem:[#allocation7 + $0x11a0] sm:$0xff]
    %v2060 = vld [vmem:[#allocation7 + $0x11a8] sm:$0xff]
    %v2061 = vld [vmem:[#allocation7 + $0x11b0] sm:$0xff]
    %v2062 = vld [vmem:[#allocation7 + $0x11b8] sm:$0xff]
    %v2063 = vld [vmem:[#allocation7 + $0x11c0] sm:$0xff]
    %v2064 = vld [vmem:[#allocation7 + $0x11c8] sm:$0xff]
    %v2065 = vld [vmem:[#allocation7 + $0x11d0] sm:$0xff]
    %v2066 = vld [vmem:[#allocation7 + $0x11d8] sm:$0xff]
    %v2067 = vld [vmem:[#allocation7 + $0x11e0] sm:$0xff]
    %v2068 = vld [vmem:[#allocation7 + $0x11e8] sm:$0xff]
    %v2069 = vld [vmem:[#allocation7 + $0x11f0] sm:$0xff]
    %v2070 = vld [vmem:[#allocation7 + $0x11f8] sm:$0xff]
    %v2071 = vld [vmem:[#allocation7 + $0x1200] sm:$0xff]
    %v2072 = vld [vmem:[#allocation7 + $0x1208] sm:$0xff]
    %v2073 = vld [vmem:[#allocation7 + $0x1210] sm:$0xff]
    %v2074 = vld [vmem:[#allocation7 + $0x1218] sm:$0xff]
    %v2075 = vld [vmem:[#allocation7 + $0x1220] sm:$0xff]
    %v2076 = vld [vmem:[#allocation7 + $0x1228] sm:$0xff]
    %v2077 = vld [vmem:[#allocation7 + $0x1230] sm:$0xff]
    %v2078 = vld [vmem:[#allocation7 + $0x1238] sm:$0xff]
    %v2079 = vld [vmem:[#allocation7 + $0x1240] sm:$0xff]
    %v2080 = vld [vmem:[#allocation7 + $0x1248] sm:$0xff]
    %v2081 = vld [vmem:[#allocation7 + $0x1250] sm:$0xff]
    %v2082 = vld [vmem:[#allocation7 + $0x1258] sm:$0xff]
    %v2083 = vld [vmem:[#allocation7 + $0x1260] sm:$0xff]
    %v2084 = vld [vmem:[#allocation7 + $0x1268] sm:$0xff]
    %v2085 = vld [vmem:[#allocation7 + $0x1270] sm:$0xff]
    %v2086 = vld [vmem:[#allocation7 + $0x1278] sm:$0xff]
    %v2087 = vld [vmem:[#allocation7 + $0x1280] sm:$0xff]
    %v2088 = vld [vmem:[#allocation7 + $0x1288] sm:$0xff]
    %v2089 = vld [vmem:[#allocation7 + $0x1290] sm:$0xff]
    %v2090 = vld [vmem:[#allocation7 + $0x1298] sm:$0xff]
    %v2091 = vld [vmem:[#allocation7 + $0x12a0] sm:$0xff]
    %v2092 = vld [vmem:[#allocation7 + $0x12a8] sm:$0xff]
    %v2093 = vld [vmem:[#allocation7 + $0x12b0] sm:$0xff]
    %v2094 = vld [vmem:[#allocation7 + $0x12b8] sm:$0xff]
    %v2095 = vld [vmem:[#allocation7 + $0x12c0] sm:$0xff]
    %v2096 = vld [vmem:[#allocation7 + $0x12c8] sm:$0xff]
    %v2097 = vld [vmem:[#allocation7 + $0x12d0] sm:$0xff]
    %v2098 = vld [vmem:[#allocation7 + $0x12d8] sm:$0xff]
    %v2099 = vld [vmem:[#allocation7 + $0x12e0] sm:$0xff]
    %v2100 = vld [vmem:[#allocation7 + $0x12e8] sm:$0xff]
    %v2101 = vld [vmem:[#allocation7 + $0x12f0] sm:$0xff]
    %v2102 = vld [vmem:[#allocation7 + $0x12f8] sm:$0xff]
    %v2103 = vld [vmem:[#allocation7 + $0x1300] sm:$0xff]
    %v2104 = vld [vmem:[#allocation7 + $0x1308] sm:$0xff]
    %v2105 = vld [vmem:[#allocation7 + $0x1310] sm:$0xff]
    %v2106 = vld [vmem:[#allocation7 + $0x1318] sm:$0xff]
    %v2107 = vld [vmem:[#allocation7 + $0x1320] sm:$0xff]
    %v2108 = vld [vmem:[#allocation7 + $0x1328] sm:$0xff]
    %v2109 = vld [vmem:[#allocation7 + $0x1330] sm:$0xff]
    %v2110 = vld [vmem:[#allocation7 + $0x1338] sm:$0xff]
    %v2111 = vld [vmem:[#allocation7 + $0x1340] sm:$0xff]
    %v2112 = vld [vmem:[#allocation7 + $0x1348] sm:$0xff]
    %v2113 = vld [vmem:[#allocation7 + $0x1350] sm:$0xff]
    %v2114 = vld [vmem:[#allocation7 + $0x1358] sm:$0xff]
    %v2115 = vld [vmem:[#allocation7 + $0x1360] sm:$0xff]
    %v2116 = vld [vmem:[#allocation7 + $0x1368] sm:$0xff]
    %v2117 = vld [vmem:[#allocation7 + $0x1370] sm:$0xff]
    %v2118 = vld [vmem:[#allocation7 + $0x1378] sm:$0xff]
    %v2119 = vld [vmem:[#allocation7 + $0x1380] sm:$0xff]
    %v2120 = vld [vmem:[#allocation7 + $0x1388] sm:$0xff]
    %v2121 = vld [vmem:[#allocation7 + $0x1390] sm:$0xff]
    %v2122 = vld [vmem:[#allocation7 + $0x1398] sm:$0xff]
    %v2123 = vld [vmem:[#allocation7 + $0x13a0] sm:$0xff]
    %v2124 = vld [vmem:[#allocation7 + $0x13a8] sm:$0xff]
    %v2125 = vld [vmem:[#allocation7 + $0x13b0] sm:$0xff]
    %v2126 = vld [vmem:[#allocation7 + $0x13b8] sm:$0xff]
    %v2127 = vld [vmem:[#allocation7 + $0x13c0] sm:$0xff]
    %v2128 = vld [vmem:[#allocation7 + $0x13c8] sm:$0xff]
    %v2129 = vld [vmem:[#allocation7 + $0x13d0] sm:$0xff]
    %v2130 = vld [vmem:[#allocation7 + $0x13d8] sm:$0xff]
    %v2131 = vld [vmem:[#allocation7 + $0x13e0] sm:$0xff]
    %v2132 = vld [vmem:[#allocation7 + $0x13e8] sm:$0xff]
    %v2133 = vld [vmem:[#allocation7 + $0x13f0] sm:$0xff]
    %v2134 = vld [vmem:[#allocation7 + $0x13f8] sm:$0xff]
    %v2135 = vld [vmem:[#allocation7 + $0x1400] sm:$0xff]
    %v2136 = vld [vmem:[#allocation7 + $0x1408] sm:$0xff]
    %v2137 = vld [vmem:[#allocation7 + $0x1410] sm:$0xff]
    %v2138 = vld [vmem:[#allocation7 + $0x1418] sm:$0xff]
    %v2139 = vld [vmem:[#allocation7 + $0x1420] sm:$0xff]
    %v2140 = vld [vmem:[#allocation7 + $0x1428] sm:$0xff]
    %v2141 = vld [vmem:[#allocation7 + $0x1430] sm:$0xff]
    %v2142 = vld [vmem:[#allocation7 + $0x1438] sm:$0xff]
    %v2143 = vld [vmem:[#allocation7 + $0x1440] sm:$0xff]
    %v2144 = vld [vmem:[#allocation7 + $0x1448] sm:$0xff]
    %v2145 = vld [vmem:[#allocation7 + $0x1450] sm:$0xff]
    %v2146 = vld [vmem:[#allocation7 + $0x1458] sm:$0xff]
    %v2147 = vld [vmem:[#allocation7 + $0x1460] sm:$0xff]
    %v2148 = vld [vmem:[#allocation7 + $0x1468] sm:$0xff]
    %v2149 = vld [vmem:[#allocation7 + $0x1470] sm:$0xff]
    %v2150 = vld [vmem:[#allocation7 + $0x1478] sm:$0xff]
    %v2151 = vld [vmem:[#allocation7 + $0x1480] sm:$0xff]
    %v2152 = vld [vmem:[#allocation7 + $0x1488] sm:$0xff]
    %v2153 = vld [vmem:[#allocation7 + $0x1490] sm:$0xff]
    %v2154 = vld [vmem:[#allocation7 + $0x1498] sm:$0xff]
    %v2155 = vld [vmem:[#allocation7 + $0x14a0] sm:$0xff]
    %v2156 = vld [vmem:[#allocation7 + $0x14a8] sm:$0xff]
    %v2157 = vld [vmem:[#allocation7 + $0x14b0] sm:$0xff]
    %v2158 = vld [vmem:[#allocation7 + $0x14b8] sm:$0xff]
    %v2159 = vld [vmem:[#allocation7 + $0x14c0] sm:$0xff]
    %v2160 = vld [vmem:[#allocation7 + $0x14c8] sm:$0xff]
    %v2161 = vld [vmem:[#allocation7 + $0x14d0] sm:$0xff]
    %v2162 = vld [vmem:[#allocation7 + $0x14d8] sm:$0xff]
    %v2163 = vld [vmem:[#allocation7 + $0x14e0] sm:$0xff]
    %v2164 = vld [vmem:[#allocation7 + $0x14e8] sm:$0xff]
    %v2165 = vld [vmem:[#allocation7 + $0x14f0] sm:$0xff]
    %v2166 = vld [vmem:[#allocation7 + $0x14f8] sm:$0xff]
    %v2167 = vld [vmem:[#allocation7 + $0x1500] sm:$0xff]
    %v2168 = vld [vmem:[#allocation7 + $0x1508] sm:$0xff]
    %v2169 = vld [vmem:[#allocation7 + $0x1510] sm:$0xff]
    %v2170 = vld [vmem:[#allocation7 + $0x1518] sm:$0xff]
    %v2171 = vld [vmem:[#allocation7 + $0x1520] sm:$0xff]
    %v2172 = vld [vmem:[#allocation7 + $0x1528] sm:$0xff]
    %v2173 = vld [vmem:[#allocation7 + $0x1530] sm:$0xff]
    %v2174 = vld [vmem:[#allocation7 + $0x1538] sm:$0xff]
    %v2175 = vld [vmem:[#allocation7 + $0x1540] sm:$0xff]
    %v2176 = vld [vmem:[#allocation7 + $0x1548] sm:$0xff]
    %v2177 = vld [vmem:[#allocation7 + $0x1550] sm:$0xff]
    %v2178 = vld [vmem:[#allocation7 + $0x1558] sm:$0xff]
    %v2179 = vld [vmem:[#allocation7 + $0x1560] sm:$0xff]
    %v2180 = vld [vmem:[#allocation7 + $0x1568] sm:$0xff]
    %v2181 = vld [vmem:[#allocation7 + $0x1570] sm:$0xff]
    %v2182 = vld [vmem:[#allocation7 + $0x1578] sm:$0xff]
    %v2183 = vld [vmem:[#allocation7 + $0x1580] sm:$0xff]
    %v2184 = vld [vmem:[#allocation7 + $0x1588] sm:$0xff]
    %v2185 = vld [vmem:[#allocation7 + $0x1590] sm:$0xff]
    %v2186 = vld [vmem:[#allocation7 + $0x1598] sm:$0xff]
    %v2187 = vld [vmem:[#allocation7 + $0x15a0] sm:$0xff]
    %v2188 = vld [vmem:[#allocation7 + $0x15a8] sm:$0xff]
    %v2189 = vld [vmem:[#allocation7 + $0x15b0] sm:$0xff]
    %v2190 = vld [vmem:[#allocation7 + $0x15b8] sm:$0xff]
    %v2191 = vld [vmem:[#allocation7 + $0x15c0] sm:$0xff]
    %v2192 = vld [vmem:[#allocation7 + $0x15c8] sm:$0xff]
    %v2193 = vld [vmem:[#allocation7 + $0x15d0] sm:$0xff]
    %v2194 = vld [vmem:[#allocation7 + $0x15d8] sm:$0xff]
    %v2195 = vld [vmem:[#allocation7 + $0x15e0] sm:$0xff]
    %v2196 = vld [vmem:[#allocation7 + $0x15e8] sm:$0xff]
    %v2197 = vld [vmem:[#allocation7 + $0x15f0] sm:$0xff]
    %v2198 = vld [vmem:[#allocation7 + $0x15f8] sm:$0xff]
    %v2199 = vld [vmem:[#allocation7 + $0x1600] sm:$0xff]
    %v2200 = vld [vmem:[#allocation7 + $0x1608] sm:$0xff]
    %v2201 = vld [vmem:[#allocation7 + $0x1610] sm:$0xff]
    %v2202 = vld [vmem:[#allocation7 + $0x1618] sm:$0xff]
    %v2203 = vld [vmem:[#allocation7 + $0x1620] sm:$0xff]
    %v2204 = vld [vmem:[#allocation7 + $0x1628] sm:$0xff]
    %v2205 = vld [vmem:[#allocation7 + $0x1630] sm:$0xff]
    %v2206 = vld [vmem:[#allocation7 + $0x1638] sm:$0xff]
    %v2207 = vld [vmem:[#allocation7 + $0x1640] sm:$0xff]
    %v2208 = vld [vmem:[#allocation7 + $0x1648] sm:$0xff]
    %v2209 = vld [vmem:[#allocation7 + $0x1650] sm:$0xff]
    %v2210 = vld [vmem:[#allocation7 + $0x1658] sm:$0xff]
    %v2211 = vld [vmem:[#allocation7 + $0x1660] sm:$0xff]
    %v2212 = vld [vmem:[#allocation7 + $0x1668] sm:$0xff]
    %v2213 = vld [vmem:[#allocation7 + $0x1670] sm:$0xff]
    %v2214 = vld [vmem:[#allocation7 + $0x1678] sm:$0xff]
    %v2215 = vld [vmem:[#allocation7 + $0x1680] sm:$0xff]
    %v2216 = vld [vmem:[#allocation7 + $0x1688] sm:$0xff]
    %v2217 = vld [vmem:[#allocation7 + $0x1690] sm:$0xff]
    %v2218 = vld [vmem:[#allocation7 + $0x1698] sm:$0xff]
    %v2219 = vld [vmem:[#allocation7 + $0x16a0] sm:$0xff]
    %v2220 = vld [vmem:[#allocation7 + $0x16a8] sm:$0xff]
    %v2221 = vld [vmem:[#allocation7 + $0x16b0] sm:$0xff]
    %v2222 = vld [vmem:[#allocation7 + $0x16b8] sm:$0xff]
    %v2223 = vld [vmem:[#allocation7 + $0x16c0] sm:$0xff]
    %v2224 = vld [vmem:[#allocation7 + $0x16c8] sm:$0xff]
    %v2225 = vld [vmem:[#allocation7 + $0x16d0] sm:$0xff]
    %v2226 = vld [vmem:[#allocation7 + $0x16d8] sm:$0xff]
    %v2227 = vld [vmem:[#allocation7 + $0x16e0] sm:$0xff]
    %v2228 = vld [vmem:[#allocation7 + $0x16e8] sm:$0xff]
    %v2229 = vld [vmem:[#allocation7 + $0x16f0] sm:$0xff]
    %v2230 = vld [vmem:[#allocation7 + $0x16f8] sm:$0xff]
    %v2231 = vld [vmem:[#allocation7 + $0x1700] sm:$0xff]
    %v2232 = vld [vmem:[#allocation7 + $0x1708] sm:$0xff]
    %v2233 = vld [vmem:[#allocation7 + $0x1710] sm:$0xff]
    %v2234 = vld [vmem:[#allocation7 + $0x1718] sm:$0xff]
    %v2235 = vld [vmem:[#allocation7 + $0x1720] sm:$0xff]
    %v2236 = vld [vmem:[#allocation7 + $0x1728] sm:$0xff]
    %v2237 = vld [vmem:[#allocation7 + $0x1730] sm:$0xff]
    %v2238 = vld [vmem:[#allocation7 + $0x1738] sm:$0xff]
    %v2239 = vld [vmem:[#allocation7 + $0x1740] sm:$0xff]
    %v2240 = vld [vmem:[#allocation7 + $0x1748] sm:$0xff]
    %v2241 = vld [vmem:[#allocation7 + $0x1750] sm:$0xff]
    %v2242 = vld [vmem:[#allocation7 + $0x1758] sm:$0xff]
    %v2243 = vld [vmem:[#allocation7 + $0x1760] sm:$0xff]
    %v2244 = vld [vmem:[#allocation7 + $0x1768] sm:$0xff]
    %v2245 = vld [vmem:[#allocation7 + $0x1770] sm:$0xff]
    %v2246 = vld [vmem:[#allocation7 + $0x1778] sm:$0xff]
    %v2247 = vld [vmem:[#allocation7 + $0x1780] sm:$0xff]
    %v2248 = vld [vmem:[#allocation7 + $0x1788] sm:$0xff]
    %v2249 = vld [vmem:[#allocation7 + $0x1790] sm:$0xff]
    %v2250 = vld [vmem:[#allocation7 + $0x1798] sm:$0xff]
    %v2251 = vld [vmem:[#allocation7 + $0x17a0] sm:$0xff]
    %v2252 = vld [vmem:[#allocation7 + $0x17a8] sm:$0xff]
    %v2253 = vld [vmem:[#allocation7 + $0x17b0] sm:$0xff]
    %v2254 = vld [vmem:[#allocation7 + $0x17b8] sm:$0xff]
    %v2255 = vld [vmem:[#allocation7 + $0x17c0] sm:$0xff]
    %v2256 = vld [vmem:[#allocation7 + $0x17c8] sm:$0xff]
    %v2257 = vld [vmem:[#allocation7 + $0x17d0] sm:$0xff]
    %v2258 = vld [vmem:[#allocation7 + $0x17d8] sm:$0xff]
    %v2259 = vld [vmem:[#allocation7 + $0x17e0] sm:$0xff]
    %v2260 = vld [vmem:[#allocation7 + $0x17e8] sm:$0xff]
    %v2261 = vld [vmem:[#allocation7 + $0x17f0] sm:$0xff]
    %v2262 = vld [vmem:[#allocation7 + $0x17f8] sm:$0xff]
    %v2263 = vld [vmem:[#allocation7 + $0x1800] sm:$0xff]
    %v2264 = vld [vmem:[#allocation7 + $0x1808] sm:$0xff]
    %v2265 = vld [vmem:[#allocation7 + $0x1810] sm:$0xff]
    %v2266 = vld [vmem:[#allocation7 + $0x1818] sm:$0xff]
    %v2267 = vld [vmem:[#allocation7 + $0x1820] sm:$0xff]
    %v2268 = vld [vmem:[#allocation7 + $0x1828] sm:$0xff]
    %v2269 = vld [vmem:[#allocation7 + $0x1830] sm:$0xff]
    %v2270 = vld [vmem:[#allocation7 + $0x1838] sm:$0xff]
    %v2271 = vld [vmem:[#allocation7 + $0x1840] sm:$0xff]
    %v2272 = vld [vmem:[#allocation7 + $0x1848] sm:$0xff]
    %v2273 = vld [vmem:[#allocation7 + $0x1850] sm:$0xff]
    %v2274 = vld [vmem:[#allocation7 + $0x1858] sm:$0xff]
    %v2275 = vld [vmem:[#allocation7 + $0x1860] sm:$0xff]
    %v2276 = vld [vmem:[#allocation7 + $0x1868] sm:$0xff]
    %v2277 = vld [vmem:[#allocation7 + $0x1870] sm:$0xff]
    %v2278 = vld [vmem:[#allocation7 + $0x1878] sm:$0xff]
    %v2279 = vld [vmem:[#allocation7 + $0x1880] sm:$0xff]
    %v2280 = vld [vmem:[#allocation7 + $0x1888] sm:$0xff]
    %v2281 = vld [vmem:[#allocation7 + $0x1890] sm:$0xff]
    %v2282 = vld [vmem:[#allocation7 + $0x1898] sm:$0xff]
    %v2283 = vld [vmem:[#allocation7 + $0x18a0] sm:$0xff]
    %v2284 = vld [vmem:[#allocation7 + $0x18a8] sm:$0xff]
    %v2285 = vld [vmem:[#allocation7 + $0x18b0] sm:$0xff]
    %v2286 = vld [vmem:[#allocation7 + $0x18b8] sm:$0xff]
    %v2287 = vld [vmem:[#allocation7 + $0x18c0] sm:$0xff]
    %v2288 = vld [vmem:[#allocation7 + $0x18c8] sm:$0xff]
    %v2289 = vld [vmem:[#allocation7 + $0x18d0] sm:$0xff]
    %v2290 = vld [vmem:[#allocation7 + $0x18d8] sm:$0xff]
    %v2291 = vld [vmem:[#allocation7 + $0x18e0] sm:$0xff]
    %v2292 = vld [vmem:[#allocation7 + $0x18e8] sm:$0xff]
    %v2293 = vld [vmem:[#allocation7 + $0x18f0] sm:$0xff]
    %v2294 = vld [vmem:[#allocation7 + $0x18f8] sm:$0xff]
    %v2295 = vld [vmem:[#allocation7 + $0x1900] sm:$0xff]
    %v2296 = vld [vmem:[#allocation7 + $0x1908] sm:$0xff]
    %v2297 = vld [vmem:[#allocation7 + $0x1910] sm:$0xff]
    %v2298 = vld [vmem:[#allocation7 + $0x1918] sm:$0xff]
    %v2299 = vld [vmem:[#allocation7 + $0x1920] sm:$0xff]
    %v2300 = vld [vmem:[#allocation7 + $0x1928] sm:$0xff]
    %v2301 = vld [vmem:[#allocation7 + $0x1930] sm:$0xff]
    %v2302 = vld [vmem:[#allocation7 + $0x1938] sm:$0xff]
    %v2303 = vld [vmem:[#allocation7 + $0x1940] sm:$0xff]
    %v2304 = vld [vmem:[#allocation7 + $0x1948] sm:$0xff]
    %v2305 = vld [vmem:[#allocation7 + $0x1950] sm:$0xff]
    %v2306 = vld [vmem:[#allocation7 + $0x1958] sm:$0xff]
    %v2307 = vld [vmem:[#allocation7 + $0x1960] sm:$0xff]
    %v2308 = vld [vmem:[#allocation7 + $0x1968] sm:$0xff]
    %v2309 = vld [vmem:[#allocation7 + $0x1970] sm:$0xff]
    %v2310 = vld [vmem:[#allocation7 + $0x1978] sm:$0xff]
    %v2311 = vld [vmem:[#allocation7 + $0x1980] sm:$0xff]
    %v2312 = vld [vmem:[#allocation7 + $0x1988] sm:$0xff]
    %v2313 = vld [vmem:[#allocation7 + $0x1990] sm:$0xff]
    %v2314 = vld [vmem:[#allocation7 + $0x1998] sm:$0xff]
    %v2315 = vld [vmem:[#allocation7 + $0x19a0] sm:$0xff]
    %v2316 = vld [vmem:[#allocation7 + $0x19a8] sm:$0xff]
    %v2317 = vld [vmem:[#allocation7 + $0x19b0] sm:$0xff]
    %v2318 = vld [vmem:[#allocation7 + $0x19b8] sm:$0xff]
    %v2319 = vld [vmem:[#allocation7 + $0x19c0] sm:$0xff]
    %v2320 = vld [vmem:[#allocation7 + $0x19c8] sm:$0xff]
    %v2321 = vld [vmem:[#allocation7 + $0x19d0] sm:$0xff]
    %v2322 = vld [vmem:[#allocation7 + $0x19d8] sm:$0xff]
    %v2323 = vld [vmem:[#allocation7 + $0x19e0] sm:$0xff]
    %v2324 = vld [vmem:[#allocation7 + $0x19e8] sm:$0xff]
    %v2325 = vld [vmem:[#allocation7 + $0x19f0] sm:$0xff]
    %v2326 = vld [vmem:[#allocation7 + $0x19f8] sm:$0xff]
    %v2327 = vld [vmem:[#allocation7 + $0x1a00] sm:$0xff]
    %v2328 = vld [vmem:[#allocation7 + $0x1a08] sm:$0xff]
    %v2329 = vld [vmem:[#allocation7 + $0x1a10] sm:$0xff]
    %v2330 = vld [vmem:[#allocation7 + $0x1a18] sm:$0xff]
    %v2331 = vld [vmem:[#allocation7 + $0x1a20] sm:$0xff]
    %v2332 = vld [vmem:[#allocation7 + $0x1a28] sm:$0xff]
    %v2333 = vld [vmem:[#allocation7 + $0x1a30] sm:$0xff]
    %v2334 = vld [vmem:[#allocation7 + $0x1a38] sm:$0xff]
    %v2335 = vld [vmem:[#allocation7 + $0x1a40] sm:$0xff]
    %v2336 = vld [vmem:[#allocation7 + $0x1a48] sm:$0xff]
    %v2337 = vld [vmem:[#allocation7 + $0x1a50] sm:$0xff]
    %v2338 = vld [vmem:[#allocation7 + $0x1a58] sm:$0xff]
    %v2339 = vld [vmem:[#allocation7 + $0x1a60] sm:$0xff]
    %v2340 = vld [vmem:[#allocation7 + $0x1a68] sm:$0xff]
    %v2341 = vld [vmem:[#allocation7 + $0x1a70] sm:$0xff]
    %v2342 = vld [vmem:[#allocation7 + $0x1a78] sm:$0xff]
    %v2343 = vld [vmem:[#allocation7 + $0x1a80] sm:$0xff]
    %v2344 = vld [vmem:[#allocation7 + $0x1a88] sm:$0xff]
    %v2345 = vld [vmem:[#allocation7 + $0x1a90] sm:$0xff]
    %v2346 = vld [vmem:[#allocation7 + $0x1a98] sm:$0xff]
    %v2347 = vld [vmem:[#allocation7 + $0x1aa0] sm:$0xff]
    %v2348 = vld [vmem:[#allocation7 + $0x1aa8] sm:$0xff]
    %v2349 = vld [vmem:[#allocation7 + $0x1ab0] sm:$0xff]
    %v2350 = vld [vmem:[#allocation7 + $0x1ab8] sm:$0xff]
    %v2351 = vld [vmem:[#allocation7 + $0x1ac0] sm:$0xff]
    %v2352 = vld [vmem:[#allocation7 + $0x1ac8] sm:$0xff]
    %v2353 = vld [vmem:[#allocation7 + $0x1ad0] sm:$0xff]
    %v2354 = vld [vmem:[#allocation7 + $0x1ad8] sm:$0xff]
    %v2355 = vld [vmem:[#allocation7 + $0x1ae0] sm:$0xff]
    %v2356 = vld [vmem:[#allocation7 + $0x1ae8] sm:$0xff]
    %v2357 = vld [vmem:[#allocation7 + $0x1af0] sm:$0xff]
    %v2358 = vld [vmem:[#allocation7 + $0x1af8] sm:$0xff]
    %v2359 = vld [vmem:[#allocation7 + $0x1b00] sm:$0xff]
    %v2360 = vld [vmem:[#allocation7 + $0x1b08] sm:$0xff]
    %v2361 = vld [vmem:[#allocation7 + $0x1b10] sm:$0xff]
    %v2362 = vld [vmem:[#allocation7 + $0x1b18] sm:$0xff]
    %v2363 = vld [vmem:[#allocation7 + $0x1b20] sm:$0xff]
    %v2364 = vld [vmem:[#allocation7 + $0x1b28] sm:$0xff]
    %v2365 = vld [vmem:[#allocation7 + $0x1b30] sm:$0xff]
    %v2366 = vld [vmem:[#allocation7 + $0x1b38] sm:$0xff]
    %v2367 = vld [vmem:[#allocation7 + $0x1b40] sm:$0xff]
    %v2368 = vld [vmem:[#allocation7 + $0x1b48] sm:$0xff]
    %v2369 = vld [vmem:[#allocation7 + $0x1b50] sm:$0xff]
    %v2370 = vld [vmem:[#allocation7 + $0x1b58] sm:$0xff]
    %v2371 = vld [vmem:[#allocation7 + $0x1b60] sm:$0xff]
    %v2372 = vld [vmem:[#allocation7 + $0x1b68] sm:$0xff]
    %v2373 = vld [vmem:[#allocation7 + $0x1b70] sm:$0xff]
    %v2374 = vld [vmem:[#allocation7 + $0x1b78] sm:$0xff]
    %v2375 = vld [vmem:[#allocation7 + $0x1b80] sm:$0xff]
    %v2376 = vld [vmem:[#allocation7 + $0x1b88] sm:$0xff]
    %v2377 = vld [vmem:[#allocation7 + $0x1b90] sm:$0xff]
    %v2378 = vld [vmem:[#allocation7 + $0x1b98] sm:$0xff]
    %v2379 = vld [vmem:[#allocation7 + $0x1ba0] sm:$0xff]
    %v2380 = vld [vmem:[#allocation7 + $0x1ba8] sm:$0xff]
    %v2381 = vld [vmem:[#allocation7 + $0x1bb0] sm:$0xff]
    %v2382 = vld [vmem:[#allocation7 + $0x1bb8] sm:$0xff]
    %v2383 = vld [vmem:[#allocation7 + $0x1bc0] sm:$0xff]
    %v2384 = vld [vmem:[#allocation7 + $0x1bc8] sm:$0xff]
    %v2385 = vld [vmem:[#allocation7 + $0x1bd0] sm:$0xff]
    %v2386 = vld [vmem:[#allocation7 + $0x1bd8] sm:$0xff]
    %v2387 = vld [vmem:[#allocation7 + $0x1be0] sm:$0xff]
    %v2388 = vld [vmem:[#allocation7 + $0x1be8] sm:$0xff]
    %v2389 = vld [vmem:[#allocation7 + $0x1bf0] sm:$0xff]
    %v2390 = vld [vmem:[#allocation7 + $0x1bf8] sm:$0xff]
    %v2391 = vld [vmem:[#allocation7 + $0x1c00] sm:$0xff]
    %v2392 = vld [vmem:[#allocation7 + $0x1c08] sm:$0xff]
    %v2393 = vld [vmem:[#allocation7 + $0x1c10] sm:$0xff]
    %v2394 = vld [vmem:[#allocation7 + $0x1c18] sm:$0xff]
    %v2395 = vld [vmem:[#allocation7 + $0x1c20] sm:$0xff]
    %v2396 = vld [vmem:[#allocation7 + $0x1c28] sm:$0xff]
    %v2397 = vld [vmem:[#allocation7 + $0x1c30] sm:$0xff]
    %v2398 = vld [vmem:[#allocation7 + $0x1c38] sm:$0xff]
    %v2399 = vld [vmem:[#allocation7 + $0x1c40] sm:$0xff]
    %v2400 = vld [vmem:[#allocation7 + $0x1c48] sm:$0xff]
    %v2401 = vld [vmem:[#allocation7 + $0x1c50] sm:$0xff]
    %v2402 = vld [vmem:[#allocation7 + $0x1c58] sm:$0xff]
    %v2403 = vld [vmem:[#allocation7 + $0x1c60] sm:$0xff]
    %v2404 = vld [vmem:[#allocation7 + $0x1c68] sm:$0xff]
    %v2405 = vld [vmem:[#allocation7 + $0x1c70] sm:$0xff]
    %v2406 = vld [vmem:[#allocation7 + $0x1c78] sm:$0xff]
    %v2407 = vld [vmem:[#allocation7 + $0x1c80] sm:$0xff]
    %v2408 = vld [vmem:[#allocation7 + $0x1c88] sm:$0xff]
    %v2409 = vld [vmem:[#allocation7 + $0x1c90] sm:$0xff]
    %v2410 = vld [vmem:[#allocation7 + $0x1c98] sm:$0xff]
    %v2411 = vld [vmem:[#allocation7 + $0x1ca0] sm:$0xff]
    %v2412 = vld [vmem:[#allocation7 + $0x1ca8] sm:$0xff]
    %v2413 = vld [vmem:[#allocation7 + $0x1cb0] sm:$0xff]
    %v2414 = vld [vmem:[#allocation7 + $0x1cb8] sm:$0xff]
    %v2415 = vld [vmem:[#allocation7 + $0x1cc0] sm:$0xff]
    %v2416 = vld [vmem:[#allocation7 + $0x1cc8] sm:$0xff]
    %v2417 = vld [vmem:[#allocation7 + $0x1cd0] sm:$0xff]
    %v2418 = vld [vmem:[#allocation7 + $0x1cd8] sm:$0xff]
    %v2419 = vld [vmem:[#allocation7 + $0x1ce0] sm:$0xff]
    %v2420 = vld [vmem:[#allocation7 + $0x1ce8] sm:$0xff]
    %v2421 = vld [vmem:[#allocation7 + $0x1cf0] sm:$0xff]
    %v2422 = vld [vmem:[#allocation7 + $0x1cf8] sm:$0xff]
    %v2423 = vld [vmem:[#allocation7 + $0x1d00] sm:$0xff]
    %v2424 = vld [vmem:[#allocation7 + $0x1d08] sm:$0xff]
    %v2425 = vld [vmem:[#allocation7 + $0x1d10] sm:$0xff]
    %v2426 = vld [vmem:[#allocation7 + $0x1d18] sm:$0xff]
    %v2427 = vld [vmem:[#allocation7 + $0x1d20] sm:$0xff]
    %v2428 = vld [vmem:[#allocation7 + $0x1d28] sm:$0xff]
    %v2429 = vld [vmem:[#allocation7 + $0x1d30] sm:$0xff]
    %v2430 = vld [vmem:[#allocation7 + $0x1d38] sm:$0xff]
    %v2431 = vld [vmem:[#allocation7 + $0x1d40] sm:$0xff]
    %v2432 = vld [vmem:[#allocation7 + $0x1d48] sm:$0xff]
    %v2433 = vld [vmem:[#allocation7 + $0x1d50] sm:$0xff]
    %v2434 = vld [vmem:[#allocation7 + $0x1d58] sm:$0xff]
    %v2435 = vld [vmem:[#allocation7 + $0x1d60] sm:$0xff]
    %v2436 = vld [vmem:[#allocation7 + $0x1d68] sm:$0xff]
    %v2437 = vld [vmem:[#allocation7 + $0x1d70] sm:$0xff]
    %v2438 = vld [vmem:[#allocation7 + $0x1d78] sm:$0xff]
    %v2439 = vld [vmem:[#allocation7 + $0x1d80] sm:$0xff]
    %v2440 = vld [vmem:[#allocation7 + $0x1d88] sm:$0xff]
    %v2441 = vld [vmem:[#allocation7 + $0x1d90] sm:$0xff]
    %v2442 = vld [vmem:[#allocation7 + $0x1d98] sm:$0xff]
    %v2443 = vld [vmem:[#allocation7 + $0x1da0] sm:$0xff]
    %v2444 = vld [vmem:[#allocation7 + $0x1da8] sm:$0xff]
    %v2445 = vld [vmem:[#allocation7 + $0x1db0] sm:$0xff]
    %v2446 = vld [vmem:[#allocation7 + $0x1db8] sm:$0xff]
    %v2447 = vld [vmem:[#allocation7 + $0x1dc0] sm:$0xff]
    %v2448 = vld [vmem:[#allocation7 + $0x1dc8] sm:$0xff]
    %v2449 = vld [vmem:[#allocation7 + $0x1dd0] sm:$0xff]
    %v2450 = vld [vmem:[#allocation7 + $0x1dd8] sm:$0xff]
    %v2451 = vld [vmem:[#allocation7 + $0x1de0] sm:$0xff]
    %v2452 = vld [vmem:[#allocation7 + $0x1de8] sm:$0xff]
    %v2453 = vld [vmem:[#allocation7 + $0x1df0] sm:$0xff]
    %v2454 = vld [vmem:[#allocation7 + $0x1df8] sm:$0xff]
    %v2455 = vld [vmem:[#allocation7 + $0x1e00] sm:$0xff]
    %v2456 = vld [vmem:[#allocation7 + $0x1e08] sm:$0xff]
    %v2457 = vld [vmem:[#allocation7 + $0x1e10] sm:$0xff]
    %v2458 = vld [vmem:[#allocation7 + $0x1e18] sm:$0xff]
    %v2459 = vld [vmem:[#allocation7 + $0x1e20] sm:$0xff]
    %v2460 = vld [vmem:[#allocation7 + $0x1e28] sm:$0xff]
    %v2461 = vld [vmem:[#allocation7 + $0x1e30] sm:$0xff]
    %v2462 = vld [vmem:[#allocation7 + $0x1e38] sm:$0xff]
    %v2463 = vld [vmem:[#allocation7 + $0x1e40] sm:$0xff]
    %v2464 = vld [vmem:[#allocation7 + $0x1e48] sm:$0xff]
    %v2465 = vld [vmem:[#allocation7 + $0x1e50] sm:$0xff]
    %v2466 = vld [vmem:[#allocation7 + $0x1e58] sm:$0xff]
    %v2467 = vld [vmem:[#allocation7 + $0x1e60] sm:$0xff]
    %v2468 = vld [vmem:[#allocation7 + $0x1e68] sm:$0xff]
    %v2469 = vld [vmem:[#allocation7 + $0x1e70] sm:$0xff]
    %v2470 = vld [vmem:[#allocation7 + $0x1e78] sm:$0xff]
    %v2471 = vld [vmem:[#allocation7 + $0x1e80] sm:$0xff]
    %v2472 = vld [vmem:[#allocation7 + $0x1e88] sm:$0xff]
    %v2473 = vld [vmem:[#allocation7 + $0x1e90] sm:$0xff]
    %v2474 = vld [vmem:[#allocation7 + $0x1e98] sm:$0xff]
    %v2475 = vld [vmem:[#allocation7 + $0x1ea0] sm:$0xff]
    %v2476 = vld [vmem:[#allocation7 + $0x1ea8] sm:$0xff]
    %v2477 = vld [vmem:[#allocation7 + $0x1eb0] sm:$0xff]
    %v2478 = vld [vmem:[#allocation7 + $0x1eb8] sm:$0xff]
    %v2479 = vld [vmem:[#allocation7 + $0x1ec0] sm:$0xff]
    %v2480 = vld [vmem:[#allocation7 + $0x1ec8] sm:$0xff]
    %v2481 = vld [vmem:[#allocation7 + $0x1ed0] sm:$0xff]
    %v2482 = vld [vmem:[#allocation7 + $0x1ed8] sm:$0xff]
    %v2483 = vld [vmem:[#allocation7 + $0x1ee0] sm:$0xff]
    %v2484 = vld [vmem:[#allocation7 + $0x1ee8] sm:$0xff]
    %v2485 = vld [vmem:[#allocation7 + $0x1ef0] sm:$0xff]
    %v2486 = vld [vmem:[#allocation7 + $0x1ef8] sm:$0xff]
    %v2487 = vld [vmem:[#allocation7 + $0x1f00] sm:$0xff]
    %v2488 = vld [vmem:[#allocation7 + $0x1f08] sm:$0xff]
    %v2489 = vld [vmem:[#allocation7 + $0x1f10] sm:$0xff]
    %v2490 = vld [vmem:[#allocation7 + $0x1f18] sm:$0xff]
    %v2491 = vld [vmem:[#allocation7 + $0x1f20] sm:$0xff]
    %v2492 = vld [vmem:[#allocation7 + $0x1f28] sm:$0xff]
    %v2493 = vld [vmem:[#allocation7 + $0x1f30] sm:$0xff]
    %v2494 = vld [vmem:[#allocation7 + $0x1f38] sm:$0xff]
    %v2495 = vld [vmem:[#allocation7 + $0x1f40] sm:$0xff]
    %v2496 = vld [vmem:[#allocation7 + $0x1f48] sm:$0xff]
    %v2497 = vld [vmem:[#allocation7 + $0x1f50] sm:$0xff]
    %v2498 = vld [vmem:[#allocation7 + $0x1f58] sm:$0xff]
    %v2499 = vld [vmem:[#allocation7 + $0x1f60] sm:$0xff]
    %v2500 = vld [vmem:[#allocation7 + $0x1f68] sm:$0xff]
    %v2501 = vld [vmem:[#allocation7 + $0x1f70] sm:$0xff]
    %v2502 = vld [vmem:[#allocation7 + $0x1f78] sm:$0xff]
    %v2503 = vld [vmem:[#allocation7 + $0x1f80] sm:$0xff]
    %v2504 = vld [vmem:[#allocation7 + $0x1f88] sm:$0xff]
    %v2505 = vld [vmem:[#allocation7 + $0x1f90] sm:$0xff]
    %v2506 = vld [vmem:[#allocation7 + $0x1f98] sm:$0xff]
    %v2507 = vld [vmem:[#allocation7 + $0x1fa0] sm:$0xff]
    %v2508 = vld [vmem:[#allocation7 + $0x1fa8] sm:$0xff]
    %v2509 = vld [vmem:[#allocation7 + $0x1fb0] sm:$0xff]
    %v2510 = vld [vmem:[#allocation7 + $0x1fb8] sm:$0xff]
    %v2511 = vld [vmem:[#allocation7 + $0x1fc0] sm:$0xff]
    %v2512 = vld [vmem:[#allocation7 + $0x1fc8] sm:$0xff]
    %v2513 = vld [vmem:[#allocation7 + $0x1fd0] sm:$0xff]
    %v2514 = vld [vmem:[#allocation7 + $0x1fd8] sm:$0xff]
    %v2515 = vld [vmem:[#allocation7 + $0x1fe0] sm:$0xff]
    %v2516 = vld [vmem:[#allocation7 + $0x1fe8] sm:$0xff]
    %v2517 = vld [vmem:[#allocation7 + $0x1ff0] sm:$0xff]
    %v2518 = vld [vmem:[#allocation7 + $0x1ff8] sm:$0xff]
    %v3543 = vunpack.c.l.b16 %v1495
    %v3544 = vunpack.c.h.b16 %v1495
    %v3545 = vunpack.c.l.b16 %v1496
    %v3546 = vunpack.c.h.b16 %v1496
    %v3547 = vunpack.c.l.b16 %v1497
    %v3548 = vunpack.c.h.b16 %v1497
    %v3549 = vunpack.c.l.b16 %v1498
    %v3550 = vunpack.c.h.b16 %v1498
    %v3551 = vunpack.c.l.b16 %v1499
    %v3552 = vunpack.c.h.b16 %v1499
    %v3553 = vunpack.c.l.b16 %v1500
    %v3554 = vunpack.c.h.b16 %v1500
    %v3555 = vunpack.c.l.b16 %v1501
    %v3556 = vunpack.c.h.b16 %v1501
    %v3557 = vunpack.c.l.b16 %v1502
    %v3558 = vunpack.c.h.b16 %v1502
    %v3559 = vunpack.c.l.b16 %v1503
    %v3560 = vunpack.c.h.b16 %v1503
    %v3561 = vunpack.c.l.b16 %v1504
    %v3562 = vunpack.c.h.b16 %v1504
    %v3563 = vunpack.c.l.b16 %v1505
    %v3564 = vunpack.c.h.b16 %v1505
    %v3565 = vunpack.c.l.b16 %v1506
    %v3566 = vunpack.c.h.b16 %v1506
    %v3567 = vunpack.c.l.b16 %v1507
    %v3568 = vunpack.c.h.b16 %v1507
    %v3569 = vunpack.c.l.b16 %v1508
    %v3570 = vunpack.c.h.b16 %v1508
    %v3571 = vunpack.c.l.b16 %v1509
    %v3572 = vunpack.c.h.b16 %v1509
    %v3573 = vunpack.c.l.b16 %v1510
    %v3574 = vunpack.c.h.b16 %v1510
    %v3575 = vunpack.c.l.b16 %v1511
    %v3576 = vunpack.c.h.b16 %v1511
    %v3577 = vunpack.c.l.b16 %v1512
    %v3578 = vunpack.c.h.b16 %v1512
    %v3579 = vunpack.c.l.b16 %v1513
    %v3580 = vunpack.c.h.b16 %v1513
    %v3581 = vunpack.c.l.b16 %v1514
    %v3582 = vunpack.c.h.b16 %v1514
    %v3583 = vunpack.c.l.b16 %v1515
    %v3584 = vunpack.c.h.b16 %v1515
    %v3585 = vunpack.c.l.b16 %v1516
    %v3586 = vunpack.c.h.b16 %v1516
    %v3587 = vunpack.c.l.b16 %v1517
    %v3588 = vunpack.c.h.b16 %v1517
    %v3589 = vunpack.c.l.b16 %v1518
    %v3590 = vunpack.c.h.b16 %v1518
    %v3591 = vunpack.c.l.b16 %v1519
    %v3592 = vunpack.c.h.b16 %v1519
    %v3593 = vunpack.c.l.b16 %v1520
    %v3594 = vunpack.c.h.b16 %v1520
    %v3595 = vunpack.c.l.b16 %v1521
    %v3596 = vunpack.c.h.b16 %v1521
    %v3597 = vunpack.c.l.b16 %v1522
    %v3598 = vunpack.c.h.b16 %v1522
    %v3599 = vunpack.c.l.b16 %v1523
    %v3600 = vunpack.c.h.b16 %v1523
    %v3601 = vunpack.c.l.b16 %v1524
    %v3602 = vunpack.c.h.b16 %v1524
    %v3603 = vunpack.c.l.b16 %v1525
    %v3604 = vunpack.c.h.b16 %v1525
    %v3605 = vunpack.c.l.b16 %v1526
    %v3606 = vunpack.c.h.b16 %v1526
    %v3607 = vunpack.c.l.b16 %v1527
    %v3608 = vunpack.c.h.b16 %v1527
    %v3609 = vunpack.c.l.b16 %v1528
    %v3610 = vunpack.c.h.b16 %v1528
    %v3611 = vunpack.c.l.b16 %v1529
    %v3612 = vunpack.c.h.b16 %v1529
    %v3613 = vunpack.c.l.b16 %v1530
    %v3614 = vunpack.c.h.b16 %v1530
    %v3615 = vunpack.c.l.b16 %v1531
    %v3616 = vunpack.c.h.b16 %v1531
    %v3617 = vunpack.c.l.b16 %v1532
    %v3618 = vunpack.c.h.b16 %v1532
    %v3619 = vunpack.c.l.b16 %v1533
    %v3620 = vunpack.c.h.b16 %v1533
    %v3621 = vunpack.c.l.b16 %v1534
    %v3622 = vunpack.c.h.b16 %v1534
    %v3623 = vunpack.c.l.b16 %v1535
    %v3624 = vunpack.c.h.b16 %v1535
    %v3625 = vunpack.c.l.b16 %v1536
    %v3626 = vunpack.c.h.b16 %v1536
    %v3627 = vunpack.c.l.b16 %v1537
    %v3628 = vunpack.c.h.b16 %v1537
    %v3629 = vunpack.c.l.b16 %v1538
    %v3630 = vunpack.c.h.b16 %v1538
    %v3631 = vunpack.c.l.b16 %v1539
    %v3632 = vunpack.c.h.b16 %v1539
    %v3633 = vunpack.c.l.b16 %v1540
    %v3634 = vunpack.c.h.b16 %v1540
    %v3635 = vunpack.c.l.b16 %v1541
    %v3636 = vunpack.c.h.b16 %v1541
    %v3637 = vunpack.c.l.b16 %v1542
    %v3638 = vunpack.c.h.b16 %v1542
    %v3639 = vunpack.c.l.b16 %v1543
    %v3640 = vunpack.c.h.b16 %v1543
    %v3641 = vunpack.c.l.b16 %v1544
    %v3642 = vunpack.c.h.b16 %v1544
    %v3643 = vunpack.c.l.b16 %v1545
    %v3644 = vunpack.c.h.b16 %v1545
    %v3645 = vunpack.c.l.b16 %v1546
    %v3646 = vunpack.c.h.b16 %v1546
    %v3647 = vunpack.c.l.b16 %v1547
    %v3648 = vunpack.c.h.b16 %v1547
    %v3649 = vunpack.c.l.b16 %v1548
    %v3650 = vunpack.c.h.b16 %v1548
    %v3651 = vunpack.c.l.b16 %v1549
    %v3652 = vunpack.c.h.b16 %v1549
    %v3653 = vunpack.c.l.b16 %v1550
    %v3654 = vunpack.c.h.b16 %v1550
    %v3655 = vunpack.c.l.b16 %v1551
    %v3656 = vunpack.c.h.b16 %v1551
    %v3657 = vunpack.c.l.b16 %v1552
    %v3658 = vunpack.c.h.b16 %v1552
    %v3659 = vunpack.c.l.b16 %v1553
    %v3660 = vunpack.c.h.b16 %v1553
    %v3661 = vunpack.c.l.b16 %v1554
    %v3662 = vunpack.c.h.b16 %v1554
    %v3663 = vunpack.c.l.b16 %v1555
    %v3664 = vunpack.c.h.b16 %v1555
    %v3665 = vunpack.c.l.b16 %v1556
    %v3666 = vunpack.c.h.b16 %v1556
    %v3667 = vunpack.c.l.b16 %v1557
    %v3668 = vunpack.c.h.b16 %v1557
    %v3669 = vunpack.c.l.b16 %v1558
    %v3670 = vunpack.c.h.b16 %v1558
    %v3671 = vunpack.c.l.b16 %v1559
    %v3672 = vunpack.c.h.b16 %v1559
    %v3673 = vunpack.c.l.b16 %v1560
    %v3674 = vunpack.c.h.b16 %v1560
    %v3675 = vunpack.c.l.b16 %v1561
    %v3676 = vunpack.c.h.b16 %v1561
    %v3677 = vunpack.c.l.b16 %v1562
    %v3678 = vunpack.c.h.b16 %v1562
    %v3679 = vunpack.c.l.b16 %v1563
    %v3680 = vunpack.c.h.b16 %v1563
    %v3681 = vunpack.c.l.b16 %v1564
    %v3682 = vunpack.c.h.b16 %v1564
    %v3683 = vunpack.c.l.b16 %v1565
    %v3684 = vunpack.c.h.b16 %v1565
    %v3685 = vunpack.c.l.b16 %v1566
    %v3686 = vunpack.c.h.b16 %v1566
    %v3687 = vunpack.c.l.b16 %v1567
    %v3688 = vunpack.c.h.b16 %v1567
    %v3689 = vunpack.c.l.b16 %v1568
    %v3690 = vunpack.c.h.b16 %v1568
    %v3691 = vunpack.c.l.b16 %v1569
    %v3692 = vunpack.c.h.b16 %v1569
    %v3693 = vunpack.c.l.b16 %v1570
    %v3694 = vunpack.c.h.b16 %v1570
    %v3695 = vunpack.c.l.b16 %v1571
    %v3696 = vunpack.c.h.b16 %v1571
    %v3697 = vunpack.c.l.b16 %v1572
    %v3698 = vunpack.c.h.b16 %v1572
    %v3699 = vunpack.c.l.b16 %v1573
    %v3700 = vunpack.c.h.b16 %v1573
    %v3701 = vunpack.c.l.b16 %v1574
    %v3702 = vunpack.c.h.b16 %v1574
    %v3703 = vunpack.c.l.b16 %v1575
    %v3704 = vunpack.c.h.b16 %v1575
    %v3705 = vunpack.c.l.b16 %v1576
    %v3706 = vunpack.c.h.b16 %v1576
    %v3707 = vunpack.c.l.b16 %v1577
    %v3708 = vunpack.c.h.b16 %v1577
    %v3709 = vunpack.c.l.b16 %v1578
    %v3710 = vunpack.c.h.b16 %v1578
    %v3711 = vunpack.c.l.b16 %v1579
    %v3712 = vunpack.c.h.b16 %v1579
    %v3713 = vunpack.c.l.b16 %v1580
    %v3714 = vunpack.c.h.b16 %v1580
    %v3715 = vunpack.c.l.b16 %v1581
    %v3716 = vunpack.c.h.b16 %v1581
    %v3717 = vunpack.c.l.b16 %v1582
    %v3718 = vunpack.c.h.b16 %v1582
    %v3719 = vunpack.c.l.b16 %v1583
    %v3720 = vunpack.c.h.b16 %v1583
    %v3721 = vunpack.c.l.b16 %v1584
    %v3722 = vunpack.c.h.b16 %v1584
    %v3723 = vunpack.c.l.b16 %v1585
    %v3724 = vunpack.c.h.b16 %v1585
    %v3725 = vunpack.c.l.b16 %v1586
    %v3726 = vunpack.c.h.b16 %v1586
    %v3727 = vunpack.c.l.b16 %v1587
    %v3728 = vunpack.c.h.b16 %v1587
    %v3729 = vunpack.c.l.b16 %v1588
    %v3730 = vunpack.c.h.b16 %v1588
    %v3731 = vunpack.c.l.b16 %v1589
    %v3732 = vunpack.c.h.b16 %v1589
    %v3733 = vunpack.c.l.b16 %v1590
    %v3734 = vunpack.c.h.b16 %v1590
    %v3735 = vunpack.c.l.b16 %v1591
    %v3736 = vunpack.c.h.b16 %v1591
    %v3737 = vunpack.c.l.b16 %v1592
    %v3738 = vunpack.c.h.b16 %v1592
    %v3739 = vunpack.c.l.b16 %v1593
    %v3740 = vunpack.c.h.b16 %v1593
    %v3741 = vunpack.c.l.b16 %v1594
    %v3742 = vunpack.c.h.b16 %v1594
    %v3743 = vunpack.c.l.b16 %v1595
    %v3744 = vunpack.c.h.b16 %v1595
    %v3745 = vunpack.c.l.b16 %v1596
    %v3746 = vunpack.c.h.b16 %v1596
    %v3747 = vunpack.c.l.b16 %v1597
    %v3748 = vunpack.c.h.b16 %v1597
    %v3749 = vunpack.c.l.b16 %v1598
    %v3750 = vunpack.c.h.b16 %v1598
    %v3751 = vunpack.c.l.b16 %v1599
    %v3752 = vunpack.c.h.b16 %v1599
    %v3753 = vunpack.c.l.b16 %v1600
    %v3754 = vunpack.c.h.b16 %v1600
    %v3755 = vunpack.c.l.b16 %v1601
    %v3756 = vunpack.c.h.b16 %v1601
    %v3757 = vunpack.c.l.b16 %v1602
    %v3758 = vunpack.c.h.b16 %v1602
    %v3759 = vunpack.c.l.b16 %v1603
    %v3760 = vunpack.c.h.b16 %v1603
    %v3761 = vunpack.c.l.b16 %v1604
    %v3762 = vunpack.c.h.b16 %v1604
    %v3763 = vunpack.c.l.b16 %v1605
    %v3764 = vunpack.c.h.b16 %v1605
    %v3765 = vunpack.c.l.b16 %v1606
    %v3766 = vunpack.c.h.b16 %v1606
    %v3767 = vunpack.c.l.b16 %v1607
    %v3768 = vunpack.c.h.b16 %v1607
    %v3769 = vunpack.c.l.b16 %v1608
    %v3770 = vunpack.c.h.b16 %v1608
    %v3771 = vunpack.c.l.b16 %v1609
    %v3772 = vunpack.c.h.b16 %v1609
    %v3773 = vunpack.c.l.b16 %v1610
    %v3774 = vunpack.c.h.b16 %v1610
    %v3775 = vunpack.c.l.b16 %v1611
    %v3776 = vunpack.c.h.b16 %v1611
    %v3777 = vunpack.c.l.b16 %v1612
    %v3778 = vunpack.c.h.b16 %v1612
    %v3779 = vunpack.c.l.b16 %v1613
    %v3780 = vunpack.c.h.b16 %v1613
    %v3781 = vunpack.c.l.b16 %v1614
    %v3782 = vunpack.c.h.b16 %v1614
    %v3783 = vunpack.c.l.b16 %v1615
    %v3784 = vunpack.c.h.b16 %v1615
    %v3785 = vunpack.c.l.b16 %v1616
    %v3786 = vunpack.c.h.b16 %v1616
    %v3787 = vunpack.c.l.b16 %v1617
    %v3788 = vunpack.c.h.b16 %v1617
    %v3789 = vunpack.c.l.b16 %v1618
    %v3790 = vunpack.c.h.b16 %v1618
    %v3791 = vunpack.c.l.b16 %v1619
    %v3792 = vunpack.c.h.b16 %v1619
    %v3793 = vunpack.c.l.b16 %v1620
    %v3794 = vunpack.c.h.b16 %v1620
    %v3795 = vunpack.c.l.b16 %v1621
    %v3796 = vunpack.c.h.b16 %v1621
    %v3797 = vunpack.c.l.b16 %v1622
    %v3798 = vunpack.c.h.b16 %v1622
    %v3799 = vunpack.c.l.b16 %v1623
    %v3800 = vunpack.c.h.b16 %v1623
    %v3801 = vunpack.c.l.b16 %v1624
    %v3802 = vunpack.c.h.b16 %v1624
    %v3803 = vunpack.c.l.b16 %v1625
    %v3804 = vunpack.c.h.b16 %v1625
    %v3805 = vunpack.c.l.b16 %v1626
    %v3806 = vunpack.c.h.b16 %v1626
    %v3807 = vunpack.c.l.b16 %v1627
    %v3808 = vunpack.c.h.b16 %v1627
    %v3809 = vunpack.c.l.b16 %v1628
    %v3810 = vunpack.c.h.b16 %v1628
    %v3811 = vunpack.c.l.b16 %v1629
    %v3812 = vunpack.c.h.b16 %v1629
    %v3813 = vunpack.c.l.b16 %v1630
    %v3814 = vunpack.c.h.b16 %v1630
    %v3815 = vunpack.c.l.b16 %v1631
    %v3816 = vunpack.c.h.b16 %v1631
    %v3817 = vunpack.c.l.b16 %v1632
    %v3818 = vunpack.c.h.b16 %v1632
    %v3819 = vunpack.c.l.b16 %v1633
    %v3820 = vunpack.c.h.b16 %v1633
    %v3821 = vunpack.c.l.b16 %v1634
    %v3822 = vunpack.c.h.b16 %v1634
    %v3823 = vunpack.c.l.b16 %v1635
    %v3824 = vunpack.c.h.b16 %v1635
    %v3825 = vunpack.c.l.b16 %v1636
    %v3826 = vunpack.c.h.b16 %v1636
    %v3827 = vunpack.c.l.b16 %v1637
    %v3828 = vunpack.c.h.b16 %v1637
    %v3829 = vunpack.c.l.b16 %v1638
    %v3830 = vunpack.c.h.b16 %v1638
    %v3831 = vunpack.c.l.b16 %v1639
    %v3832 = vunpack.c.h.b16 %v1639
    %v3833 = vunpack.c.l.b16 %v1640
    %v3834 = vunpack.c.h.b16 %v1640
    %v3835 = vunpack.c.l.b16 %v1641
    %v3836 = vunpack.c.h.b16 %v1641
    %v3837 = vunpack.c.l.b16 %v1642
    %v3838 = vunpack.c.h.b16 %v1642
    %v3839 = vunpack.c.l.b16 %v1643
    %v3840 = vunpack.c.h.b16 %v1643
    %v3841 = vunpack.c.l.b16 %v1644
    %v3842 = vunpack.c.h.b16 %v1644
    %v3843 = vunpack.c.l.b16 %v1645
    %v3844 = vunpack.c.h.b16 %v1645
    %v3845 = vunpack.c.l.b16 %v1646
    %v3846 = vunpack.c.h.b16 %v1646
    %v3847 = vunpack.c.l.b16 %v1647
    %v3848 = vunpack.c.h.b16 %v1647
    %v3849 = vunpack.c.l.b16 %v1648
    %v3850 = vunpack.c.h.b16 %v1648
    %v3851 = vunpack.c.l.b16 %v1649
    %v3852 = vunpack.c.h.b16 %v1649
    %v3853 = vunpack.c.l.b16 %v1650
    %v3854 = vunpack.c.h.b16 %v1650
    %v3855 = vunpack.c.l.b16 %v1651
    %v3856 = vunpack.c.h.b16 %v1651
    %v3857 = vunpack.c.l.b16 %v1652
    %v3858 = vunpack.c.h.b16 %v1652
    %v3859 = vunpack.c.l.b16 %v1653
    %v3860 = vunpack.c.h.b16 %v1653
    %v3861 = vunpack.c.l.b16 %v1654
    %v3862 = vunpack.c.h.b16 %v1654
    %v3863 = vunpack.c.l.b16 %v1655
    %v3864 = vunpack.c.h.b16 %v1655
    %v3865 = vunpack.c.l.b16 %v1656
    %v3866 = vunpack.c.h.b16 %v1656
    %v3867 = vunpack.c.l.b16 %v1657
    %v3868 = vunpack.c.h.b16 %v1657
    %v3869 = vunpack.c.l.b16 %v1658
    %v3870 = vunpack.c.h.b16 %v1658
    %v3871 = vunpack.c.l.b16 %v1659
    %v3872 = vunpack.c.h.b16 %v1659
    %v3873 = vunpack.c.l.b16 %v1660
    %v3874 = vunpack.c.h.b16 %v1660
    %v3875 = vunpack.c.l.b16 %v1661
    %v3876 = vunpack.c.h.b16 %v1661
    %v3877 = vunpack.c.l.b16 %v1662
    %v3878 = vunpack.c.h.b16 %v1662
    %v3879 = vunpack.c.l.b16 %v1663
    %v3880 = vunpack.c.h.b16 %v1663
    %v3881 = vunpack.c.l.b16 %v1664
    %v3882 = vunpack.c.h.b16 %v1664
    %v3883 = vunpack.c.l.b16 %v1665
    %v3884 = vunpack.c.h.b16 %v1665
    %v3885 = vunpack.c.l.b16 %v1666
    %v3886 = vunpack.c.h.b16 %v1666
    %v3887 = vunpack.c.l.b16 %v1667
    %v3888 = vunpack.c.h.b16 %v1667
    %v3889 = vunpack.c.l.b16 %v1668
    %v3890 = vunpack.c.h.b16 %v1668
    %v3891 = vunpack.c.l.b16 %v1669
    %v3892 = vunpack.c.h.b16 %v1669
    %v3893 = vunpack.c.l.b16 %v1670
    %v3894 = vunpack.c.h.b16 %v1670
    %v3895 = vunpack.c.l.b16 %v1671
    %v3896 = vunpack.c.h.b16 %v1671
    %v3897 = vunpack.c.l.b16 %v1672
    %v3898 = vunpack.c.h.b16 %v1672
    %v3899 = vunpack.c.l.b16 %v1673
    %v3900 = vunpack.c.h.b16 %v1673
    %v3901 = vunpack.c.l.b16 %v1674
    %v3902 = vunpack.c.h.b16 %v1674
    %v3903 = vunpack.c.l.b16 %v1675
    %v3904 = vunpack.c.h.b16 %v1675
    %v3905 = vunpack.c.l.b16 %v1676
    %v3906 = vunpack.c.h.b16 %v1676
    %v3907 = vunpack.c.l.b16 %v1677
    %v3908 = vunpack.c.h.b16 %v1677
    %v3909 = vunpack.c.l.b16 %v1678
    %v3910 = vunpack.c.h.b16 %v1678
    %v3911 = vunpack.c.l.b16 %v1679
    %v3912 = vunpack.c.h.b16 %v1679
    %v3913 = vunpack.c.l.b16 %v1680
    %v3914 = vunpack.c.h.b16 %v1680
    %v3915 = vunpack.c.l.b16 %v1681
    %v3916 = vunpack.c.h.b16 %v1681
    %v3917 = vunpack.c.l.b16 %v1682
    %v3918 = vunpack.c.h.b16 %v1682
    %v3919 = vunpack.c.l.b16 %v1683
    %v3920 = vunpack.c.h.b16 %v1683
    %v3921 = vunpack.c.l.b16 %v1684
    %v3922 = vunpack.c.h.b16 %v1684
    %v3923 = vunpack.c.l.b16 %v1685
    %v3924 = vunpack.c.h.b16 %v1685
    %v3925 = vunpack.c.l.b16 %v1686
    %v3926 = vunpack.c.h.b16 %v1686
    %v3927 = vunpack.c.l.b16 %v1687
    %v3928 = vunpack.c.h.b16 %v1687
    %v3929 = vunpack.c.l.b16 %v1688
    %v3930 = vunpack.c.h.b16 %v1688
    %v3931 = vunpack.c.l.b16 %v1689
    %v3932 = vunpack.c.h.b16 %v1689
    %v3933 = vunpack.c.l.b16 %v1690
    %v3934 = vunpack.c.h.b16 %v1690
    %v3935 = vunpack.c.l.b16 %v1691
    %v3936 = vunpack.c.h.b16 %v1691
    %v3937 = vunpack.c.l.b16 %v1692
    %v3938 = vunpack.c.h.b16 %v1692
    %v3939 = vunpack.c.l.b16 %v1693
    %v3940 = vunpack.c.h.b16 %v1693
    %v3941 = vunpack.c.l.b16 %v1694
    %v3942 = vunpack.c.h.b16 %v1694
    %v3943 = vunpack.c.l.b16 %v1695
    %v3944 = vunpack.c.h.b16 %v1695
    %v3945 = vunpack.c.l.b16 %v1696
    %v3946 = vunpack.c.h.b16 %v1696
    %v3947 = vunpack.c.l.b16 %v1697
    %v3948 = vunpack.c.h.b16 %v1697
    %v3949 = vunpack.c.l.b16 %v1698
    %v3950 = vunpack.c.h.b16 %v1698
    %v3951 = vunpack.c.l.b16 %v1699
    %v3952 = vunpack.c.h.b16 %v1699
    %v3953 = vunpack.c.l.b16 %v1700
    %v3954 = vunpack.c.h.b16 %v1700
    %v3955 = vunpack.c.l.b16 %v1701
    %v3956 = vunpack.c.h.b16 %v1701
    %v3957 = vunpack.c.l.b16 %v1702
    %v3958 = vunpack.c.h.b16 %v1702
    %v3959 = vunpack.c.l.b16 %v1703
    %v3960 = vunpack.c.h.b16 %v1703
    %v3961 = vunpack.c.l.b16 %v1704
    %v3962 = vunpack.c.h.b16 %v1704
    %v3963 = vunpack.c.l.b16 %v1705
    %v3964 = vunpack.c.h.b16 %v1705
    %v3965 = vunpack.c.l.b16 %v1706
    %v3966 = vunpack.c.h.b16 %v1706
    %v3967 = vunpack.c.l.b16 %v1707
    %v3968 = vunpack.c.h.b16 %v1707
    %v3969 = vunpack.c.l.b16 %v1708
    %v3970 = vunpack.c.h.b16 %v1708
    %v3971 = vunpack.c.l.b16 %v1709
    %v3972 = vunpack.c.h.b16 %v1709
    %v3973 = vunpack.c.l.b16 %v1710
    %v3974 = vunpack.c.h.b16 %v1710
    %v3975 = vunpack.c.l.b16 %v1711
    %v3976 = vunpack.c.h.b16 %v1711
    %v3977 = vunpack.c.l.b16 %v1712
    %v3978 = vunpack.c.h.b16 %v1712
    %v3979 = vunpack.c.l.b16 %v1713
    %v3980 = vunpack.c.h.b16 %v1713
    %v3981 = vunpack.c.l.b16 %v1714
    %v3982 = vunpack.c.h.b16 %v1714
    %v3983 = vunpack.c.l.b16 %v1715
    %v3984 = vunpack.c.h.b16 %v1715
    %v3985 = vunpack.c.l.b16 %v1716
    %v3986 = vunpack.c.h.b16 %v1716
    %v3987 = vunpack.c.l.b16 %v1717
    %v3988 = vunpack.c.h.b16 %v1717
    %v3989 = vunpack.c.l.b16 %v1718
    %v3990 = vunpack.c.h.b16 %v1718
    %v3991 = vunpack.c.l.b16 %v1719
    %v3992 = vunpack.c.h.b16 %v1719
    %v3993 = vunpack.c.l.b16 %v1720
    %v3994 = vunpack.c.h.b16 %v1720
    %v3995 = vunpack.c.l.b16 %v1721
    %v3996 = vunpack.c.h.b16 %v1721
    %v3997 = vunpack.c.l.b16 %v1722
    %v3998 = vunpack.c.h.b16 %v1722
    %v3999 = vunpack.c.l.b16 %v1723
    %v4000 = vunpack.c.h.b16 %v1723
    %v4001 = vunpack.c.l.b16 %v1724
    %v4002 = vunpack.c.h.b16 %v1724
    %v4003 = vunpack.c.l.b16 %v1725
    %v4004 = vunpack.c.h.b16 %v1725
    %v4005 = vunpack.c.l.b16 %v1726
    %v4006 = vunpack.c.h.b16 %v1726
    %v4007 = vunpack.c.l.b16 %v1727
    %v4008 = vunpack.c.h.b16 %v1727
    %v4009 = vunpack.c.l.b16 %v1728
    %v4010 = vunpack.c.h.b16 %v1728
    %v4011 = vunpack.c.l.b16 %v1729
    %v4012 = vunpack.c.h.b16 %v1729
    %v4013 = vunpack.c.l.b16 %v1730
    %v4014 = vunpack.c.h.b16 %v1730
    %v4015 = vunpack.c.l.b16 %v1731
    %v4016 = vunpack.c.h.b16 %v1731
    %v4017 = vunpack.c.l.b16 %v1732
    %v4018 = vunpack.c.h.b16 %v1732
    %v4019 = vunpack.c.l.b16 %v1733
    %v4020 = vunpack.c.h.b16 %v1733
    %v4021 = vunpack.c.l.b16 %v1734
    %v4022 = vunpack.c.h.b16 %v1734
    %v4023 = vunpack.c.l.b16 %v1735
    %v4024 = vunpack.c.h.b16 %v1735
    %v4025 = vunpack.c.l.b16 %v1736
    %v4026 = vunpack.c.h.b16 %v1736
    %v4027 = vunpack.c.l.b16 %v1737
    %v4028 = vunpack.c.h.b16 %v1737
    %v4029 = vunpack.c.l.b16 %v1738
    %v4030 = vunpack.c.h.b16 %v1738
    %v4031 = vunpack.c.l.b16 %v1739
    %v4032 = vunpack.c.h.b16 %v1739
    %v4033 = vunpack.c.l.b16 %v1740
    %v4034 = vunpack.c.h.b16 %v1740
    %v4035 = vunpack.c.l.b16 %v1741
    %v4036 = vunpack.c.h.b16 %v1741
    %v4037 = vunpack.c.l.b16 %v1742
    %v4038 = vunpack.c.h.b16 %v1742
    %v4039 = vunpack.c.l.b16 %v1743
    %v4040 = vunpack.c.h.b16 %v1743
    %v4041 = vunpack.c.l.b16 %v1744
    %v4042 = vunpack.c.h.b16 %v1744
    %v4043 = vunpack.c.l.b16 %v1745
    %v4044 = vunpack.c.h.b16 %v1745
    %v4045 = vunpack.c.l.b16 %v1746
    %v4046 = vunpack.c.h.b16 %v1746
    %v4047 = vunpack.c.l.b16 %v1747
    %v4048 = vunpack.c.h.b16 %v1747
    %v4049 = vunpack.c.l.b16 %v1748
    %v4050 = vunpack.c.h.b16 %v1748
    %v4051 = vunpack.c.l.b16 %v1749
    %v4052 = vunpack.c.h.b16 %v1749
    %v4053 = vunpack.c.l.b16 %v1750
    %v4054 = vunpack.c.h.b16 %v1750
    %v4055 = vunpack.c.l.b16 %v1751
    %v4056 = vunpack.c.h.b16 %v1751
    %v4057 = vunpack.c.l.b16 %v1752
    %v4058 = vunpack.c.h.b16 %v1752
    %v4059 = vunpack.c.l.b16 %v1753
    %v4060 = vunpack.c.h.b16 %v1753
    %v4061 = vunpack.c.l.b16 %v1754
    %v4062 = vunpack.c.h.b16 %v1754
    %v4063 = vunpack.c.l.b16 %v1755
    %v4064 = vunpack.c.h.b16 %v1755
    %v4065 = vunpack.c.l.b16 %v1756
    %v4066 = vunpack.c.h.b16 %v1756
    %v4067 = vunpack.c.l.b16 %v1757
    %v4068 = vunpack.c.h.b16 %v1757
    %v4069 = vunpack.c.l.b16 %v1758
    %v4070 = vunpack.c.h.b16 %v1758
    %v4071 = vunpack.c.l.b16 %v1759
    %v4072 = vunpack.c.h.b16 %v1759
    %v4073 = vunpack.c.l.b16 %v1760
    %v4074 = vunpack.c.h.b16 %v1760
    %v4075 = vunpack.c.l.b16 %v1761
    %v4076 = vunpack.c.h.b16 %v1761
    %v4077 = vunpack.c.l.b16 %v1762
    %v4078 = vunpack.c.h.b16 %v1762
    %v4079 = vunpack.c.l.b16 %v1763
    %v4080 = vunpack.c.h.b16 %v1763
    %v4081 = vunpack.c.l.b16 %v1764
    %v4082 = vunpack.c.h.b16 %v1764
    %v4083 = vunpack.c.l.b16 %v1765
    %v4084 = vunpack.c.h.b16 %v1765
    %v4085 = vunpack.c.l.b16 %v1766
    %v4086 = vunpack.c.h.b16 %v1766
    %v4087 = vunpack.c.l.b16 %v1767
    %v4088 = vunpack.c.h.b16 %v1767
    %v4089 = vunpack.c.l.b16 %v1768
    %v4090 = vunpack.c.h.b16 %v1768
    %v4091 = vunpack.c.l.b16 %v1769
    %v4092 = vunpack.c.h.b16 %v1769
    %v4093 = vunpack.c.l.b16 %v1770
    %v4094 = vunpack.c.h.b16 %v1770
    %v4095 = vunpack.c.l.b16 %v1771
    %v4096 = vunpack.c.h.b16 %v1771
    %v4097 = vunpack.c.l.b16 %v1772
    %v4098 = vunpack.c.h.b16 %v1772
    %v4099 = vunpack.c.l.b16 %v1773
    %v4100 = vunpack.c.h.b16 %v1773
    %v4101 = vunpack.c.l.b16 %v1774
    %v4102 = vunpack.c.h.b16 %v1774
    %v4103 = vunpack.c.l.b16 %v1775
    %v4104 = vunpack.c.h.b16 %v1775
    %v4105 = vunpack.c.l.b16 %v1776
    %v4106 = vunpack.c.h.b16 %v1776
    %v4107 = vunpack.c.l.b16 %v1777
    %v4108 = vunpack.c.h.b16 %v1777
    %v4109 = vunpack.c.l.b16 %v1778
    %v4110 = vunpack.c.h.b16 %v1778
    %v4111 = vunpack.c.l.b16 %v1779
    %v4112 = vunpack.c.h.b16 %v1779
    %v4113 = vunpack.c.l.b16 %v1780
    %v4114 = vunpack.c.h.b16 %v1780
    %v4115 = vunpack.c.l.b16 %v1781
    %v4116 = vunpack.c.h.b16 %v1781
    %v4117 = vunpack.c.l.b16 %v1782
    %v4118 = vunpack.c.h.b16 %v1782
    %v4119 = vunpack.c.l.b16 %v1783
    %v4120 = vunpack.c.h.b16 %v1783
    %v4121 = vunpack.c.l.b16 %v1784
    %v4122 = vunpack.c.h.b16 %v1784
    %v4123 = vunpack.c.l.b16 %v1785
    %v4124 = vunpack.c.h.b16 %v1785
    %v4125 = vunpack.c.l.b16 %v1786
    %v4126 = vunpack.c.h.b16 %v1786
    %v4127 = vunpack.c.l.b16 %v1787
    %v4128 = vunpack.c.h.b16 %v1787
    %v4129 = vunpack.c.l.b16 %v1788
    %v4130 = vunpack.c.h.b16 %v1788
    %v4131 = vunpack.c.l.b16 %v1789
    %v4132 = vunpack.c.h.b16 %v1789
    %v4133 = vunpack.c.l.b16 %v1790
    %v4134 = vunpack.c.h.b16 %v1790
    %v4135 = vunpack.c.l.b16 %v1791
    %v4136 = vunpack.c.h.b16 %v1791
    %v4137 = vunpack.c.l.b16 %v1792
    %v4138 = vunpack.c.h.b16 %v1792
    %v4139 = vunpack.c.l.b16 %v1793
    %v4140 = vunpack.c.h.b16 %v1793
    %v4141 = vunpack.c.l.b16 %v1794
    %v4142 = vunpack.c.h.b16 %v1794
    %v4143 = vunpack.c.l.b16 %v1795
    %v4144 = vunpack.c.h.b16 %v1795
    %v4145 = vunpack.c.l.b16 %v1796
    %v4146 = vunpack.c.h.b16 %v1796
    %v4147 = vunpack.c.l.b16 %v1797
    %v4148 = vunpack.c.h.b16 %v1797
    %v4149 = vunpack.c.l.b16 %v1798
    %v4150 = vunpack.c.h.b16 %v1798
    %v4151 = vunpack.c.l.b16 %v1799
    %v4152 = vunpack.c.h.b16 %v1799
    %v4153 = vunpack.c.l.b16 %v1800
    %v4154 = vunpack.c.h.b16 %v1800
    %v4155 = vunpack.c.l.b16 %v1801
    %v4156 = vunpack.c.h.b16 %v1801
    %v4157 = vunpack.c.l.b16 %v1802
    %v4158 = vunpack.c.h.b16 %v1802
    %v4159 = vunpack.c.l.b16 %v1803
    %v4160 = vunpack.c.h.b16 %v1803
    %v4161 = vunpack.c.l.b16 %v1804
    %v4162 = vunpack.c.h.b16 %v1804
    %v4163 = vunpack.c.l.b16 %v1805
    %v4164 = vunpack.c.h.b16 %v1805
    %v4165 = vunpack.c.l.b16 %v1806
    %v4166 = vunpack.c.h.b16 %v1806
    %v4167 = vunpack.c.l.b16 %v1807
    %v4168 = vunpack.c.h.b16 %v1807
    %v4169 = vunpack.c.l.b16 %v1808
    %v4170 = vunpack.c.h.b16 %v1808
    %v4171 = vunpack.c.l.b16 %v1809
    %v4172 = vunpack.c.h.b16 %v1809
    %v4173 = vunpack.c.l.b16 %v1810
    %v4174 = vunpack.c.h.b16 %v1810
    %v4175 = vunpack.c.l.b16 %v1811
    %v4176 = vunpack.c.h.b16 %v1811
    %v4177 = vunpack.c.l.b16 %v1812
    %v4178 = vunpack.c.h.b16 %v1812
    %v4179 = vunpack.c.l.b16 %v1813
    %v4180 = vunpack.c.h.b16 %v1813
    %v4181 = vunpack.c.l.b16 %v1814
    %v4182 = vunpack.c.h.b16 %v1814
    %v4183 = vunpack.c.l.b16 %v1815
    %v4184 = vunpack.c.h.b16 %v1815
    %v4185 = vunpack.c.l.b16 %v1816
    %v4186 = vunpack.c.h.b16 %v1816
    %v4187 = vunpack.c.l.b16 %v1817
    %v4188 = vunpack.c.h.b16 %v1817
    %v4189 = vunpack.c.l.b16 %v1818
    %v4190 = vunpack.c.h.b16 %v1818
    %v4191 = vunpack.c.l.b16 %v1819
    %v4192 = vunpack.c.h.b16 %v1819
    %v4193 = vunpack.c.l.b16 %v1820
    %v4194 = vunpack.c.h.b16 %v1820
    %v4195 = vunpack.c.l.b16 %v1821
    %v4196 = vunpack.c.h.b16 %v1821
    %v4197 = vunpack.c.l.b16 %v1822
    %v4198 = vunpack.c.h.b16 %v1822
    %v4199 = vunpack.c.l.b16 %v1823
    %v4200 = vunpack.c.h.b16 %v1823
    %v4201 = vunpack.c.l.b16 %v1824
    %v4202 = vunpack.c.h.b16 %v1824
    %v4203 = vunpack.c.l.b16 %v1825
    %v4204 = vunpack.c.h.b16 %v1825
    %v4205 = vunpack.c.l.b16 %v1826
    %v4206 = vunpack.c.h.b16 %v1826
    %v4207 = vunpack.c.l.b16 %v1827
    %v4208 = vunpack.c.h.b16 %v1827
    %v4209 = vunpack.c.l.b16 %v1828
    %v4210 = vunpack.c.h.b16 %v1828
    %v4211 = vunpack.c.l.b16 %v1829
    %v4212 = vunpack.c.h.b16 %v1829
    %v4213 = vunpack.c.l.b16 %v1830
    %v4214 = vunpack.c.h.b16 %v1830
    %v4215 = vunpack.c.l.b16 %v1831
    %v4216 = vunpack.c.h.b16 %v1831
    %v4217 = vunpack.c.l.b16 %v1832
    %v4218 = vunpack.c.h.b16 %v1832
    %v4219 = vunpack.c.l.b16 %v1833
    %v4220 = vunpack.c.h.b16 %v1833
    %v4221 = vunpack.c.l.b16 %v1834
    %v4222 = vunpack.c.h.b16 %v1834
    %v4223 = vunpack.c.l.b16 %v1835
    %v4224 = vunpack.c.h.b16 %v1835
    %v4225 = vunpack.c.l.b16 %v1836
    %v4226 = vunpack.c.h.b16 %v1836
    %v4227 = vunpack.c.l.b16 %v1837
    %v4228 = vunpack.c.h.b16 %v1837
    %v4229 = vunpack.c.l.b16 %v1838
    %v4230 = vunpack.c.h.b16 %v1838
    %v4231 = vunpack.c.l.b16 %v1839
    %v4232 = vunpack.c.h.b16 %v1839
    %v4233 = vunpack.c.l.b16 %v1840
    %v4234 = vunpack.c.h.b16 %v1840
    %v4235 = vunpack.c.l.b16 %v1841
    %v4236 = vunpack.c.h.b16 %v1841
    %v4237 = vunpack.c.l.b16 %v1842
    %v4238 = vunpack.c.h.b16 %v1842
    %v4239 = vunpack.c.l.b16 %v1843
    %v4240 = vunpack.c.h.b16 %v1843
    %v4241 = vunpack.c.l.b16 %v1844
    %v4242 = vunpack.c.h.b16 %v1844
    %v4243 = vunpack.c.l.b16 %v1845
    %v4244 = vunpack.c.h.b16 %v1845
    %v4245 = vunpack.c.l.b16 %v1846
    %v4246 = vunpack.c.h.b16 %v1846
    %v4247 = vunpack.c.l.b16 %v1847
    %v4248 = vunpack.c.h.b16 %v1847
    %v4249 = vunpack.c.l.b16 %v1848
    %v4250 = vunpack.c.h.b16 %v1848
    %v4251 = vunpack.c.l.b16 %v1849
    %v4252 = vunpack.c.h.b16 %v1849
    %v4253 = vunpack.c.l.b16 %v1850
    %v4254 = vunpack.c.h.b16 %v1850
    %v4255 = vunpack.c.l.b16 %v1851
    %v4256 = vunpack.c.h.b16 %v1851
    %v4257 = vunpack.c.l.b16 %v1852
    %v4258 = vunpack.c.h.b16 %v1852
    %v4259 = vunpack.c.l.b16 %v1853
    %v4260 = vunpack.c.h.b16 %v1853
    %v4261 = vunpack.c.l.b16 %v1854
    %v4262 = vunpack.c.h.b16 %v1854
    %v4263 = vunpack.c.l.b16 %v1855
    %v4264 = vunpack.c.h.b16 %v1855
    %v4265 = vunpack.c.l.b16 %v1856
    %v4266 = vunpack.c.h.b16 %v1856
    %v4267 = vunpack.c.l.b16 %v1857
    %v4268 = vunpack.c.h.b16 %v1857
    %v4269 = vunpack.c.l.b16 %v1858
    %v4270 = vunpack.c.h.b16 %v1858
    %v4271 = vunpack.c.l.b16 %v1859
    %v4272 = vunpack.c.h.b16 %v1859
    %v4273 = vunpack.c.l.b16 %v1860
    %v4274 = vunpack.c.h.b16 %v1860
    %v4275 = vunpack.c.l.b16 %v1861
    %v4276 = vunpack.c.h.b16 %v1861
    %v4277 = vunpack.c.l.b16 %v1862
    %v4278 = vunpack.c.h.b16 %v1862
    %v4279 = vunpack.c.l.b16 %v1863
    %v4280 = vunpack.c.h.b16 %v1863
    %v4281 = vunpack.c.l.b16 %v1864
    %v4282 = vunpack.c.h.b16 %v1864
    %v4283 = vunpack.c.l.b16 %v1865
    %v4284 = vunpack.c.h.b16 %v1865
    %v4285 = vunpack.c.l.b16 %v1866
    %v4286 = vunpack.c.h.b16 %v1866
    %v4287 = vunpack.c.l.b16 %v1867
    %v4288 = vunpack.c.h.b16 %v1867
    %v4289 = vunpack.c.l.b16 %v1868
    %v4290 = vunpack.c.h.b16 %v1868
    %v4291 = vunpack.c.l.b16 %v1869
    %v4292 = vunpack.c.h.b16 %v1869
    %v4293 = vunpack.c.l.b16 %v1870
    %v4294 = vunpack.c.h.b16 %v1870
    %v4295 = vunpack.c.l.b16 %v1871
    %v4296 = vunpack.c.h.b16 %v1871
    %v4297 = vunpack.c.l.b16 %v1872
    %v4298 = vunpack.c.h.b16 %v1872
    %v4299 = vunpack.c.l.b16 %v1873
    %v4300 = vunpack.c.h.b16 %v1873
    %v4301 = vunpack.c.l.b16 %v1874
    %v4302 = vunpack.c.h.b16 %v1874
    %v4303 = vunpack.c.l.b16 %v1875
    %v4304 = vunpack.c.h.b16 %v1875
    %v4305 = vunpack.c.l.b16 %v1876
    %v4306 = vunpack.c.h.b16 %v1876
    %v4307 = vunpack.c.l.b16 %v1877
    %v4308 = vunpack.c.h.b16 %v1877
    %v4309 = vunpack.c.l.b16 %v1878
    %v4310 = vunpack.c.h.b16 %v1878
    %v4311 = vunpack.c.l.b16 %v1879
    %v4312 = vunpack.c.h.b16 %v1879
    %v4313 = vunpack.c.l.b16 %v1880
    %v4314 = vunpack.c.h.b16 %v1880
    %v4315 = vunpack.c.l.b16 %v1881
    %v4316 = vunpack.c.h.b16 %v1881
    %v4317 = vunpack.c.l.b16 %v1882
    %v4318 = vunpack.c.h.b16 %v1882
    %v4319 = vunpack.c.l.b16 %v1883
    %v4320 = vunpack.c.h.b16 %v1883
    %v4321 = vunpack.c.l.b16 %v1884
    %v4322 = vunpack.c.h.b16 %v1884
    %v4323 = vunpack.c.l.b16 %v1885
    %v4324 = vunpack.c.h.b16 %v1885
    %v4325 = vunpack.c.l.b16 %v1886
    %v4326 = vunpack.c.h.b16 %v1886
    %v4327 = vunpack.c.l.b16 %v1887
    %v4328 = vunpack.c.h.b16 %v1887
    %v4329 = vunpack.c.l.b16 %v1888
    %v4330 = vunpack.c.h.b16 %v1888
    %v4331 = vunpack.c.l.b16 %v1889
    %v4332 = vunpack.c.h.b16 %v1889
    %v4333 = vunpack.c.l.b16 %v1890
    %v4334 = vunpack.c.h.b16 %v1890
    %v4335 = vunpack.c.l.b16 %v1891
    %v4336 = vunpack.c.h.b16 %v1891
    %v4337 = vunpack.c.l.b16 %v1892
    %v4338 = vunpack.c.h.b16 %v1892
    %v4339 = vunpack.c.l.b16 %v1893
    %v4340 = vunpack.c.h.b16 %v1893
    %v4341 = vunpack.c.l.b16 %v1894
    %v4342 = vunpack.c.h.b16 %v1894
    %v4343 = vunpack.c.l.b16 %v1895
    %v4344 = vunpack.c.h.b16 %v1895
    %v4345 = vunpack.c.l.b16 %v1896
    %v4346 = vunpack.c.h.b16 %v1896
    %v4347 = vunpack.c.l.b16 %v1897
    %v4348 = vunpack.c.h.b16 %v1897
    %v4349 = vunpack.c.l.b16 %v1898
    %v4350 = vunpack.c.h.b16 %v1898
    %v4351 = vunpack.c.l.b16 %v1899
    %v4352 = vunpack.c.h.b16 %v1899
    %v4353 = vunpack.c.l.b16 %v1900
    %v4354 = vunpack.c.h.b16 %v1900
    %v4355 = vunpack.c.l.b16 %v1901
    %v4356 = vunpack.c.h.b16 %v1901
    %v4357 = vunpack.c.l.b16 %v1902
    %v4358 = vunpack.c.h.b16 %v1902
    %v4359 = vunpack.c.l.b16 %v1903
    %v4360 = vunpack.c.h.b16 %v1903
    %v4361 = vunpack.c.l.b16 %v1904
    %v4362 = vunpack.c.h.b16 %v1904
    %v4363 = vunpack.c.l.b16 %v1905
    %v4364 = vunpack.c.h.b16 %v1905
    %v4365 = vunpack.c.l.b16 %v1906
    %v4366 = vunpack.c.h.b16 %v1906
    %v4367 = vunpack.c.l.b16 %v1907
    %v4368 = vunpack.c.h.b16 %v1907
    %v4369 = vunpack.c.l.b16 %v1908
    %v4370 = vunpack.c.h.b16 %v1908
    %v4371 = vunpack.c.l.b16 %v1909
    %v4372 = vunpack.c.h.b16 %v1909
    %v4373 = vunpack.c.l.b16 %v1910
    %v4374 = vunpack.c.h.b16 %v1910
    %v4375 = vunpack.c.l.b16 %v1911
    %v4376 = vunpack.c.h.b16 %v1911
    %v4377 = vunpack.c.l.b16 %v1912
    %v4378 = vunpack.c.h.b16 %v1912
    %v4379 = vunpack.c.l.b16 %v1913
    %v4380 = vunpack.c.h.b16 %v1913
    %v4381 = vunpack.c.l.b16 %v1914
    %v4382 = vunpack.c.h.b16 %v1914
    %v4383 = vunpack.c.l.b16 %v1915
    %v4384 = vunpack.c.h.b16 %v1915
    %v4385 = vunpack.c.l.b16 %v1916
    %v4386 = vunpack.c.h.b16 %v1916
    %v4387 = vunpack.c.l.b16 %v1917
    %v4388 = vunpack.c.h.b16 %v1917
    %v4389 = vunpack.c.l.b16 %v1918
    %v4390 = vunpack.c.h.b16 %v1918
    %v4391 = vunpack.c.l.b16 %v1919
    %v4392 = vunpack.c.h.b16 %v1919
    %v4393 = vunpack.c.l.b16 %v1920
    %v4394 = vunpack.c.h.b16 %v1920
    %v4395 = vunpack.c.l.b16 %v1921
    %v4396 = vunpack.c.h.b16 %v1921
    %v4397 = vunpack.c.l.b16 %v1922
    %v4398 = vunpack.c.h.b16 %v1922
    %v4399 = vunpack.c.l.b16 %v1923
    %v4400 = vunpack.c.h.b16 %v1923
    %v4401 = vunpack.c.l.b16 %v1924
    %v4402 = vunpack.c.h.b16 %v1924
    %v4403 = vunpack.c.l.b16 %v1925
    %v4404 = vunpack.c.h.b16 %v1925
    %v4405 = vunpack.c.l.b16 %v1926
    %v4406 = vunpack.c.h.b16 %v1926
    %v4407 = vunpack.c.l.b16 %v1927
    %v4408 = vunpack.c.h.b16 %v1927
    %v4409 = vunpack.c.l.b16 %v1928
    %v4410 = vunpack.c.h.b16 %v1928
    %v4411 = vunpack.c.l.b16 %v1929
    %v4412 = vunpack.c.h.b16 %v1929
    %v4413 = vunpack.c.l.b16 %v1930
    %v4414 = vunpack.c.h.b16 %v1930
    %v4415 = vunpack.c.l.b16 %v1931
    %v4416 = vunpack.c.h.b16 %v1931
    %v4417 = vunpack.c.l.b16 %v1932
    %v4418 = vunpack.c.h.b16 %v1932
    %v4419 = vunpack.c.l.b16 %v1933
    %v4420 = vunpack.c.h.b16 %v1933
    %v4421 = vunpack.c.l.b16 %v1934
    %v4422 = vunpack.c.h.b16 %v1934
    %v4423 = vunpack.c.l.b16 %v1935
    %v4424 = vunpack.c.h.b16 %v1935
    %v4425 = vunpack.c.l.b16 %v1936
    %v4426 = vunpack.c.h.b16 %v1936
    %v4427 = vunpack.c.l.b16 %v1937
    %v4428 = vunpack.c.h.b16 %v1937
    %v4429 = vunpack.c.l.b16 %v1938
    %v4430 = vunpack.c.h.b16 %v1938
    %v4431 = vunpack.c.l.b16 %v1939
    %v4432 = vunpack.c.h.b16 %v1939
    %v4433 = vunpack.c.l.b16 %v1940
    %v4434 = vunpack.c.h.b16 %v1940
    %v4435 = vunpack.c.l.b16 %v1941
    %v4436 = vunpack.c.h.b16 %v1941
    %v4437 = vunpack.c.l.b16 %v1942
    %v4438 = vunpack.c.h.b16 %v1942
    %v4439 = vunpack.c.l.b16 %v1943
    %v4440 = vunpack.c.h.b16 %v1943
    %v4441 = vunpack.c.l.b16 %v1944
    %v4442 = vunpack.c.h.b16 %v1944
    %v4443 = vunpack.c.l.b16 %v1945
    %v4444 = vunpack.c.h.b16 %v1945
    %v4445 = vunpack.c.l.b16 %v1946
    %v4446 = vunpack.c.h.b16 %v1946
    %v4447 = vunpack.c.l.b16 %v1947
    %v4448 = vunpack.c.h.b16 %v1947
    %v4449 = vunpack.c.l.b16 %v1948
    %v4450 = vunpack.c.h.b16 %v1948
    %v4451 = vunpack.c.l.b16 %v1949
    %v4452 = vunpack.c.h.b16 %v1949
    %v4453 = vunpack.c.l.b16 %v1950
    %v4454 = vunpack.c.h.b16 %v1950
    %v4455 = vunpack.c.l.b16 %v1951
    %v4456 = vunpack.c.h.b16 %v1951
    %v4457 = vunpack.c.l.b16 %v1952
    %v4458 = vunpack.c.h.b16 %v1952
    %v4459 = vunpack.c.l.b16 %v1953
    %v4460 = vunpack.c.h.b16 %v1953
    %v4461 = vunpack.c.l.b16 %v1954
    %v4462 = vunpack.c.h.b16 %v1954
    %v4463 = vunpack.c.l.b16 %v1955
    %v4464 = vunpack.c.h.b16 %v1955
    %v4465 = vunpack.c.l.b16 %v1956
    %v4466 = vunpack.c.h.b16 %v1956
    %v4467 = vunpack.c.l.b16 %v1957
    %v4468 = vunpack.c.h.b16 %v1957
    %v4469 = vunpack.c.l.b16 %v1958
    %v4470 = vunpack.c.h.b16 %v1958
    %v4471 = vunpack.c.l.b16 %v1959
    %v4472 = vunpack.c.h.b16 %v1959
    %v4473 = vunpack.c.l.b16 %v1960
    %v4474 = vunpack.c.h.b16 %v1960
    %v4475 = vunpack.c.l.b16 %v1961
    %v4476 = vunpack.c.h.b16 %v1961
    %v4477 = vunpack.c.l.b16 %v1962
    %v4478 = vunpack.c.h.b16 %v1962
    %v4479 = vunpack.c.l.b16 %v1963
    %v4480 = vunpack.c.h.b16 %v1963
    %v4481 = vunpack.c.l.b16 %v1964
    %v4482 = vunpack.c.h.b16 %v1964
    %v4483 = vunpack.c.l.b16 %v1965
    %v4484 = vunpack.c.h.b16 %v1965
    %v4485 = vunpack.c.l.b16 %v1966
    %v4486 = vunpack.c.h.b16 %v1966
    %v4487 = vunpack.c.l.b16 %v1967
    %v4488 = vunpack.c.h.b16 %v1967
    %v4489 = vunpack.c.l.b16 %v1968
    %v4490 = vunpack.c.h.b16 %v1968
    %v4491 = vunpack.c.l.b16 %v1969
    %v4492 = vunpack.c.h.b16 %v1969
    %v4493 = vunpack.c.l.b16 %v1970
    %v4494 = vunpack.c.h.b16 %v1970
    %v4495 = vunpack.c.l.b16 %v1971
    %v4496 = vunpack.c.h.b16 %v1971
    %v4497 = vunpack.c.l.b16 %v1972
    %v4498 = vunpack.c.h.b16 %v1972
    %v4499 = vunpack.c.l.b16 %v1973
    %v4500 = vunpack.c.h.b16 %v1973
    %v4501 = vunpack.c.l.b16 %v1974
    %v4502 = vunpack.c.h.b16 %v1974
    %v4503 = vunpack.c.l.b16 %v1975
    %v4504 = vunpack.c.h.b16 %v1975
    %v4505 = vunpack.c.l.b16 %v1976
    %v4506 = vunpack.c.h.b16 %v1976
    %v4507 = vunpack.c.l.b16 %v1977
    %v4508 = vunpack.c.h.b16 %v1977
    %v4509 = vunpack.c.l.b16 %v1978
    %v4510 = vunpack.c.h.b16 %v1978
    %v4511 = vunpack.c.l.b16 %v1979
    %v4512 = vunpack.c.h.b16 %v1979
    %v4513 = vunpack.c.l.b16 %v1980
    %v4514 = vunpack.c.h.b16 %v1980
    %v4515 = vunpack.c.l.b16 %v1981
    %v4516 = vunpack.c.h.b16 %v1981
    %v4517 = vunpack.c.l.b16 %v1982
    %v4518 = vunpack.c.h.b16 %v1982
    %v4519 = vunpack.c.l.b16 %v1983
    %v4520 = vunpack.c.h.b16 %v1983
    %v4521 = vunpack.c.l.b16 %v1984
    %v4522 = vunpack.c.h.b16 %v1984
    %v4523 = vunpack.c.l.b16 %v1985
    %v4524 = vunpack.c.h.b16 %v1985
    %v4525 = vunpack.c.l.b16 %v1986
    %v4526 = vunpack.c.h.b16 %v1986
    %v4527 = vunpack.c.l.b16 %v1987
    %v4528 = vunpack.c.h.b16 %v1987
    %v4529 = vunpack.c.l.b16 %v1988
    %v4530 = vunpack.c.h.b16 %v1988
    %v4531 = vunpack.c.l.b16 %v1989
    %v4532 = vunpack.c.h.b16 %v1989
    %v4533 = vunpack.c.l.b16 %v1990
    %v4534 = vunpack.c.h.b16 %v1990
    %v4535 = vunpack.c.l.b16 %v1991
    %v4536 = vunpack.c.h.b16 %v1991
    %v4537 = vunpack.c.l.b16 %v1992
    %v4538 = vunpack.c.h.b16 %v1992
    %v4539 = vunpack.c.l.b16 %v1993
    %v4540 = vunpack.c.h.b16 %v1993
    %v4541 = vunpack.c.l.b16 %v1994
    %v4542 = vunpack.c.h.b16 %v1994
    %v4543 = vunpack.c.l.b16 %v1995
    %v4544 = vunpack.c.h.b16 %v1995
    %v4545 = vunpack.c.l.b16 %v1996
    %v4546 = vunpack.c.h.b16 %v1996
    %v4547 = vunpack.c.l.b16 %v1997
    %v4548 = vunpack.c.h.b16 %v1997
    %v4549 = vunpack.c.l.b16 %v1998
    %v4550 = vunpack.c.h.b16 %v1998
    %v4551 = vunpack.c.l.b16 %v1999
    %v4552 = vunpack.c.h.b16 %v1999
    %v4553 = vunpack.c.l.b16 %v2000
    %v4554 = vunpack.c.h.b16 %v2000
    %v4555 = vunpack.c.l.b16 %v2001
    %v4556 = vunpack.c.h.b16 %v2001
    %v4557 = vunpack.c.l.b16 %v2002
    %v4558 = vunpack.c.h.b16 %v2002
    %v4559 = vunpack.c.l.b16 %v2003
    %v4560 = vunpack.c.h.b16 %v2003
    %v4561 = vunpack.c.l.b16 %v2004
    %v4562 = vunpack.c.h.b16 %v2004
    %v4563 = vunpack.c.l.b16 %v2005
    %v4564 = vunpack.c.h.b16 %v2005
    %v4565 = vunpack.c.l.b16 %v2006
    %v4566 = vunpack.c.h.b16 %v2006
    %v4567 = vunpack.c.l.b16 %v2007
    %v4568 = vunpack.c.h.b16 %v2007
    %v4569 = vunpack.c.l.b16 %v2008
    %v4570 = vunpack.c.h.b16 %v2008
    %v4571 = vunpack.c.l.b16 %v2009
    %v4572 = vunpack.c.h.b16 %v2009
    %v4573 = vunpack.c.l.b16 %v2010
    %v4574 = vunpack.c.h.b16 %v2010
    %v4575 = vunpack.c.l.b16 %v2011
    %v4576 = vunpack.c.h.b16 %v2011
    %v4577 = vunpack.c.l.b16 %v2012
    %v4578 = vunpack.c.h.b16 %v2012
    %v4579 = vunpack.c.l.b16 %v2013
    %v4580 = vunpack.c.h.b16 %v2013
    %v4581 = vunpack.c.l.b16 %v2014
    %v4582 = vunpack.c.h.b16 %v2014
    %v4583 = vunpack.c.l.b16 %v2015
    %v4584 = vunpack.c.h.b16 %v2015
    %v4585 = vunpack.c.l.b16 %v2016
    %v4586 = vunpack.c.h.b16 %v2016
    %v4587 = vunpack.c.l.b16 %v2017
    %v4588 = vunpack.c.h.b16 %v2017
    %v4589 = vunpack.c.l.b16 %v2018
    %v4590 = vunpack.c.h.b16 %v2018
    %v4591 = vunpack.c.l.b16 %v2019
    %v4592 = vunpack.c.h.b16 %v2019
    %v4593 = vunpack.c.l.b16 %v2020
    %v4594 = vunpack.c.h.b16 %v2020
    %v4595 = vunpack.c.l.b16 %v2021
    %v4596 = vunpack.c.h.b16 %v2021
    %v4597 = vunpack.c.l.b16 %v2022
    %v4598 = vunpack.c.h.b16 %v2022
    %v4599 = vunpack.c.l.b16 %v2023
    %v4600 = vunpack.c.h.b16 %v2023
    %v4601 = vunpack.c.l.b16 %v2024
    %v4602 = vunpack.c.h.b16 %v2024
    %v4603 = vunpack.c.l.b16 %v2025
    %v4604 = vunpack.c.h.b16 %v2025
    %v4605 = vunpack.c.l.b16 %v2026
    %v4606 = vunpack.c.h.b16 %v2026
    %v4607 = vunpack.c.l.b16 %v2027
    %v4608 = vunpack.c.h.b16 %v2027
    %v4609 = vunpack.c.l.b16 %v2028
    %v4610 = vunpack.c.h.b16 %v2028
    %v4611 = vunpack.c.l.b16 %v2029
    %v4612 = vunpack.c.h.b16 %v2029
    %v4613 = vunpack.c.l.b16 %v2030
    %v4614 = vunpack.c.h.b16 %v2030
    %v4615 = vunpack.c.l.b16 %v2031
    %v4616 = vunpack.c.h.b16 %v2031
    %v4617 = vunpack.c.l.b16 %v2032
    %v4618 = vunpack.c.h.b16 %v2032
    %v4619 = vunpack.c.l.b16 %v2033
    %v4620 = vunpack.c.h.b16 %v2033
    %v4621 = vunpack.c.l.b16 %v2034
    %v4622 = vunpack.c.h.b16 %v2034
    %v4623 = vunpack.c.l.b16 %v2035
    %v4624 = vunpack.c.h.b16 %v2035
    %v4625 = vunpack.c.l.b16 %v2036
    %v4626 = vunpack.c.h.b16 %v2036
    %v4627 = vunpack.c.l.b16 %v2037
    %v4628 = vunpack.c.h.b16 %v2037
    %v4629 = vunpack.c.l.b16 %v2038
    %v4630 = vunpack.c.h.b16 %v2038
    %v4631 = vunpack.c.l.b16 %v2039
    %v4632 = vunpack.c.h.b16 %v2039
    %v4633 = vunpack.c.l.b16 %v2040
    %v4634 = vunpack.c.h.b16 %v2040
    %v4635 = vunpack.c.l.b16 %v2041
    %v4636 = vunpack.c.h.b16 %v2041
    %v4637 = vunpack.c.l.b16 %v2042
    %v4638 = vunpack.c.h.b16 %v2042
    %v4639 = vunpack.c.l.b16 %v2043
    %v4640 = vunpack.c.h.b16 %v2043
    %v4641 = vunpack.c.l.b16 %v2044
    %v4642 = vunpack.c.h.b16 %v2044
    %v4643 = vunpack.c.l.b16 %v2045
    %v4644 = vunpack.c.h.b16 %v2045
    %v4645 = vunpack.c.l.b16 %v2046
    %v4646 = vunpack.c.h.b16 %v2046
    %v4647 = vunpack.c.l.b16 %v2047
    %v4648 = vunpack.c.h.b16 %v2047
    %v4649 = vunpack.c.l.b16 %v2048
    %v4650 = vunpack.c.h.b16 %v2048
    %v4651 = vunpack.c.l.b16 %v2049
    %v4652 = vunpack.c.h.b16 %v2049
    %v4653 = vunpack.c.l.b16 %v2050
    %v4654 = vunpack.c.h.b16 %v2050
    %v4655 = vunpack.c.l.b16 %v2051
    %v4656 = vunpack.c.h.b16 %v2051
    %v4657 = vunpack.c.l.b16 %v2052
    %v4658 = vunpack.c.h.b16 %v2052
    %v4659 = vunpack.c.l.b16 %v2053
    %v4660 = vunpack.c.h.b16 %v2053
    %v4661 = vunpack.c.l.b16 %v2054
    %v4662 = vunpack.c.h.b16 %v2054
    %v4663 = vunpack.c.l.b16 %v2055
    %v4664 = vunpack.c.h.b16 %v2055
    %v4665 = vunpack.c.l.b16 %v2056
    %v4666 = vunpack.c.h.b16 %v2056
    %v4667 = vunpack.c.l.b16 %v2057
    %v4668 = vunpack.c.h.b16 %v2057
    %v4669 = vunpack.c.l.b16 %v2058
    %v4670 = vunpack.c.h.b16 %v2058
    %v4671 = vunpack.c.l.b16 %v2059
    %v4672 = vunpack.c.h.b16 %v2059
    %v4673 = vunpack.c.l.b16 %v2060
    %v4674 = vunpack.c.h.b16 %v2060
    %v4675 = vunpack.c.l.b16 %v2061
    %v4676 = vunpack.c.h.b16 %v2061
    %v4677 = vunpack.c.l.b16 %v2062
    %v4678 = vunpack.c.h.b16 %v2062
    %v4679 = vunpack.c.l.b16 %v2063
    %v4680 = vunpack.c.h.b16 %v2063
    %v4681 = vunpack.c.l.b16 %v2064
    %v4682 = vunpack.c.h.b16 %v2064
    %v4683 = vunpack.c.l.b16 %v2065
    %v4684 = vunpack.c.h.b16 %v2065
    %v4685 = vunpack.c.l.b16 %v2066
    %v4686 = vunpack.c.h.b16 %v2066
    %v4687 = vunpack.c.l.b16 %v2067
    %v4688 = vunpack.c.h.b16 %v2067
    %v4689 = vunpack.c.l.b16 %v2068
    %v4690 = vunpack.c.h.b16 %v2068
    %v4691 = vunpack.c.l.b16 %v2069
    %v4692 = vunpack.c.h.b16 %v2069
    %v4693 = vunpack.c.l.b16 %v2070
    %v4694 = vunpack.c.h.b16 %v2070
    %v4695 = vunpack.c.l.b16 %v2071
    %v4696 = vunpack.c.h.b16 %v2071
    %v4697 = vunpack.c.l.b16 %v2072
    %v4698 = vunpack.c.h.b16 %v2072
    %v4699 = vunpack.c.l.b16 %v2073
    %v4700 = vunpack.c.h.b16 %v2073
    %v4701 = vunpack.c.l.b16 %v2074
    %v4702 = vunpack.c.h.b16 %v2074
    %v4703 = vunpack.c.l.b16 %v2075
    %v4704 = vunpack.c.h.b16 %v2075
    %v4705 = vunpack.c.l.b16 %v2076
    %v4706 = vunpack.c.h.b16 %v2076
    %v4707 = vunpack.c.l.b16 %v2077
    %v4708 = vunpack.c.h.b16 %v2077
    %v4709 = vunpack.c.l.b16 %v2078
    %v4710 = vunpack.c.h.b16 %v2078
    %v4711 = vunpack.c.l.b16 %v2079
    %v4712 = vunpack.c.h.b16 %v2079
    %v4713 = vunpack.c.l.b16 %v2080
    %v4714 = vunpack.c.h.b16 %v2080
    %v4715 = vunpack.c.l.b16 %v2081
    %v4716 = vunpack.c.h.b16 %v2081
    %v4717 = vunpack.c.l.b16 %v2082
    %v4718 = vunpack.c.h.b16 %v2082
    %v4719 = vunpack.c.l.b16 %v2083
    %v4720 = vunpack.c.h.b16 %v2083
    %v4721 = vunpack.c.l.b16 %v2084
    %v4722 = vunpack.c.h.b16 %v2084
    %v4723 = vunpack.c.l.b16 %v2085
    %v4724 = vunpack.c.h.b16 %v2085
    %v4725 = vunpack.c.l.b16 %v2086
    %v4726 = vunpack.c.h.b16 %v2086
    %v4727 = vunpack.c.l.b16 %v2087
    %v4728 = vunpack.c.h.b16 %v2087
    %v4729 = vunpack.c.l.b16 %v2088
    %v4730 = vunpack.c.h.b16 %v2088
    %v4731 = vunpack.c.l.b16 %v2089
    %v4732 = vunpack.c.h.b16 %v2089
    %v4733 = vunpack.c.l.b16 %v2090
    %v4734 = vunpack.c.h.b16 %v2090
    %v4735 = vunpack.c.l.b16 %v2091
    %v4736 = vunpack.c.h.b16 %v2091
    %v4737 = vunpack.c.l.b16 %v2092
    %v4738 = vunpack.c.h.b16 %v2092
    %v4739 = vunpack.c.l.b16 %v2093
    %v4740 = vunpack.c.h.b16 %v2093
    %v4741 = vunpack.c.l.b16 %v2094
    %v4742 = vunpack.c.h.b16 %v2094
    %v4743 = vunpack.c.l.b16 %v2095
    %v4744 = vunpack.c.h.b16 %v2095
    %v4745 = vunpack.c.l.b16 %v2096
    %v4746 = vunpack.c.h.b16 %v2096
    %v4747 = vunpack.c.l.b16 %v2097
    %v4748 = vunpack.c.h.b16 %v2097
    %v4749 = vunpack.c.l.b16 %v2098
    %v4750 = vunpack.c.h.b16 %v2098
    %v4751 = vunpack.c.l.b16 %v2099
    %v4752 = vunpack.c.h.b16 %v2099
    %v4753 = vunpack.c.l.b16 %v2100
    %v4754 = vunpack.c.h.b16 %v2100
    %v4755 = vunpack.c.l.b16 %v2101
    %v4756 = vunpack.c.h.b16 %v2101
    %v4757 = vunpack.c.l.b16 %v2102
    %v4758 = vunpack.c.h.b16 %v2102
    %v4759 = vunpack.c.l.b16 %v2103
    %v4760 = vunpack.c.h.b16 %v2103
    %v4761 = vunpack.c.l.b16 %v2104
    %v4762 = vunpack.c.h.b16 %v2104
    %v4763 = vunpack.c.l.b16 %v2105
    %v4764 = vunpack.c.h.b16 %v2105
    %v4765 = vunpack.c.l.b16 %v2106
    %v4766 = vunpack.c.h.b16 %v2106
    %v4767 = vunpack.c.l.b16 %v2107
    %v4768 = vunpack.c.h.b16 %v2107
    %v4769 = vunpack.c.l.b16 %v2108
    %v4770 = vunpack.c.h.b16 %v2108
    %v4771 = vunpack.c.l.b16 %v2109
    %v4772 = vunpack.c.h.b16 %v2109
    %v4773 = vunpack.c.l.b16 %v2110
    %v4774 = vunpack.c.h.b16 %v2110
    %v4775 = vunpack.c.l.b16 %v2111
    %v4776 = vunpack.c.h.b16 %v2111
    %v4777 = vunpack.c.l.b16 %v2112
    %v4778 = vunpack.c.h.b16 %v2112
    %v4779 = vunpack.c.l.b16 %v2113
    %v4780 = vunpack.c.h.b16 %v2113
    %v4781 = vunpack.c.l.b16 %v2114
    %v4782 = vunpack.c.h.b16 %v2114
    %v4783 = vunpack.c.l.b16 %v2115
    %v4784 = vunpack.c.h.b16 %v2115
    %v4785 = vunpack.c.l.b16 %v2116
    %v4786 = vunpack.c.h.b16 %v2116
    %v4787 = vunpack.c.l.b16 %v2117
    %v4788 = vunpack.c.h.b16 %v2117
    %v4789 = vunpack.c.l.b16 %v2118
    %v4790 = vunpack.c.h.b16 %v2118
    %v4791 = vunpack.c.l.b16 %v2119
    %v4792 = vunpack.c.h.b16 %v2119
    %v4793 = vunpack.c.l.b16 %v2120
    %v4794 = vunpack.c.h.b16 %v2120
    %v4795 = vunpack.c.l.b16 %v2121
    %v4796 = vunpack.c.h.b16 %v2121
    %v4797 = vunpack.c.l.b16 %v2122
    %v4798 = vunpack.c.h.b16 %v2122
    %v4799 = vunpack.c.l.b16 %v2123
    %v4800 = vunpack.c.h.b16 %v2123
    %v4801 = vunpack.c.l.b16 %v2124
    %v4802 = vunpack.c.h.b16 %v2124
    %v4803 = vunpack.c.l.b16 %v2125
    %v4804 = vunpack.c.h.b16 %v2125
    %v4805 = vunpack.c.l.b16 %v2126
    %v4806 = vunpack.c.h.b16 %v2126
    %v4807 = vunpack.c.l.b16 %v2127
    %v4808 = vunpack.c.h.b16 %v2127
    %v4809 = vunpack.c.l.b16 %v2128
    %v4810 = vunpack.c.h.b16 %v2128
    %v4811 = vunpack.c.l.b16 %v2129
    %v4812 = vunpack.c.h.b16 %v2129
    %v4813 = vunpack.c.l.b16 %v2130
    %v4814 = vunpack.c.h.b16 %v2130
    %v4815 = vunpack.c.l.b16 %v2131
    %v4816 = vunpack.c.h.b16 %v2131
    %v4817 = vunpack.c.l.b16 %v2132
    %v4818 = vunpack.c.h.b16 %v2132
    %v4819 = vunpack.c.l.b16 %v2133
    %v4820 = vunpack.c.h.b16 %v2133
    %v4821 = vunpack.c.l.b16 %v2134
    %v4822 = vunpack.c.h.b16 %v2134
    %v4823 = vunpack.c.l.b16 %v2135
    %v4824 = vunpack.c.h.b16 %v2135
    %v4825 = vunpack.c.l.b16 %v2136
    %v4826 = vunpack.c.h.b16 %v2136
    %v4827 = vunpack.c.l.b16 %v2137
    %v4828 = vunpack.c.h.b16 %v2137
    %v4829 = vunpack.c.l.b16 %v2138
    %v4830 = vunpack.c.h.b16 %v2138
    %v4831 = vunpack.c.l.b16 %v2139
    %v4832 = vunpack.c.h.b16 %v2139
    %v4833 = vunpack.c.l.b16 %v2140
    %v4834 = vunpack.c.h.b16 %v2140
    %v4835 = vunpack.c.l.b16 %v2141
    %v4836 = vunpack.c.h.b16 %v2141
    %v4837 = vunpack.c.l.b16 %v2142
    %v4838 = vunpack.c.h.b16 %v2142
    %v4839 = vunpack.c.l.b16 %v2143
    %v4840 = vunpack.c.h.b16 %v2143
    %v4841 = vunpack.c.l.b16 %v2144
    %v4842 = vunpack.c.h.b16 %v2144
    %v4843 = vunpack.c.l.b16 %v2145
    %v4844 = vunpack.c.h.b16 %v2145
    %v4845 = vunpack.c.l.b16 %v2146
    %v4846 = vunpack.c.h.b16 %v2146
    %v4847 = vunpack.c.l.b16 %v2147
    %v4848 = vunpack.c.h.b16 %v2147
    %v4849 = vunpack.c.l.b16 %v2148
    %v4850 = vunpack.c.h.b16 %v2148
    %v4851 = vunpack.c.l.b16 %v2149
    %v4852 = vunpack.c.h.b16 %v2149
    %v4853 = vunpack.c.l.b16 %v2150
    %v4854 = vunpack.c.h.b16 %v2150
    %v4855 = vunpack.c.l.b16 %v2151
    %v4856 = vunpack.c.h.b16 %v2151
    %v4857 = vunpack.c.l.b16 %v2152
    %v4858 = vunpack.c.h.b16 %v2152
    %v4859 = vunpack.c.l.b16 %v2153
    %v4860 = vunpack.c.h.b16 %v2153
    %v4861 = vunpack.c.l.b16 %v2154
    %v4862 = vunpack.c.h.b16 %v2154
    %v4863 = vunpack.c.l.b16 %v2155
    %v4864 = vunpack.c.h.b16 %v2155
    %v4865 = vunpack.c.l.b16 %v2156
    %v4866 = vunpack.c.h.b16 %v2156
    %v4867 = vunpack.c.l.b16 %v2157
    %v4868 = vunpack.c.h.b16 %v2157
    %v4869 = vunpack.c.l.b16 %v2158
    %v4870 = vunpack.c.h.b16 %v2158
    %v4871 = vunpack.c.l.b16 %v2159
    %v4872 = vunpack.c.h.b16 %v2159
    %v4873 = vunpack.c.l.b16 %v2160
    %v4874 = vunpack.c.h.b16 %v2160
    %v4875 = vunpack.c.l.b16 %v2161
    %v4876 = vunpack.c.h.b16 %v2161
    %v4877 = vunpack.c.l.b16 %v2162
    %v4878 = vunpack.c.h.b16 %v2162
    %v4879 = vunpack.c.l.b16 %v2163
    %v4880 = vunpack.c.h.b16 %v2163
    %v4881 = vunpack.c.l.b16 %v2164
    %v4882 = vunpack.c.h.b16 %v2164
    %v4883 = vunpack.c.l.b16 %v2165
    %v4884 = vunpack.c.h.b16 %v2165
    %v4885 = vunpack.c.l.b16 %v2166
    %v4886 = vunpack.c.h.b16 %v2166
    %v4887 = vunpack.c.l.b16 %v2167
    %v4888 = vunpack.c.h.b16 %v2167
    %v4889 = vunpack.c.l.b16 %v2168
    %v4890 = vunpack.c.h.b16 %v2168
    %v4891 = vunpack.c.l.b16 %v2169
    %v4892 = vunpack.c.h.b16 %v2169
    %v4893 = vunpack.c.l.b16 %v2170
    %v4894 = vunpack.c.h.b16 %v2170
    %v4895 = vunpack.c.l.b16 %v2171
    %v4896 = vunpack.c.h.b16 %v2171
    %v4897 = vunpack.c.l.b16 %v2172
    %v4898 = vunpack.c.h.b16 %v2172
    %v4899 = vunpack.c.l.b16 %v2173
    %v4900 = vunpack.c.h.b16 %v2173
    %v4901 = vunpack.c.l.b16 %v2174
    %v4902 = vunpack.c.h.b16 %v2174
    %v4903 = vunpack.c.l.b16 %v2175
    %v4904 = vunpack.c.h.b16 %v2175
    %v4905 = vunpack.c.l.b16 %v2176
    %v4906 = vunpack.c.h.b16 %v2176
    %v4907 = vunpack.c.l.b16 %v2177
    %v4908 = vunpack.c.h.b16 %v2177
    %v4909 = vunpack.c.l.b16 %v2178
    %v4910 = vunpack.c.h.b16 %v2178
    %v4911 = vunpack.c.l.b16 %v2179
    %v4912 = vunpack.c.h.b16 %v2179
    %v4913 = vunpack.c.l.b16 %v2180
    %v4914 = vunpack.c.h.b16 %v2180
    %v4915 = vunpack.c.l.b16 %v2181
    %v4916 = vunpack.c.h.b16 %v2181
    %v4917 = vunpack.c.l.b16 %v2182
    %v4918 = vunpack.c.h.b16 %v2182
    %v4919 = vunpack.c.l.b16 %v2183
    %v4920 = vunpack.c.h.b16 %v2183
    %v4921 = vunpack.c.l.b16 %v2184
    %v4922 = vunpack.c.h.b16 %v2184
    %v4923 = vunpack.c.l.b16 %v2185
    %v4924 = vunpack.c.h.b16 %v2185
    %v4925 = vunpack.c.l.b16 %v2186
    %v4926 = vunpack.c.h.b16 %v2186
    %v4927 = vunpack.c.l.b16 %v2187
    %v4928 = vunpack.c.h.b16 %v2187
    %v4929 = vunpack.c.l.b16 %v2188
    %v4930 = vunpack.c.h.b16 %v2188
    %v4931 = vunpack.c.l.b16 %v2189
    %v4932 = vunpack.c.h.b16 %v2189
    %v4933 = vunpack.c.l.b16 %v2190
    %v4934 = vunpack.c.h.b16 %v2190
    %v4935 = vunpack.c.l.b16 %v2191
    %v4936 = vunpack.c.h.b16 %v2191
    %v4937 = vunpack.c.l.b16 %v2192
    %v4938 = vunpack.c.h.b16 %v2192
    %v4939 = vunpack.c.l.b16 %v2193
    %v4940 = vunpack.c.h.b16 %v2193
    %v4941 = vunpack.c.l.b16 %v2194
    %v4942 = vunpack.c.h.b16 %v2194
    %v4943 = vunpack.c.l.b16 %v2195
    %v4944 = vunpack.c.h.b16 %v2195
    %v4945 = vunpack.c.l.b16 %v2196
    %v4946 = vunpack.c.h.b16 %v2196
    %v4947 = vunpack.c.l.b16 %v2197
    %v4948 = vunpack.c.h.b16 %v2197
    %v4949 = vunpack.c.l.b16 %v2198
    %v4950 = vunpack.c.h.b16 %v2198
    %v4951 = vunpack.c.l.b16 %v2199
    %v4952 = vunpack.c.h.b16 %v2199
    %v4953 = vunpack.c.l.b16 %v2200
    %v4954 = vunpack.c.h.b16 %v2200
    %v4955 = vunpack.c.l.b16 %v2201
    %v4956 = vunpack.c.h.b16 %v2201
    %v4957 = vunpack.c.l.b16 %v2202
    %v4958 = vunpack.c.h.b16 %v2202
    %v4959 = vunpack.c.l.b16 %v2203
    %v4960 = vunpack.c.h.b16 %v2203
    %v4961 = vunpack.c.l.b16 %v2204
    %v4962 = vunpack.c.h.b16 %v2204
    %v4963 = vunpack.c.l.b16 %v2205
    %v4964 = vunpack.c.h.b16 %v2205
    %v4965 = vunpack.c.l.b16 %v2206
    %v4966 = vunpack.c.h.b16 %v2206
    %v4967 = vunpack.c.l.b16 %v2207
    %v4968 = vunpack.c.h.b16 %v2207
    %v4969 = vunpack.c.l.b16 %v2208
    %v4970 = vunpack.c.h.b16 %v2208
    %v4971 = vunpack.c.l.b16 %v2209
    %v4972 = vunpack.c.h.b16 %v2209
    %v4973 = vunpack.c.l.b16 %v2210
    %v4974 = vunpack.c.h.b16 %v2210
    %v4975 = vunpack.c.l.b16 %v2211
    %v4976 = vunpack.c.h.b16 %v2211
    %v4977 = vunpack.c.l.b16 %v2212
    %v4978 = vunpack.c.h.b16 %v2212
    %v4979 = vunpack.c.l.b16 %v2213
    %v4980 = vunpack.c.h.b16 %v2213
    %v4981 = vunpack.c.l.b16 %v2214
    %v4982 = vunpack.c.h.b16 %v2214
    %v4983 = vunpack.c.l.b16 %v2215
    %v4984 = vunpack.c.h.b16 %v2215
    %v4985 = vunpack.c.l.b16 %v2216
    %v4986 = vunpack.c.h.b16 %v2216
    %v4987 = vunpack.c.l.b16 %v2217
    %v4988 = vunpack.c.h.b16 %v2217
    %v4989 = vunpack.c.l.b16 %v2218
    %v4990 = vunpack.c.h.b16 %v2218
    %v4991 = vunpack.c.l.b16 %v2219
    %v4992 = vunpack.c.h.b16 %v2219
    %v4993 = vunpack.c.l.b16 %v2220
    %v4994 = vunpack.c.h.b16 %v2220
    %v4995 = vunpack.c.l.b16 %v2221
    %v4996 = vunpack.c.h.b16 %v2221
    %v4997 = vunpack.c.l.b16 %v2222
    %v4998 = vunpack.c.h.b16 %v2222
    %v4999 = vunpack.c.l.b16 %v2223
    %v5000 = vunpack.c.h.b16 %v2223
    %v5001 = vunpack.c.l.b16 %v2224
    %v5002 = vunpack.c.h.b16 %v2224
    %v5003 = vunpack.c.l.b16 %v2225
    %v5004 = vunpack.c.h.b16 %v2225
    %v5005 = vunpack.c.l.b16 %v2226
    %v5006 = vunpack.c.h.b16 %v2226
    %v5007 = vunpack.c.l.b16 %v2227
    %v5008 = vunpack.c.h.b16 %v2227
    %v5009 = vunpack.c.l.b16 %v2228
    %v5010 = vunpack.c.h.b16 %v2228
    %v5011 = vunpack.c.l.b16 %v2229
    %v5012 = vunpack.c.h.b16 %v2229
    %v5013 = vunpack.c.l.b16 %v2230
    %v5014 = vunpack.c.h.b16 %v2230
    %v5015 = vunpack.c.l.b16 %v2231
    %v5016 = vunpack.c.h.b16 %v2231
    %v5017 = vunpack.c.l.b16 %v2232
    %v5018 = vunpack.c.h.b16 %v2232
    %v5019 = vunpack.c.l.b16 %v2233
    %v5020 = vunpack.c.h.b16 %v2233
    %v5021 = vunpack.c.l.b16 %v2234
    %v5022 = vunpack.c.h.b16 %v2234
    %v5023 = vunpack.c.l.b16 %v2235
    %v5024 = vunpack.c.h.b16 %v2235
    %v5025 = vunpack.c.l.b16 %v2236
    %v5026 = vunpack.c.h.b16 %v2236
    %v5027 = vunpack.c.l.b16 %v2237
    %v5028 = vunpack.c.h.b16 %v2237
    %v5029 = vunpack.c.l.b16 %v2238
    %v5030 = vunpack.c.h.b16 %v2238
    %v5031 = vunpack.c.l.b16 %v2239
    %v5032 = vunpack.c.h.b16 %v2239
    %v5033 = vunpack.c.l.b16 %v2240
    %v5034 = vunpack.c.h.b16 %v2240
    %v5035 = vunpack.c.l.b16 %v2241
    %v5036 = vunpack.c.h.b16 %v2241
    %v5037 = vunpack.c.l.b16 %v2242
    %v5038 = vunpack.c.h.b16 %v2242
    %v5039 = vunpack.c.l.b16 %v2243
    %v5040 = vunpack.c.h.b16 %v2243
    %v5041 = vunpack.c.l.b16 %v2244
    %v5042 = vunpack.c.h.b16 %v2244
    %v5043 = vunpack.c.l.b16 %v2245
    %v5044 = vunpack.c.h.b16 %v2245
    %v5045 = vunpack.c.l.b16 %v2246
    %v5046 = vunpack.c.h.b16 %v2246
    %v5047 = vunpack.c.l.b16 %v2247
    %v5048 = vunpack.c.h.b16 %v2247
    %v5049 = vunpack.c.l.b16 %v2248
    %v5050 = vunpack.c.h.b16 %v2248
    %v5051 = vunpack.c.l.b16 %v2249
    %v5052 = vunpack.c.h.b16 %v2249
    %v5053 = vunpack.c.l.b16 %v2250
    %v5054 = vunpack.c.h.b16 %v2250
    %v5055 = vunpack.c.l.b16 %v2251
    %v5056 = vunpack.c.h.b16 %v2251
    %v5057 = vunpack.c.l.b16 %v2252
    %v5058 = vunpack.c.h.b16 %v2252
    %v5059 = vunpack.c.l.b16 %v2253
    %v5060 = vunpack.c.h.b16 %v2253
    %v5061 = vunpack.c.l.b16 %v2254
    %v5062 = vunpack.c.h.b16 %v2254
    %v5063 = vunpack.c.l.b16 %v2255
    %v5064 = vunpack.c.h.b16 %v2255
    %v5065 = vunpack.c.l.b16 %v2256
    %v5066 = vunpack.c.h.b16 %v2256
    %v5067 = vunpack.c.l.b16 %v2257
    %v5068 = vunpack.c.h.b16 %v2257
    %v5069 = vunpack.c.l.b16 %v2258
    %v5070 = vunpack.c.h.b16 %v2258
    %v5071 = vunpack.c.l.b16 %v2259
    %v5072 = vunpack.c.h.b16 %v2259
    %v5073 = vunpack.c.l.b16 %v2260
    %v5074 = vunpack.c.h.b16 %v2260
    %v5075 = vunpack.c.l.b16 %v2261
    %v5076 = vunpack.c.h.b16 %v2261
    %v5077 = vunpack.c.l.b16 %v2262
    %v5078 = vunpack.c.h.b16 %v2262
    %v5079 = vunpack.c.l.b16 %v2263
    %v5080 = vunpack.c.h.b16 %v2263
    %v5081 = vunpack.c.l.b16 %v2264
    %v5082 = vunpack.c.h.b16 %v2264
    %v5083 = vunpack.c.l.b16 %v2265
    %v5084 = vunpack.c.h.b16 %v2265
    %v5085 = vunpack.c.l.b16 %v2266
    %v5086 = vunpack.c.h.b16 %v2266
    %v5087 = vunpack.c.l.b16 %v2267
    %v5088 = vunpack.c.h.b16 %v2267
    %v5089 = vunpack.c.l.b16 %v2268
    %v5090 = vunpack.c.h.b16 %v2268
    %v5091 = vunpack.c.l.b16 %v2269
    %v5092 = vunpack.c.h.b16 %v2269
    %v5093 = vunpack.c.l.b16 %v2270
    %v5094 = vunpack.c.h.b16 %v2270
    %v5095 = vunpack.c.l.b16 %v2271
    %v5096 = vunpack.c.h.b16 %v2271
    %v5097 = vunpack.c.l.b16 %v2272
    %v5098 = vunpack.c.h.b16 %v2272
    %v5099 = vunpack.c.l.b16 %v2273
    %v5100 = vunpack.c.h.b16 %v2273
    %v5101 = vunpack.c.l.b16 %v2274
    %v5102 = vunpack.c.h.b16 %v2274
    %v5103 = vunpack.c.l.b16 %v2275
    %v5104 = vunpack.c.h.b16 %v2275
    %v5105 = vunpack.c.l.b16 %v2276
    %v5106 = vunpack.c.h.b16 %v2276
    %v5107 = vunpack.c.l.b16 %v2277
    %v5108 = vunpack.c.h.b16 %v2277
    %v5109 = vunpack.c.l.b16 %v2278
    %v5110 = vunpack.c.h.b16 %v2278
    %v5111 = vunpack.c.l.b16 %v2279
    %v5112 = vunpack.c.h.b16 %v2279
    %v5113 = vunpack.c.l.b16 %v2280
    %v5114 = vunpack.c.h.b16 %v2280
    %v5115 = vunpack.c.l.b16 %v2281
    %v5116 = vunpack.c.h.b16 %v2281
    %v5117 = vunpack.c.l.b16 %v2282
    %v5118 = vunpack.c.h.b16 %v2282
    %v5119 = vunpack.c.l.b16 %v2283
    %v5120 = vunpack.c.h.b16 %v2283
    %v5121 = vunpack.c.l.b16 %v2284
    %v5122 = vunpack.c.h.b16 %v2284
    %v5123 = vunpack.c.l.b16 %v2285
    %v5124 = vunpack.c.h.b16 %v2285
    %v5125 = vunpack.c.l.b16 %v2286
    %v5126 = vunpack.c.h.b16 %v2286
    %v5127 = vunpack.c.l.b16 %v2287
    %v5128 = vunpack.c.h.b16 %v2287
    %v5129 = vunpack.c.l.b16 %v2288
    %v5130 = vunpack.c.h.b16 %v2288
    %v5131 = vunpack.c.l.b16 %v2289
    %v5132 = vunpack.c.h.b16 %v2289
    %v5133 = vunpack.c.l.b16 %v2290
    %v5134 = vunpack.c.h.b16 %v2290
    %v5135 = vunpack.c.l.b16 %v2291
    %v5136 = vunpack.c.h.b16 %v2291
    %v5137 = vunpack.c.l.b16 %v2292
    %v5138 = vunpack.c.h.b16 %v2292
    %v5139 = vunpack.c.l.b16 %v2293
    %v5140 = vunpack.c.h.b16 %v2293
    %v5141 = vunpack.c.l.b16 %v2294
    %v5142 = vunpack.c.h.b16 %v2294
    %v5143 = vunpack.c.l.b16 %v2295
    %v5144 = vunpack.c.h.b16 %v2295
    %v5145 = vunpack.c.l.b16 %v2296
    %v5146 = vunpack.c.h.b16 %v2296
    %v5147 = vunpack.c.l.b16 %v2297
    %v5148 = vunpack.c.h.b16 %v2297
    %v5149 = vunpack.c.l.b16 %v2298
    %v5150 = vunpack.c.h.b16 %v2298
    %v5151 = vunpack.c.l.b16 %v2299
    %v5152 = vunpack.c.h.b16 %v2299
    %v5153 = vunpack.c.l.b16 %v2300
    %v5154 = vunpack.c.h.b16 %v2300
    %v5155 = vunpack.c.l.b16 %v2301
    %v5156 = vunpack.c.h.b16 %v2301
    %v5157 = vunpack.c.l.b16 %v2302
    %v5158 = vunpack.c.h.b16 %v2302
    %v5159 = vunpack.c.l.b16 %v2303
    %v5160 = vunpack.c.h.b16 %v2303
    %v5161 = vunpack.c.l.b16 %v2304
    %v5162 = vunpack.c.h.b16 %v2304
    %v5163 = vunpack.c.l.b16 %v2305
    %v5164 = vunpack.c.h.b16 %v2305
    %v5165 = vunpack.c.l.b16 %v2306
    %v5166 = vunpack.c.h.b16 %v2306
    %v5167 = vunpack.c.l.b16 %v2307
    %v5168 = vunpack.c.h.b16 %v2307
    %v5169 = vunpack.c.l.b16 %v2308
    %v5170 = vunpack.c.h.b16 %v2308
    %v5171 = vunpack.c.l.b16 %v2309
    %v5172 = vunpack.c.h.b16 %v2309
    %v5173 = vunpack.c.l.b16 %v2310
    %v5174 = vunpack.c.h.b16 %v2310
    %v5175 = vunpack.c.l.b16 %v2311
    %v5176 = vunpack.c.h.b16 %v2311
    %v5177 = vunpack.c.l.b16 %v2312
    %v5178 = vunpack.c.h.b16 %v2312
    %v5179 = vunpack.c.l.b16 %v2313
    %v5180 = vunpack.c.h.b16 %v2313
    %v5181 = vunpack.c.l.b16 %v2314
    %v5182 = vunpack.c.h.b16 %v2314
    %v5183 = vunpack.c.l.b16 %v2315
    %v5184 = vunpack.c.h.b16 %v2315
    %v5185 = vunpack.c.l.b16 %v2316
    %v5186 = vunpack.c.h.b16 %v2316
    %v5187 = vunpack.c.l.b16 %v2317
    %v5188 = vunpack.c.h.b16 %v2317
    %v5189 = vunpack.c.l.b16 %v2318
    %v5190 = vunpack.c.h.b16 %v2318
    %v5191 = vunpack.c.l.b16 %v2319
    %v5192 = vunpack.c.h.b16 %v2319
    %v5193 = vunpack.c.l.b16 %v2320
    %v5194 = vunpack.c.h.b16 %v2320
    %v5195 = vunpack.c.l.b16 %v2321
    %v5196 = vunpack.c.h.b16 %v2321
    %v5197 = vunpack.c.l.b16 %v2322
    %v5198 = vunpack.c.h.b16 %v2322
    %v5199 = vunpack.c.l.b16 %v2323
    %v5200 = vunpack.c.h.b16 %v2323
    %v5201 = vunpack.c.l.b16 %v2324
    %v5202 = vunpack.c.h.b16 %v2324
    %v5203 = vunpack.c.l.b16 %v2325
    %v5204 = vunpack.c.h.b16 %v2325
    %v5205 = vunpack.c.l.b16 %v2326
    %v5206 = vunpack.c.h.b16 %v2326
    %v5207 = vunpack.c.l.b16 %v2327
    %v5208 = vunpack.c.h.b16 %v2327
    %v5209 = vunpack.c.l.b16 %v2328
    %v5210 = vunpack.c.h.b16 %v2328
    %v5211 = vunpack.c.l.b16 %v2329
    %v5212 = vunpack.c.h.b16 %v2329
    %v5213 = vunpack.c.l.b16 %v2330
    %v5214 = vunpack.c.h.b16 %v2330
    %v5215 = vunpack.c.l.b16 %v2331
    %v5216 = vunpack.c.h.b16 %v2331
    %v5217 = vunpack.c.l.b16 %v2332
    %v5218 = vunpack.c.h.b16 %v2332
    %v5219 = vunpack.c.l.b16 %v2333
    %v5220 = vunpack.c.h.b16 %v2333
    %v5221 = vunpack.c.l.b16 %v2334
    %v5222 = vunpack.c.h.b16 %v2334
    %v5223 = vunpack.c.l.b16 %v2335
    %v5224 = vunpack.c.h.b16 %v2335
    %v5225 = vunpack.c.l.b16 %v2336
    %v5226 = vunpack.c.h.b16 %v2336
    %v5227 = vunpack.c.l.b16 %v2337
    %v5228 = vunpack.c.h.b16 %v2337
    %v5229 = vunpack.c.l.b16 %v2338
    %v5230 = vunpack.c.h.b16 %v2338
    %v5231 = vunpack.c.l.b16 %v2339
    %v5232 = vunpack.c.h.b16 %v2339
    %v5233 = vunpack.c.l.b16 %v2340
    %v5234 = vunpack.c.h.b16 %v2340
    %v5235 = vunpack.c.l.b16 %v2341
    %v5236 = vunpack.c.h.b16 %v2341
    %v5237 = vunpack.c.l.b16 %v2342
    %v5238 = vunpack.c.h.b16 %v2342
    %v5239 = vunpack.c.l.b16 %v2343
    %v5240 = vunpack.c.h.b16 %v2343
    %v5241 = vunpack.c.l.b16 %v2344
    %v5242 = vunpack.c.h.b16 %v2344
    %v5243 = vunpack.c.l.b16 %v2345
    %v5244 = vunpack.c.h.b16 %v2345
    %v5245 = vunpack.c.l.b16 %v2346
    %v5246 = vunpack.c.h.b16 %v2346
    %v5247 = vunpack.c.l.b16 %v2347
    %v5248 = vunpack.c.h.b16 %v2347
    %v5249 = vunpack.c.l.b16 %v2348
    %v5250 = vunpack.c.h.b16 %v2348
    %v5251 = vunpack.c.l.b16 %v2349
    %v5252 = vunpack.c.h.b16 %v2349
    %v5253 = vunpack.c.l.b16 %v2350
    %v5254 = vunpack.c.h.b16 %v2350
    %v5255 = vunpack.c.l.b16 %v2351
    %v5256 = vunpack.c.h.b16 %v2351
    %v5257 = vunpack.c.l.b16 %v2352
    %v5258 = vunpack.c.h.b16 %v2352
    %v5259 = vunpack.c.l.b16 %v2353
    %v5260 = vunpack.c.h.b16 %v2353
    %v5261 = vunpack.c.l.b16 %v2354
    %v5262 = vunpack.c.h.b16 %v2354
    %v5263 = vunpack.c.l.b16 %v2355
    %v5264 = vunpack.c.h.b16 %v2355
    %v5265 = vunpack.c.l.b16 %v2356
    %v5266 = vunpack.c.h.b16 %v2356
    %v5267 = vunpack.c.l.b16 %v2357
    %v5268 = vunpack.c.h.b16 %v2357
    %v5269 = vunpack.c.l.b16 %v2358
    %v5270 = vunpack.c.h.b16 %v2358
    %v5271 = vunpack.c.l.b16 %v2359
    %v5272 = vunpack.c.h.b16 %v2359
    %v5273 = vunpack.c.l.b16 %v2360
    %v5274 = vunpack.c.h.b16 %v2360
    %v5275 = vunpack.c.l.b16 %v2361
    %v5276 = vunpack.c.h.b16 %v2361
    %v5277 = vunpack.c.l.b16 %v2362
    %v5278 = vunpack.c.h.b16 %v2362
    %v5279 = vunpack.c.l.b16 %v2363
    %v5280 = vunpack.c.h.b16 %v2363
    %v5281 = vunpack.c.l.b16 %v2364
    %v5282 = vunpack.c.h.b16 %v2364
    %v5283 = vunpack.c.l.b16 %v2365
    %v5284 = vunpack.c.h.b16 %v2365
    %v5285 = vunpack.c.l.b16 %v2366
    %v5286 = vunpack.c.h.b16 %v2366
    %v5287 = vunpack.c.l.b16 %v2367
    %v5288 = vunpack.c.h.b16 %v2367
    %v5289 = vunpack.c.l.b16 %v2368
    %v5290 = vunpack.c.h.b16 %v2368
    %v5291 = vunpack.c.l.b16 %v2369
    %v5292 = vunpack.c.h.b16 %v2369
    %v5293 = vunpack.c.l.b16 %v2370
    %v5294 = vunpack.c.h.b16 %v2370
    %v5295 = vunpack.c.l.b16 %v2371
    %v5296 = vunpack.c.h.b16 %v2371
    %v5297 = vunpack.c.l.b16 %v2372
    %v5298 = vunpack.c.h.b16 %v2372
    %v5299 = vunpack.c.l.b16 %v2373
    %v5300 = vunpack.c.h.b16 %v2373
    %v5301 = vunpack.c.l.b16 %v2374
    %v5302 = vunpack.c.h.b16 %v2374
    %v5303 = vunpack.c.l.b16 %v2375
    %v5304 = vunpack.c.h.b16 %v2375
    %v5305 = vunpack.c.l.b16 %v2376
    %v5306 = vunpack.c.h.b16 %v2376
    %v5307 = vunpack.c.l.b16 %v2377
    %v5308 = vunpack.c.h.b16 %v2377
    %v5309 = vunpack.c.l.b16 %v2378
    %v5310 = vunpack.c.h.b16 %v2378
    %v5311 = vunpack.c.l.b16 %v2379
    %v5312 = vunpack.c.h.b16 %v2379
    %v5313 = vunpack.c.l.b16 %v2380
    %v5314 = vunpack.c.h.b16 %v2380
    %v5315 = vunpack.c.l.b16 %v2381
    %v5316 = vunpack.c.h.b16 %v2381
    %v5317 = vunpack.c.l.b16 %v2382
    %v5318 = vunpack.c.h.b16 %v2382
    %v5319 = vunpack.c.l.b16 %v2383
    %v5320 = vunpack.c.h.b16 %v2383
    %v5321 = vunpack.c.l.b16 %v2384
    %v5322 = vunpack.c.h.b16 %v2384
    %v5323 = vunpack.c.l.b16 %v2385
    %v5324 = vunpack.c.h.b16 %v2385
    %v5325 = vunpack.c.l.b16 %v2386
    %v5326 = vunpack.c.h.b16 %v2386
    %v5327 = vunpack.c.l.b16 %v2387
    %v5328 = vunpack.c.h.b16 %v2387
    %v5329 = vunpack.c.l.b16 %v2388
    %v5330 = vunpack.c.h.b16 %v2388
    %v5331 = vunpack.c.l.b16 %v2389
    %v5332 = vunpack.c.h.b16 %v2389
    %v5333 = vunpack.c.l.b16 %v2390
    %v5334 = vunpack.c.h.b16 %v2390
    %v5335 = vunpack.c.l.b16 %v2391
    %v5336 = vunpack.c.h.b16 %v2391
    %v5337 = vunpack.c.l.b16 %v2392
    %v5338 = vunpack.c.h.b16 %v2392
    %v5339 = vunpack.c.l.b16 %v2393
    %v5340 = vunpack.c.h.b16 %v2393
    %v5341 = vunpack.c.l.b16 %v2394
    %v5342 = vunpack.c.h.b16 %v2394
    %v5343 = vunpack.c.l.b16 %v2395
    %v5344 = vunpack.c.h.b16 %v2395
    %v5345 = vunpack.c.l.b16 %v2396
    %v5346 = vunpack.c.h.b16 %v2396
    %v5347 = vunpack.c.l.b16 %v2397
    %v5348 = vunpack.c.h.b16 %v2397
    %v5349 = vunpack.c.l.b16 %v2398
    %v5350 = vunpack.c.h.b16 %v2398
    %v5351 = vunpack.c.l.b16 %v2399
    %v5352 = vunpack.c.h.b16 %v2399
    %v5353 = vunpack.c.l.b16 %v2400
    %v5354 = vunpack.c.h.b16 %v2400
    %v5355 = vunpack.c.l.b16 %v2401
    %v5356 = vunpack.c.h.b16 %v2401
    %v5357 = vunpack.c.l.b16 %v2402
    %v5358 = vunpack.c.h.b16 %v2402
    %v5359 = vunpack.c.l.b16 %v2403
    %v5360 = vunpack.c.h.b16 %v2403
    %v5361 = vunpack.c.l.b16 %v2404
    %v5362 = vunpack.c.h.b16 %v2404
    %v5363 = vunpack.c.l.b16 %v2405
    %v5364 = vunpack.c.h.b16 %v2405
    %v5365 = vunpack.c.l.b16 %v2406
    %v5366 = vunpack.c.h.b16 %v2406
    %v5367 = vunpack.c.l.b16 %v2407
    %v5368 = vunpack.c.h.b16 %v2407
    %v5369 = vunpack.c.l.b16 %v2408
    %v5370 = vunpack.c.h.b16 %v2408
    %v5371 = vunpack.c.l.b16 %v2409
    %v5372 = vunpack.c.h.b16 %v2409
    %v5373 = vunpack.c.l.b16 %v2410
    %v5374 = vunpack.c.h.b16 %v2410
    %v5375 = vunpack.c.l.b16 %v2411
    %v5376 = vunpack.c.h.b16 %v2411
    %v5377 = vunpack.c.l.b16 %v2412
    %v5378 = vunpack.c.h.b16 %v2412
    %v5379 = vunpack.c.l.b16 %v2413
    %v5380 = vunpack.c.h.b16 %v2413
    %v5381 = vunpack.c.l.b16 %v2414
    %v5382 = vunpack.c.h.b16 %v2414
    %v5383 = vunpack.c.l.b16 %v2415
    %v5384 = vunpack.c.h.b16 %v2415
    %v5385 = vunpack.c.l.b16 %v2416
    %v5386 = vunpack.c.h.b16 %v2416
    %v5387 = vunpack.c.l.b16 %v2417
    %v5388 = vunpack.c.h.b16 %v2417
    %v5389 = vunpack.c.l.b16 %v2418
    %v5390 = vunpack.c.h.b16 %v2418
    %v5391 = vunpack.c.l.b16 %v2419
    %v5392 = vunpack.c.h.b16 %v2419
    %v5393 = vunpack.c.l.b16 %v2420
    %v5394 = vunpack.c.h.b16 %v2420
    %v5395 = vunpack.c.l.b16 %v2421
    %v5396 = vunpack.c.h.b16 %v2421
    %v5397 = vunpack.c.l.b16 %v2422
    %v5398 = vunpack.c.h.b16 %v2422
    %v5399 = vunpack.c.l.b16 %v2423
    %v5400 = vunpack.c.h.b16 %v2423
    %v5401 = vunpack.c.l.b16 %v2424
    %v5402 = vunpack.c.h.b16 %v2424
    %v5403 = vunpack.c.l.b16 %v2425
    %v5404 = vunpack.c.h.b16 %v2425
    %v5405 = vunpack.c.l.b16 %v2426
    %v5406 = vunpack.c.h.b16 %v2426
    %v5407 = vunpack.c.l.b16 %v2427
    %v5408 = vunpack.c.h.b16 %v2427
    %v5409 = vunpack.c.l.b16 %v2428
    %v5410 = vunpack.c.h.b16 %v2428
    %v5411 = vunpack.c.l.b16 %v2429
    %v5412 = vunpack.c.h.b16 %v2429
    %v5413 = vunpack.c.l.b16 %v2430
    %v5414 = vunpack.c.h.b16 %v2430
    %v5415 = vunpack.c.l.b16 %v2431
    %v5416 = vunpack.c.h.b16 %v2431
    %v5417 = vunpack.c.l.b16 %v2432
    %v5418 = vunpack.c.h.b16 %v2432
    %v5419 = vunpack.c.l.b16 %v2433
    %v5420 = vunpack.c.h.b16 %v2433
    %v5421 = vunpack.c.l.b16 %v2434
    %v5422 = vunpack.c.h.b16 %v2434
    %v5423 = vunpack.c.l.b16 %v2435
    %v5424 = vunpack.c.h.b16 %v2435
    %v5425 = vunpack.c.l.b16 %v2436
    %v5426 = vunpack.c.h.b16 %v2436
    %v5427 = vunpack.c.l.b16 %v2437
    %v5428 = vunpack.c.h.b16 %v2437
    %v5429 = vunpack.c.l.b16 %v2438
    %v5430 = vunpack.c.h.b16 %v2438
    %v5431 = vunpack.c.l.b16 %v2439
    %v5432 = vunpack.c.h.b16 %v2439
    %v5433 = vunpack.c.l.b16 %v2440
    %v5434 = vunpack.c.h.b16 %v2440
    %v5435 = vunpack.c.l.b16 %v2441
    %v5436 = vunpack.c.h.b16 %v2441
    %v5437 = vunpack.c.l.b16 %v2442
    %v5438 = vunpack.c.h.b16 %v2442
    %v5439 = vunpack.c.l.b16 %v2443
    %v5440 = vunpack.c.h.b16 %v2443
    %v5441 = vunpack.c.l.b16 %v2444
    %v5442 = vunpack.c.h.b16 %v2444
    %v5443 = vunpack.c.l.b16 %v2445
    %v5444 = vunpack.c.h.b16 %v2445
    %v5445 = vunpack.c.l.b16 %v2446
    %v5446 = vunpack.c.h.b16 %v2446
    %v5447 = vunpack.c.l.b16 %v2447
    %v5448 = vunpack.c.h.b16 %v2447
    %v5449 = vunpack.c.l.b16 %v2448
    %v5450 = vunpack.c.h.b16 %v2448
    %v5451 = vunpack.c.l.b16 %v2449
    %v5452 = vunpack.c.h.b16 %v2449
    %v5453 = vunpack.c.l.b16 %v2450
    %v5454 = vunpack.c.h.b16 %v2450
    %v5455 = vunpack.c.l.b16 %v2451
    %v5456 = vunpack.c.h.b16 %v2451
    %v5457 = vunpack.c.l.b16 %v2452
    %v5458 = vunpack.c.h.b16 %v2452
    %v5459 = vunpack.c.l.b16 %v2453
    %v5460 = vunpack.c.h.b16 %v2453
    %v5461 = vunpack.c.l.b16 %v2454
    %v5462 = vunpack.c.h.b16 %v2454
    %v5463 = vunpack.c.l.b16 %v2455
    %v5464 = vunpack.c.h.b16 %v2455
    %v5465 = vunpack.c.l.b16 %v2456
    %v5466 = vunpack.c.h.b16 %v2456
    %v5467 = vunpack.c.l.b16 %v2457
    %v5468 = vunpack.c.h.b16 %v2457
    %v5469 = vunpack.c.l.b16 %v2458
    %v5470 = vunpack.c.h.b16 %v2458
    %v5471 = vunpack.c.l.b16 %v2459
    %v5472 = vunpack.c.h.b16 %v2459
    %v5473 = vunpack.c.l.b16 %v2460
    %v5474 = vunpack.c.h.b16 %v2460
    %v5475 = vunpack.c.l.b16 %v2461
    %v5476 = vunpack.c.h.b16 %v2461
    %v5477 = vunpack.c.l.b16 %v2462
    %v5478 = vunpack.c.h.b16 %v2462
    %v5479 = vunpack.c.l.b16 %v2463
    %v5480 = vunpack.c.h.b16 %v2463
    %v5481 = vunpack.c.l.b16 %v2464
    %v5482 = vunpack.c.h.b16 %v2464
    %v5483 = vunpack.c.l.b16 %v2465
    %v5484 = vunpack.c.h.b16 %v2465
    %v5485 = vunpack.c.l.b16 %v2466
    %v5486 = vunpack.c.h.b16 %v2466
    %v5487 = vunpack.c.l.b16 %v2467
    %v5488 = vunpack.c.h.b16 %v2467
    %v5489 = vunpack.c.l.b16 %v2468
    %v5490 = vunpack.c.h.b16 %v2468
    %v5491 = vunpack.c.l.b16 %v2469
    %v5492 = vunpack.c.h.b16 %v2469
    %v5493 = vunpack.c.l.b16 %v2470
    %v5494 = vunpack.c.h.b16 %v2470
    %v5495 = vunpack.c.l.b16 %v2471
    %v5496 = vunpack.c.h.b16 %v2471
    %v5497 = vunpack.c.l.b16 %v2472
    %v5498 = vunpack.c.h.b16 %v2472
    %v5499 = vunpack.c.l.b16 %v2473
    %v5500 = vunpack.c.h.b16 %v2473
    %v5501 = vunpack.c.l.b16 %v2474
    %v5502 = vunpack.c.h.b16 %v2474
    %v5503 = vunpack.c.l.b16 %v2475
    %v5504 = vunpack.c.h.b16 %v2475
    %v5505 = vunpack.c.l.b16 %v2476
    %v5506 = vunpack.c.h.b16 %v2476
    %v5507 = vunpack.c.l.b16 %v2477
    %v5508 = vunpack.c.h.b16 %v2477
    %v5509 = vunpack.c.l.b16 %v2478
    %v5510 = vunpack.c.h.b16 %v2478
    %v5511 = vunpack.c.l.b16 %v2479
    %v5512 = vunpack.c.h.b16 %v2479
    %v5513 = vunpack.c.l.b16 %v2480
    %v5514 = vunpack.c.h.b16 %v2480
    %v5515 = vunpack.c.l.b16 %v2481
    %v5516 = vunpack.c.h.b16 %v2481
    %v5517 = vunpack.c.l.b16 %v2482
    %v5518 = vunpack.c.h.b16 %v2482
    %v5519 = vunpack.c.l.b16 %v2483
    %v5520 = vunpack.c.h.b16 %v2483
    %v5521 = vunpack.c.l.b16 %v2484
    %v5522 = vunpack.c.h.b16 %v2484
    %v5523 = vunpack.c.l.b16 %v2485
    %v5524 = vunpack.c.h.b16 %v2485
    %v5525 = vunpack.c.l.b16 %v2486
    %v5526 = vunpack.c.h.b16 %v2486
    %v5527 = vunpack.c.l.b16 %v2487
    %v5528 = vunpack.c.h.b16 %v2487
    %v5529 = vunpack.c.l.b16 %v2488
    %v5530 = vunpack.c.h.b16 %v2488
    %v5531 = vunpack.c.l.b16 %v2489
    %v5532 = vunpack.c.h.b16 %v2489
    %v5533 = vunpack.c.l.b16 %v2490
    %v5534 = vunpack.c.h.b16 %v2490
    %v5535 = vunpack.c.l.b16 %v2491
    %v5536 = vunpack.c.h.b16 %v2491
    %v5537 = vunpack.c.l.b16 %v2492
    %v5538 = vunpack.c.h.b16 %v2492
    %v5539 = vunpack.c.l.b16 %v2493
    %v5540 = vunpack.c.h.b16 %v2493
    %v5541 = vunpack.c.l.b16 %v2494
    %v5542 = vunpack.c.h.b16 %v2494
    %v5543 = vunpack.c.l.b16 %v2495
    %v5544 = vunpack.c.h.b16 %v2495
    %v5545 = vunpack.c.l.b16 %v2496
    %v5546 = vunpack.c.h.b16 %v2496
    %v5547 = vunpack.c.l.b16 %v2497
    %v5548 = vunpack.c.h.b16 %v2497
    %v5549 = vunpack.c.l.b16 %v2498
    %v5550 = vunpack.c.h.b16 %v2498
    %v5551 = vunpack.c.l.b16 %v2499
    %v5552 = vunpack.c.h.b16 %v2499
    %v5553 = vunpack.c.l.b16 %v2500
    %v5554 = vunpack.c.h.b16 %v2500
    %v5555 = vunpack.c.l.b16 %v2501
    %v5556 = vunpack.c.h.b16 %v2501
    %v5557 = vunpack.c.l.b16 %v2502
    %v5558 = vunpack.c.h.b16 %v2502
    %v5559 = vunpack.c.l.b16 %v2503
    %v5560 = vunpack.c.h.b16 %v2503
    %v5561 = vunpack.c.l.b16 %v2504
    %v5562 = vunpack.c.h.b16 %v2504
    %v5563 = vunpack.c.l.b16 %v2505
    %v5564 = vunpack.c.h.b16 %v2505
    %v5565 = vunpack.c.l.b16 %v2506
    %v5566 = vunpack.c.h.b16 %v2506
    %v5567 = vunpack.c.l.b16 %v2507
    %v5568 = vunpack.c.h.b16 %v2507
    %v5569 = vunpack.c.l.b16 %v2508
    %v5570 = vunpack.c.h.b16 %v2508
    %v5571 = vunpack.c.l.b16 %v2509
    %v5572 = vunpack.c.h.b16 %v2509
    %v5573 = vunpack.c.l.b16 %v2510
    %v5574 = vunpack.c.h.b16 %v2510
    %v5575 = vunpack.c.l.b16 %v2511
    %v5576 = vunpack.c.h.b16 %v2511
    %v5577 = vunpack.c.l.b16 %v2512
    %v5578 = vunpack.c.h.b16 %v2512
    %v5579 = vunpack.c.l.b16 %v2513
    %v5580 = vunpack.c.h.b16 %v2513
    %v5581 = vunpack.c.l.b16 %v2514
    %v5582 = vunpack.c.h.b16 %v2514
    %v5583 = vunpack.c.l.b16 %v2515
    %v5584 = vunpack.c.h.b16 %v2515
    %v5585 = vunpack.c.l.b16 %v2516
    %v5586 = vunpack.c.h.b16 %v2516
    %v5587 = vunpack.c.l.b16 %v2517
    %v5588 = vunpack.c.h.b16 %v2517
    %v5589 = vunpack.c.l.b16 %v2518
    %v5590 = vunpack.c.h.b16 %v2518
    %v5591 = vpack.c.b16 %v3551, %v3543
    %v5592 = vpack.c.b16 %v3552, %v3544
    %v5593 = vpack.c.b16 %v3553, %v3545
    %v5594 = vpack.c.b16 %v3554, %v3546
    %v5595 = vpack.c.b16 %v3555, %v3547
    %v5596 = vpack.c.b16 %v3556, %v3548
    %v5597 = vpack.c.b16 %v3557, %v3549
    %v5598 = vpack.c.b16 %v3558, %v3550
    %v5599 = vpack.c.b16 %v3567, %v3559
    %v5600 = vpack.c.b16 %v3568, %v3560
    %v5601 = vpack.c.b16 %v3569, %v3561
    %v5602 = vpack.c.b16 %v3570, %v3562
    %v5603 = vpack.c.b16 %v3571, %v3563
    %v5604 = vpack.c.b16 %v3572, %v3564
    %v5605 = vpack.c.b16 %v3573, %v3565
    %v5606 = vpack.c.b16 %v3574, %v3566
    %v5607 = vpack.c.b16 %v3583, %v3575
    %v5608 = vpack.c.b16 %v3584, %v3576
    %v5609 = vpack.c.b16 %v3585, %v3577
    %v5610 = vpack.c.b16 %v3586, %v3578
    %v5611 = vpack.c.b16 %v3587, %v3579
    %v5612 = vpack.c.b16 %v3588, %v3580
    %v5613 = vpack.c.b16 %v3589, %v3581
    %v5614 = vpack.c.b16 %v3590, %v3582
    %v5615 = vpack.c.b16 %v3599, %v3591
    %v5616 = vpack.c.b16 %v3600, %v3592
    %v5617 = vpack.c.b16 %v3601, %v3593
    %v5618 = vpack.c.b16 %v3602, %v3594
    %v5619 = vpack.c.b16 %v3603, %v3595
    %v5620 = vpack.c.b16 %v3604, %v3596
    %v5621 = vpack.c.b16 %v3605, %v3597
    %v5622 = vpack.c.b16 %v3606, %v3598
    %v5623 = vpack.c.b16 %v3615, %v3607
    %v5624 = vpack.c.b16 %v3616, %v3608
    %v5625 = vpack.c.b16 %v3617, %v3609
    %v5626 = vpack.c.b16 %v3618, %v3610
    %v5627 = vpack.c.b16 %v3619, %v3611
    %v5628 = vpack.c.b16 %v3620, %v3612
    %v5629 = vpack.c.b16 %v3621, %v3613
    %v5630 = vpack.c.b16 %v3622, %v3614
    %v5631 = vpack.c.b16 %v3631, %v3623
    %v5632 = vpack.c.b16 %v3632, %v3624
    %v5633 = vpack.c.b16 %v3633, %v3625
    %v5634 = vpack.c.b16 %v3634, %v3626
    %v5635 = vpack.c.b16 %v3635, %v3627
    %v5636 = vpack.c.b16 %v3636, %v3628
    %v5637 = vpack.c.b16 %v3637, %v3629
    %v5638 = vpack.c.b16 %v3638, %v3630
    %v5639 = vpack.c.b16 %v3647, %v3639
    %v5640 = vpack.c.b16 %v3648, %v3640
    %v5641 = vpack.c.b16 %v3649, %v3641
    %v5642 = vpack.c.b16 %v3650, %v3642
    %v5643 = vpack.c.b16 %v3651, %v3643
    %v5644 = vpack.c.b16 %v3652, %v3644
    %v5645 = vpack.c.b16 %v3653, %v3645
    %v5646 = vpack.c.b16 %v3654, %v3646
    %v5647 = vpack.c.b16 %v3663, %v3655
    %v5648 = vpack.c.b16 %v3664, %v3656
    %v5649 = vpack.c.b16 %v3665, %v3657
    %v5650 = vpack.c.b16 %v3666, %v3658
    %v5651 = vpack.c.b16 %v3667, %v3659
    %v5652 = vpack.c.b16 %v3668, %v3660
    %v5653 = vpack.c.b16 %v3669, %v3661
    %v5654 = vpack.c.b16 %v3670, %v3662
    %v5655 = vpack.c.b16 %v3679, %v3671
    %v5656 = vpack.c.b16 %v3680, %v3672
    %v5657 = vpack.c.b16 %v3681, %v3673
    %v5658 = vpack.c.b16 %v3682, %v3674
    %v5659 = vpack.c.b16 %v3683, %v3675
    %v5660 = vpack.c.b16 %v3684, %v3676
    %v5661 = vpack.c.b16 %v3685, %v3677
    %v5662 = vpack.c.b16 %v3686, %v3678
    %v5663 = vpack.c.b16 %v3695, %v3687
    %v5664 = vpack.c.b16 %v3696, %v3688
    %v5665 = vpack.c.b16 %v3697, %v3689
    %v5666 = vpack.c.b16 %v3698, %v3690
    %v5667 = vpack.c.b16 %v3699, %v3691
    %v5668 = vpack.c.b16 %v3700, %v3692
    %v5669 = vpack.c.b16 %v3701, %v3693
    %v5670 = vpack.c.b16 %v3702, %v3694
    %v5671 = vpack.c.b16 %v3711, %v3703
    %v5672 = vpack.c.b16 %v3712, %v3704
    %v5673 = vpack.c.b16 %v3713, %v3705
    %v5674 = vpack.c.b16 %v3714, %v3706
    %v5675 = vpack.c.b16 %v3715, %v3707
    %v5676 = vpack.c.b16 %v3716, %v3708
    %v5677 = vpack.c.b16 %v3717, %v3709
    %v5678 = vpack.c.b16 %v3718, %v3710
    %v5679 = vpack.c.b16 %v3727, %v3719
    %v5680 = vpack.c.b16 %v3728, %v3720
    %v5681 = vpack.c.b16 %v3729, %v3721
    %v5682 = vpack.c.b16 %v3730, %v3722
    %v5683 = vpack.c.b16 %v3731, %v3723
    %v5684 = vpack.c.b16 %v3732, %v3724
    %v5685 = vpack.c.b16 %v3733, %v3725
    %v5686 = vpack.c.b16 %v3734, %v3726
    %v5687 = vpack.c.b16 %v3743, %v3735
    %v5688 = vpack.c.b16 %v3744, %v3736
    %v5689 = vpack.c.b16 %v3745, %v3737
    %v5690 = vpack.c.b16 %v3746, %v3738
    %v5691 = vpack.c.b16 %v3747, %v3739
    %v5692 = vpack.c.b16 %v3748, %v3740
    %v5693 = vpack.c.b16 %v3749, %v3741
    %v5694 = vpack.c.b16 %v3750, %v3742
    %v5695 = vpack.c.b16 %v3759, %v3751
    %v5696 = vpack.c.b16 %v3760, %v3752
    %v5697 = vpack.c.b16 %v3761, %v3753
    %v5698 = vpack.c.b16 %v3762, %v3754
    %v5699 = vpack.c.b16 %v3763, %v3755
    %v5700 = vpack.c.b16 %v3764, %v3756
    %v5701 = vpack.c.b16 %v3765, %v3757
    %v5702 = vpack.c.b16 %v3766, %v3758
    %v5703 = vpack.c.b16 %v3775, %v3767
    %v5704 = vpack.c.b16 %v3776, %v3768
    %v5705 = vpack.c.b16 %v3777, %v3769
    %v5706 = vpack.c.b16 %v3778, %v3770
    %v5707 = vpack.c.b16 %v3779, %v3771
    %v5708 = vpack.c.b16 %v3780, %v3772
    %v5709 = vpack.c.b16 %v3781, %v3773
    %v5710 = vpack.c.b16 %v3782, %v3774
    %v5711 = vpack.c.b16 %v3791, %v3783
    %v5712 = vpack.c.b16 %v3792, %v3784
    %v5713 = vpack.c.b16 %v3793, %v3785
    %v5714 = vpack.c.b16 %v3794, %v3786
    %v5715 = vpack.c.b16 %v3795, %v3787
    %v5716 = vpack.c.b16 %v3796, %v3788
    %v5717 = vpack.c.b16 %v3797, %v3789
    %v5718 = vpack.c.b16 %v3798, %v3790
    %v5719 = vpack.c.b16 %v3807, %v3799
    %v5720 = vpack.c.b16 %v3808, %v3800
    %v5721 = vpack.c.b16 %v3809, %v3801
    %v5722 = vpack.c.b16 %v3810, %v3802
    %v5723 = vpack.c.b16 %v3811, %v3803
    %v5724 = vpack.c.b16 %v3812, %v3804
    %v5725 = vpack.c.b16 %v3813, %v3805
    %v5726 = vpack.c.b16 %v3814, %v3806
    %v5727 = vpack.c.b16 %v3823, %v3815
    %v5728 = vpack.c.b16 %v3824, %v3816
    %v5729 = vpack.c.b16 %v3825, %v3817
    %v5730 = vpack.c.b16 %v3826, %v3818
    %v5731 = vpack.c.b16 %v3827, %v3819
    %v5732 = vpack.c.b16 %v3828, %v3820
    %v5733 = vpack.c.b16 %v3829, %v3821
    %v5734 = vpack.c.b16 %v3830, %v3822
    %v5735 = vpack.c.b16 %v3839, %v3831
    %v5736 = vpack.c.b16 %v3840, %v3832
    %v5737 = vpack.c.b16 %v3841, %v3833
    %v5738 = vpack.c.b16 %v3842, %v3834
    %v5739 = vpack.c.b16 %v3843, %v3835
    %v5740 = vpack.c.b16 %v3844, %v3836
    %v5741 = vpack.c.b16 %v3845, %v3837
    %v5742 = vpack.c.b16 %v3846, %v3838
    %v5743 = vpack.c.b16 %v3855, %v3847
    %v5744 = vpack.c.b16 %v3856, %v3848
    %v5745 = vpack.c.b16 %v3857, %v3849
    %v5746 = vpack.c.b16 %v3858, %v3850
    %v5747 = vpack.c.b16 %v3859, %v3851
    %v5748 = vpack.c.b16 %v3860, %v3852
    %v5749 = vpack.c.b16 %v3861, %v3853
    %v5750 = vpack.c.b16 %v3862, %v3854
    %v5751 = vpack.c.b16 %v3871, %v3863
    %v5752 = vpack.c.b16 %v3872, %v3864
    %v5753 = vpack.c.b16 %v3873, %v3865
    %v5754 = vpack.c.b16 %v3874, %v3866
    %v5755 = vpack.c.b16 %v3875, %v3867
    %v5756 = vpack.c.b16 %v3876, %v3868
    %v5757 = vpack.c.b16 %v3877, %v3869
    %v5758 = vpack.c.b16 %v3878, %v3870
    %v5759 = vpack.c.b16 %v3887, %v3879
    %v5760 = vpack.c.b16 %v3888, %v3880
    %v5761 = vpack.c.b16 %v3889, %v3881
    %v5762 = vpack.c.b16 %v3890, %v3882
    %v5763 = vpack.c.b16 %v3891, %v3883
    %v5764 = vpack.c.b16 %v3892, %v3884
    %v5765 = vpack.c.b16 %v3893, %v3885
    %v5766 = vpack.c.b16 %v3894, %v3886
    %v5767 = vpack.c.b16 %v3903, %v3895
    %v5768 = vpack.c.b16 %v3904, %v3896
    %v5769 = vpack.c.b16 %v3905, %v3897
    %v5770 = vpack.c.b16 %v3906, %v3898
    %v5771 = vpack.c.b16 %v3907, %v3899
    %v5772 = vpack.c.b16 %v3908, %v3900
    %v5773 = vpack.c.b16 %v3909, %v3901
    %v5774 = vpack.c.b16 %v3910, %v3902
    %v5775 = vpack.c.b16 %v3919, %v3911
    %v5776 = vpack.c.b16 %v3920, %v3912
    %v5777 = vpack.c.b16 %v3921, %v3913
    %v5778 = vpack.c.b16 %v3922, %v3914
    %v5779 = vpack.c.b16 %v3923, %v3915
    %v5780 = vpack.c.b16 %v3924, %v3916
    %v5781 = vpack.c.b16 %v3925, %v3917
    %v5782 = vpack.c.b16 %v3926, %v3918
    %v5783 = vpack.c.b16 %v3935, %v3927
    %v5784 = vpack.c.b16 %v3936, %v3928
    %v5785 = vpack.c.b16 %v3937, %v3929
    %v5786 = vpack.c.b16 %v3938, %v3930
    %v5787 = vpack.c.b16 %v3939, %v3931
    %v5788 = vpack.c.b16 %v3940, %v3932
    %v5789 = vpack.c.b16 %v3941, %v3933
    %v5790 = vpack.c.b16 %v3942, %v3934
    %v5791 = vpack.c.b16 %v3951, %v3943
    %v5792 = vpack.c.b16 %v3952, %v3944
    %v5793 = vpack.c.b16 %v3953, %v3945
    %v5794 = vpack.c.b16 %v3954, %v3946
    %v5795 = vpack.c.b16 %v3955, %v3947
    %v5796 = vpack.c.b16 %v3956, %v3948
    %v5797 = vpack.c.b16 %v3957, %v3949
    %v5798 = vpack.c.b16 %v3958, %v3950
    %v5799 = vpack.c.b16 %v3967, %v3959
    %v5800 = vpack.c.b16 %v3968, %v3960
    %v5801 = vpack.c.b16 %v3969, %v3961
    %v5802 = vpack.c.b16 %v3970, %v3962
    %v5803 = vpack.c.b16 %v3971, %v3963
    %v5804 = vpack.c.b16 %v3972, %v3964
    %v5805 = vpack.c.b16 %v3973, %v3965
    %v5806 = vpack.c.b16 %v3974, %v3966
    %v5807 = vpack.c.b16 %v3983, %v3975
    %v5808 = vpack.c.b16 %v3984, %v3976
    %v5809 = vpack.c.b16 %v3985, %v3977
    %v5810 = vpack.c.b16 %v3986, %v3978
    %v5811 = vpack.c.b16 %v3987, %v3979
    %v5812 = vpack.c.b16 %v3988, %v3980
    %v5813 = vpack.c.b16 %v3989, %v3981
    %v5814 = vpack.c.b16 %v3990, %v3982
    %v5815 = vpack.c.b16 %v3999, %v3991
    %v5816 = vpack.c.b16 %v4000, %v3992
    %v5817 = vpack.c.b16 %v4001, %v3993
    %v5818 = vpack.c.b16 %v4002, %v3994
    %v5819 = vpack.c.b16 %v4003, %v3995
    %v5820 = vpack.c.b16 %v4004, %v3996
    %v5821 = vpack.c.b16 %v4005, %v3997
    %v5822 = vpack.c.b16 %v4006, %v3998
    %v5823 = vpack.c.b16 %v4015, %v4007
    %v5824 = vpack.c.b16 %v4016, %v4008
    %v5825 = vpack.c.b16 %v4017, %v4009
    %v5826 = vpack.c.b16 %v4018, %v4010
    %v5827 = vpack.c.b16 %v4019, %v4011
    %v5828 = vpack.c.b16 %v4020, %v4012
    %v5829 = vpack.c.b16 %v4021, %v4013
    %v5830 = vpack.c.b16 %v4022, %v4014
    %v5831 = vpack.c.b16 %v4031, %v4023
    %v5832 = vpack.c.b16 %v4032, %v4024
    %v5833 = vpack.c.b16 %v4033, %v4025
    %v5834 = vpack.c.b16 %v4034, %v4026
    %v5835 = vpack.c.b16 %v4035, %v4027
    %v5836 = vpack.c.b16 %v4036, %v4028
    %v5837 = vpack.c.b16 %v4037, %v4029
    %v5838 = vpack.c.b16 %v4038, %v4030
    %v5839 = vpack.c.b16 %v4047, %v4039
    %v5840 = vpack.c.b16 %v4048, %v4040
    %v5841 = vpack.c.b16 %v4049, %v4041
    %v5842 = vpack.c.b16 %v4050, %v4042
    %v5843 = vpack.c.b16 %v4051, %v4043
    %v5844 = vpack.c.b16 %v4052, %v4044
    %v5845 = vpack.c.b16 %v4053, %v4045
    %v5846 = vpack.c.b16 %v4054, %v4046
    %v5847 = vpack.c.b16 %v4063, %v4055
    %v5848 = vpack.c.b16 %v4064, %v4056
    %v5849 = vpack.c.b16 %v4065, %v4057
    %v5850 = vpack.c.b16 %v4066, %v4058
    %v5851 = vpack.c.b16 %v4067, %v4059
    %v5852 = vpack.c.b16 %v4068, %v4060
    %v5853 = vpack.c.b16 %v4069, %v4061
    %v5854 = vpack.c.b16 %v4070, %v4062
    %v5855 = vpack.c.b16 %v4079, %v4071
    %v5856 = vpack.c.b16 %v4080, %v4072
    %v5857 = vpack.c.b16 %v4081, %v4073
    %v5858 = vpack.c.b16 %v4082, %v4074
    %v5859 = vpack.c.b16 %v4083, %v4075
    %v5860 = vpack.c.b16 %v4084, %v4076
    %v5861 = vpack.c.b16 %v4085, %v4077
    %v5862 = vpack.c.b16 %v4086, %v4078
    %v5863 = vpack.c.b16 %v4095, %v4087
    %v5864 = vpack.c.b16 %v4096, %v4088
    %v5865 = vpack.c.b16 %v4097, %v4089
    %v5866 = vpack.c.b16 %v4098, %v4090
    %v5867 = vpack.c.b16 %v4099, %v4091
    %v5868 = vpack.c.b16 %v4100, %v4092
    %v5869 = vpack.c.b16 %v4101, %v4093
    %v5870 = vpack.c.b16 %v4102, %v4094
    %v5871 = vpack.c.b16 %v4111, %v4103
    %v5872 = vpack.c.b16 %v4112, %v4104
    %v5873 = vpack.c.b16 %v4113, %v4105
    %v5874 = vpack.c.b16 %v4114, %v4106
    %v5875 = vpack.c.b16 %v4115, %v4107
    %v5876 = vpack.c.b16 %v4116, %v4108
    %v5877 = vpack.c.b16 %v4117, %v4109
    %v5878 = vpack.c.b16 %v4118, %v4110
    %v5879 = vpack.c.b16 %v4127, %v4119
    %v5880 = vpack.c.b16 %v4128, %v4120
    %v5881 = vpack.c.b16 %v4129, %v4121
    %v5882 = vpack.c.b16 %v4130, %v4122
    %v5883 = vpack.c.b16 %v4131, %v4123
    %v5884 = vpack.c.b16 %v4132, %v4124
    %v5885 = vpack.c.b16 %v4133, %v4125
    %v5886 = vpack.c.b16 %v4134, %v4126
    %v5887 = vpack.c.b16 %v4143, %v4135
    %v5888 = vpack.c.b16 %v4144, %v4136
    %v5889 = vpack.c.b16 %v4145, %v4137
    %v5890 = vpack.c.b16 %v4146, %v4138
    %v5891 = vpack.c.b16 %v4147, %v4139
    %v5892 = vpack.c.b16 %v4148, %v4140
    %v5893 = vpack.c.b16 %v4149, %v4141
    %v5894 = vpack.c.b16 %v4150, %v4142
    %v5895 = vpack.c.b16 %v4159, %v4151
    %v5896 = vpack.c.b16 %v4160, %v4152
    %v5897 = vpack.c.b16 %v4161, %v4153
    %v5898 = vpack.c.b16 %v4162, %v4154
    %v5899 = vpack.c.b16 %v4163, %v4155
    %v5900 = vpack.c.b16 %v4164, %v4156
    %v5901 = vpack.c.b16 %v4165, %v4157
    %v5902 = vpack.c.b16 %v4166, %v4158
    %v5903 = vpack.c.b16 %v4175, %v4167
    %v5904 = vpack.c.b16 %v4176, %v4168
    %v5905 = vpack.c.b16 %v4177, %v4169
    %v5906 = vpack.c.b16 %v4178, %v4170
    %v5907 = vpack.c.b16 %v4179, %v4171
    %v5908 = vpack.c.b16 %v4180, %v4172
    %v5909 = vpack.c.b16 %v4181, %v4173
    %v5910 = vpack.c.b16 %v4182, %v4174
    %v5911 = vpack.c.b16 %v4191, %v4183
    %v5912 = vpack.c.b16 %v4192, %v4184
    %v5913 = vpack.c.b16 %v4193, %v4185
    %v5914 = vpack.c.b16 %v4194, %v4186
    %v5915 = vpack.c.b16 %v4195, %v4187
    %v5916 = vpack.c.b16 %v4196, %v4188
    %v5917 = vpack.c.b16 %v4197, %v4189
    %v5918 = vpack.c.b16 %v4198, %v4190
    %v5919 = vpack.c.b16 %v4207, %v4199
    %v5920 = vpack.c.b16 %v4208, %v4200
    %v5921 = vpack.c.b16 %v4209, %v4201
    %v5922 = vpack.c.b16 %v4210, %v4202
    %v5923 = vpack.c.b16 %v4211, %v4203
    %v5924 = vpack.c.b16 %v4212, %v4204
    %v5925 = vpack.c.b16 %v4213, %v4205
    %v5926 = vpack.c.b16 %v4214, %v4206
    %v5927 = vpack.c.b16 %v4223, %v4215
    %v5928 = vpack.c.b16 %v4224, %v4216
    %v5929 = vpack.c.b16 %v4225, %v4217
    %v5930 = vpack.c.b16 %v4226, %v4218
    %v5931 = vpack.c.b16 %v4227, %v4219
    %v5932 = vpack.c.b16 %v4228, %v4220
    %v5933 = vpack.c.b16 %v4229, %v4221
    %v5934 = vpack.c.b16 %v4230, %v4222
    %v5935 = vpack.c.b16 %v4239, %v4231
    %v5936 = vpack.c.b16 %v4240, %v4232
    %v5937 = vpack.c.b16 %v4241, %v4233
    %v5938 = vpack.c.b16 %v4242, %v4234
    %v5939 = vpack.c.b16 %v4243, %v4235
    %v5940 = vpack.c.b16 %v4244, %v4236
    %v5941 = vpack.c.b16 %v4245, %v4237
    %v5942 = vpack.c.b16 %v4246, %v4238
    %v5943 = vpack.c.b16 %v4255, %v4247
    %v5944 = vpack.c.b16 %v4256, %v4248
    %v5945 = vpack.c.b16 %v4257, %v4249
    %v5946 = vpack.c.b16 %v4258, %v4250
    %v5947 = vpack.c.b16 %v4259, %v4251
    %v5948 = vpack.c.b16 %v4260, %v4252
    %v5949 = vpack.c.b16 %v4261, %v4253
    %v5950 = vpack.c.b16 %v4262, %v4254
    %v5951 = vpack.c.b16 %v4271, %v4263
    %v5952 = vpack.c.b16 %v4272, %v4264
    %v5953 = vpack.c.b16 %v4273, %v4265
    %v5954 = vpack.c.b16 %v4274, %v4266
    %v5955 = vpack.c.b16 %v4275, %v4267
    %v5956 = vpack.c.b16 %v4276, %v4268
    %v5957 = vpack.c.b16 %v4277, %v4269
    %v5958 = vpack.c.b16 %v4278, %v4270
    %v5959 = vpack.c.b16 %v4287, %v4279
    %v5960 = vpack.c.b16 %v4288, %v4280
    %v5961 = vpack.c.b16 %v4289, %v4281
    %v5962 = vpack.c.b16 %v4290, %v4282
    %v5963 = vpack.c.b16 %v4291, %v4283
    %v5964 = vpack.c.b16 %v4292, %v4284
    %v5965 = vpack.c.b16 %v4293, %v4285
    %v5966 = vpack.c.b16 %v4294, %v4286
    %v5967 = vpack.c.b16 %v4303, %v4295
    %v5968 = vpack.c.b16 %v4304, %v4296
    %v5969 = vpack.c.b16 %v4305, %v4297
    %v5970 = vpack.c.b16 %v4306, %v4298
    %v5971 = vpack.c.b16 %v4307, %v4299
    %v5972 = vpack.c.b16 %v4308, %v4300
    %v5973 = vpack.c.b16 %v4309, %v4301
    %v5974 = vpack.c.b16 %v4310, %v4302
    %v5975 = vpack.c.b16 %v4319, %v4311
    %v5976 = vpack.c.b16 %v4320, %v4312
    %v5977 = vpack.c.b16 %v4321, %v4313
    %v5978 = vpack.c.b16 %v4322, %v4314
    %v5979 = vpack.c.b16 %v4323, %v4315
    %v5980 = vpack.c.b16 %v4324, %v4316
    %v5981 = vpack.c.b16 %v4325, %v4317
    %v5982 = vpack.c.b16 %v4326, %v4318
    %v5983 = vpack.c.b16 %v4335, %v4327
    %v5984 = vpack.c.b16 %v4336, %v4328
    %v5985 = vpack.c.b16 %v4337, %v4329
    %v5986 = vpack.c.b16 %v4338, %v4330
    %v5987 = vpack.c.b16 %v4339, %v4331
    %v5988 = vpack.c.b16 %v4340, %v4332
    %v5989 = vpack.c.b16 %v4341, %v4333
    %v5990 = vpack.c.b16 %v4342, %v4334
    %v5991 = vpack.c.b16 %v4351, %v4343
    %v5992 = vpack.c.b16 %v4352, %v4344
    %v5993 = vpack.c.b16 %v4353, %v4345
    %v5994 = vpack.c.b16 %v4354, %v4346
    %v5995 = vpack.c.b16 %v4355, %v4347
    %v5996 = vpack.c.b16 %v4356, %v4348
    %v5997 = vpack.c.b16 %v4357, %v4349
    %v5998 = vpack.c.b16 %v4358, %v4350
    %v5999 = vpack.c.b16 %v4367, %v4359
    %v6000 = vpack.c.b16 %v4368, %v4360
    %v6001 = vpack.c.b16 %v4369, %v4361
    %v6002 = vpack.c.b16 %v4370, %v4362
    %v6003 = vpack.c.b16 %v4371, %v4363
    %v6004 = vpack.c.b16 %v4372, %v4364
    %v6005 = vpack.c.b16 %v4373, %v4365
    %v6006 = vpack.c.b16 %v4374, %v4366
    %v6007 = vpack.c.b16 %v4383, %v4375
    %v6008 = vpack.c.b16 %v4384, %v4376
    %v6009 = vpack.c.b16 %v4385, %v4377
    %v6010 = vpack.c.b16 %v4386, %v4378
    %v6011 = vpack.c.b16 %v4387, %v4379
    %v6012 = vpack.c.b16 %v4388, %v4380
    %v6013 = vpack.c.b16 %v4389, %v4381
    %v6014 = vpack.c.b16 %v4390, %v4382
    %v6015 = vpack.c.b16 %v4399, %v4391
    %v6016 = vpack.c.b16 %v4400, %v4392
    %v6017 = vpack.c.b16 %v4401, %v4393
    %v6018 = vpack.c.b16 %v4402, %v4394
    %v6019 = vpack.c.b16 %v4403, %v4395
    %v6020 = vpack.c.b16 %v4404, %v4396
    %v6021 = vpack.c.b16 %v4405, %v4397
    %v6022 = vpack.c.b16 %v4406, %v4398
    %v6023 = vpack.c.b16 %v4415, %v4407
    %v6024 = vpack.c.b16 %v4416, %v4408
    %v6025 = vpack.c.b16 %v4417, %v4409
    %v6026 = vpack.c.b16 %v4418, %v4410
    %v6027 = vpack.c.b16 %v4419, %v4411
    %v6028 = vpack.c.b16 %v4420, %v4412
    %v6029 = vpack.c.b16 %v4421, %v4413
    %v6030 = vpack.c.b16 %v4422, %v4414
    %v6031 = vpack.c.b16 %v4431, %v4423
    %v6032 = vpack.c.b16 %v4432, %v4424
    %v6033 = vpack.c.b16 %v4433, %v4425
    %v6034 = vpack.c.b16 %v4434, %v4426
    %v6035 = vpack.c.b16 %v4435, %v4427
    %v6036 = vpack.c.b16 %v4436, %v4428
    %v6037 = vpack.c.b16 %v4437, %v4429
    %v6038 = vpack.c.b16 %v4438, %v4430
    %v6039 = vpack.c.b16 %v4447, %v4439
    %v6040 = vpack.c.b16 %v4448, %v4440
    %v6041 = vpack.c.b16 %v4449, %v4441
    %v6042 = vpack.c.b16 %v4450, %v4442
    %v6043 = vpack.c.b16 %v4451, %v4443
    %v6044 = vpack.c.b16 %v4452, %v4444
    %v6045 = vpack.c.b16 %v4453, %v4445
    %v6046 = vpack.c.b16 %v4454, %v4446
    %v6047 = vpack.c.b16 %v4463, %v4455
    %v6048 = vpack.c.b16 %v4464, %v4456
    %v6049 = vpack.c.b16 %v4465, %v4457
    %v6050 = vpack.c.b16 %v4466, %v4458
    %v6051 = vpack.c.b16 %v4467, %v4459
    %v6052 = vpack.c.b16 %v4468, %v4460
    %v6053 = vpack.c.b16 %v4469, %v4461
    %v6054 = vpack.c.b16 %v4470, %v4462
    %v6055 = vpack.c.b16 %v4479, %v4471
    %v6056 = vpack.c.b16 %v4480, %v4472
    %v6057 = vpack.c.b16 %v4481, %v4473
    %v6058 = vpack.c.b16 %v4482, %v4474
    %v6059 = vpack.c.b16 %v4483, %v4475
    %v6060 = vpack.c.b16 %v4484, %v4476
    %v6061 = vpack.c.b16 %v4485, %v4477
    %v6062 = vpack.c.b16 %v4486, %v4478
    %v6063 = vpack.c.b16 %v4495, %v4487
    %v6064 = vpack.c.b16 %v4496, %v4488
    %v6065 = vpack.c.b16 %v4497, %v4489
    %v6066 = vpack.c.b16 %v4498, %v4490
    %v6067 = vpack.c.b16 %v4499, %v4491
    %v6068 = vpack.c.b16 %v4500, %v4492
    %v6069 = vpack.c.b16 %v4501, %v4493
    %v6070 = vpack.c.b16 %v4502, %v4494
    %v6071 = vpack.c.b16 %v4511, %v4503
    %v6072 = vpack.c.b16 %v4512, %v4504
    %v6073 = vpack.c.b16 %v4513, %v4505
    %v6074 = vpack.c.b16 %v4514, %v4506
    %v6075 = vpack.c.b16 %v4515, %v4507
    %v6076 = vpack.c.b16 %v4516, %v4508
    %v6077 = vpack.c.b16 %v4517, %v4509
    %v6078 = vpack.c.b16 %v4518, %v4510
    %v6079 = vpack.c.b16 %v4527, %v4519
    %v6080 = vpack.c.b16 %v4528, %v4520
    %v6081 = vpack.c.b16 %v4529, %v4521
    %v6082 = vpack.c.b16 %v4530, %v4522
    %v6083 = vpack.c.b16 %v4531, %v4523
    %v6084 = vpack.c.b16 %v4532, %v4524
    %v6085 = vpack.c.b16 %v4533, %v4525
    %v6086 = vpack.c.b16 %v4534, %v4526
    %v6087 = vpack.c.b16 %v4543, %v4535
    %v6088 = vpack.c.b16 %v4544, %v4536
    %v6089 = vpack.c.b16 %v4545, %v4537
    %v6090 = vpack.c.b16 %v4546, %v4538
    %v6091 = vpack.c.b16 %v4547, %v4539
    %v6092 = vpack.c.b16 %v4548, %v4540
    %v6093 = vpack.c.b16 %v4549, %v4541
    %v6094 = vpack.c.b16 %v4550, %v4542
    %v6095 = vpack.c.b16 %v4559, %v4551
    %v6096 = vpack.c.b16 %v4560, %v4552
    %v6097 = vpack.c.b16 %v4561, %v4553
    %v6098 = vpack.c.b16 %v4562, %v4554
    %v6099 = vpack.c.b16 %v4563, %v4555
    %v6100 = vpack.c.b16 %v4564, %v4556
    %v6101 = vpack.c.b16 %v4565, %v4557
    %v6102 = vpack.c.b16 %v4566, %v4558
    %v6103 = vpack.c.b16 %v4575, %v4567
    %v6104 = vpack.c.b16 %v4576, %v4568
    %v6105 = vpack.c.b16 %v4577, %v4569
    %v6106 = vpack.c.b16 %v4578, %v4570
    %v6107 = vpack.c.b16 %v4579, %v4571
    %v6108 = vpack.c.b16 %v4580, %v4572
    %v6109 = vpack.c.b16 %v4581, %v4573
    %v6110 = vpack.c.b16 %v4582, %v4574
    %v6111 = vpack.c.b16 %v4591, %v4583
    %v6112 = vpack.c.b16 %v4592, %v4584
    %v6113 = vpack.c.b16 %v4593, %v4585
    %v6114 = vpack.c.b16 %v4594, %v4586
    %v6115 = vpack.c.b16 %v4595, %v4587
    %v6116 = vpack.c.b16 %v4596, %v4588
    %v6117 = vpack.c.b16 %v4597, %v4589
    %v6118 = vpack.c.b16 %v4598, %v4590
    %v6119 = vpack.c.b16 %v4607, %v4599
    %v6120 = vpack.c.b16 %v4608, %v4600
    %v6121 = vpack.c.b16 %v4609, %v4601
    %v6122 = vpack.c.b16 %v4610, %v4602
    %v6123 = vpack.c.b16 %v4611, %v4603
    %v6124 = vpack.c.b16 %v4612, %v4604
    %v6125 = vpack.c.b16 %v4613, %v4605
    %v6126 = vpack.c.b16 %v4614, %v4606
    %v6127 = vpack.c.b16 %v4623, %v4615
    %v6128 = vpack.c.b16 %v4624, %v4616
    %v6129 = vpack.c.b16 %v4625, %v4617
    %v6130 = vpack.c.b16 %v4626, %v4618
    %v6131 = vpack.c.b16 %v4627, %v4619
    %v6132 = vpack.c.b16 %v4628, %v4620
    %v6133 = vpack.c.b16 %v4629, %v4621
    %v6134 = vpack.c.b16 %v4630, %v4622
    %v6135 = vpack.c.b16 %v4639, %v4631
    %v6136 = vpack.c.b16 %v4640, %v4632
    %v6137 = vpack.c.b16 %v4641, %v4633
    %v6138 = vpack.c.b16 %v4642, %v4634
    %v6139 = vpack.c.b16 %v4643, %v4635
    %v6140 = vpack.c.b16 %v4644, %v4636
    %v6141 = vpack.c.b16 %v4645, %v4637
    %v6142 = vpack.c.b16 %v4646, %v4638
    %v6143 = vpack.c.b16 %v4655, %v4647
    %v6144 = vpack.c.b16 %v4656, %v4648
    %v6145 = vpack.c.b16 %v4657, %v4649
    %v6146 = vpack.c.b16 %v4658, %v4650
    %v6147 = vpack.c.b16 %v4659, %v4651
    %v6148 = vpack.c.b16 %v4660, %v4652
    %v6149 = vpack.c.b16 %v4661, %v4653
    %v6150 = vpack.c.b16 %v4662, %v4654
    %v6151 = vpack.c.b16 %v4671, %v4663
    %v6152 = vpack.c.b16 %v4672, %v4664
    %v6153 = vpack.c.b16 %v4673, %v4665
    %v6154 = vpack.c.b16 %v4674, %v4666
    %v6155 = vpack.c.b16 %v4675, %v4667
    %v6156 = vpack.c.b16 %v4676, %v4668
    %v6157 = vpack.c.b16 %v4677, %v4669
    %v6158 = vpack.c.b16 %v4678, %v4670
    %v6159 = vpack.c.b16 %v4687, %v4679
    %v6160 = vpack.c.b16 %v4688, %v4680
    %v6161 = vpack.c.b16 %v4689, %v4681
    %v6162 = vpack.c.b16 %v4690, %v4682
    %v6163 = vpack.c.b16 %v4691, %v4683
    %v6164 = vpack.c.b16 %v4692, %v4684
    %v6165 = vpack.c.b16 %v4693, %v4685
    %v6166 = vpack.c.b16 %v4694, %v4686
    %v6167 = vpack.c.b16 %v4703, %v4695
    %v6168 = vpack.c.b16 %v4704, %v4696
    %v6169 = vpack.c.b16 %v4705, %v4697
    %v6170 = vpack.c.b16 %v4706, %v4698
    %v6171 = vpack.c.b16 %v4707, %v4699
    %v6172 = vpack.c.b16 %v4708, %v4700
    %v6173 = vpack.c.b16 %v4709, %v4701
    %v6174 = vpack.c.b16 %v4710, %v4702
    %v6175 = vpack.c.b16 %v4719, %v4711
    %v6176 = vpack.c.b16 %v4720, %v4712
    %v6177 = vpack.c.b16 %v4721, %v4713
    %v6178 = vpack.c.b16 %v4722, %v4714
    %v6179 = vpack.c.b16 %v4723, %v4715
    %v6180 = vpack.c.b16 %v4724, %v4716
    %v6181 = vpack.c.b16 %v4725, %v4717
    %v6182 = vpack.c.b16 %v4726, %v4718
    %v6183 = vpack.c.b16 %v4735, %v4727
    %v6184 = vpack.c.b16 %v4736, %v4728
    %v6185 = vpack.c.b16 %v4737, %v4729
    %v6186 = vpack.c.b16 %v4738, %v4730
    %v6187 = vpack.c.b16 %v4739, %v4731
    %v6188 = vpack.c.b16 %v4740, %v4732
    %v6189 = vpack.c.b16 %v4741, %v4733
    %v6190 = vpack.c.b16 %v4742, %v4734
    %v6191 = vpack.c.b16 %v4751, %v4743
    %v6192 = vpack.c.b16 %v4752, %v4744
    %v6193 = vpack.c.b16 %v4753, %v4745
    %v6194 = vpack.c.b16 %v4754, %v4746
    %v6195 = vpack.c.b16 %v4755, %v4747
    %v6196 = vpack.c.b16 %v4756, %v4748
    %v6197 = vpack.c.b16 %v4757, %v4749
    %v6198 = vpack.c.b16 %v4758, %v4750
    %v6199 = vpack.c.b16 %v4767, %v4759
    %v6200 = vpack.c.b16 %v4768, %v4760
    %v6201 = vpack.c.b16 %v4769, %v4761
    %v6202 = vpack.c.b16 %v4770, %v4762
    %v6203 = vpack.c.b16 %v4771, %v4763
    %v6204 = vpack.c.b16 %v4772, %v4764
    %v6205 = vpack.c.b16 %v4773, %v4765
    %v6206 = vpack.c.b16 %v4774, %v4766
    %v6207 = vpack.c.b16 %v4783, %v4775
    %v6208 = vpack.c.b16 %v4784, %v4776
    %v6209 = vpack.c.b16 %v4785, %v4777
    %v6210 = vpack.c.b16 %v4786, %v4778
    %v6211 = vpack.c.b16 %v4787, %v4779
    %v6212 = vpack.c.b16 %v4788, %v4780
    %v6213 = vpack.c.b16 %v4789, %v4781
    %v6214 = vpack.c.b16 %v4790, %v4782
    %v6215 = vpack.c.b16 %v4799, %v4791
    %v6216 = vpack.c.b16 %v4800, %v4792
    %v6217 = vpack.c.b16 %v4801, %v4793
    %v6218 = vpack.c.b16 %v4802, %v4794
    %v6219 = vpack.c.b16 %v4803, %v4795
    %v6220 = vpack.c.b16 %v4804, %v4796
    %v6221 = vpack.c.b16 %v4805, %v4797
    %v6222 = vpack.c.b16 %v4806, %v4798
    %v6223 = vpack.c.b16 %v4815, %v4807
    %v6224 = vpack.c.b16 %v4816, %v4808
    %v6225 = vpack.c.b16 %v4817, %v4809
    %v6226 = vpack.c.b16 %v4818, %v4810
    %v6227 = vpack.c.b16 %v4819, %v4811
    %v6228 = vpack.c.b16 %v4820, %v4812
    %v6229 = vpack.c.b16 %v4821, %v4813
    %v6230 = vpack.c.b16 %v4822, %v4814
    %v6231 = vpack.c.b16 %v4831, %v4823
    %v6232 = vpack.c.b16 %v4832, %v4824
    %v6233 = vpack.c.b16 %v4833, %v4825
    %v6234 = vpack.c.b16 %v4834, %v4826
    %v6235 = vpack.c.b16 %v4835, %v4827
    %v6236 = vpack.c.b16 %v4836, %v4828
    %v6237 = vpack.c.b16 %v4837, %v4829
    %v6238 = vpack.c.b16 %v4838, %v4830
    %v6239 = vpack.c.b16 %v4847, %v4839
    %v6240 = vpack.c.b16 %v4848, %v4840
    %v6241 = vpack.c.b16 %v4849, %v4841
    %v6242 = vpack.c.b16 %v4850, %v4842
    %v6243 = vpack.c.b16 %v4851, %v4843
    %v6244 = vpack.c.b16 %v4852, %v4844
    %v6245 = vpack.c.b16 %v4853, %v4845
    %v6246 = vpack.c.b16 %v4854, %v4846
    %v6247 = vpack.c.b16 %v4863, %v4855
    %v6248 = vpack.c.b16 %v4864, %v4856
    %v6249 = vpack.c.b16 %v4865, %v4857
    %v6250 = vpack.c.b16 %v4866, %v4858
    %v6251 = vpack.c.b16 %v4867, %v4859
    %v6252 = vpack.c.b16 %v4868, %v4860
    %v6253 = vpack.c.b16 %v4869, %v4861
    %v6254 = vpack.c.b16 %v4870, %v4862
    %v6255 = vpack.c.b16 %v4879, %v4871
    %v6256 = vpack.c.b16 %v4880, %v4872
    %v6257 = vpack.c.b16 %v4881, %v4873
    %v6258 = vpack.c.b16 %v4882, %v4874
    %v6259 = vpack.c.b16 %v4883, %v4875
    %v6260 = vpack.c.b16 %v4884, %v4876
    %v6261 = vpack.c.b16 %v4885, %v4877
    %v6262 = vpack.c.b16 %v4886, %v4878
    %v6263 = vpack.c.b16 %v4895, %v4887
    %v6264 = vpack.c.b16 %v4896, %v4888
    %v6265 = vpack.c.b16 %v4897, %v4889
    %v6266 = vpack.c.b16 %v4898, %v4890
    %v6267 = vpack.c.b16 %v4899, %v4891
    %v6268 = vpack.c.b16 %v4900, %v4892
    %v6269 = vpack.c.b16 %v4901, %v4893
    %v6270 = vpack.c.b16 %v4902, %v4894
    %v6271 = vpack.c.b16 %v4911, %v4903
    %v6272 = vpack.c.b16 %v4912, %v4904
    %v6273 = vpack.c.b16 %v4913, %v4905
    %v6274 = vpack.c.b16 %v4914, %v4906
    %v6275 = vpack.c.b16 %v4915, %v4907
    %v6276 = vpack.c.b16 %v4916, %v4908
    %v6277 = vpack.c.b16 %v4917, %v4909
    %v6278 = vpack.c.b16 %v4918, %v4910
    %v6279 = vpack.c.b16 %v4927, %v4919
    %v6280 = vpack.c.b16 %v4928, %v4920
    %v6281 = vpack.c.b16 %v4929, %v4921
    %v6282 = vpack.c.b16 %v4930, %v4922
    %v6283 = vpack.c.b16 %v4931, %v4923
    %v6284 = vpack.c.b16 %v4932, %v4924
    %v6285 = vpack.c.b16 %v4933, %v4925
    %v6286 = vpack.c.b16 %v4934, %v4926
    %v6287 = vpack.c.b16 %v4943, %v4935
    %v6288 = vpack.c.b16 %v4944, %v4936
    %v6289 = vpack.c.b16 %v4945, %v4937
    %v6290 = vpack.c.b16 %v4946, %v4938
    %v6291 = vpack.c.b16 %v4947, %v4939
    %v6292 = vpack.c.b16 %v4948, %v4940
    %v6293 = vpack.c.b16 %v4949, %v4941
    %v6294 = vpack.c.b16 %v4950, %v4942
    %v6295 = vpack.c.b16 %v4959, %v4951
    %v6296 = vpack.c.b16 %v4960, %v4952
    %v6297 = vpack.c.b16 %v4961, %v4953
    %v6298 = vpack.c.b16 %v4962, %v4954
    %v6299 = vpack.c.b16 %v4963, %v4955
    %v6300 = vpack.c.b16 %v4964, %v4956
    %v6301 = vpack.c.b16 %v4965, %v4957
    %v6302 = vpack.c.b16 %v4966, %v4958
    %v6303 = vpack.c.b16 %v4975, %v4967
    %v6304 = vpack.c.b16 %v4976, %v4968
    %v6305 = vpack.c.b16 %v4977, %v4969
    %v6306 = vpack.c.b16 %v4978, %v4970
    %v6307 = vpack.c.b16 %v4979, %v4971
    %v6308 = vpack.c.b16 %v4980, %v4972
    %v6309 = vpack.c.b16 %v4981, %v4973
    %v6310 = vpack.c.b16 %v4982, %v4974
    %v6311 = vpack.c.b16 %v4991, %v4983
    %v6312 = vpack.c.b16 %v4992, %v4984
    %v6313 = vpack.c.b16 %v4993, %v4985
    %v6314 = vpack.c.b16 %v4994, %v4986
    %v6315 = vpack.c.b16 %v4995, %v4987
    %v6316 = vpack.c.b16 %v4996, %v4988
    %v6317 = vpack.c.b16 %v4997, %v4989
    %v6318 = vpack.c.b16 %v4998, %v4990
    %v6319 = vpack.c.b16 %v5007, %v4999
    %v6320 = vpack.c.b16 %v5008, %v5000
    %v6321 = vpack.c.b16 %v5009, %v5001
    %v6322 = vpack.c.b16 %v5010, %v5002
    %v6323 = vpack.c.b16 %v5011, %v5003
    %v6324 = vpack.c.b16 %v5012, %v5004
    %v6325 = vpack.c.b16 %v5013, %v5005
    %v6326 = vpack.c.b16 %v5014, %v5006
    %v6327 = vpack.c.b16 %v5023, %v5015
    %v6328 = vpack.c.b16 %v5024, %v5016
    %v6329 = vpack.c.b16 %v5025, %v5017
    %v6330 = vpack.c.b16 %v5026, %v5018
    %v6331 = vpack.c.b16 %v5027, %v5019
    %v6332 = vpack.c.b16 %v5028, %v5020
    %v6333 = vpack.c.b16 %v5029, %v5021
    %v6334 = vpack.c.b16 %v5030, %v5022
    %v6335 = vpack.c.b16 %v5039, %v5031
    %v6336 = vpack.c.b16 %v5040, %v5032
    %v6337 = vpack.c.b16 %v5041, %v5033
    %v6338 = vpack.c.b16 %v5042, %v5034
    %v6339 = vpack.c.b16 %v5043, %v5035
    %v6340 = vpack.c.b16 %v5044, %v5036
    %v6341 = vpack.c.b16 %v5045, %v5037
    %v6342 = vpack.c.b16 %v5046, %v5038
    %v6343 = vpack.c.b16 %v5055, %v5047
    %v6344 = vpack.c.b16 %v5056, %v5048
    %v6345 = vpack.c.b16 %v5057, %v5049
    %v6346 = vpack.c.b16 %v5058, %v5050
    %v6347 = vpack.c.b16 %v5059, %v5051
    %v6348 = vpack.c.b16 %v5060, %v5052
    %v6349 = vpack.c.b16 %v5061, %v5053
    %v6350 = vpack.c.b16 %v5062, %v5054
    %v6351 = vpack.c.b16 %v5071, %v5063
    %v6352 = vpack.c.b16 %v5072, %v5064
    %v6353 = vpack.c.b16 %v5073, %v5065
    %v6354 = vpack.c.b16 %v5074, %v5066
    %v6355 = vpack.c.b16 %v5075, %v5067
    %v6356 = vpack.c.b16 %v5076, %v5068
    %v6357 = vpack.c.b16 %v5077, %v5069
    %v6358 = vpack.c.b16 %v5078, %v5070
    %v6359 = vpack.c.b16 %v5087, %v5079
    %v6360 = vpack.c.b16 %v5088, %v5080
    %v6361 = vpack.c.b16 %v5089, %v5081
    %v6362 = vpack.c.b16 %v5090, %v5082
    %v6363 = vpack.c.b16 %v5091, %v5083
    %v6364 = vpack.c.b16 %v5092, %v5084
    %v6365 = vpack.c.b16 %v5093, %v5085
    %v6366 = vpack.c.b16 %v5094, %v5086
    %v6367 = vpack.c.b16 %v5103, %v5095
    %v6368 = vpack.c.b16 %v5104, %v5096
    %v6369 = vpack.c.b16 %v5105, %v5097
    %v6370 = vpack.c.b16 %v5106, %v5098
    %v6371 = vpack.c.b16 %v5107, %v5099
    %v6372 = vpack.c.b16 %v5108, %v5100
    %v6373 = vpack.c.b16 %v5109, %v5101
    %v6374 = vpack.c.b16 %v5110, %v5102
    %v6375 = vpack.c.b16 %v5119, %v5111
    %v6376 = vpack.c.b16 %v5120, %v5112
    %v6377 = vpack.c.b16 %v5121, %v5113
    %v6378 = vpack.c.b16 %v5122, %v5114
    %v6379 = vpack.c.b16 %v5123, %v5115
    %v6380 = vpack.c.b16 %v5124, %v5116
    %v6381 = vpack.c.b16 %v5125, %v5117
    %v6382 = vpack.c.b16 %v5126, %v5118
    %v6383 = vpack.c.b16 %v5135, %v5127
    %v6384 = vpack.c.b16 %v5136, %v5128
    %v6385 = vpack.c.b16 %v5137, %v5129
    %v6386 = vpack.c.b16 %v5138, %v5130
    %v6387 = vpack.c.b16 %v5139, %v5131
    %v6388 = vpack.c.b16 %v5140, %v5132
    %v6389 = vpack.c.b16 %v5141, %v5133
    %v6390 = vpack.c.b16 %v5142, %v5134
    %v6391 = vpack.c.b16 %v5151, %v5143
    %v6392 = vpack.c.b16 %v5152, %v5144
    %v6393 = vpack.c.b16 %v5153, %v5145
    %v6394 = vpack.c.b16 %v5154, %v5146
    %v6395 = vpack.c.b16 %v5155, %v5147
    %v6396 = vpack.c.b16 %v5156, %v5148
    %v6397 = vpack.c.b16 %v5157, %v5149
    %v6398 = vpack.c.b16 %v5158, %v5150
    %v6399 = vpack.c.b16 %v5167, %v5159
    %v6400 = vpack.c.b16 %v5168, %v5160
    %v6401 = vpack.c.b16 %v5169, %v5161
    %v6402 = vpack.c.b16 %v5170, %v5162
    %v6403 = vpack.c.b16 %v5171, %v5163
    %v6404 = vpack.c.b16 %v5172, %v5164
    %v6405 = vpack.c.b16 %v5173, %v5165
    %v6406 = vpack.c.b16 %v5174, %v5166
    %v6407 = vpack.c.b16 %v5183, %v5175
    %v6408 = vpack.c.b16 %v5184, %v5176
    %v6409 = vpack.c.b16 %v5185, %v5177
    %v6410 = vpack.c.b16 %v5186, %v5178
    %v6411 = vpack.c.b16 %v5187, %v5179
    %v6412 = vpack.c.b16 %v5188, %v5180
    %v6413 = vpack.c.b16 %v5189, %v5181
    %v6414 = vpack.c.b16 %v5190, %v5182
    %v6415 = vpack.c.b16 %v5199, %v5191
    %v6416 = vpack.c.b16 %v5200, %v5192
    %v6417 = vpack.c.b16 %v5201, %v5193
    %v6418 = vpack.c.b16 %v5202, %v5194
    %v6419 = vpack.c.b16 %v5203, %v5195
    %v6420 = vpack.c.b16 %v5204, %v5196
    %v6421 = vpack.c.b16 %v5205, %v5197
    %v6422 = vpack.c.b16 %v5206, %v5198
    %v6423 = vpack.c.b16 %v5215, %v5207
    %v6424 = vpack.c.b16 %v5216, %v5208
    %v6425 = vpack.c.b16 %v5217, %v5209
    %v6426 = vpack.c.b16 %v5218, %v5210
    %v6427 = vpack.c.b16 %v5219, %v5211
    %v6428 = vpack.c.b16 %v5220, %v5212
    %v6429 = vpack.c.b16 %v5221, %v5213
    %v6430 = vpack.c.b16 %v5222, %v5214
    %v6431 = vpack.c.b16 %v5231, %v5223
    %v6432 = vpack.c.b16 %v5232, %v5224
    %v6433 = vpack.c.b16 %v5233, %v5225
    %v6434 = vpack.c.b16 %v5234, %v5226
    %v6435 = vpack.c.b16 %v5235, %v5227
    %v6436 = vpack.c.b16 %v5236, %v5228
    %v6437 = vpack.c.b16 %v5237, %v5229
    %v6438 = vpack.c.b16 %v5238, %v5230
    %v6439 = vpack.c.b16 %v5247, %v5239
    %v6440 = vpack.c.b16 %v5248, %v5240
    %v6441 = vpack.c.b16 %v5249, %v5241
    %v6442 = vpack.c.b16 %v5250, %v5242
    %v6443 = vpack.c.b16 %v5251, %v5243
    %v6444 = vpack.c.b16 %v5252, %v5244
    %v6445 = vpack.c.b16 %v5253, %v5245
    %v6446 = vpack.c.b16 %v5254, %v5246
    %v6447 = vpack.c.b16 %v5263, %v5255
    %v6448 = vpack.c.b16 %v5264, %v5256
    %v6449 = vpack.c.b16 %v5265, %v5257
    %v6450 = vpack.c.b16 %v5266, %v5258
    %v6451 = vpack.c.b16 %v5267, %v5259
    %v6452 = vpack.c.b16 %v5268, %v5260
    %v6453 = vpack.c.b16 %v5269, %v5261
    %v6454 = vpack.c.b16 %v5270, %v5262
    %v6455 = vpack.c.b16 %v5279, %v5271
    %v6456 = vpack.c.b16 %v5280, %v5272
    %v6457 = vpack.c.b16 %v5281, %v5273
    %v6458 = vpack.c.b16 %v5282, %v5274
    %v6459 = vpack.c.b16 %v5283, %v5275
    %v6460 = vpack.c.b16 %v5284, %v5276
    %v6461 = vpack.c.b16 %v5285, %v5277
    %v6462 = vpack.c.b16 %v5286, %v5278
    %v6463 = vpack.c.b16 %v5295, %v5287
    %v6464 = vpack.c.b16 %v5296, %v5288
    %v6465 = vpack.c.b16 %v5297, %v5289
    %v6466 = vpack.c.b16 %v5298, %v5290
    %v6467 = vpack.c.b16 %v5299, %v5291
    %v6468 = vpack.c.b16 %v5300, %v5292
    %v6469 = vpack.c.b16 %v5301, %v5293
    %v6470 = vpack.c.b16 %v5302, %v5294
    %v6471 = vpack.c.b16 %v5311, %v5303
    %v6472 = vpack.c.b16 %v5312, %v5304
    %v6473 = vpack.c.b16 %v5313, %v5305
    %v6474 = vpack.c.b16 %v5314, %v5306
    %v6475 = vpack.c.b16 %v5315, %v5307
    %v6476 = vpack.c.b16 %v5316, %v5308
    %v6477 = vpack.c.b16 %v5317, %v5309
    %v6478 = vpack.c.b16 %v5318, %v5310
    %v6479 = vpack.c.b16 %v5327, %v5319
    %v6480 = vpack.c.b16 %v5328, %v5320
    %v6481 = vpack.c.b16 %v5329, %v5321
    %v6482 = vpack.c.b16 %v5330, %v5322
    %v6483 = vpack.c.b16 %v5331, %v5323
    %v6484 = vpack.c.b16 %v5332, %v5324
    %v6485 = vpack.c.b16 %v5333, %v5325
    %v6486 = vpack.c.b16 %v5334, %v5326
    %v6487 = vpack.c.b16 %v5343, %v5335
    %v6488 = vpack.c.b16 %v5344, %v5336
    %v6489 = vpack.c.b16 %v5345, %v5337
    %v6490 = vpack.c.b16 %v5346, %v5338
    %v6491 = vpack.c.b16 %v5347, %v5339
    %v6492 = vpack.c.b16 %v5348, %v5340
    %v6493 = vpack.c.b16 %v5349, %v5341
    %v6494 = vpack.c.b16 %v5350, %v5342
    %v6495 = vpack.c.b16 %v5359, %v5351
    %v6496 = vpack.c.b16 %v5360, %v5352
    %v6497 = vpack.c.b16 %v5361, %v5353
    %v6498 = vpack.c.b16 %v5362, %v5354
    %v6499 = vpack.c.b16 %v5363, %v5355
    %v6500 = vpack.c.b16 %v5364, %v5356
    %v6501 = vpack.c.b16 %v5365, %v5357
    %v6502 = vpack.c.b16 %v5366, %v5358
    %v6503 = vpack.c.b16 %v5375, %v5367
    %v6504 = vpack.c.b16 %v5376, %v5368
    %v6505 = vpack.c.b16 %v5377, %v5369
    %v6506 = vpack.c.b16 %v5378, %v5370
    %v6507 = vpack.c.b16 %v5379, %v5371
    %v6508 = vpack.c.b16 %v5380, %v5372
    %v6509 = vpack.c.b16 %v5381, %v5373
    %v6510 = vpack.c.b16 %v5382, %v5374
    %v6511 = vpack.c.b16 %v5391, %v5383
    %v6512 = vpack.c.b16 %v5392, %v5384
    %v6513 = vpack.c.b16 %v5393, %v5385
    %v6514 = vpack.c.b16 %v5394, %v5386
    %v6515 = vpack.c.b16 %v5395, %v5387
    %v6516 = vpack.c.b16 %v5396, %v5388
    %v6517 = vpack.c.b16 %v5397, %v5389
    %v6518 = vpack.c.b16 %v5398, %v5390
    %v6519 = vpack.c.b16 %v5407, %v5399
    %v6520 = vpack.c.b16 %v5408, %v5400
    %v6521 = vpack.c.b16 %v5409, %v5401
    %v6522 = vpack.c.b16 %v5410, %v5402
    %v6523 = vpack.c.b16 %v5411, %v5403
    %v6524 = vpack.c.b16 %v5412, %v5404
    %v6525 = vpack.c.b16 %v5413, %v5405
    %v6526 = vpack.c.b16 %v5414, %v5406
    %v6527 = vpack.c.b16 %v5423, %v5415
    %v6528 = vpack.c.b16 %v5424, %v5416
    %v6529 = vpack.c.b16 %v5425, %v5417
    %v6530 = vpack.c.b16 %v5426, %v5418
    %v6531 = vpack.c.b16 %v5427, %v5419
    %v6532 = vpack.c.b16 %v5428, %v5420
    %v6533 = vpack.c.b16 %v5429, %v5421
    %v6534 = vpack.c.b16 %v5430, %v5422
    %v6535 = vpack.c.b16 %v5439, %v5431
    %v6536 = vpack.c.b16 %v5440, %v5432
    %v6537 = vpack.c.b16 %v5441, %v5433
    %v6538 = vpack.c.b16 %v5442, %v5434
    %v6539 = vpack.c.b16 %v5443, %v5435
    %v6540 = vpack.c.b16 %v5444, %v5436
    %v6541 = vpack.c.b16 %v5445, %v5437
    %v6542 = vpack.c.b16 %v5446, %v5438
    %v6543 = vpack.c.b16 %v5455, %v5447
    %v6544 = vpack.c.b16 %v5456, %v5448
    %v6545 = vpack.c.b16 %v5457, %v5449
    %v6546 = vpack.c.b16 %v5458, %v5450
    %v6547 = vpack.c.b16 %v5459, %v5451
    %v6548 = vpack.c.b16 %v5460, %v5452
    %v6549 = vpack.c.b16 %v5461, %v5453
    %v6550 = vpack.c.b16 %v5462, %v5454
    %v6551 = vpack.c.b16 %v5471, %v5463
    %v6552 = vpack.c.b16 %v5472, %v5464
    %v6553 = vpack.c.b16 %v5473, %v5465
    %v6554 = vpack.c.b16 %v5474, %v5466
    %v6555 = vpack.c.b16 %v5475, %v5467
    %v6556 = vpack.c.b16 %v5476, %v5468
    %v6557 = vpack.c.b16 %v5477, %v5469
    %v6558 = vpack.c.b16 %v5478, %v5470
    %v6559 = vpack.c.b16 %v5487, %v5479
    %v6560 = vpack.c.b16 %v5488, %v5480
    %v6561 = vpack.c.b16 %v5489, %v5481
    %v6562 = vpack.c.b16 %v5490, %v5482
    %v6563 = vpack.c.b16 %v5491, %v5483
    %v6564 = vpack.c.b16 %v5492, %v5484
    %v6565 = vpack.c.b16 %v5493, %v5485
    %v6566 = vpack.c.b16 %v5494, %v5486
    %v6567 = vpack.c.b16 %v5503, %v5495
    %v6568 = vpack.c.b16 %v5504, %v5496
    %v6569 = vpack.c.b16 %v5505, %v5497
    %v6570 = vpack.c.b16 %v5506, %v5498
    %v6571 = vpack.c.b16 %v5507, %v5499
    %v6572 = vpack.c.b16 %v5508, %v5500
    %v6573 = vpack.c.b16 %v5509, %v5501
    %v6574 = vpack.c.b16 %v5510, %v5502
    %v6575 = vpack.c.b16 %v5519, %v5511
    %v6576 = vpack.c.b16 %v5520, %v5512
    %v6577 = vpack.c.b16 %v5521, %v5513
    %v6578 = vpack.c.b16 %v5522, %v5514
    %v6579 = vpack.c.b16 %v5523, %v5515
    %v6580 = vpack.c.b16 %v5524, %v5516
    %v6581 = vpack.c.b16 %v5525, %v5517
    %v6582 = vpack.c.b16 %v5526, %v5518
    %v6583 = vpack.c.b16 %v5535, %v5527
    %v6584 = vpack.c.b16 %v5536, %v5528
    %v6585 = vpack.c.b16 %v5537, %v5529
    %v6586 = vpack.c.b16 %v5538, %v5530
    %v6587 = vpack.c.b16 %v5539, %v5531
    %v6588 = vpack.c.b16 %v5540, %v5532
    %v6589 = vpack.c.b16 %v5541, %v5533
    %v6590 = vpack.c.b16 %v5542, %v5534
    %v6591 = vpack.c.b16 %v5551, %v5543
    %v6592 = vpack.c.b16 %v5552, %v5544
    %v6593 = vpack.c.b16 %v5553, %v5545
    %v6594 = vpack.c.b16 %v5554, %v5546
    %v6595 = vpack.c.b16 %v5555, %v5547
    %v6596 = vpack.c.b16 %v5556, %v5548
    %v6597 = vpack.c.b16 %v5557, %v5549
    %v6598 = vpack.c.b16 %v5558, %v5550
    %v6599 = vpack.c.b16 %v5567, %v5559
    %v6600 = vpack.c.b16 %v5568, %v5560
    %v6601 = vpack.c.b16 %v5569, %v5561
    %v6602 = vpack.c.b16 %v5570, %v5562
    %v6603 = vpack.c.b16 %v5571, %v5563
    %v6604 = vpack.c.b16 %v5572, %v5564
    %v6605 = vpack.c.b16 %v5573, %v5565
    %v6606 = vpack.c.b16 %v5574, %v5566
    %v6607 = vpack.c.b16 %v5583, %v5575
    %v6608 = vpack.c.b16 %v5584, %v5576
    %v6609 = vpack.c.b16 %v5585, %v5577
    %v6610 = vpack.c.b16 %v5586, %v5578
    %v6611 = vpack.c.b16 %v5587, %v5579
    %v6612 = vpack.c.b16 %v5588, %v5580
    %v6613 = vpack.c.b16 %v5589, %v5581
    %v6614 = vpack.c.b16 %v5590, %v5582
    %7639 = vmatprep.subr.bf16.mxu0 %v5648
    %7640 = vmatpush1.bf16.msra.mxu0 %v5647
    %7641 = vmatprep.subr.bf16.mxu0 %v5640
    %7642 = vmatpush1.bf16.msra.mxu0 %v5639
    %7643 = vmatprep.subr.bf16.mxu0 %v5632
    %7644 = vmatpush1.bf16.msra.mxu0 %v5631
    %7645 = vmatprep.subr.bf16.mxu0 %v5624
    %7646 = vmatpush1.bf16.msra.mxu0 %v5623
    %7647 = vmatprep.subr.bf16.mxu0 %v5616
    %7648 = vmatpush1.bf16.msra.mxu0 %v5615
    %7649 = vmatprep.subr.bf16.mxu0 %v5608
    %7650 = vmatpush1.bf16.msra.mxu0 %v5607
    %7651 = vmatprep.subr.bf16.mxu0 %v5600
    %7652 = vmatpush1.bf16.msra.mxu0 %v5599
    %7653 = vmatprep.subr.bf16.mxu0 %v5592
    %7654 = vmatpush1.bf16.msra.mxu0 %v5591
    %7655 = vmatprep.subr.bf16.mxu0 %v5712
    %7656 = vmatpush2.bf16.msra.mxu0 %v5711
    %7657 = vmatprep.subr.bf16.mxu0 %v5704
    %7658 = vmatpush2.bf16.msra.mxu0 %v5703
    %7659 = vmatprep.subr.bf16.mxu0 %v5696
    %7660 = vmatpush2.bf16.msra.mxu0 %v5695
    %7661 = vmatprep.subr.bf16.mxu0 %v5688
    %7662 = vmatpush2.bf16.msra.mxu0 %v5687
    %7663 = vmatprep.subr.bf16.mxu0 %v5680
    %7664 = vmatpush2.bf16.msra.mxu0 %v5679
    %7665 = vmatprep.subr.bf16.mxu0 %v5672
    %7666 = vmatpush2.bf16.msra.mxu0 %v5671
    %7667 = vmatprep.subr.bf16.mxu0 %v5664
    %7668 = vmatpush2.bf16.msra.mxu0 %v5663
    %7669 = vmatprep.subr.bf16.mxu0 %v5656
    %7670 = vmatpush2.bf16.msra.mxu0 %v5655
    %7671 = vmatprep.mubr.bf16.mxu0 %v1480
    %7672 = vmatmul.mubr.bf16.gmra.mxu0 %v1479
    %v7673 = vpop.f32.mrf.mxu0
    %v7674 = vadd.f32 0.0, %v7673
    %v7675 = vpop.f32.mrf.mxu0
    %v7676 = vadd.f32 0.0, %v7675
    %v7677 = vpop.f32.mrf.mxu0
    %v7678 = vpop.f32.mrf.mxu0
    %7679 = vdwg.mxu0
    %7680 = vmatprep.subr.bf16.mxu0 %v5776
    %7681 = vmatpush1.bf16.msra.mxu0 %v5775
    %7682 = vmatprep.subr.bf16.mxu0 %v5768
    %7683 = vmatpush1.bf16.msra.mxu0 %v5767
    %7684 = vmatprep.subr.bf16.mxu0 %v5760
    %7685 = vmatpush1.bf16.msra.mxu0 %v5759
    %7686 = vmatprep.subr.bf16.mxu0 %v5752
    %7687 = vmatpush1.bf16.msra.mxu0 %v5751
    %7688 = vmatprep.subr.bf16.mxu0 %v5744
    %7689 = vmatpush1.bf16.msra.mxu0 %v5743
    %7690 = vmatprep.subr.bf16.mxu0 %v5736
    %7691 = vmatpush1.bf16.msra.mxu0 %v5735
    %7692 = vmatprep.subr.bf16.mxu0 %v5728
    %7693 = vmatpush1.bf16.msra.mxu0 %v5727
    %7694 = vmatprep.subr.bf16.mxu0 %v5720
    %7695 = vmatpush1.bf16.msra.mxu0 %v5719
    %7696 = vmatprep.subr.bf16.mxu0 %v5840
    %7697 = vmatpush2.bf16.msra.mxu0 %v5839
    %7698 = vmatprep.subr.bf16.mxu0 %v5832
    %7699 = vmatpush2.bf16.msra.mxu0 %v5831
    %7700 = vmatprep.subr.bf16.mxu0 %v5824
    %7701 = vmatpush2.bf16.msra.mxu0 %v5823
    %7702 = vmatprep.subr.bf16.mxu0 %v5816
    %7703 = vmatpush2.bf16.msra.mxu0 %v5815
    %7704 = vmatprep.subr.bf16.mxu0 %v5808
    %7705 = vmatpush2.bf16.msra.mxu0 %v5807
    %7706 = vmatprep.subr.bf16.mxu0 %v5800
    %7707 = vmatpush2.bf16.msra.mxu0 %v5799
    %7708 = vmatprep.subr.bf16.mxu0 %v5792
    %7709 = vmatpush2.bf16.msra.mxu0 %v5791
    %7710 = vmatprep.subr.bf16.mxu0 %v5784
    %7711 = vmatpush2.bf16.msra.mxu0 %v5783
    %7712 = vmatprep.mubr.bf16.mxu0 %v1482
    %7713 = vmatmul.mubr.bf16.gmra.mxu0 %v1481
    %v7714 = vpop.f32.mrf.mxu0
    %v7715 = vadd.f32 %v7674, %v7714
    %v7716 = vpop.f32.mrf.mxu0
    %v7717 = vadd.f32 %v7676, %v7716
    %v7718 = vpop.f32.mrf.mxu0
    %v7719 = vpop.f32.mrf.mxu0
    %7720 = vdwg.mxu0
    %7721 = vmatprep.subr.bf16.mxu0 %v5904
    %7722 = vmatpush1.bf16.msra.mxu0 %v5903
    %7723 = vmatprep.subr.bf16.mxu0 %v5896
    %7724 = vmatpush1.bf16.msra.mxu0 %v5895
    %7725 = vmatprep.subr.bf16.mxu0 %v5888
    %7726 = vmatpush1.bf16.msra.mxu0 %v5887
    %7727 = vmatprep.subr.bf16.mxu0 %v5880
    %7728 = vmatpush1.bf16.msra.mxu0 %v5879
    %7729 = vmatprep.subr.bf16.mxu0 %v5872
    %7730 = vmatpush1.bf16.msra.mxu0 %v5871
    %7731 = vmatprep.subr.bf16.mxu0 %v5864
    %7732 = vmatpush1.bf16.msra.mxu0 %v5863
    %7733 = vmatprep.subr.bf16.mxu0 %v5856
    %7734 = vmatpush1.bf16.msra.mxu0 %v5855
    %7735 = vmatprep.subr.bf16.mxu0 %v5848
    %7736 = vmatpush1.bf16.msra.mxu0 %v5847
    %7737 = vmatprep.subr.bf16.mxu0 %v5968
    %7738 = vmatpush2.bf16.msra.mxu0 %v5967
    %7739 = vmatprep.subr.bf16.mxu0 %v5960
    %7740 = vmatpush2.bf16.msra.mxu0 %v5959
    %7741 = vmatprep.subr.bf16.mxu0 %v5952
    %7742 = vmatpush2.bf16.msra.mxu0 %v5951
    %7743 = vmatprep.subr.bf16.mxu0 %v5944
    %7744 = vmatpush2.bf16.msra.mxu0 %v5943
    %7745 = vmatprep.subr.bf16.mxu0 %v5936
    %7746 = vmatpush2.bf16.msra.mxu0 %v5935
    %7747 = vmatprep.subr.bf16.mxu0 %v5928
    %7748 = vmatpush2.bf16.msra.mxu0 %v5927
    %7749 = vmatprep.subr.bf16.mxu0 %v5920
    %7750 = vmatpush2.bf16.msra.mxu0 %v5919
    %7751 = vmatprep.subr.bf16.mxu0 %v5912
    %7752 = vmatpush2.bf16.msra.mxu0 %v5911
    %7753 = vmatprep.mubr.bf16.mxu0 %v1484
    %7754 = vmatmul.mubr.bf16.gmra.mxu0 %v1483
    %v7755 = vpop.f32.mrf.mxu0
    %v7756 = vadd.f32 %v7715, %v7755
    %v7757 = vpop.f32.mrf.mxu0
    %v7758 = vadd.f32 %v7717, %v7757
    %v7759 = vpop.f32.mrf.mxu0
    %v7760 = vpop.f32.mrf.mxu0
    %7761 = vdwg.mxu0
    %7762 = vmatprep.subr.bf16.mxu0 %v6032
    %7763 = vmatpush1.bf16.msra.mxu0 %v6031
    %7764 = vmatprep.subr.bf16.mxu0 %v6024
    %7765 = vmatpush1.bf16.msra.mxu0 %v6023
    %7766 = vmatprep.subr.bf16.mxu0 %v6016
    %7767 = vmatpush1.bf16.msra.mxu0 %v6015
    %7768 = vmatprep.subr.bf16.mxu0 %v6008
    %7769 = vmatpush1.bf16.msra.mxu0 %v6007
    %7770 = vmatprep.subr.bf16.mxu0 %v6000
    %7771 = vmatpush1.bf16.msra.mxu0 %v5999
    %7772 = vmatprep.subr.bf16.mxu0 %v5992
    %7773 = vmatpush1.bf16.msra.mxu0 %v5991
    %7774 = vmatprep.subr.bf16.mxu0 %v5984
    %7775 = vmatpush1.bf16.msra.mxu0 %v5983
    %7776 = vmatprep.subr.bf16.mxu0 %v5976
    %7777 = vmatpush1.bf16.msra.mxu0 %v5975
    %7778 = vmatprep.subr.bf16.mxu0 %v6096
    %7779 = vmatpush2.bf16.msra.mxu0 %v6095
    %7780 = vmatprep.subr.bf16.mxu0 %v6088
    %7781 = vmatpush2.bf16.msra.mxu0 %v6087
    %7782 = vmatprep.subr.bf16.mxu0 %v6080
    %7783 = vmatpush2.bf16.msra.mxu0 %v6079
    %7784 = vmatprep.subr.bf16.mxu0 %v6072
    %7785 = vmatpush2.bf16.msra.mxu0 %v6071
    %7786 = vmatprep.subr.bf16.mxu0 %v6064
    %7787 = vmatpush2.bf16.msra.mxu0 %v6063
    %7788 = vmatprep.subr.bf16.mxu0 %v6056
    %7789 = vmatpush2.bf16.msra.mxu0 %v6055
    %7790 = vmatprep.subr.bf16.mxu0 %v6048
    %7791 = vmatpush2.bf16.msra.mxu0 %v6047
    %7792 = vmatprep.subr.bf16.mxu0 %v6040
    %7793 = vmatpush2.bf16.msra.mxu0 %v6039
    %7794 = vmatprep.mubr.bf16.mxu0 %v1486
    %7795 = vmatmul.mubr.bf16.gmra.mxu0 %v1485
    %v7796 = vpop.f32.mrf.mxu0
    %v7797 = vadd.f32 %v7756, %v7796
    %v7798 = vpop.f32.mrf.mxu0
    %v7799 = vadd.f32 %v7758, %v7798
    %v7800 = vpop.f32.mrf.mxu0
    %v7801 = vpop.f32.mrf.mxu0
    %7802 = vdwg.mxu0
    %7803 = vmatprep.subr.bf16.mxu0 %v6160
    %7804 = vmatpush1.bf16.msra.mxu0 %v6159
    %7805 = vmatprep.subr.bf16.mxu0 %v6152
    %7806 = vmatpush1.bf16.msra.mxu0 %v6151
    %7807 = vmatprep.subr.bf16.mxu0 %v6144
    %7808 = vmatpush1.bf16.msra.mxu0 %v6143
    %7809 = vmatprep.subr.bf16.mxu0 %v6136
    %7810 = vmatpush1.bf16.msra.mxu0 %v6135
    %7811 = vmatprep.subr.bf16.mxu0 %v6128
    %7812 = vmatpush1.bf16.msra.mxu0 %v6127
    %7813 = vmatprep.subr.bf16.mxu0 %v6120
    %7814 = vmatpush1.bf16.msra.mxu0 %v6119
    %7815 = vmatprep.subr.bf16.mxu0 %v6112
    %7816 = vmatpush1.bf16.msra.mxu0 %v6111
    %7817 = vmatprep.subr.bf16.mxu0 %v6104
    %7818 = vmatpush1.bf16.msra.mxu0 %v6103
    %7819 = vmatprep.subr.bf16.mxu0 %v6224
    %7820 = vmatpush2.bf16.msra.mxu0 %v6223
    %7821 = vmatprep.subr.bf16.mxu0 %v6216
    %7822 = vmatpush2.bf16.msra.mxu0 %v6215
    %7823 = vmatprep.subr.bf16.mxu0 %v6208
    %7824 = vmatpush2.bf16.msra.mxu0 %v6207
    %7825 = vmatprep.subr.bf16.mxu0 %v6200
    %7826 = vmatpush2.bf16.msra.mxu0 %v6199
    %7827 = vmatprep.subr.bf16.mxu0 %v6192
    %7828 = vmatpush2.bf16.msra.mxu0 %v6191
    %7829 = vmatprep.subr.bf16.mxu0 %v6184
    %7830 = vmatpush2.bf16.msra.mxu0 %v6183
    %7831 = vmatprep.subr.bf16.mxu0 %v6176
    %7832 = vmatpush2.bf16.msra.mxu0 %v6175
    %7833 = vmatprep.subr.bf16.mxu0 %v6168
    %7834 = vmatpush2.bf16.msra.mxu0 %v6167
    %7835 = vmatprep.mubr.bf16.mxu0 %v1488
    %7836 = vmatmul.mubr.bf16.gmra.mxu0 %v1487
    %v7837 = vpop.f32.mrf.mxu0
    %v7838 = vadd.f32 %v7797, %v7837
    %v7839 = vpop.f32.mrf.mxu0
    %v7840 = vadd.f32 %v7799, %v7839
    %v7841 = vpop.f32.mrf.mxu0
    %v7842 = vpop.f32.mrf.mxu0
    %7843 = vdwg.mxu0
    %7844 = vmatprep.subr.bf16.mxu0 %v6288
    %7845 = vmatpush1.bf16.msra.mxu0 %v6287
    %7846 = vmatprep.subr.bf16.mxu0 %v6280
    %7847 = vmatpush1.bf16.msra.mxu0 %v6279
    %7848 = vmatprep.subr.bf16.mxu0 %v6272
    %7849 = vmatpush1.bf16.msra.mxu0 %v6271
    %7850 = vmatprep.subr.bf16.mxu0 %v6264
    %7851 = vmatpush1.bf16.msra.mxu0 %v6263
    %7852 = vmatprep.subr.bf16.mxu0 %v6256
    %7853 = vmatpush1.bf16.msra.mxu0 %v6255
    %7854 = vmatprep.subr.bf16.mxu0 %v6248
    %7855 = vmatpush1.bf16.msra.mxu0 %v6247
    %7856 = vmatprep.subr.bf16.mxu0 %v6240
    %7857 = vmatpush1.bf16.msra.mxu0 %v6239
    %7858 = vmatprep.subr.bf16.mxu0 %v6232
    %7859 = vmatpush1.bf16.msra.mxu0 %v6231
    %7860 = vmatprep.subr.bf16.mxu0 %v6352
    %7861 = vmatpush2.bf16.msra.mxu0 %v6351
    %7862 = vmatprep.subr.bf16.mxu0 %v6344
    %7863 = vmatpush2.bf16.msra.mxu0 %v6343
    %7864 = vmatprep.subr.bf16.mxu0 %v6336
    %7865 = vmatpush2.bf16.msra.mxu0 %v6335
    %7866 = vmatprep.subr.bf16.mxu0 %v6328
    %7867 = vmatpush2.bf16.msra.mxu0 %v6327
    %7868 = vmatprep.subr.bf16.mxu0 %v6320
    %7869 = vmatpush2.bf16.msra.mxu0 %v6319
    %7870 = vmatprep.subr.bf16.mxu0 %v6312
    %7871 = vmatpush2.bf16.msra.mxu0 %v6311
    %7872 = vmatprep.subr.bf16.mxu0 %v6304
    %7873 = vmatpush2.bf16.msra.mxu0 %v6303
    %7874 = vmatprep.subr.bf16.mxu0 %v6296
    %7875 = vmatpush2.bf16.msra.mxu0 %v6295
    %7876 = vmatprep.mubr.bf16.mxu0 %v1490
    %7877 = vmatmul.mubr.bf16.gmra.mxu0 %v1489
    %v7878 = vpop.f32.mrf.mxu0
    %v7879 = vadd.f32 %v7838, %v7878
    %v7880 = vpop.f32.mrf.mxu0
    %v7881 = vadd.f32 %v7840, %v7880
    %v7882 = vpop.f32.mrf.mxu0
    %v7883 = vpop.f32.mrf.mxu0
    %7884 = vdwg.mxu0
    %7885 = vmatprep.subr.bf16.mxu0 %v6416
    %7886 = vmatpush1.bf16.msra.mxu0 %v6415
    %7887 = vmatprep.subr.bf16.mxu0 %v6408
    %7888 = vmatpush1.bf16.msra.mxu0 %v6407
    %7889 = vmatprep.subr.bf16.mxu0 %v6400
    %7890 = vmatpush1.bf16.msra.mxu0 %v6399
    %7891 = vmatprep.subr.bf16.mxu0 %v6392
    %7892 = vmatpush1.bf16.msra.mxu0 %v6391
    %7893 = vmatprep.subr.bf16.mxu0 %v6384
    %7894 = vmatpush1.bf16.msra.mxu0 %v6383
    %7895 = vmatprep.subr.bf16.mxu0 %v6376
    %7896 = vmatpush1.bf16.msra.mxu0 %v6375
    %7897 = vmatprep.subr.bf16.mxu0 %v6368
    %7898 = vmatpush1.bf16.msra.mxu0 %v6367
    %7899 = vmatprep.subr.bf16.mxu0 %v6360
    %7900 = vmatpush1.bf16.msra.mxu0 %v6359
    %7901 = vmatprep.subr.bf16.mxu0 %v6480
    %7902 = vmatpush2.bf16.msra.mxu0 %v6479
    %7903 = vmatprep.subr.bf16.mxu0 %v6472
    %7904 = vmatpush2.bf16.msra.mxu0 %v6471
    %7905 = vmatprep.subr.bf16.mxu0 %v6464
    %7906 = vmatpush2.bf16.msra.mxu0 %v6463
    %7907 = vmatprep.subr.bf16.mxu0 %v6456
    %7908 = vmatpush2.bf16.msra.mxu0 %v6455
    %7909 = vmatprep.subr.bf16.mxu0 %v6448
    %7910 = vmatpush2.bf16.msra.mxu0 %v6447
    %7911 = vmatprep.subr.bf16.mxu0 %v6440
    %7912 = vmatpush2.bf16.msra.mxu0 %v6439
    %7913 = vmatprep.subr.bf16.mxu0 %v6432
    %7914 = vmatpush2.bf16.msra.mxu0 %v6431
    %7915 = vmatprep.subr.bf16.mxu0 %v6424
    %7916 = vmatpush2.bf16.msra.mxu0 %v6423
    %7917 = vmatprep.mubr.bf16.mxu0 %v1492
    %7918 = vmatmul.mubr.bf16.gmra.mxu0 %v1491
    %v7919 = vpop.f32.mrf.mxu0
    %v7920 = vadd.f32 %v7879, %v7919
    %v7921 = vpop.f32.mrf.mxu0
    %v7922 = vadd.f32 %v7881, %v7921
    %v7923 = vpop.f32.mrf.mxu0
    %v7924 = vpop.f32.mrf.mxu0
    %7925 = vdwg.mxu0
    %7926 = vmatprep.subr.bf16.mxu0 %v6544
    %7927 = vmatpush1.bf16.msra.mxu0 %v6543
    %7928 = vmatprep.subr.bf16.mxu0 %v6536
    %7929 = vmatpush1.bf16.msra.mxu0 %v6535
    %7930 = vmatprep.subr.bf16.mxu0 %v6528
    %7931 = vmatpush1.bf16.msra.mxu0 %v6527
    %7932 = vmatprep.subr.bf16.mxu0 %v6520
    %7933 = vmatpush1.bf16.msra.mxu0 %v6519
    %7934 = vmatprep.subr.bf16.mxu0 %v6512
    %7935 = vmatpush1.bf16.msra.mxu0 %v6511
    %7936 = vmatprep.subr.bf16.mxu0 %v6504
    %7937 = vmatpush1.bf16.msra.mxu0 %v6503
    %7938 = vmatprep.subr.bf16.mxu0 %v6496
    %7939 = vmatpush1.bf16.msra.mxu0 %v6495
    %7940 = vmatprep.subr.bf16.mxu0 %v6488
    %7941 = vmatpush1.bf16.msra.mxu0 %v6487
    %7942 = vmatprep.subr.bf16.mxu0 %v6608
    %7943 = vmatpush2.bf16.msra.mxu0 %v6607
    %7944 = vmatprep.subr.bf16.mxu0 %v6600
    %7945 = vmatpush2.bf16.msra.mxu0 %v6599
    %7946 = vmatprep.subr.bf16.mxu0 %v6592
    %7947 = vmatpush2.bf16.msra.mxu0 %v6591
    %7948 = vmatprep.subr.bf16.mxu0 %v6584
    %7949 = vmatpush2.bf16.msra.mxu0 %v6583
    %7950 = vmatprep.subr.bf16.mxu0 %v6576
    %7951 = vmatpush2.bf16.msra.mxu0 %v6575
    %7952 = vmatprep.subr.bf16.mxu0 %v6568
    %7953 = vmatpush2.bf16.msra.mxu0 %v6567
    %7954 = vmatprep.subr.bf16.mxu0 %v6560
    %7955 = vmatpush2.bf16.msra.mxu0 %v6559
    %7956 = vmatprep.subr.bf16.mxu0 %v6552
    %7957 = vmatpush2.bf16.msra.mxu0 %v6551
    %7958 = vmatprep.mubr.bf16.mxu0 %v1494
    %7959 = vmatmul.mubr.bf16.gmra.mxu0 %v1493
    %v7960 = vpop.f32.mrf.mxu0
    %v7961 = vadd.f32 %v7920, %v7960
    %v7962 = vpop.f32.mrf.mxu0
    %v7963 = vadd.f32 %v7922, %v7962
    %v7964 = vpop.f32.mrf.mxu0
    %v7965 = vpop.f32.mrf.mxu0
    %7966 = vdwg.mxu0
    %7967 = vmatprep.subr.bf16.mxu0 %v5650
    %7968 = vmatpush1.bf16.msra.mxu0 %v5649
    %7969 = vmatprep.subr.bf16.mxu0 %v5642
    %7970 = vmatpush1.bf16.msra.mxu0 %v5641
    %7971 = vmatprep.subr.bf16.mxu0 %v5634
    %7972 = vmatpush1.bf16.msra.mxu0 %v5633
    %7973 = vmatprep.subr.bf16.mxu0 %v5626
    %7974 = vmatpush1.bf16.msra.mxu0 %v5625
    %7975 = vmatprep.subr.bf16.mxu0 %v5618
    %7976 = vmatpush1.bf16.msra.mxu0 %v5617
    %7977 = vmatprep.subr.bf16.mxu0 %v5610
    %7978 = vmatpush1.bf16.msra.mxu0 %v5609
    %7979 = vmatprep.subr.bf16.mxu0 %v5602
    %7980 = vmatpush1.bf16.msra.mxu0 %v5601
    %7981 = vmatprep.subr.bf16.mxu0 %v5594
    %7982 = vmatpush1.bf16.msra.mxu0 %v5593
    %7983 = vmatprep.subr.bf16.mxu0 %v5714
    %7984 = vmatpush2.bf16.msra.mxu0 %v5713
    %7985 = vmatprep.subr.bf16.mxu0 %v5706
    %7986 = vmatpush2.bf16.msra.mxu0 %v5705
    %7987 = vmatprep.subr.bf16.mxu0 %v5698
    %7988 = vmatpush2.bf16.msra.mxu0 %v5697
    %7989 = vmatprep.subr.bf16.mxu0 %v5690
    %7990 = vmatpush2.bf16.msra.mxu0 %v5689
    %7991 = vmatprep.subr.bf16.mxu0 %v5682
    %7992 = vmatpush2.bf16.msra.mxu0 %v5681
    %7993 = vmatprep.subr.bf16.mxu0 %v5674
    %7994 = vmatpush2.bf16.msra.mxu0 %v5673
    %7995 = vmatprep.subr.bf16.mxu0 %v5666
    %7996 = vmatpush2.bf16.msra.mxu0 %v5665
    %7997 = vmatprep.subr.bf16.mxu0 %v5658
    %7998 = vmatpush2.bf16.msra.mxu0 %v5657
    %7999 = vmatprep.mubr.bf16.mxu0 %v1480
    %8000 = vmatmul.mubr.bf16.gmra.mxu0 %v1479
    %v8001 = vpop.f32.mrf.mxu0
    %v8002 = vadd.f32 0.0, %v8001
    %v8003 = vpop.f32.mrf.mxu0
    %v8004 = vadd.f32 0.0, %v8003
    %v8005 = vpop.f32.mrf.mxu0
    %v8006 = vpop.f32.mrf.mxu0
    %8007 = vdwg.mxu0
    %8008 = vmatprep.subr.bf16.mxu0 %v5778
    %8009 = vmatpush1.bf16.msra.mxu0 %v5777
    %8010 = vmatprep.subr.bf16.mxu0 %v5770
    %8011 = vmatpush1.bf16.msra.mxu0 %v5769
    %8012 = vmatprep.subr.bf16.mxu0 %v5762
    %8013 = vmatpush1.bf16.msra.mxu0 %v5761
    %8014 = vmatprep.subr.bf16.mxu0 %v5754
    %8015 = vmatpush1.bf16.msra.mxu0 %v5753
    %8016 = vmatprep.subr.bf16.mxu0 %v5746
    %8017 = vmatpush1.bf16.msra.mxu0 %v5745
    %8018 = vmatprep.subr.bf16.mxu0 %v5738
    %8019 = vmatpush1.bf16.msra.mxu0 %v5737
    %8020 = vmatprep.subr.bf16.mxu0 %v5730
    %8021 = vmatpush1.bf16.msra.mxu0 %v5729
    %8022 = vmatprep.subr.bf16.mxu0 %v5722
    %8023 = vmatpush1.bf16.msra.mxu0 %v5721
    %8024 = vmatprep.subr.bf16.mxu0 %v5842
    %8025 = vmatpush2.bf16.msra.mxu0 %v5841
    %8026 = vmatprep.subr.bf16.mxu0 %v5834
    %8027 = vmatpush2.bf16.msra.mxu0 %v5833
    %8028 = vmatprep.subr.bf16.mxu0 %v5826
    %8029 = vmatpush2.bf16.msra.mxu0 %v5825
    %8030 = vmatprep.subr.bf16.mxu0 %v5818
    %8031 = vmatpush2.bf16.msra.mxu0 %v5817
    %8032 = vmatprep.subr.bf16.mxu0 %v5810
    %8033 = vmatpush2.bf16.msra.mxu0 %v5809
    %8034 = vmatprep.subr.bf16.mxu0 %v5802
    %8035 = vmatpush2.bf16.msra.mxu0 %v5801
    %8036 = vmatprep.subr.bf16.mxu0 %v5794
    %8037 = vmatpush2.bf16.msra.mxu0 %v5793
    %8038 = vmatprep.subr.bf16.mxu0 %v5786
    %8039 = vmatpush2.bf16.msra.mxu0 %v5785
    %8040 = vmatprep.mubr.bf16.mxu0 %v1482
    %8041 = vmatmul.mubr.bf16.gmra.mxu0 %v1481
    %v8042 = vpop.f32.mrf.mxu0
    %v8043 = vadd.f32 %v8002, %v8042
    %v8044 = vpop.f32.mrf.mxu0
    %v8045 = vadd.f32 %v8004, %v8044
    %v8046 = vpop.f32.mrf.mxu0
    %v8047 = vpop.f32.mrf.mxu0
    %8048 = vdwg.mxu0
    %8049 = vmatprep.subr.bf16.mxu0 %v5906
    %8050 = vmatpush1.bf16.msra.mxu0 %v5905
    %8051 = vmatprep.subr.bf16.mxu0 %v5898
    %8052 = vmatpush1.bf16.msra.mxu0 %v5897
    %8053 = vmatprep.subr.bf16.mxu0 %v5890
    %8054 = vmatpush1.bf16.msra.mxu0 %v5889
    %8055 = vmatprep.subr.bf16.mxu0 %v5882
    %8056 = vmatpush1.bf16.msra.mxu0 %v5881
    %8057 = vmatprep.subr.bf16.mxu0 %v5874
    %8058 = vmatpush1.bf16.msra.mxu0 %v5873
    %8059 = vmatprep.subr.bf16.mxu0 %v5866
    %8060 = vmatpush1.bf16.msra.mxu0 %v5865
    %8061 = vmatprep.subr.bf16.mxu0 %v5858
    %8062 = vmatpush1.bf16.msra.mxu0 %v5857
    %8063 = vmatprep.subr.bf16.mxu0 %v5850
    %8064 = vmatpush1.bf16.msra.mxu0 %v5849
    %8065 = vmatprep.subr.bf16.mxu0 %v5970
    %8066 = vmatpush2.bf16.msra.mxu0 %v5969
    %8067 = vmatprep.subr.bf16.mxu0 %v5962
    %8068 = vmatpush2.bf16.msra.mxu0 %v5961
    %8069 = vmatprep.subr.bf16.mxu0 %v5954
    %8070 = vmatpush2.bf16.msra.mxu0 %v5953
    %8071 = vmatprep.subr.bf16.mxu0 %v5946
    %8072 = vmatpush2.bf16.msra.mxu0 %v5945
    %8073 = vmatprep.subr.bf16.mxu0 %v5938
    %8074 = vmatpush2.bf16.msra.mxu0 %v5937
    %8075 = vmatprep.subr.bf16.mxu0 %v5930
    %8076 = vmatpush2.bf16.msra.mxu0 %v5929
    %8077 = vmatprep.subr.bf16.mxu0 %v5922
    %8078 = vmatpush2.bf16.msra.mxu0 %v5921
    %8079 = vmatprep.subr.bf16.mxu0 %v5914
    %8080 = vmatpush2.bf16.msra.mxu0 %v5913
    %8081 = vmatprep.mubr.bf16.mxu0 %v1484
    %8082 = vmatmul.mubr.bf16.gmra.mxu0 %v1483
    %v8083 = vpop.f32.mrf.mxu0
    %v8084 = vadd.f32 %v8043, %v8083
    %v8085 = vpop.f32.mrf.mxu0
    %v8086 = vadd.f32 %v8045, %v8085
    %v8087 = vpop.f32.mrf.mxu0
    %v8088 = vpop.f32.mrf.mxu0
    %8089 = vdwg.mxu0
    %8090 = vmatprep.subr.bf16.mxu0 %v6034
    %8091 = vmatpush1.bf16.msra.mxu0 %v6033
    %8092 = vmatprep.subr.bf16.mxu0 %v6026
    %8093 = vmatpush1.bf16.msra.mxu0 %v6025
    %8094 = vmatprep.subr.bf16.mxu0 %v6018
    %8095 = vmatpush1.bf16.msra.mxu0 %v6017
    %8096 = vmatprep.subr.bf16.mxu0 %v6010
    %8097 = vmatpush1.bf16.msra.mxu0 %v6009
    %8098 = vmatprep.subr.bf16.mxu0 %v6002
    %8099 = vmatpush1.bf16.msra.mxu0 %v6001
    %8100 = vmatprep.subr.bf16.mxu0 %v5994
    %8101 = vmatpush1.bf16.msra.mxu0 %v5993
    %8102 = vmatprep.subr.bf16.mxu0 %v5986
    %8103 = vmatpush1.bf16.msra.mxu0 %v5985
    %8104 = vmatprep.subr.bf16.mxu0 %v5978
    %8105 = vmatpush1.bf16.msra.mxu0 %v5977
    %8106 = vmatprep.subr.bf16.mxu0 %v6098
    %8107 = vmatpush2.bf16.msra.mxu0 %v6097
    %8108 = vmatprep.subr.bf16.mxu0 %v6090
    %8109 = vmatpush2.bf16.msra.mxu0 %v6089
    %8110 = vmatprep.subr.bf16.mxu0 %v6082
    %8111 = vmatpush2.bf16.msra.mxu0 %v6081
    %8112 = vmatprep.subr.bf16.mxu0 %v6074
    %8113 = vmatpush2.bf16.msra.mxu0 %v6073
    %8114 = vmatprep.subr.bf16.mxu0 %v6066
    %8115 = vmatpush2.bf16.msra.mxu0 %v6065
    %8116 = vmatprep.subr.bf16.mxu0 %v6058
    %8117 = vmatpush2.bf16.msra.mxu0 %v6057
    %8118 = vmatprep.subr.bf16.mxu0 %v6050
    %8119 = vmatpush2.bf16.msra.mxu0 %v6049
    %8120 = vmatprep.subr.bf16.mxu0 %v6042
    %8121 = vmatpush2.bf16.msra.mxu0 %v6041
    %8122 = vmatprep.mubr.bf16.mxu0 %v1486
    %8123 = vmatmul.mubr.bf16.gmra.mxu0 %v1485
    %v8124 = vpop.f32.mrf.mxu0
    %v8125 = vadd.f32 %v8084, %v8124
    %v8126 = vpop.f32.mrf.mxu0
    %v8127 = vadd.f32 %v8086, %v8126
    %v8128 = vpop.f32.mrf.mxu0
    %v8129 = vpop.f32.mrf.mxu0
    %8130 = vdwg.mxu0
    %8131 = vmatprep.subr.bf16.mxu0 %v6162
    %8132 = vmatpush1.bf16.msra.mxu0 %v6161
    %8133 = vmatprep.subr.bf16.mxu0 %v6154
    %8134 = vmatpush1.bf16.msra.mxu0 %v6153
    %8135 = vmatprep.subr.bf16.mxu0 %v6146
    %8136 = vmatpush1.bf16.msra.mxu0 %v6145
    %8137 = vmatprep.subr.bf16.mxu0 %v6138
    %8138 = vmatpush1.bf16.msra.mxu0 %v6137
    %8139 = vmatprep.subr.bf16.mxu0 %v6130
    %8140 = vmatpush1.bf16.msra.mxu0 %v6129
    %8141 = vmatprep.subr.bf16.mxu0 %v6122
    %8142 = vmatpush1.bf16.msra.mxu0 %v6121
    %8143 = vmatprep.subr.bf16.mxu0 %v6114
    %8144 = vmatpush1.bf16.msra.mxu0 %v6113
    %8145 = vmatprep.subr.bf16.mxu0 %v6106
    %8146 = vmatpush1.bf16.msra.mxu0 %v6105
    %8147 = vmatprep.subr.bf16.mxu0 %v6226
    %8148 = vmatpush2.bf16.msra.mxu0 %v6225
    %8149 = vmatprep.subr.bf16.mxu0 %v6218
    %8150 = vmatpush2.bf16.msra.mxu0 %v6217
    %8151 = vmatprep.subr.bf16.mxu0 %v6210
    %8152 = vmatpush2.bf16.msra.mxu0 %v6209
    %8153 = vmatprep.subr.bf16.mxu0 %v6202
    %8154 = vmatpush2.bf16.msra.mxu0 %v6201
    %8155 = vmatprep.subr.bf16.mxu0 %v6194
    %8156 = vmatpush2.bf16.msra.mxu0 %v6193
    %8157 = vmatprep.subr.bf16.mxu0 %v6186
    %8158 = vmatpush2.bf16.msra.mxu0 %v6185
    %8159 = vmatprep.subr.bf16.mxu0 %v6178
    %8160 = vmatpush2.bf16.msra.mxu0 %v6177
    %8161 = vmatprep.subr.bf16.mxu0 %v6170
    %8162 = vmatpush2.bf16.msra.mxu0 %v6169
    %8163 = vmatprep.mubr.bf16.mxu0 %v1488
    %8164 = vmatmul.mubr.bf16.gmra.mxu0 %v1487
    %v8165 = vpop.f32.mrf.mxu0
    %v8166 = vadd.f32 %v8125, %v8165
    %v8167 = vpop.f32.mrf.mxu0
    %v8168 = vadd.f32 %v8127, %v8167
    %v8169 = vpop.f32.mrf.mxu0
    %v8170 = vpop.f32.mrf.mxu0
    %8171 = vdwg.mxu0
    %8172 = vmatprep.subr.bf16.mxu0 %v6290
    %8173 = vmatpush1.bf16.msra.mxu0 %v6289
    %8174 = vmatprep.subr.bf16.mxu0 %v6282
    %8175 = vmatpush1.bf16.msra.mxu0 %v6281
    %8176 = vmatprep.subr.bf16.mxu0 %v6274
    %8177 = vmatpush1.bf16.msra.mxu0 %v6273
    %8178 = vmatprep.subr.bf16.mxu0 %v6266
    %8179 = vmatpush1.bf16.msra.mxu0 %v6265
    %8180 = vmatprep.subr.bf16.mxu0 %v6258
    %8181 = vmatpush1.bf16.msra.mxu0 %v6257
    %8182 = vmatprep.subr.bf16.mxu0 %v6250
    %8183 = vmatpush1.bf16.msra.mxu0 %v6249
    %8184 = vmatprep.subr.bf16.mxu0 %v6242
    %8185 = vmatpush1.bf16.msra.mxu0 %v6241
    %8186 = vmatprep.subr.bf16.mxu0 %v6234
    %8187 = vmatpush1.bf16.msra.mxu0 %v6233
    %8188 = vmatprep.subr.bf16.mxu0 %v6354
    %8189 = vmatpush2.bf16.msra.mxu0 %v6353
    %8190 = vmatprep.subr.bf16.mxu0 %v6346
    %8191 = vmatpush2.bf16.msra.mxu0 %v6345
    %8192 = vmatprep.subr.bf16.mxu0 %v6338
    %8193 = vmatpush2.bf16.msra.mxu0 %v6337
    %8194 = vmatprep.subr.bf16.mxu0 %v6330
    %8195 = vmatpush2.bf16.msra.mxu0 %v6329
    %8196 = vmatprep.subr.bf16.mxu0 %v6322
    %8197 = vmatpush2.bf16.msra.mxu0 %v6321
    %8198 = vmatprep.subr.bf16.mxu0 %v6314
    %8199 = vmatpush2.bf16.msra.mxu0 %v6313
    %8200 = vmatprep.subr.bf16.mxu0 %v6306
    %8201 = vmatpush2.bf16.msra.mxu0 %v6305
    %8202 = vmatprep.subr.bf16.mxu0 %v6298
    %8203 = vmatpush2.bf16.msra.mxu0 %v6297
    %8204 = vmatprep.mubr.bf16.mxu0 %v1490
    %8205 = vmatmul.mubr.bf16.gmra.mxu0 %v1489
    %v8206 = vpop.f32.mrf.mxu0
    %v8207 = vadd.f32 %v8166, %v8206
    %v8208 = vpop.f32.mrf.mxu0
    %v8209 = vadd.f32 %v8168, %v8208
    %v8210 = vpop.f32.mrf.mxu0
    %v8211 = vpop.f32.mrf.mxu0
    %8212 = vdwg.mxu0
    %8213 = vmatprep.subr.bf16.mxu0 %v6418
    %8214 = vmatpush1.bf16.msra.mxu0 %v6417
    %8215 = vmatprep.subr.bf16.mxu0 %v6410
    %8216 = vmatpush1.bf16.msra.mxu0 %v6409
    %8217 = vmatprep.subr.bf16.mxu0 %v6402
    %8218 = vmatpush1.bf16.msra.mxu0 %v6401
    %8219 = vmatprep.subr.bf16.mxu0 %v6394
    %8220 = vmatpush1.bf16.msra.mxu0 %v6393
    %8221 = vmatprep.subr.bf16.mxu0 %v6386
    %8222 = vmatpush1.bf16.msra.mxu0 %v6385
    %8223 = vmatprep.subr.bf16.mxu0 %v6378
    %8224 = vmatpush1.bf16.msra.mxu0 %v6377
    %8225 = vmatprep.subr.bf16.mxu0 %v6370
    %8226 = vmatpush1.bf16.msra.mxu0 %v6369
    %8227 = vmatprep.subr.bf16.mxu0 %v6362
    %8228 = vmatpush1.bf16.msra.mxu0 %v6361
    %8229 = vmatprep.subr.bf16.mxu0 %v6482
    %8230 = vmatpush2.bf16.msra.mxu0 %v6481
    %8231 = vmatprep.subr.bf16.mxu0 %v6474
    %8232 = vmatpush2.bf16.msra.mxu0 %v6473
    %8233 = vmatprep.subr.bf16.mxu0 %v6466
    %8234 = vmatpush2.bf16.msra.mxu0 %v6465
    %8235 = vmatprep.subr.bf16.mxu0 %v6458
    %8236 = vmatpush2.bf16.msra.mxu0 %v6457
    %8237 = vmatprep.subr.bf16.mxu0 %v6450
    %8238 = vmatpush2.bf16.msra.mxu0 %v6449
    %8239 = vmatprep.subr.bf16.mxu0 %v6442
    %8240 = vmatpush2.bf16.msra.mxu0 %v6441
    %8241 = vmatprep.subr.bf16.mxu0 %v6434
    %8242 = vmatpush2.bf16.msra.mxu0 %v6433
    %8243 = vmatprep.subr.bf16.mxu0 %v6426
    %8244 = vmatpush2.bf16.msra.mxu0 %v6425
    %8245 = vmatprep.mubr.bf16.mxu0 %v1492
    %8246 = vmatmul.mubr.bf16.gmra.mxu0 %v1491
    %v8247 = vpop.f32.mrf.mxu0
    %v8248 = vadd.f32 %v8207, %v8247
    %v8249 = vpop.f32.mrf.mxu0
    %v8250 = vadd.f32 %v8209, %v8249
    %v8251 = vpop.f32.mrf.mxu0
    %v8252 = vpop.f32.mrf.mxu0
    %8253 = vdwg.mxu0
    %8254 = vmatprep.subr.bf16.mxu0 %v6546
    %8255 = vmatpush1.bf16.msra.mxu0 %v6545
    %8256 = vmatprep.subr.bf16.mxu0 %v6538
    %8257 = vmatpush1.bf16.msra.mxu0 %v6537
    %8258 = vmatprep.subr.bf16.mxu0 %v6530
    %8259 = vmatpush1.bf16.msra.mxu0 %v6529
    %8260 = vmatprep.subr.bf16.mxu0 %v6522
    %8261 = vmatpush1.bf16.msra.mxu0 %v6521
    %8262 = vmatprep.subr.bf16.mxu0 %v6514
    %8263 = vmatpush1.bf16.msra.mxu0 %v6513
    %8264 = vmatprep.subr.bf16.mxu0 %v6506
    %8265 = vmatpush1.bf16.msra.mxu0 %v6505
    %8266 = vmatprep.subr.bf16.mxu0 %v6498
    %8267 = vmatpush1.bf16.msra.mxu0 %v6497
    %8268 = vmatprep.subr.bf16.mxu0 %v6490
    %8269 = vmatpush1.bf16.msra.mxu0 %v6489
    %8270 = vmatprep.subr.bf16.mxu0 %v6610
    %8271 = vmatpush2.bf16.msra.mxu0 %v6609
    %8272 = vmatprep.subr.bf16.mxu0 %v6602
    %8273 = vmatpush2.bf16.msra.mxu0 %v6601
    %8274 = vmatprep.subr.bf16.mxu0 %v6594
    %8275 = vmatpush2.bf16.msra.mxu0 %v6593
    %8276 = vmatprep.subr.bf16.mxu0 %v6586
    %8277 = vmatpush2.bf16.msra.mxu0 %v6585
    %8278 = vmatprep.subr.bf16.mxu0 %v6578
    %8279 = vmatpush2.bf16.msra.mxu0 %v6577
    %8280 = vmatprep.subr.bf16.mxu0 %v6570
    %8281 = vmatpush2.bf16.msra.mxu0 %v6569
    %8282 = vmatprep.subr.bf16.mxu0 %v6562
    %8283 = vmatpush2.bf16.msra.mxu0 %v6561
    %8284 = vmatprep.subr.bf16.mxu0 %v6554
    %8285 = vmatpush2.bf16.msra.mxu0 %v6553
    %8286 = vmatprep.mubr.bf16.mxu0 %v1494
    %8287 = vmatmul.mubr.bf16.gmra.mxu0 %v1493
    %v8288 = vpop.f32.mrf.mxu0
    %v8289 = vadd.f32 %v8248, %v8288
    %v8290 = vpop.f32.mrf.mxu0
    %v8291 = vadd.f32 %v8250, %v8290
    %v8292 = vpop.f32.mrf.mxu0
    %v8293 = vpop.f32.mrf.mxu0
    %8294 = vdwg.mxu0
    %8295 = vmatprep.subr.bf16.mxu0 %v5652
    %8296 = vmatpush1.bf16.msra.mxu0 %v5651
    %8297 = vmatprep.subr.bf16.mxu0 %v5644
    %8298 = vmatpush1.bf16.msra.mxu0 %v5643
    %8299 = vmatprep.subr.bf16.mxu0 %v5636
    %8300 = vmatpush1.bf16.msra.mxu0 %v5635
    %8301 = vmatprep.subr.bf16.mxu0 %v5628
    %8302 = vmatpush1.bf16.msra.mxu0 %v5627
    %8303 = vmatprep.subr.bf16.mxu0 %v5620
    %8304 = vmatpush1.bf16.msra.mxu0 %v5619
    %8305 = vmatprep.subr.bf16.mxu0 %v5612
    %8306 = vmatpush1.bf16.msra.mxu0 %v5611
    %8307 = vmatprep.subr.bf16.mxu0 %v5604
    %8308 = vmatpush1.bf16.msra.mxu0 %v5603
    %8309 = vmatprep.subr.bf16.mxu0 %v5596
    %8310 = vmatpush1.bf16.msra.mxu0 %v5595
    %8311 = vmatprep.subr.bf16.mxu0 %v5716
    %8312 = vmatpush2.bf16.msra.mxu0 %v5715
    %8313 = vmatprep.subr.bf16.mxu0 %v5708
    %8314 = vmatpush2.bf16.msra.mxu0 %v5707
    %8315 = vmatprep.subr.bf16.mxu0 %v5700
    %8316 = vmatpush2.bf16.msra.mxu0 %v5699
    %8317 = vmatprep.subr.bf16.mxu0 %v5692
    %8318 = vmatpush2.bf16.msra.mxu0 %v5691
    %8319 = vmatprep.subr.bf16.mxu0 %v5684
    %8320 = vmatpush2.bf16.msra.mxu0 %v5683
    %8321 = vmatprep.subr.bf16.mxu0 %v5676
    %8322 = vmatpush2.bf16.msra.mxu0 %v5675
    %8323 = vmatprep.subr.bf16.mxu0 %v5668
    %8324 = vmatpush2.bf16.msra.mxu0 %v5667
    %8325 = vmatprep.subr.bf16.mxu0 %v5660
    %8326 = vmatpush2.bf16.msra.mxu0 %v5659
    %8327 = vmatprep.mubr.bf16.mxu0 %v1480
    %8328 = vmatmul.mubr.bf16.gmra.mxu0 %v1479
    %v8329 = vpop.f32.mrf.mxu0
    %v8330 = vadd.f32 0.0, %v8329
    %v8331 = vpop.f32.mrf.mxu0
    %v8332 = vadd.f32 0.0, %v8331
    %v8333 = vpop.f32.mrf.mxu0
    %v8334 = vpop.f32.mrf.mxu0
    %8335 = vdwg.mxu0
    %8336 = vmatprep.subr.bf16.mxu0 %v5780
    %8337 = vmatpush1.bf16.msra.mxu0 %v5779
    %8338 = vmatprep.subr.bf16.mxu0 %v5772
    %8339 = vmatpush1.bf16.msra.mxu0 %v5771
    %8340 = vmatprep.subr.bf16.mxu0 %v5764
    %8341 = vmatpush1.bf16.msra.mxu0 %v5763
    %8342 = vmatprep.subr.bf16.mxu0 %v5756
    %8343 = vmatpush1.bf16.msra.mxu0 %v5755
    %8344 = vmatprep.subr.bf16.mxu0 %v5748
    %8345 = vmatpush1.bf16.msra.mxu0 %v5747
    %8346 = vmatprep.subr.bf16.mxu0 %v5740
    %8347 = vmatpush1.bf16.msra.mxu0 %v5739
    %8348 = vmatprep.subr.bf16.mxu0 %v5732
    %8349 = vmatpush1.bf16.msra.mxu0 %v5731
    %8350 = vmatprep.subr.bf16.mxu0 %v5724
    %8351 = vmatpush1.bf16.msra.mxu0 %v5723
    %8352 = vmatprep.subr.bf16.mxu0 %v5844
    %8353 = vmatpush2.bf16.msra.mxu0 %v5843
    %8354 = vmatprep.subr.bf16.mxu0 %v5836
    %8355 = vmatpush2.bf16.msra.mxu0 %v5835
    %8356 = vmatprep.subr.bf16.mxu0 %v5828
    %8357 = vmatpush2.bf16.msra.mxu0 %v5827
    %8358 = vmatprep.subr.bf16.mxu0 %v5820
    %8359 = vmatpush2.bf16.msra.mxu0 %v5819
    %8360 = vmatprep.subr.bf16.mxu0 %v5812
    %8361 = vmatpush2.bf16.msra.mxu0 %v5811
    %8362 = vmatprep.subr.bf16.mxu0 %v5804
    %8363 = vmatpush2.bf16.msra.mxu0 %v5803
    %8364 = vmatprep.subr.bf16.mxu0 %v5796
    %8365 = vmatpush2.bf16.msra.mxu0 %v5795
    %8366 = vmatprep.subr.bf16.mxu0 %v5788
    %8367 = vmatpush2.bf16.msra.mxu0 %v5787
    %8368 = vmatprep.mubr.bf16.mxu0 %v1482
    %8369 = vmatmul.mubr.bf16.gmra.mxu0 %v1481
    %v8370 = vpop.f32.mrf.mxu0
    %v8371 = vadd.f32 %v8330, %v8370
    %v8372 = vpop.f32.mrf.mxu0
    %v8373 = vadd.f32 %v8332, %v8372
    %v8374 = vpop.f32.mrf.mxu0
    %v8375 = vpop.f32.mrf.mxu0
    %8376 = vdwg.mxu0
    %8377 = vmatprep.subr.bf16.mxu0 %v5908
    %8378 = vmatpush1.bf16.msra.mxu0 %v5907
    %8379 = vmatprep.subr.bf16.mxu0 %v5900
    %8380 = vmatpush1.bf16.msra.mxu0 %v5899
    %8381 = vmatprep.subr.bf16.mxu0 %v5892
    %8382 = vmatpush1.bf16.msra.mxu0 %v5891
    %8383 = vmatprep.subr.bf16.mxu0 %v5884
    %8384 = vmatpush1.bf16.msra.mxu0 %v5883
    %8385 = vmatprep.subr.bf16.mxu0 %v5876
    %8386 = vmatpush1.bf16.msra.mxu0 %v5875
    %8387 = vmatprep.subr.bf16.mxu0 %v5868
    %8388 = vmatpush1.bf16.msra.mxu0 %v5867
    %8389 = vmatprep.subr.bf16.mxu0 %v5860
    %8390 = vmatpush1.bf16.msra.mxu0 %v5859
    %8391 = vmatprep.subr.bf16.mxu0 %v5852
    %8392 = vmatpush1.bf16.msra.mxu0 %v5851
    %8393 = vmatprep.subr.bf16.mxu0 %v5972
    %8394 = vmatpush2.bf16.msra.mxu0 %v5971
    %8395 = vmatprep.subr.bf16.mxu0 %v5964
    %8396 = vmatpush2.bf16.msra.mxu0 %v5963
    %8397 = vmatprep.subr.bf16.mxu0 %v5956
    %8398 = vmatpush2.bf16.msra.mxu0 %v5955
    %8399 = vmatprep.subr.bf16.mxu0 %v5948
    %8400 = vmatpush2.bf16.msra.mxu0 %v5947
    %8401 = vmatprep.subr.bf16.mxu0 %v5940
    %8402 = vmatpush2.bf16.msra.mxu0 %v5939
    %8403 = vmatprep.subr.bf16.mxu0 %v5932
    %8404 = vmatpush2.bf16.msra.mxu0 %v5931
    %8405 = vmatprep.subr.bf16.mxu0 %v5924
    %8406 = vmatpush2.bf16.msra.mxu0 %v5923
    %8407 = vmatprep.subr.bf16.mxu0 %v5916
    %8408 = vmatpush2.bf16.msra.mxu0 %v5915
    %8409 = vmatprep.mubr.bf16.mxu0 %v1484
    %8410 = vmatmul.mubr.bf16.gmra.mxu0 %v1483
    %v8411 = vpop.f32.mrf.mxu0
    %v8412 = vadd.f32 %v8371, %v8411
    %v8413 = vpop.f32.mrf.mxu0
    %v8414 = vadd.f32 %v8373, %v8413
    %v8415 = vpop.f32.mrf.mxu0
    %v8416 = vpop.f32.mrf.mxu0
    %8417 = vdwg.mxu0
    %8418 = vmatprep.subr.bf16.mxu0 %v6036
    %8419 = vmatpush1.bf16.msra.mxu0 %v6035
    %8420 = vmatprep.subr.bf16.mxu0 %v6028
    %8421 = vmatpush1.bf16.msra.mxu0 %v6027
    %8422 = vmatprep.subr.bf16.mxu0 %v6020
    %8423 = vmatpush1.bf16.msra.mxu0 %v6019
    %8424 = vmatprep.subr.bf16.mxu0 %v6012
    %8425 = vmatpush1.bf16.msra.mxu0 %v6011
    %8426 = vmatprep.subr.bf16.mxu0 %v6004
    %8427 = vmatpush1.bf16.msra.mxu0 %v6003
    %8428 = vmatprep.subr.bf16.mxu0 %v5996
    %8429 = vmatpush1.bf16.msra.mxu0 %v5995
    %8430 = vmatprep.subr.bf16.mxu0 %v5988
    %8431 = vmatpush1.bf16.msra.mxu0 %v5987
    %8432 = vmatprep.subr.bf16.mxu0 %v5980
    %8433 = vmatpush1.bf16.msra.mxu0 %v5979
    %8434 = vmatprep.subr.bf16.mxu0 %v6100
    %8435 = vmatpush2.bf16.msra.mxu0 %v6099
    %8436 = vmatprep.subr.bf16.mxu0 %v6092
    %8437 = vmatpush2.bf16.msra.mxu0 %v6091
    %8438 = vmatprep.subr.bf16.mxu0 %v6084
    %8439 = vmatpush2.bf16.msra.mxu0 %v6083
    %8440 = vmatprep.subr.bf16.mxu0 %v6076
    %8441 = vmatpush2.bf16.msra.mxu0 %v6075
    %8442 = vmatprep.subr.bf16.mxu0 %v6068
    %8443 = vmatpush2.bf16.msra.mxu0 %v6067
    %8444 = vmatprep.subr.bf16.mxu0 %v6060
    %8445 = vmatpush2.bf16.msra.mxu0 %v6059
    %8446 = vmatprep.subr.bf16.mxu0 %v6052
    %8447 = vmatpush2.bf16.msra.mxu0 %v6051
    %8448 = vmatprep.subr.bf16.mxu0 %v6044
    %8449 = vmatpush2.bf16.msra.mxu0 %v6043
    %8450 = vmatprep.mubr.bf16.mxu0 %v1486
    %8451 = vmatmul.mubr.bf16.gmra.mxu0 %v1485
    %v8452 = vpop.f32.mrf.mxu0
    %v8453 = vadd.f32 %v8412, %v8452
    %v8454 = vpop.f32.mrf.mxu0
    %v8455 = vadd.f32 %v8414, %v8454
    %v8456 = vpop.f32.mrf.mxu0
    %v8457 = vpop.f32.mrf.mxu0
    %8458 = vdwg.mxu0
    %8459 = vmatprep.subr.bf16.mxu0 %v6164
    %8460 = vmatpush1.bf16.msra.mxu0 %v6163
    %8461 = vmatprep.subr.bf16.mxu0 %v6156
    %8462 = vmatpush1.bf16.msra.mxu0 %v6155
    %8463 = vmatprep.subr.bf16.mxu0 %v6148
    %8464 = vmatpush1.bf16.msra.mxu0 %v6147
    %8465 = vmatprep.subr.bf16.mxu0 %v6140
    %8466 = vmatpush1.bf16.msra.mxu0 %v6139
    %8467 = vmatprep.subr.bf16.mxu0 %v6132
    %8468 = vmatpush1.bf16.msra.mxu0 %v6131
    %8469 = vmatprep.subr.bf16.mxu0 %v6124
    %8470 = vmatpush1.bf16.msra.mxu0 %v6123
    %8471 = vmatprep.subr.bf16.mxu0 %v6116
    %8472 = vmatpush1.bf16.msra.mxu0 %v6115
    %8473 = vmatprep.subr.bf16.mxu0 %v6108
    %8474 = vmatpush1.bf16.msra.mxu0 %v6107
    %8475 = vmatprep.subr.bf16.mxu0 %v6228
    %8476 = vmatpush2.bf16.msra.mxu0 %v6227
    %8477 = vmatprep.subr.bf16.mxu0 %v6220
    %8478 = vmatpush2.bf16.msra.mxu0 %v6219
    %8479 = vmatprep.subr.bf16.mxu0 %v6212
    %8480 = vmatpush2.bf16.msra.mxu0 %v6211
    %8481 = vmatprep.subr.bf16.mxu0 %v6204
    %8482 = vmatpush2.bf16.msra.mxu0 %v6203
    %8483 = vmatprep.subr.bf16.mxu0 %v6196
    %8484 = vmatpush2.bf16.msra.mxu0 %v6195
    %8485 = vmatprep.subr.bf16.mxu0 %v6188
    %8486 = vmatpush2.bf16.msra.mxu0 %v6187
    %8487 = vmatprep.subr.bf16.mxu0 %v6180
    %8488 = vmatpush2.bf16.msra.mxu0 %v6179
    %8489 = vmatprep.subr.bf16.mxu0 %v6172
    %8490 = vmatpush2.bf16.msra.mxu0 %v6171
    %8491 = vmatprep.mubr.bf16.mxu0 %v1488
    %8492 = vmatmul.mubr.bf16.gmra.mxu0 %v1487
    %v8493 = vpop.f32.mrf.mxu0
    %v8494 = vadd.f32 %v8453, %v8493
    %v8495 = vpop.f32.mrf.mxu0
    %v8496 = vadd.f32 %v8455, %v8495
    %v8497 = vpop.f32.mrf.mxu0
    %v8498 = vpop.f32.mrf.mxu0
    %8499 = vdwg.mxu0
    %8500 = vmatprep.subr.bf16.mxu0 %v6292
    %8501 = vmatpush1.bf16.msra.mxu0 %v6291
    %8502 = vmatprep.subr.bf16.mxu0 %v6284
    %8503 = vmatpush1.bf16.msra.mxu0 %v6283
    %8504 = vmatprep.subr.bf16.mxu0 %v6276
    %8505 = vmatpush1.bf16.msra.mxu0 %v6275
    %8506 = vmatprep.subr.bf16.mxu0 %v6268
    %8507 = vmatpush1.bf16.msra.mxu0 %v6267
    %8508 = vmatprep.subr.bf16.mxu0 %v6260
    %8509 = vmatpush1.bf16.msra.mxu0 %v6259
    %8510 = vmatprep.subr.bf16.mxu0 %v6252
    %8511 = vmatpush1.bf16.msra.mxu0 %v6251
    %8512 = vmatprep.subr.bf16.mxu0 %v6244
    %8513 = vmatpush1.bf16.msra.mxu0 %v6243
    %8514 = vmatprep.subr.bf16.mxu0 %v6236
    %8515 = vmatpush1.bf16.msra.mxu0 %v6235
    %8516 = vmatprep.subr.bf16.mxu0 %v6356
    %8517 = vmatpush2.bf16.msra.mxu0 %v6355
    %8518 = vmatprep.subr.bf16.mxu0 %v6348
    %8519 = vmatpush2.bf16.msra.mxu0 %v6347
    %8520 = vmatprep.subr.bf16.mxu0 %v6340
    %8521 = vmatpush2.bf16.msra.mxu0 %v6339
    %8522 = vmatprep.subr.bf16.mxu0 %v6332
    %8523 = vmatpush2.bf16.msra.mxu0 %v6331
    %8524 = vmatprep.subr.bf16.mxu0 %v6324
    %8525 = vmatpush2.bf16.msra.mxu0 %v6323
    %8526 = vmatprep.subr.bf16.mxu0 %v6316
    %8527 = vmatpush2.bf16.msra.mxu0 %v6315
    %8528 = vmatprep.subr.bf16.mxu0 %v6308
    %8529 = vmatpush2.bf16.msra.mxu0 %v6307
    %8530 = vmatprep.subr.bf16.mxu0 %v6300
    %8531 = vmatpush2.bf16.msra.mxu0 %v6299
    %8532 = vmatprep.mubr.bf16.mxu0 %v1490
    %8533 = vmatmul.mubr.bf16.gmra.mxu0 %v1489
    %v8534 = vpop.f32.mrf.mxu0
    %v8535 = vadd.f32 %v8494, %v8534
    %v8536 = vpop.f32.mrf.mxu0
    %v8537 = vadd.f32 %v8496, %v8536
    %v8538 = vpop.f32.mrf.mxu0
    %v8539 = vpop.f32.mrf.mxu0
    %8540 = vdwg.mxu0
    %8541 = vmatprep.subr.bf16.mxu0 %v6420
    %8542 = vmatpush1.bf16.msra.mxu0 %v6419
    %8543 = vmatprep.subr.bf16.mxu0 %v6412
    %8544 = vmatpush1.bf16.msra.mxu0 %v6411
    %8545 = vmatprep.subr.bf16.mxu0 %v6404
    %8546 = vmatpush1.bf16.msra.mxu0 %v6403
    %8547 = vmatprep.subr.bf16.mxu0 %v6396
    %8548 = vmatpush1.bf16.msra.mxu0 %v6395
    %8549 = vmatprep.subr.bf16.mxu0 %v6388
    %8550 = vmatpush1.bf16.msra.mxu0 %v6387
    %8551 = vmatprep.subr.bf16.mxu0 %v6380
    %8552 = vmatpush1.bf16.msra.mxu0 %v6379
    %8553 = vmatprep.subr.bf16.mxu0 %v6372
    %8554 = vmatpush1.bf16.msra.mxu0 %v6371
    %8555 = vmatprep.subr.bf16.mxu0 %v6364
    %8556 = vmatpush1.bf16.msra.mxu0 %v6363
    %8557 = vmatprep.subr.bf16.mxu0 %v6484
    %8558 = vmatpush2.bf16.msra.mxu0 %v6483
    %8559 = vmatprep.subr.bf16.mxu0 %v6476
    %8560 = vmatpush2.bf16.msra.mxu0 %v6475
    %8561 = vmatprep.subr.bf16.mxu0 %v6468
    %8562 = vmatpush2.bf16.msra.mxu0 %v6467
    %8563 = vmatprep.subr.bf16.mxu0 %v6460
    %8564 = vmatpush2.bf16.msra.mxu0 %v6459
    %8565 = vmatprep.subr.bf16.mxu0 %v6452
    %8566 = vmatpush2.bf16.msra.mxu0 %v6451
    %8567 = vmatprep.subr.bf16.mxu0 %v6444
    %8568 = vmatpush2.bf16.msra.mxu0 %v6443
    %8569 = vmatprep.subr.bf16.mxu0 %v6436
    %8570 = vmatpush2.bf16.msra.mxu0 %v6435
    %8571 = vmatprep.subr.bf16.mxu0 %v6428
    %8572 = vmatpush2.bf16.msra.mxu0 %v6427
    %8573 = vmatprep.mubr.bf16.mxu0 %v1492
    %8574 = vmatmul.mubr.bf16.gmra.mxu0 %v1491
    %v8575 = vpop.f32.mrf.mxu0
    %v8576 = vadd.f32 %v8535, %v8575
    %v8577 = vpop.f32.mrf.mxu0
    %v8578 = vadd.f32 %v8537, %v8577
    %v8579 = vpop.f32.mrf.mxu0
    %v8580 = vpop.f32.mrf.mxu0
    %8581 = vdwg.mxu0
    %8582 = vmatprep.subr.bf16.mxu0 %v6548
    %8583 = vmatpush1.bf16.msra.mxu0 %v6547
    %8584 = vmatprep.subr.bf16.mxu0 %v6540
    %8585 = vmatpush1.bf16.msra.mxu0 %v6539
    %8586 = vmatprep.subr.bf16.mxu0 %v6532
    %8587 = vmatpush1.bf16.msra.mxu0 %v6531
    %8588 = vmatprep.subr.bf16.mxu0 %v6524
    %8589 = vmatpush1.bf16.msra.mxu0 %v6523
    %8590 = vmatprep.subr.bf16.mxu0 %v6516
    %8591 = vmatpush1.bf16.msra.mxu0 %v6515
    %8592 = vmatprep.subr.bf16.mxu0 %v6508
    %8593 = vmatpush1.bf16.msra.mxu0 %v6507
    %8594 = vmatprep.subr.bf16.mxu0 %v6500
    %8595 = vmatpush1.bf16.msra.mxu0 %v6499
    %8596 = vmatprep.subr.bf16.mxu0 %v6492
    %8597 = vmatpush1.bf16.msra.mxu0 %v6491
    %8598 = vmatprep.subr.bf16.mxu0 %v6612
    %8599 = vmatpush2.bf16.msra.mxu0 %v6611
    %8600 = vmatprep.subr.bf16.mxu0 %v6604
    %8601 = vmatpush2.bf16.msra.mxu0 %v6603
    %8602 = vmatprep.subr.bf16.mxu0 %v6596
    %8603 = vmatpush2.bf16.msra.mxu0 %v6595
    %8604 = vmatprep.subr.bf16.mxu0 %v6588
    %8605 = vmatpush2.bf16.msra.mxu0 %v6587
    %8606 = vmatprep.subr.bf16.mxu0 %v6580
    %8607 = vmatpush2.bf16.msra.mxu0 %v6579
    %8608 = vmatprep.subr.bf16.mxu0 %v6572
    %8609 = vmatpush2.bf16.msra.mxu0 %v6571
    %8610 = vmatprep.subr.bf16.mxu0 %v6564
    %8611 = vmatpush2.bf16.msra.mxu0 %v6563
    %8612 = vmatprep.subr.bf16.mxu0 %v6556
    %8613 = vmatpush2.bf16.msra.mxu0 %v6555
    %8614 = vmatprep.mubr.bf16.mxu0 %v1494
    %8615 = vmatmul.mubr.bf16.gmra.mxu0 %v1493
    %v8616 = vpop.f32.mrf.mxu0
    %v8617 = vadd.f32 %v8576, %v8616
    %v8618 = vpop.f32.mrf.mxu0
    %v8619 = vadd.f32 %v8578, %v8618
    %v8620 = vpop.f32.mrf.mxu0
    %v8621 = vpop.f32.mrf.mxu0
    %8622 = vdwg.mxu0
    %8623 = vmatprep.subr.bf16.mxu0 %v5654
    %8624 = vmatpush1.bf16.msra.mxu0 %v5653
    %8625 = vmatprep.subr.bf16.mxu0 %v5646
    %8626 = vmatpush1.bf16.msra.mxu0 %v5645
    %8627 = vmatprep.subr.bf16.mxu0 %v5638
    %8628 = vmatpush1.bf16.msra.mxu0 %v5637
    %8629 = vmatprep.subr.bf16.mxu0 %v5630
    %8630 = vmatpush1.bf16.msra.mxu0 %v5629
    %8631 = vmatprep.subr.bf16.mxu0 %v5622
    %8632 = vmatpush1.bf16.msra.mxu0 %v5621
    %8633 = vmatprep.subr.bf16.mxu0 %v5614
    %8634 = vmatpush1.bf16.msra.mxu0 %v5613
    %8635 = vmatprep.subr.bf16.mxu0 %v5606
    %8636 = vmatpush1.bf16.msra.mxu0 %v5605
    %8637 = vmatprep.subr.bf16.mxu0 %v5598
    %8638 = vmatpush1.bf16.msra.mxu0 %v5597
    %8639 = vmatprep.subr.bf16.mxu0 %v5718
    %8640 = vmatpush2.bf16.msra.mxu0 %v5717
    %8641 = vmatprep.subr.bf16.mxu0 %v5710
    %8642 = vmatpush2.bf16.msra.mxu0 %v5709
    %8643 = vmatprep.subr.bf16.mxu0 %v5702
    %8644 = vmatpush2.bf16.msra.mxu0 %v5701
    %8645 = vmatprep.subr.bf16.mxu0 %v5694
    %8646 = vmatpush2.bf16.msra.mxu0 %v5693
    %8647 = vmatprep.subr.bf16.mxu0 %v5686
    %8648 = vmatpush2.bf16.msra.mxu0 %v5685
    %8649 = vmatprep.subr.bf16.mxu0 %v5678
    %8650 = vmatpush2.bf16.msra.mxu0 %v5677
    %8651 = vmatprep.subr.bf16.mxu0 %v5670
    %8652 = vmatpush2.bf16.msra.mxu0 %v5669
    %8653 = vmatprep.subr.bf16.mxu0 %v5662
    %8654 = vmatpush2.bf16.msra.mxu0 %v5661
    %8655 = vmatprep.mubr.bf16.mxu0 %v1480
    %8656 = vmatmul.mubr.bf16.gmra.mxu0 %v1479
    %v8657 = vpop.f32.mrf.mxu0
    %v8658 = vadd.f32 0.0, %v8657
    %v8659 = vpop.f32.mrf.mxu0
    %v8660 = vadd.f32 0.0, %v8659
    %v8661 = vpop.f32.mrf.mxu0
    %v8662 = vpop.f32.mrf.mxu0
    %8663 = vdwg.mxu0
    %8664 = vmatprep.subr.bf16.mxu0 %v5782
    %8665 = vmatpush1.bf16.msra.mxu0 %v5781
    %8666 = vmatprep.subr.bf16.mxu0 %v5774
    %8667 = vmatpush1.bf16.msra.mxu0 %v5773
    %8668 = vmatprep.subr.bf16.mxu0 %v5766
    %8669 = vmatpush1.bf16.msra.mxu0 %v5765
    %8670 = vmatprep.subr.bf16.mxu0 %v5758
    %8671 = vmatpush1.bf16.msra.mxu0 %v5757
    %8672 = vmatprep.subr.bf16.mxu0 %v5750
    %8673 = vmatpush1.bf16.msra.mxu0 %v5749
    %8674 = vmatprep.subr.bf16.mxu0 %v5742
    %8675 = vmatpush1.bf16.msra.mxu0 %v5741
    %8676 = vmatprep.subr.bf16.mxu0 %v5734
    %8677 = vmatpush1.bf16.msra.mxu0 %v5733
    %8678 = vmatprep.subr.bf16.mxu0 %v5726
    %8679 = vmatpush1.bf16.msra.mxu0 %v5725
    %8680 = vmatprep.subr.bf16.mxu0 %v5846
    %8681 = vmatpush2.bf16.msra.mxu0 %v5845
    %8682 = vmatprep.subr.bf16.mxu0 %v5838
    %8683 = vmatpush2.bf16.msra.mxu0 %v5837
    %8684 = vmatprep.subr.bf16.mxu0 %v5830
    %8685 = vmatpush2.bf16.msra.mxu0 %v5829
    %8686 = vmatprep.subr.bf16.mxu0 %v5822
    %8687 = vmatpush2.bf16.msra.mxu0 %v5821
    %8688 = vmatprep.subr.bf16.mxu0 %v5814
    %8689 = vmatpush2.bf16.msra.mxu0 %v5813
    %8690 = vmatprep.subr.bf16.mxu0 %v5806
    %8691 = vmatpush2.bf16.msra.mxu0 %v5805
    %8692 = vmatprep.subr.bf16.mxu0 %v5798
    %8693 = vmatpush2.bf16.msra.mxu0 %v5797
    %8694 = vmatprep.subr.bf16.mxu0 %v5790
    %8695 = vmatpush2.bf16.msra.mxu0 %v5789
    %8696 = vmatprep.mubr.bf16.mxu0 %v1482
    %8697 = vmatmul.mubr.bf16.gmra.mxu0 %v1481
    %v8698 = vpop.f32.mrf.mxu0
    %v8699 = vadd.f32 %v8658, %v8698
    %v8700 = vpop.f32.mrf.mxu0
    %v8701 = vadd.f32 %v8660, %v8700
    %v8702 = vpop.f32.mrf.mxu0
    %v8703 = vpop.f32.mrf.mxu0
    %8704 = vdwg.mxu0
    %8705 = vmatprep.subr.bf16.mxu0 %v5910
    %8706 = vmatpush1.bf16.msra.mxu0 %v5909
    %8707 = vmatprep.subr.bf16.mxu0 %v5902
    %8708 = vmatpush1.bf16.msra.mxu0 %v5901
    %8709 = vmatprep.subr.bf16.mxu0 %v5894
    %8710 = vmatpush1.bf16.msra.mxu0 %v5893
    %8711 = vmatprep.subr.bf16.mxu0 %v5886
    %8712 = vmatpush1.bf16.msra.mxu0 %v5885
    %8713 = vmatprep.subr.bf16.mxu0 %v5878
    %8714 = vmatpush1.bf16.msra.mxu0 %v5877
    %8715 = vmatprep.subr.bf16.mxu0 %v5870
    %8716 = vmatpush1.bf16.msra.mxu0 %v5869
    %8717 = vmatprep.subr.bf16.mxu0 %v5862
    %8718 = vmatpush1.bf16.msra.mxu0 %v5861
    %8719 = vmatprep.subr.bf16.mxu0 %v5854
    %8720 = vmatpush1.bf16.msra.mxu0 %v5853
    %8721 = vmatprep.subr.bf16.mxu0 %v5974
    %8722 = vmatpush2.bf16.msra.mxu0 %v5973
    %8723 = vmatprep.subr.bf16.mxu0 %v5966
    %8724 = vmatpush2.bf16.msra.mxu0 %v5965
    %8725 = vmatprep.subr.bf16.mxu0 %v5958
    %8726 = vmatpush2.bf16.msra.mxu0 %v5957
    %8727 = vmatprep.subr.bf16.mxu0 %v5950
    %8728 = vmatpush2.bf16.msra.mxu0 %v5949
    %8729 = vmatprep.subr.bf16.mxu0 %v5942
    %8730 = vmatpush2.bf16.msra.mxu0 %v5941
    %8731 = vmatprep.subr.bf16.mxu0 %v5934
    %8732 = vmatpush2.bf16.msra.mxu0 %v5933
    %8733 = vmatprep.subr.bf16.mxu0 %v5926
    %8734 = vmatpush2.bf16.msra.mxu0 %v5925
    %8735 = vmatprep.subr.bf16.mxu0 %v5918
    %8736 = vmatpush2.bf16.msra.mxu0 %v5917
    %8737 = vmatprep.mubr.bf16.mxu0 %v1484
    %8738 = vmatmul.mubr.bf16.gmra.mxu0 %v1483
    %v8739 = vpop.f32.mrf.mxu0
    %v8740 = vadd.f32 %v8699, %v8739
    %v8741 = vpop.f32.mrf.mxu0
    %v8742 = vadd.f32 %v8701, %v8741
    %v8743 = vpop.f32.mrf.mxu0
    %v8744 = vpop.f32.mrf.mxu0
    %8745 = vdwg.mxu0
    %8746 = vmatprep.subr.bf16.mxu0 %v6038
    %8747 = vmatpush1.bf16.msra.mxu0 %v6037
    %8748 = vmatprep.subr.bf16.mxu0 %v6030
    %8749 = vmatpush1.bf16.msra.mxu0 %v6029
    %8750 = vmatprep.subr.bf16.mxu0 %v6022
    %8751 = vmatpush1.bf16.msra.mxu0 %v6021
    %8752 = vmatprep.subr.bf16.mxu0 %v6014
    %8753 = vmatpush1.bf16.msra.mxu0 %v6013
    %8754 = vmatprep.subr.bf16.mxu0 %v6006
    %8755 = vmatpush1.bf16.msra.mxu0 %v6005
    %8756 = vmatprep.subr.bf16.mxu0 %v5998
    %8757 = vmatpush1.bf16.msra.mxu0 %v5997
    %8758 = vmatprep.subr.bf16.mxu0 %v5990
    %8759 = vmatpush1.bf16.msra.mxu0 %v5989
    %8760 = vmatprep.subr.bf16.mxu0 %v5982
    %8761 = vmatpush1.bf16.msra.mxu0 %v5981
    %8762 = vmatprep.subr.bf16.mxu0 %v6102
    %8763 = vmatpush2.bf16.msra.mxu0 %v6101
    %8764 = vmatprep.subr.bf16.mxu0 %v6094
    %8765 = vmatpush2.bf16.msra.mxu0 %v6093
    %8766 = vmatprep.subr.bf16.mxu0 %v6086
    %8767 = vmatpush2.bf16.msra.mxu0 %v6085
    %8768 = vmatprep.subr.bf16.mxu0 %v6078
    %8769 = vmatpush2.bf16.msra.mxu0 %v6077
    %8770 = vmatprep.subr.bf16.mxu0 %v6070
    %8771 = vmatpush2.bf16.msra.mxu0 %v6069
    %8772 = vmatprep.subr.bf16.mxu0 %v6062
    %8773 = vmatpush2.bf16.msra.mxu0 %v6061
    %8774 = vmatprep.subr.bf16.mxu0 %v6054
    %8775 = vmatpush2.bf16.msra.mxu0 %v6053
    %8776 = vmatprep.subr.bf16.mxu0 %v6046
    %8777 = vmatpush2.bf16.msra.mxu0 %v6045
    %8778 = vmatprep.mubr.bf16.mxu0 %v1486
    %8779 = vmatmul.mubr.bf16.gmra.mxu0 %v1485
    %v8780 = vpop.f32.mrf.mxu0
    %v8781 = vadd.f32 %v8740, %v8780
    %v8782 = vpop.f32.mrf.mxu0
    %v8783 = vadd.f32 %v8742, %v8782
    %v8784 = vpop.f32.mrf.mxu0
    %v8785 = vpop.f32.mrf.mxu0
    %8786 = vdwg.mxu0
    %8787 = vmatprep.subr.bf16.mxu0 %v6166
    %8788 = vmatpush1.bf16.msra.mxu0 %v6165
    %8789 = vmatprep.subr.bf16.mxu0 %v6158
    %8790 = vmatpush1.bf16.msra.mxu0 %v6157
    %8791 = vmatprep.subr.bf16.mxu0 %v6150
    %8792 = vmatpush1.bf16.msra.mxu0 %v6149
    %8793 = vmatprep.subr.bf16.mxu0 %v6142
    %8794 = vmatpush1.bf16.msra.mxu0 %v6141
    %8795 = vmatprep.subr.bf16.mxu0 %v6134
    %8796 = vmatpush1.bf16.msra.mxu0 %v6133
    %8797 = vmatprep.subr.bf16.mxu0 %v6126
    %8798 = vmatpush1.bf16.msra.mxu0 %v6125
    %8799 = vmatprep.subr.bf16.mxu0 %v6118
    %8800 = vmatpush1.bf16.msra.mxu0 %v6117
    %8801 = vmatprep.subr.bf16.mxu0 %v6110
    %8802 = vmatpush1.bf16.msra.mxu0 %v6109
    %8803 = vmatprep.subr.bf16.mxu0 %v6230
    %8804 = vmatpush2.bf16.msra.mxu0 %v6229
    %8805 = vmatprep.subr.bf16.mxu0 %v6222
    %8806 = vmatpush2.bf16.msra.mxu0 %v6221
    %8807 = vmatprep.subr.bf16.mxu0 %v6214
    %8808 = vmatpush2.bf16.msra.mxu0 %v6213
    %8809 = vmatprep.subr.bf16.mxu0 %v6206
    %8810 = vmatpush2.bf16.msra.mxu0 %v6205
    %8811 = vmatprep.subr.bf16.mxu0 %v6198
    %8812 = vmatpush2.bf16.msra.mxu0 %v6197
    %8813 = vmatprep.subr.bf16.mxu0 %v6190
    %8814 = vmatpush2.bf16.msra.mxu0 %v6189
    %8815 = vmatprep.subr.bf16.mxu0 %v6182
    %8816 = vmatpush2.bf16.msra.mxu0 %v6181
    %8817 = vmatprep.subr.bf16.mxu0 %v6174
    %8818 = vmatpush2.bf16.msra.mxu0 %v6173
    %8819 = vmatprep.mubr.bf16.mxu0 %v1488
    %8820 = vmatmul.mubr.bf16.gmra.mxu0 %v1487
    %v8821 = vpop.f32.mrf.mxu0
    %v8822 = vadd.f32 %v8781, %v8821
    %v8823 = vpop.f32.mrf.mxu0
    %v8824 = vadd.f32 %v8783, %v8823
    %v8825 = vpop.f32.mrf.mxu0
    %v8826 = vpop.f32.mrf.mxu0
    %8827 = vdwg.mxu0
    %8828 = vmatprep.subr.bf16.mxu0 %v6294
    %8829 = vmatpush1.bf16.msra.mxu0 %v6293
    %8830 = vmatprep.subr.bf16.mxu0 %v6286
    %8831 = vmatpush1.bf16.msra.mxu0 %v6285
    %8832 = vmatprep.subr.bf16.mxu0 %v6278
    %8833 = vmatpush1.bf16.msra.mxu0 %v6277
    %8834 = vmatprep.subr.bf16.mxu0 %v6270
    %8835 = vmatpush1.bf16.msra.mxu0 %v6269
    %8836 = vmatprep.subr.bf16.mxu0 %v6262
    %8837 = vmatpush1.bf16.msra.mxu0 %v6261
    %8838 = vmatprep.subr.bf16.mxu0 %v6254
    %8839 = vmatpush1.bf16.msra.mxu0 %v6253
    %8840 = vmatprep.subr.bf16.mxu0 %v6246
    %8841 = vmatpush1.bf16.msra.mxu0 %v6245
    %8842 = vmatprep.subr.bf16.mxu0 %v6238
    %8843 = vmatpush1.bf16.msra.mxu0 %v6237
    %8844 = vmatprep.subr.bf16.mxu0 %v6358
    %8845 = vmatpush2.bf16.msra.mxu0 %v6357
    %8846 = vmatprep.subr.bf16.mxu0 %v6350
    %8847 = vmatpush2.bf16.msra.mxu0 %v6349
    %8848 = vmatprep.subr.bf16.mxu0 %v6342
    %8849 = vmatpush2.bf16.msra.mxu0 %v6341
    %8850 = vmatprep.subr.bf16.mxu0 %v6334
    %8851 = vmatpush2.bf16.msra.mxu0 %v6333
    %8852 = vmatprep.subr.bf16.mxu0 %v6326
    %8853 = vmatpush2.bf16.msra.mxu0 %v6325
    %8854 = vmatprep.subr.bf16.mxu0 %v6318
    %8855 = vmatpush2.bf16.msra.mxu0 %v6317
    %8856 = vmatprep.subr.bf16.mxu0 %v6310
    %8857 = vmatpush2.bf16.msra.mxu0 %v6309
    %8858 = vmatprep.subr.bf16.mxu0 %v6302
    %8859 = vmatpush2.bf16.msra.mxu0 %v6301
    %8860 = vmatprep.mubr.bf16.mxu0 %v1490
    %8861 = vmatmul.mubr.bf16.gmra.mxu0 %v1489
    %v8862 = vpop.f32.mrf.mxu0
    %v8863 = vadd.f32 %v8822, %v8862
    %v8864 = vpop.f32.mrf.mxu0
    %v8865 = vadd.f32 %v8824, %v8864
    %v8866 = vpop.f32.mrf.mxu0
    %v8867 = vpop.f32.mrf.mxu0
    %8868 = vdwg.mxu0
    %8869 = vmatprep.subr.bf16.mxu0 %v6422
    %8870 = vmatpush1.bf16.msra.mxu0 %v6421
    %8871 = vmatprep.subr.bf16.mxu0 %v6414
    %8872 = vmatpush1.bf16.msra.mxu0 %v6413
    %8873 = vmatprep.subr.bf16.mxu0 %v6406
    %8874 = vmatpush1.bf16.msra.mxu0 %v6405
    %8875 = vmatprep.subr.bf16.mxu0 %v6398
    %8876 = vmatpush1.bf16.msra.mxu0 %v6397
    %8877 = vmatprep.subr.bf16.mxu0 %v6390
    %8878 = vmatpush1.bf16.msra.mxu0 %v6389
    %8879 = vmatprep.subr.bf16.mxu0 %v6382
    %8880 = vmatpush1.bf16.msra.mxu0 %v6381
    %8881 = vmatprep.subr.bf16.mxu0 %v6374
    %8882 = vmatpush1.bf16.msra.mxu0 %v6373
    %8883 = vmatprep.subr.bf16.mxu0 %v6366
    %8884 = vmatpush1.bf16.msra.mxu0 %v6365
    %8885 = vmatprep.subr.bf16.mxu0 %v6486
    %8886 = vmatpush2.bf16.msra.mxu0 %v6485
    %8887 = vmatprep.subr.bf16.mxu0 %v6478
    %8888 = vmatpush2.bf16.msra.mxu0 %v6477
    %8889 = vmatprep.subr.bf16.mxu0 %v6470
    %8890 = vmatpush2.bf16.msra.mxu0 %v6469
    %8891 = vmatprep.subr.bf16.mxu0 %v6462
    %8892 = vmatpush2.bf16.msra.mxu0 %v6461
    %8893 = vmatprep.subr.bf16.mxu0 %v6454
    %8894 = vmatpush2.bf16.msra.mxu0 %v6453
    %8895 = vmatprep.subr.bf16.mxu0 %v6446
    %8896 = vmatpush2.bf16.msra.mxu0 %v6445
    %8897 = vmatprep.subr.bf16.mxu0 %v6438
    %8898 = vmatpush2.bf16.msra.mxu0 %v6437
    %8899 = vmatprep.subr.bf16.mxu0 %v6430
    %8900 = vmatpush2.bf16.msra.mxu0 %v6429
    %8901 = vmatprep.mubr.bf16.mxu0 %v1492
    %8902 = vmatmul.mubr.bf16.gmra.mxu0 %v1491
    %v8903 = vpop.f32.mrf.mxu0
    %v8904 = vadd.f32 %v8863, %v8903
    %v8905 = vpop.f32.mrf.mxu0
    %v8906 = vadd.f32 %v8865, %v8905
    %v8907 = vpop.f32.mrf.mxu0
    %v8908 = vpop.f32.mrf.mxu0
    %8909 = vdwg.mxu0
    %8910 = vmatprep.subr.bf16.mxu0 %v6550
    %8911 = vmatpush1.bf16.msra.mxu0 %v6549
    %8912 = vmatprep.subr.bf16.mxu0 %v6542
    %8913 = vmatpush1.bf16.msra.mxu0 %v6541
    %8914 = vmatprep.subr.bf16.mxu0 %v6534
    %8915 = vmatpush1.bf16.msra.mxu0 %v6533
    %8916 = vmatprep.subr.bf16.mxu0 %v6526
    %8917 = vmatpush1.bf16.msra.mxu0 %v6525
    %8918 = vmatprep.subr.bf16.mxu0 %v6518
    %8919 = vmatpush1.bf16.msra.mxu0 %v6517
    %8920 = vmatprep.subr.bf16.mxu0 %v6510
    %8921 = vmatpush1.bf16.msra.mxu0 %v6509
    %8922 = vmatprep.subr.bf16.mxu0 %v6502
    %8923 = vmatpush1.bf16.msra.mxu0 %v6501
    %8924 = vmatprep.subr.bf16.mxu0 %v6494
    %8925 = vmatpush1.bf16.msra.mxu0 %v6493
    %8926 = vmatprep.subr.bf16.mxu0 %v6614
    %8927 = vmatpush2.bf16.msra.mxu0 %v6613
    %8928 = vmatprep.subr.bf16.mxu0 %v6606
    %8929 = vmatpush2.bf16.msra.mxu0 %v6605
    %8930 = vmatprep.subr.bf16.mxu0 %v6598
    %8931 = vmatpush2.bf16.msra.mxu0 %v6597
    %8932 = vmatprep.subr.bf16.mxu0 %v6590
    %8933 = vmatpush2.bf16.msra.mxu0 %v6589
    %8934 = vmatprep.subr.bf16.mxu0 %v6582
    %8935 = vmatpush2.bf16.msra.mxu0 %v6581
    %8936 = vmatprep.subr.bf16.mxu0 %v6574
    %8937 = vmatpush2.bf16.msra.mxu0 %v6573
    %8938 = vmatprep.subr.bf16.mxu0 %v6566
    %8939 = vmatpush2.bf16.msra.mxu0 %v6565
    %8940 = vmatprep.subr.bf16.mxu0 %v6558
    %8941 = vmatpush2.bf16.msra.mxu0 %v6557
    %8942 = vmatprep.mubr.bf16.mxu0 %v1494
    %8943 = vmatmul.mubr.bf16.gmra.mxu0 %v1493
    %v8944 = vpop.f32.mrf.mxu0
    %v8945 = vadd.f32 %v8904, %v8944
    %v8946 = vpop.f32.mrf.mxu0
    %v8947 = vadd.f32 %v8906, %v8946
    %v8948 = vpop.f32.mrf.mxu0
    %v8949 = vpop.f32.mrf.mxu0
    %8950 = vdwg.mxu0
    %v8951 = vrot.slane %v7961, 4
    %v8952 = vadd.f32 %v7961, %v8951
    %v8953 = vrot.slane %v8952, 2
    %v8954 = vadd.f32 %v8952, %v8953
    %v8955 = vrot.slane %v8954, 1
    %v8956 = vadd.f32 %v8954, %v8955
    %v8957 = vrot.slane %v7963, 4
    %v8958 = vadd.f32 %v7963, %v8957
    %v8959 = vrot.slane %v8958, 2
    %v8960 = vadd.f32 %v8958, %v8959
    %v8961 = vrot.slane %v8960, 1
    %v8962 = vadd.f32 %v8960, %v8961
    %v8963 = vrot.slane %v8289, 4
    %v8964 = vadd.f32 %v8289, %v8963
    %v8965 = vrot.slane %v8964, 2
    %v8966 = vadd.f32 %v8964, %v8965
    %v8967 = vrot.slane %v8966, 1
    %v8968 = vadd.f32 %v8966, %v8967
    %v8969 = vrot.slane %v8291, 4
    %v8970 = vadd.f32 %v8291, %v8969
    %v8971 = vrot.slane %v8970, 2
    %v8972 = vadd.f32 %v8970, %v8971
    %v8973 = vrot.slane %v8972, 1
    %v8974 = vadd.f32 %v8972, %v8973
    %v8975 = vrot.slane %v8617, 4
    %v8976 = vadd.f32 %v8617, %v8975
    %v8977 = vrot.slane %v8976, 2
    %v8978 = vadd.f32 %v8976, %v8977
    %v8979 = vrot.slane %v8978, 1
    %v8980 = vadd.f32 %v8978, %v8979
    %v8981 = vrot.slane %v8619, 4
    %v8982 = vadd.f32 %v8619, %v8981
    %v8983 = vrot.slane %v8982, 2
    %v8984 = vadd.f32 %v8982, %v8983
    %v8985 = vrot.slane %v8984, 1
    %v8986 = vadd.f32 %v8984, %v8985
    %v8987 = vrot.slane %v8945, 4
    %v8988 = vadd.f32 %v8945, %v8987
    %v8989 = vrot.slane %v8988, 2
    %v8990 = vadd.f32 %v8988, %v8989
    %v8991 = vrot.slane %v8990, 1
    %v8992 = vadd.f32 %v8990, %v8991
    %v8993 = vrot.slane %v8947, 4
    %v8994 = vadd.f32 %v8947, %v8993
    %v8995 = vrot.slane %v8994, 2
    %v8996 = vadd.f32 %v8994, %v8995
    %v8997 = vrot.slane %v8996, 1
    %v8998 = vadd.f32 %v8996, %v8997
    %v8999 = vmul.f32 %v8956, 0.125
    %v9000 = vmul.f32 %v8962, 0.125
    %v9001 = vmul.f32 %v8968, 0.125
    %v9002 = vmul.f32 %v8974, 0.125
    %v9003 = vmul.f32 %v8980, 0.125
    %v9004 = vmul.f32 %v8986, 0.125
    %v9005 = vmul.f32 %v8992, 0.125
    %v9006 = vmul.f32 %v8998, 0.125
    %v9007 = vsub.f32 %v7961, %v8999
    %v9008 = vsub.f32 %v7963, %v9000
    %v9009 = vsub.f32 %v8289, %v9001
    %v9010 = vsub.f32 %v8291, %v9002
    %v9011 = vsub.f32 %v8617, %v9003
    %v9012 = vsub.f32 %v8619, %v9004
    %v9013 = vsub.f32 %v8945, %v9005
    %v9014 = vsub.f32 %v8947, %v9006
    %v9015 = vmul.f32 %v9007, %v9007
    %v9016 = vmul.f32 %v9008, %v9008
    %v9017 = vmul.f32 %v9009, %v9009
    %v9018 = vmul.f32 %v9010, %v9010
    %v9019 = vmul.f32 %v9011, %v9011
    %v9020 = vmul.f32 %v9012, %v9012
    %v9021 = vmul.f32 %v9013, %v9013
    %v9022 = vmul.f32 %v9014, %v9014
    %v9023 = vrot.slane %v9015, 4
    %v9024 = vadd.f32 %v9015, %v9023
    %v9025 = vrot.slane %v9024, 2
    %v9026 = vadd.f32 %v9024, %v9025
    %v9027 = vrot.slane %v9026, 1
    %v9028 = vadd.f32 %v9026, %v9027
    %v9029 = vrot.slane %v9016, 4
    %v9030 = vadd.f32 %v9016, %v9029
    %v9031 = vrot.slane %v9030, 2
    %v9032 = vadd.f32 %v9030, %v9031
    %v9033 = vrot.slane %v9032, 1
    %v9034 = vadd.f32 %v9032, %v9033
    %v9035 = vrot.slane %v9017, 4
    %v9036 = vadd.f32 %v9017, %v9035
    %v9037 = vrot.slane %v9036, 2
    %v9038 = vadd.f32 %v9036, %v9037
    %v9039 = vrot.slane %v9038, 1
    %v9040 = vadd.f32 %v9038, %v9039
    %v9041 = vrot.slane %v9018, 4
    %v9042 = vadd.f32 %v9018, %v9041
    %v9043 = vrot.slane %v9042, 2
    %v9044 = vadd.f32 %v9042, %v9043
    %v9045 = vrot.slane %v9044, 1
    %v9046 = vadd.f32 %v9044, %v9045
    %v9047 = vrot.slane %v9019, 4
    %v9048 = vadd.f32 %v9019, %v9047
    %v9049 = vrot.slane %v9048, 2
    %v9050 = vadd.f32 %v9048, %v9049
    %v9051 = vrot.slane %v9050, 1
    %v9052 = vadd.f32 %v9050, %v9051
    %v9053 = vrot.slane %v9020, 4
    %v9054 = vadd.f32 %v9020, %v9053
    %v9055 = vrot.slane %v9054, 2
    %v9056 = vadd.f32 %v9054, %v9055
    %v9057 = vrot.slane %v9056, 1
    %v9058 = vadd.f32 %v9056, %v9057
    %v9059 = vrot.slane %v9021, 4
    %v9060 = vadd.f32 %v9021, %v9059
    %v9061 = vrot.slane %v9060, 2
    %v9062 = vadd.f32 %v9060, %v9061
    %v9063 = vrot.slane %v9062, 1
    %v9064 = vadd.f32 %v9062, %v9063
    %v9065 = vrot.slane %v9022, 4
    %v9066 = vadd.f32 %v9022, %v9065
    %v9067 = vrot.slane %v9066, 2
    %v9068 = vadd.f32 %v9066, %v9067
    %v9069 = vrot.slane %v9068, 1
    %v9070 = vadd.f32 %v9068, %v9069
    %v9071 = vmul.f32 %v9028, 0.125
    %v9072 = vmul.f32 %v9034, 0.125
    %v9073 = vmul.f32 %v9040, 0.125
    %v9074 = vmul.f32 %v9046, 0.125
    %v9075 = vmul.f32 %v9052, 0.125
    %v9076 = vmul.f32 %v9058, 0.125
    %v9077 = vmul.f32 %v9064, 0.125
    %v9078 = vmul.f32 %v9070, 0.125
    %v9079 = vld [vmem:[#allocation9] sm:$0xff]
    %v9080 = vadd.f32 %v9071, 1e-05
    %v9081 = vadd.f32 %v9072, 1e-05
    %v9082 = vadd.f32 %v9073, 1e-05
    %v9083 = vadd.f32 %v9074, 1e-05
    %v9084 = vadd.f32 %v9075, 1e-05
    %v9085 = vadd.f32 %v9076, 1e-05
    %v9086 = vadd.f32 %v9077, 1e-05
    %v9087 = vadd.f32 %v9078, 1e-05
    %v9088 = vrsqrt.pop %v9080
    %v9089 = vrsqrt.pop %v9081
    %v9090 = vrsqrt.pop %v9082
    %v9091 = vrsqrt.pop %v9083
    %v9092 = vrsqrt.pop %v9084
    %v9093 = vrsqrt.pop %v9085
    %v9094 = vrsqrt.pop %v9086
    %v9095 = vrsqrt.pop %v9087
    %v9104 = vcombine.low %v9088, %v9089
    %v9105 = vcombine.low %v9090, %v9091
    %v9106 = vcombine.low %v9092, %v9093
    %v9107 = vcombine.low %v9094, %v9095
    %v9109 = vunpack.c.l.s4 1966171168
    %v9110 = vunpack.c.0.s8 %v9109
    %v9111 = vlaneseq
    %v9112 = vshrl.u32 %v9111, 7
    %v9113 = vsub.s32 %v9110, %v9112
    %v9114 = vrot.slane %v9104, %v9113
    %v9116 = vunpack.c.l.s4 1966171168
    %v9117 = vunpack.c.0.s8 %v9116
    %v9118 = vlaneseq
    %v9119 = vshrl.u32 %v9118, 7
    %v9120 = vsub.s32 %v9117, %v9119
    %v9121 = vrot.slane %v9105, %v9120
    %v9123 = vunpack.c.l.s4 1966171168
    %v9124 = vunpack.c.0.s8 %v9123
    %v9125 = vlaneseq
    %v9126 = vshrl.u32 %v9125, 7
    %v9127 = vsub.s32 %v9124, %v9126
    %v9128 = vrot.slane %v9106, %v9127
    %v9130 = vunpack.c.l.s4 1966171168
    %v9131 = vunpack.c.0.s8 %v9130
    %v9132 = vlaneseq
    %v9133 = vshrl.u32 %v9132, 7
    %v9134 = vsub.s32 %v9131, %v9133
    %v9135 = vrot.slane %v9107, %v9134
    %v9136 = vcombine.low %v9114, %v9121
    %v9137 = vcombine.low %v9128, %v9135
    %v9139 = vunpack.c.l.s4 1966171168
    %v9140 = vunpack.c.0.s8 %v9139
    %v9141 = vlaneseq
    %v9142 = vshrl.u32 %v9141, 7
    %v9143 = vsub.s32 %v9140, %v9142
    %v9144 = vrot.slane %v9136, %v9143
    %v9146 = vunpack.c.l.s4 1966171168
    %v9147 = vunpack.c.0.s8 %v9146
    %v9148 = vlaneseq
    %v9149 = vshrl.u32 %v9148, 7
    %v9150 = vsub.s32 %v9147, %v9149
    %v9151 = vrot.slane %v9137, %v9150
    %v9152 = vcombine.low %v9144, %v9151
    %v9154 = vmul.f32 %v9079, %v9152
    %v9156 = vlaneseq
    %v9157 = vshrl.u32 %v9156, 7
    %v9158 = vsub.s32 0, %v9157
    %v9159 = vrot.slane %v9154, %v9158
    %v9160 = vlaneseq
    %v9161 = vshrl.u32 %v9160, 7
    %v9162 = vsub.s32 1, %v9161
    %v9163 = vrot.slane %v9154, %v9162
    %v9164 = vlaneseq
    %v9165 = vshrl.u32 %v9164, 7
    %v9166 = vsub.s32 2, %v9165
    %v9167 = vrot.slane %v9154, %v9166
    %v9168 = vlaneseq
    %v9169 = vshrl.u32 %v9168, 7
    %v9170 = vsub.s32 3, %v9169
    %v9171 = vrot.slane %v9154, %v9170
    %v9172 = vlaneseq
    %v9173 = vshrl.u32 %v9172, 7
    %v9174 = vsub.s32 4, %v9173
    %v9175 = vrot.slane %v9154, %v9174
    %v9176 = vlaneseq
    %v9177 = vshrl.u32 %v9176, 7
    %v9178 = vsub.s32 5, %v9177
    %v9179 = vrot.slane %v9154, %v9178
    %v9180 = vlaneseq
    %v9181 = vshrl.u32 %v9180, 7
    %v9182 = vsub.s32 6, %v9181
    %v9183 = vrot.slane %v9154, %v9182
    %v9184 = vlaneseq
    %v9185 = vshrl.u32 %v9184, 7
    %v9186 = vsub.s32 7, %v9185
    %v9187 = vrot.slane %v9154, %v9186
    %v9196 = vmul.f32 %v9007, %v9159
    %v9197 = vmul.f32 %v9008, %v9163
    %v9198 = vmul.f32 %v9009, %v9167
    %v9199 = vmul.f32 %v9010, %v9171
    %v9200 = vmul.f32 %v9011, %v9175
    %v9201 = vmul.f32 %v9012, %v9179
    %v9202 = vmul.f32 %v9013, %v9183
    %v9203 = vmul.f32 %v9014, %v9187
    %v9204 = vld [vmem:[#allocation10] sm:$0xff]
    %v9206 = vlaneseq
    %v9207 = vshrl.u32 %v9206, 7
    %v9208 = vsub.s32 0, %v9207
    %v9209 = vrot.slane %v9204, %v9208
    %v9210 = vlaneseq
    %v9211 = vshrl.u32 %v9210, 7
    %v9212 = vsub.s32 1, %v9211
    %v9213 = vrot.slane %v9204, %v9212
    %v9214 = vlaneseq
    %v9215 = vshrl.u32 %v9214, 7
    %v9216 = vsub.s32 2, %v9215
    %v9217 = vrot.slane %v9204, %v9216
    %v9218 = vlaneseq
    %v9219 = vshrl.u32 %v9218, 7
    %v9220 = vsub.s32 3, %v9219
    %v9221 = vrot.slane %v9204, %v9220
    %v9222 = vlaneseq
    %v9223 = vshrl.u32 %v9222, 7
    %v9224 = vsub.s32 4, %v9223
    %v9225 = vrot.slane %v9204, %v9224
    %v9226 = vlaneseq
    %v9227 = vshrl.u32 %v9226, 7
    %v9228 = vsub.s32 5, %v9227
    %v9229 = vrot.slane %v9204, %v9228
    %v9230 = vlaneseq
    %v9231 = vshrl.u32 %v9230, 7
    %v9232 = vsub.s32 6, %v9231
    %v9233 = vrot.slane %v9204, %v9232
    %v9234 = vlaneseq
    %v9235 = vshrl.u32 %v9234, 7
    %v9236 = vsub.s32 7, %v9235
    %v9237 = vrot.slane %v9204, %v9236
    %v9246 = vadd.f32 %v9196, %v9209
    %v9247 = vadd.f32 %v9197, %v9213
    %v9248 = vadd.f32 %v9198, %v9217
    %v9249 = vadd.f32 %v9199, %v9221
    %v9250 = vadd.f32 %v9200, %v9225
    %v9251 = vadd.f32 %v9201, %v9229
    %v9252 = vadd.f32 %v9202, %v9233
    %v9253 = vadd.f32 %v9203, %v9237
    %v9254 = vmax.f32 %v9246, 0.0
    %v9255 = vmax.f32 %v9247, 0.0
    %v9256 = vmax.f32 %v9248, 0.0
    %v9257 = vmax.f32 %v9249, 0.0
    %v9258 = vmax.f32 %v9250, 0.0
    %v9259 = vmax.f32 %v9251, 0.0
    %v9260 = vmax.f32 %v9252, 0.0
    %v9261 = vmax.f32 %v9253, 0.0
    %v9262 = vpack.c.bf16 %v9254, %v9254
    %v9263 = vpack.c.bf16 %v9255, %v9255
    %v9264 = vpack.c.bf16 %v9256, %v9256
    %v9265 = vpack.c.bf16 %v9257, %v9257
    %v9266 = vpack.c.bf16 %v9258, %v9258
    %v9267 = vpack.c.bf16 %v9259, %v9259
    %v9268 = vpack.c.bf16 %v9260, %v9260
    %v9269 = vpack.c.bf16 %v9261, %v9261
    %v9270 = vld [vmem:[#allocation12] sm:$0xff]
    %v9271 = vld [vmem:[#allocation12 + $0x8] sm:$0xff]
    %v9272 = vld [vmem:[#allocation12 + $0x10] sm:$0xff]
    %v9273 = vld [vmem:[#allocation12 + $0x18] sm:$0xff]
    %v9274 = vld [vmem:[#allocation12 + $0x20] sm:$0xff]
    %v9275 = vld [vmem:[#allocation12 + $0x28] sm:$0xff]
    %v9276 = vld [vmem:[#allocation12 + $0x30] sm:$0xff]
    %v9277 = vld [vmem:[#allocation12 + $0x38] sm:$0xff]
    %v9278 = vld [vmem:[#allocation12 + $0x40] sm:$0xff]
    %v9279 = vld [vmem:[#allocation12 + $0x48] sm:$0xff]
    %v9280 = vld [vmem:[#allocation12 + $0x50] sm:$0xff]
    %v9281 = vld [vmem:[#allocation12 + $0x58] sm:$0xff]
    %v9282 = vld [vmem:[#allocation12 + $0x60] sm:$0xff]
    %v9283 = vld [vmem:[#allocation12 + $0x68] sm:$0xff]
    %v9284 = vld [vmem:[#allocation12 + $0x70] sm:$0xff]
    %v9285 = vld [vmem:[#allocation12 + $0x78] sm:$0xff]
    %v9286 = vld [vmem:[#allocation12 + $0x80] sm:$0xff]
    %v9287 = vld [vmem:[#allocation12 + $0x88] sm:$0xff]
    %v9288 = vld [vmem:[#allocation12 + $0x90] sm:$0xff]
    %v9289 = vld [vmem:[#allocation12 + $0x98] sm:$0xff]
    %v9290 = vld [vmem:[#allocation12 + $0xa0] sm:$0xff]
    %v9291 = vld [vmem:[#allocation12 + $0xa8] sm:$0xff]
    %v9292 = vld [vmem:[#allocation12 + $0xb0] sm:$0xff]
    %v9293 = vld [vmem:[#allocation12 + $0xb8] sm:$0xff]
    %v9294 = vld [vmem:[#allocation12 + $0xc0] sm:$0xff]
    %v9295 = vld [vmem:[#allocation12 + $0xc8] sm:$0xff]
    %v9296 = vld [vmem:[#allocation12 + $0xd0] sm:$0xff]
    %v9297 = vld [vmem:[#allocation12 + $0xd8] sm:$0xff]
    %v9298 = vld [vmem:[#allocation12 + $0xe0] sm:$0xff]
    %v9299 = vld [vmem:[#allocation12 + $0xe8] sm:$0xff]
    %v9300 = vld [vmem:[#allocation12 + $0xf0] sm:$0xff]
    %v9301 = vld [vmem:[#allocation12 + $0xf8] sm:$0xff]
    %v9302 = vld [vmem:[#allocation12 + $0x100] sm:$0xff]
    %v9303 = vld [vmem:[#allocation12 + $0x108] sm:$0xff]
    %v9304 = vld [vmem:[#allocation12 + $0x110] sm:$0xff]
    %v9305 = vld [vmem:[#allocation12 + $0x118] sm:$0xff]
    %v9306 = vld [vmem:[#allocation12 + $0x120] sm:$0xff]
    %v9307 = vld [vmem:[#allocation12 + $0x128] sm:$0xff]
    %v9308 = vld [vmem:[#allocation12 + $0x130] sm:$0xff]
    %v9309 = vld [vmem:[#allocation12 + $0x138] sm:$0xff]
    %v9310 = vld [vmem:[#allocation12 + $0x140] sm:$0xff]
    %v9311 = vld [vmem:[#allocation12 + $0x148] sm:$0xff]
    %v9312 = vld [vmem:[#allocation12 + $0x150] sm:$0xff]
    %v9313 = vld [vmem:[#allocation12 + $0x158] sm:$0xff]
    %v9314 = vld [vmem:[#allocation12 + $0x160] sm:$0xff]
    %v9315 = vld [vmem:[#allocation12 + $0x168] sm:$0xff]
    %v9316 = vld [vmem:[#allocation12 + $0x170] sm:$0xff]
    %v9317 = vld [vmem:[#allocation12 + $0x178] sm:$0xff]
    %v9318 = vld [vmem:[#allocation12 + $0x180] sm:$0xff]
    %v9319 = vld [vmem:[#allocation12 + $0x188] sm:$0xff]
    %v9320 = vld [vmem:[#allocation12 + $0x190] sm:$0xff]
    %v9321 = vld [vmem:[#allocation12 + $0x198] sm:$0xff]
    %v9322 = vld [vmem:[#allocation12 + $0x1a0] sm:$0xff]
    %v9323 = vld [vmem:[#allocation12 + $0x1a8] sm:$0xff]
    %v9324 = vld [vmem:[#allocation12 + $0x1b0] sm:$0xff]
    %v9325 = vld [vmem:[#allocation12 + $0x1b8] sm:$0xff]
    %v9326 = vld [vmem:[#allocation12 + $0x1c0] sm:$0xff]
    %v9327 = vld [vmem:[#allocation12 + $0x1c8] sm:$0xff]
    %v9328 = vld [vmem:[#allocation12 + $0x1d0] sm:$0xff]
    %v9329 = vld [vmem:[#allocation12 + $0x1d8] sm:$0xff]
    %v9330 = vld [vmem:[#allocation12 + $0x1e0] sm:$0xff]
    %v9331 = vld [vmem:[#allocation12 + $0x1e8] sm:$0xff]
    %v9332 = vld [vmem:[#allocation12 + $0x1f0] sm:$0xff]
    %v9333 = vld [vmem:[#allocation12 + $0x1f8] sm:$0xff]
    %v9334 = vld [vmem:[#allocation12 + $0x200] sm:$0xff]
    %v9335 = vld [vmem:[#allocation12 + $0x208] sm:$0xff]
    %v9336 = vld [vmem:[#allocation12 + $0x210] sm:$0xff]
    %v9337 = vld [vmem:[#allocation12 + $0x218] sm:$0xff]
    %v9338 = vld [vmem:[#allocation12 + $0x220] sm:$0xff]
    %v9339 = vld [vmem:[#allocation12 + $0x228] sm:$0xff]
    %v9340 = vld [vmem:[#allocation12 + $0x230] sm:$0xff]
    %v9341 = vld [vmem:[#allocation12 + $0x238] sm:$0xff]
    %v9342 = vld [vmem:[#allocation12 + $0x240] sm:$0xff]
    %v9343 = vld [vmem:[#allocation12 + $0x248] sm:$0xff]
    %v9344 = vld [vmem:[#allocation12 + $0x250] sm:$0xff]
    %v9345 = vld [vmem:[#allocation12 + $0x258] sm:$0xff]
    %v9346 = vld [vmem:[#allocation12 + $0x260] sm:$0xff]
    %v9347 = vld [vmem:[#allocation12 + $0x268] sm:$0xff]
    %v9348 = vld [vmem:[#allocation12 + $0x270] sm:$0xff]
    %v9349 = vld [vmem:[#allocation12 + $0x278] sm:$0xff]
    %v9350 = vld [vmem:[#allocation12 + $0x280] sm:$0xff]
    %v9351 = vld [vmem:[#allocation12 + $0x288] sm:$0xff]
    %v9352 = vld [vmem:[#allocation12 + $0x290] sm:$0xff]
    %v9353 = vld [vmem:[#allocation12 + $0x298] sm:$0xff]
    %v9354 = vld [vmem:[#allocation12 + $0x2a0] sm:$0xff]
    %v9355 = vld [vmem:[#allocation12 + $0x2a8] sm:$0xff]
    %v9356 = vld [vmem:[#allocation12 + $0x2b0] sm:$0xff]
    %v9357 = vld [vmem:[#allocation12 + $0x2b8] sm:$0xff]
    %v9358 = vld [vmem:[#allocation12 + $0x2c0] sm:$0xff]
    %v9359 = vld [vmem:[#allocation12 + $0x2c8] sm:$0xff]
    %v9360 = vld [vmem:[#allocation12 + $0x2d0] sm:$0xff]
    %v9361 = vld [vmem:[#allocation12 + $0x2d8] sm:$0xff]
    %v9362 = vld [vmem:[#allocation12 + $0x2e0] sm:$0xff]
    %v9363 = vld [vmem:[#allocation12 + $0x2e8] sm:$0xff]
    %v9364 = vld [vmem:[#allocation12 + $0x2f0] sm:$0xff]
    %v9365 = vld [vmem:[#allocation12 + $0x2f8] sm:$0xff]
    %v9366 = vld [vmem:[#allocation12 + $0x300] sm:$0xff]
    %v9367 = vld [vmem:[#allocation12 + $0x308] sm:$0xff]
    %v9368 = vld [vmem:[#allocation12 + $0x310] sm:$0xff]
    %v9369 = vld [vmem:[#allocation12 + $0x318] sm:$0xff]
    %v9370 = vld [vmem:[#allocation12 + $0x320] sm:$0xff]
    %v9371 = vld [vmem:[#allocation12 + $0x328] sm:$0xff]
    %v9372 = vld [vmem:[#allocation12 + $0x330] sm:$0xff]
    %v9373 = vld [vmem:[#allocation12 + $0x338] sm:$0xff]
    %v9374 = vld [vmem:[#allocation12 + $0x340] sm:$0xff]
    %v9375 = vld [vmem:[#allocation12 + $0x348] sm:$0xff]
    %v9376 = vld [vmem:[#allocation12 + $0x350] sm:$0xff]
    %v9377 = vld [vmem:[#allocation12 + $0x358] sm:$0xff]
    %v9378 = vld [vmem:[#allocation12 + $0x360] sm:$0xff]
    %v9379 = vld [vmem:[#allocation12 + $0x368] sm:$0xff]
    %v9380 = vld [vmem:[#allocation12 + $0x370] sm:$0xff]
    %v9381 = vld [vmem:[#allocation12 + $0x378] sm:$0xff]
    %v9382 = vld [vmem:[#allocation12 + $0x380] sm:$0xff]
    %v9383 = vld [vmem:[#allocation12 + $0x388] sm:$0xff]
    %v9384 = vld [vmem:[#allocation12 + $0x390] sm:$0xff]
    %v9385 = vld [vmem:[#allocation12 + $0x398] sm:$0xff]
    %v9386 = vld [vmem:[#allocation12 + $0x3a0] sm:$0xff]
    %v9387 = vld [vmem:[#allocation12 + $0x3a8] sm:$0xff]
    %v9388 = vld [vmem:[#allocation12 + $0x3b0] sm:$0xff]
    %v9389 = vld [vmem:[#allocation12 + $0x3b8] sm:$0xff]
    %v9390 = vld [vmem:[#allocation12 + $0x3c0] sm:$0xff]
    %v9391 = vld [vmem:[#allocation12 + $0x3c8] sm:$0xff]
    %v9392 = vld [vmem:[#allocation12 + $0x3d0] sm:$0xff]
    %v9393 = vld [vmem:[#allocation12 + $0x3d8] sm:$0xff]
    %v9394 = vld [vmem:[#allocation12 + $0x3e0] sm:$0xff]
    %v9395 = vld [vmem:[#allocation12 + $0x3e8] sm:$0xff]
    %v9396 = vld [vmem:[#allocation12 + $0x3f0] sm:$0xff]
    %v9397 = vld [vmem:[#allocation12 + $0x3f8] sm:$0xff]
    %v9526 = vunpack.c.l.b16 %v9270
    %v9527 = vunpack.c.h.b16 %v9270
    %v9528 = vunpack.c.l.b16 %v9271
    %v9529 = vunpack.c.h.b16 %v9271
    %v9530 = vunpack.c.l.b16 %v9272
    %v9531 = vunpack.c.h.b16 %v9272
    %v9532 = vunpack.c.l.b16 %v9273
    %v9533 = vunpack.c.h.b16 %v9273
    %v9534 = vunpack.c.l.b16 %v9274
    %v9535 = vunpack.c.h.b16 %v9274
    %v9536 = vunpack.c.l.b16 %v9275
    %v9537 = vunpack.c.h.b16 %v9275
    %v9538 = vunpack.c.l.b16 %v9276
    %v9539 = vunpack.c.h.b16 %v9276
    %v9540 = vunpack.c.l.b16 %v9277
    %v9541 = vunpack.c.h.b16 %v9277
    %v9542 = vunpack.c.l.b16 %v9278
    %v9543 = vunpack.c.h.b16 %v9278
    %v9544 = vunpack.c.l.b16 %v9279
    %v9545 = vunpack.c.h.b16 %v9279
    %v9546 = vunpack.c.l.b16 %v9280
    %v9547 = vunpack.c.h.b16 %v9280
    %v9548 = vunpack.c.l.b16 %v9281
    %v9549 = vunpack.c.h.b16 %v9281
    %v9550 = vunpack.c.l.b16 %v9282
    %v9551 = vunpack.c.h.b16 %v9282
    %v9552 = vunpack.c.l.b16 %v9283
    %v9553 = vunpack.c.h.b16 %v9283
    %v9554 = vunpack.c.l.b16 %v9284
    %v9555 = vunpack.c.h.b16 %v9284
    %v9556 = vunpack.c.l.b16 %v9285
    %v9557 = vunpack.c.h.b16 %v9285
    %v9558 = vunpack.c.l.b16 %v9286
    %v9559 = vunpack.c.h.b16 %v9286
    %v9560 = vunpack.c.l.b16 %v9287
    %v9561 = vunpack.c.h.b16 %v9287
    %v9562 = vunpack.c.l.b16 %v9288
    %v9563 = vunpack.c.h.b16 %v9288
    %v9564 = vunpack.c.l.b16 %v9289
    %v9565 = vunpack.c.h.b16 %v9289
    %v9566 = vunpack.c.l.b16 %v9290
    %v9567 = vunpack.c.h.b16 %v9290
    %v9568 = vunpack.c.l.b16 %v9291
    %v9569 = vunpack.c.h.b16 %v9291
    %v9570 = vunpack.c.l.b16 %v9292
    %v9571 = vunpack.c.h.b16 %v9292
    %v9572 = vunpack.c.l.b16 %v9293
    %v9573 = vunpack.c.h.b16 %v9293
    %v9574 = vunpack.c.l.b16 %v9294
    %v9575 = vunpack.c.h.b16 %v9294
    %v9576 = vunpack.c.l.b16 %v9295
    %v9577 = vunpack.c.h.b16 %v9295
    %v9578 = vunpack.c.l.b16 %v9296
    %v9579 = vunpack.c.h.b16 %v9296
    %v9580 = vunpack.c.l.b16 %v9297
    %v9581 = vunpack.c.h.b16 %v9297
    %v9582 = vunpack.c.l.b16 %v9298
    %v9583 = vunpack.c.h.b16 %v9298
    %v9584 = vunpack.c.l.b16 %v9299
    %v9585 = vunpack.c.h.b16 %v9299
    %v9586 = vunpack.c.l.b16 %v9300
    %v9587 = vunpack.c.h.b16 %v9300
    %v9588 = vunpack.c.l.b16 %v9301
    %v9589 = vunpack.c.h.b16 %v9301
    %v9590 = vunpack.c.l.b16 %v9302
    %v9591 = vunpack.c.h.b16 %v9302
    %v9592 = vunpack.c.l.b16 %v9303
    %v9593 = vunpack.c.h.b16 %v9303
    %v9594 = vunpack.c.l.b16 %v9304
    %v9595 = vunpack.c.h.b16 %v9304
    %v9596 = vunpack.c.l.b16 %v9305
    %v9597 = vunpack.c.h.b16 %v9305
    %v9598 = vunpack.c.l.b16 %v9306
    %v9599 = vunpack.c.h.b16 %v9306
    %v9600 = vunpack.c.l.b16 %v9307
    %v9601 = vunpack.c.h.b16 %v9307
    %v9602 = vunpack.c.l.b16 %v9308
    %v9603 = vunpack.c.h.b16 %v9308
    %v9604 = vunpack.c.l.b16 %v9309
    %v9605 = vunpack.c.h.b16 %v9309
    %v9606 = vunpack.c.l.b16 %v9310
    %v9607 = vunpack.c.h.b16 %v9310
    %v9608 = vunpack.c.l.b16 %v9311
    %v9609 = vunpack.c.h.b16 %v9311
    %v9610 = vunpack.c.l.b16 %v9312
    %v9611 = vunpack.c.h.b16 %v9312
    %v9612 = vunpack.c.l.b16 %v9313
    %v9613 = vunpack.c.h.b16 %v9313
    %v9614 = vunpack.c.l.b16 %v9314
    %v9615 = vunpack.c.h.b16 %v9314
    %v9616 = vunpack.c.l.b16 %v9315
    %v9617 = vunpack.c.h.b16 %v9315
    %v9618 = vunpack.c.l.b16 %v9316
    %v9619 = vunpack.c.h.b16 %v9316
    %v9620 = vunpack.c.l.b16 %v9317
    %v9621 = vunpack.c.h.b16 %v9317
    %v9622 = vunpack.c.l.b16 %v9318
    %v9623 = vunpack.c.h.b16 %v9318
    %v9624 = vunpack.c.l.b16 %v9319
    %v9625 = vunpack.c.h.b16 %v9319
    %v9626 = vunpack.c.l.b16 %v9320
    %v9627 = vunpack.c.h.b16 %v9320
    %v9628 = vunpack.c.l.b16 %v9321
    %v9629 = vunpack.c.h.b16 %v9321
    %v9630 = vunpack.c.l.b16 %v9322
    %v9631 = vunpack.c.h.b16 %v9322
    %v9632 = vunpack.c.l.b16 %v9323
    %v9633 = vunpack.c.h.b16 %v9323
    %v9634 = vunpack.c.l.b16 %v9324
    %v9635 = vunpack.c.h.b16 %v9324
    %v9636 = vunpack.c.l.b16 %v9325
    %v9637 = vunpack.c.h.b16 %v9325
    %v9638 = vunpack.c.l.b16 %v9326
    %v9639 = vunpack.c.h.b16 %v9326
    %v9640 = vunpack.c.l.b16 %v9327
    %v9641 = vunpack.c.h.b16 %v9327
    %v9642 = vunpack.c.l.b16 %v9328
    %v9643 = vunpack.c.h.b16 %v9328
    %v9644 = vunpack.c.l.b16 %v9329
    %v9645 = vunpack.c.h.b16 %v9329
    %v9646 = vunpack.c.l.b16 %v9330
    %v9647 = vunpack.c.h.b16 %v9330
    %v9648 = vunpack.c.l.b16 %v9331
    %v9649 = vunpack.c.h.b16 %v9331
    %v9650 = vunpack.c.l.b16 %v9332
    %v9651 = vunpack.c.h.b16 %v9332
    %v9652 = vunpack.c.l.b16 %v9333
    %v9653 = vunpack.c.h.b16 %v9333
    %v9654 = vunpack.c.l.b16 %v9334
    %v9655 = vunpack.c.h.b16 %v9334
    %v9656 = vunpack.c.l.b16 %v9335
    %v9657 = vunpack.c.h.b16 %v9335
    %v9658 = vunpack.c.l.b16 %v9336
    %v9659 = vunpack.c.h.b16 %v9336
    %v9660 = vunpack.c.l.b16 %v9337
    %v9661 = vunpack.c.h.b16 %v9337
    %v9662 = vunpack.c.l.b16 %v9338
    %v9663 = vunpack.c.h.b16 %v9338
    %v9664 = vunpack.c.l.b16 %v9339
    %v9665 = vunpack.c.h.b16 %v9339
    %v9666 = vunpack.c.l.b16 %v9340
    %v9667 = vunpack.c.h.b16 %v9340
    %v9668 = vunpack.c.l.b16 %v9341
    %v9669 = vunpack.c.h.b16 %v9341
    %v9670 = vunpack.c.l.b16 %v9342
    %v9671 = vunpack.c.h.b16 %v9342
    %v9672 = vunpack.c.l.b16 %v9343
    %v9673 = vunpack.c.h.b16 %v9343
    %v9674 = vunpack.c.l.b16 %v9344
    %v9675 = vunpack.c.h.b16 %v9344
    %v9676 = vunpack.c.l.b16 %v9345
    %v9677 = vunpack.c.h.b16 %v9345
    %v9678 = vunpack.c.l.b16 %v9346
    %v9679 = vunpack.c.h.b16 %v9346
    %v9680 = vunpack.c.l.b16 %v9347
    %v9681 = vunpack.c.h.b16 %v9347
    %v9682 = vunpack.c.l.b16 %v9348
    %v9683 = vunpack.c.h.b16 %v9348
    %v9684 = vunpack.c.l.b16 %v9349
    %v9685 = vunpack.c.h.b16 %v9349
    %v9686 = vunpack.c.l.b16 %v9350
    %v9687 = vunpack.c.h.b16 %v9350
    %v9688 = vunpack.c.l.b16 %v9351
    %v9689 = vunpack.c.h.b16 %v9351
    %v9690 = vunpack.c.l.b16 %v9352
    %v9691 = vunpack.c.h.b16 %v9352
    %v9692 = vunpack.c.l.b16 %v9353
    %v9693 = vunpack.c.h.b16 %v9353
    %v9694 = vunpack.c.l.b16 %v9354
    %v9695 = vunpack.c.h.b16 %v9354
    %v9696 = vunpack.c.l.b16 %v9355
    %v9697 = vunpack.c.h.b16 %v9355
    %v9698 = vunpack.c.l.b16 %v9356
    %v9699 = vunpack.c.h.b16 %v9356
    %v9700 = vunpack.c.l.b16 %v9357
    %v9701 = vunpack.c.h.b16 %v9357
    %v9702 = vunpack.c.l.b16 %v9358
    %v9703 = vunpack.c.h.b16 %v9358
    %v9704 = vunpack.c.l.b16 %v9359
    %v9705 = vunpack.c.h.b16 %v9359
    %v9706 = vunpack.c.l.b16 %v9360
    %v9707 = vunpack.c.h.b16 %v9360
    %v9708 = vunpack.c.l.b16 %v9361
    %v9709 = vunpack.c.h.b16 %v9361
    %v9710 = vunpack.c.l.b16 %v9362
    %v9711 = vunpack.c.h.b16 %v9362
    %v9712 = vunpack.c.l.b16 %v9363
    %v9713 = vunpack.c.h.b16 %v9363
    %v9714 = vunpack.c.l.b16 %v9364
    %v9715 = vunpack.c.h.b16 %v9364
    %v9716 = vunpack.c.l.b16 %v9365
    %v9717 = vunpack.c.h.b16 %v9365
    %v9718 = vunpack.c.l.b16 %v9366
    %v9719 = vunpack.c.h.b16 %v9366
    %v9720 = vunpack.c.l.b16 %v9367
    %v9721 = vunpack.c.h.b16 %v9367
    %v9722 = vunpack.c.l.b16 %v9368
    %v9723 = vunpack.c.h.b16 %v9368
    %v9724 = vunpack.c.l.b16 %v9369
    %v9725 = vunpack.c.h.b16 %v9369
    %v9726 = vunpack.c.l.b16 %v9370
    %v9727 = vunpack.c.h.b16 %v9370
    %v9728 = vunpack.c.l.b16 %v9371
    %v9729 = vunpack.c.h.b16 %v9371
    %v9730 = vunpack.c.l.b16 %v9372
    %v9731 = vunpack.c.h.b16 %v9372
    %v9732 = vunpack.c.l.b16 %v9373
    %v9733 = vunpack.c.h.b16 %v9373
    %v9734 = vunpack.c.l.b16 %v9374
    %v9735 = vunpack.c.h.b16 %v9374
    %v9736 = vunpack.c.l.b16 %v9375
    %v9737 = vunpack.c.h.b16 %v9375
    %v9738 = vunpack.c.l.b16 %v9376
    %v9739 = vunpack.c.h.b16 %v9376
    %v9740 = vunpack.c.l.b16 %v9377
    %v9741 = vunpack.c.h.b16 %v9377
    %v9742 = vunpack.c.l.b16 %v9378
    %v9743 = vunpack.c.h.b16 %v9378
    %v9744 = vunpack.c.l.b16 %v9379
    %v9745 = vunpack.c.h.b16 %v9379
    %v9746 = vunpack.c.l.b16 %v9380
    %v9747 = vunpack.c.h.b16 %v9380
    %v9748 = vunpack.c.l.b16 %v9381
    %v9749 = vunpack.c.h.b16 %v9381
    %v9750 = vunpack.c.l.b16 %v9382
    %v9751 = vunpack.c.h.b16 %v9382
    %v9752 = vunpack.c.l.b16 %v9383
    %v9753 = vunpack.c.h.b16 %v9383
    %v9754 = vunpack.c.l.b16 %v9384
    %v9755 = vunpack.c.h.b16 %v9384
    %v9756 = vunpack.c.l.b16 %v9385
    %v9757 = vunpack.c.h.b16 %v9385
    %v9758 = vunpack.c.l.b16 %v9386
    %v9759 = vunpack.c.h.b16 %v9386
    %v9760 = vunpack.c.l.b16 %v9387
    %v9761 = vunpack.c.h.b16 %v9387
    %v9762 = vunpack.c.l.b16 %v9388
    %v9763 = vunpack.c.h.b16 %v9388
    %v9764 = vunpack.c.l.b16 %v9389
    %v9765 = vunpack.c.h.b16 %v9389
    %v9766 = vunpack.c.l.b16 %v9390
    %v9767 = vunpack.c.h.b16 %v9390
    %v9768 = vunpack.c.l.b16 %v9391
    %v9769 = vunpack.c.h.b16 %v9391
    %v9770 = vunpack.c.l.b16 %v9392
    %v9771 = vunpack.c.h.b16 %v9392
    %v9772 = vunpack.c.l.b16 %v9393
    %v9773 = vunpack.c.h.b16 %v9393
    %v9774 = vunpack.c.l.b16 %v9394
    %v9775 = vunpack.c.h.b16 %v9394
    %v9776 = vunpack.c.l.b16 %v9395
    %v9777 = vunpack.c.h.b16 %v9395
    %v9778 = vunpack.c.l.b16 %v9396
    %v9779 = vunpack.c.h.b16 %v9396
    %v9780 = vunpack.c.l.b16 %v9397
    %v9781 = vunpack.c.h.b16 %v9397
    %v9782 = vpack.c.b16 %v9528, %v9526
    %v9783 = vpack.c.b16 %v9529, %v9527
    %v9784 = vpack.c.b16 %v9532, %v9530
    %v9785 = vpack.c.b16 %v9533, %v9531
    %v9786 = vpack.c.b16 %v9536, %v9534
    %v9787 = vpack.c.b16 %v9537, %v9535
    %v9788 = vpack.c.b16 %v9540, %v9538
    %v9789 = vpack.c.b16 %v9541, %v9539
    %v9790 = vpack.c.b16 %v9544, %v9542
    %v9791 = vpack.c.b16 %v9545, %v9543
    %v9792 = vpack.c.b16 %v9548, %v9546
    %v9793 = vpack.c.b16 %v9549, %v9547
    %v9794 = vpack.c.b16 %v9552, %v9550
    %v9795 = vpack.c.b16 %v9553, %v9551
    %v9796 = vpack.c.b16 %v9556, %v9554
    %v9797 = vpack.c.b16 %v9557, %v9555
    %v9798 = vpack.c.b16 %v9560, %v9558
    %v9799 = vpack.c.b16 %v9561, %v9559
    %v9800 = vpack.c.b16 %v9564, %v9562
    %v9801 = vpack.c.b16 %v9565, %v9563
    %v9802 = vpack.c.b16 %v9568, %v9566
    %v9803 = vpack.c.b16 %v9569, %v9567
    %v9804 = vpack.c.b16 %v9572, %v9570
    %v9805 = vpack.c.b16 %v9573, %v9571
    %v9806 = vpack.c.b16 %v9576, %v9574
    %v9807 = vpack.c.b16 %v9577, %v9575
    %v9808 = vpack.c.b16 %v9580, %v9578
    %v9809 = vpack.c.b16 %v9581, %v9579
    %v9810 = vpack.c.b16 %v9584, %v9582
    %v9811 = vpack.c.b16 %v9585, %v9583
    %v9812 = vpack.c.b16 %v9588, %v9586
    %v9813 = vpack.c.b16 %v9589, %v9587
    %v9814 = vpack.c.b16 %v9592, %v9590
    %v9815 = vpack.c.b16 %v9593, %v9591
    %v9816 = vpack.c.b16 %v9596, %v9594
    %v9817 = vpack.c.b16 %v9597, %v9595
    %v9818 = vpack.c.b16 %v9600, %v9598
    %v9819 = vpack.c.b16 %v9601, %v9599
    %v9820 = vpack.c.b16 %v9604, %v9602
    %v9821 = vpack.c.b16 %v9605, %v9603
    %v9822 = vpack.c.b16 %v9608, %v9606
    %v9823 = vpack.c.b16 %v9609, %v9607
    %v9824 = vpack.c.b16 %v9612, %v9610
    %v9825 = vpack.c.b16 %v9613, %v9611
    %v9826 = vpack.c.b16 %v9616, %v9614
    %v9827 = vpack.c.b16 %v9617, %v9615
    %v9828 = vpack.c.b16 %v9620, %v9618
    %v9829 = vpack.c.b16 %v9621, %v9619
    %v9830 = vpack.c.b16 %v9624, %v9622
    %v9831 = vpack.c.b16 %v9625, %v9623
    %v9832 = vpack.c.b16 %v9628, %v9626
    %v9833 = vpack.c.b16 %v9629, %v9627
    %v9834 = vpack.c.b16 %v9632, %v9630
    %v9835 = vpack.c.b16 %v9633, %v9631
    %v9836 = vpack.c.b16 %v9636, %v9634
    %v9837 = vpack.c.b16 %v9637, %v9635
    %v9838 = vpack.c.b16 %v9640, %v9638
    %v9839 = vpack.c.b16 %v9641, %v9639
    %v9840 = vpack.c.b16 %v9644, %v9642
    %v9841 = vpack.c.b16 %v9645, %v9643
    %v9842 = vpack.c.b16 %v9648, %v9646
    %v9843 = vpack.c.b16 %v9649, %v9647
    %v9844 = vpack.c.b16 %v9652, %v9650
    %v9845 = vpack.c.b16 %v9653, %v9651
    %v9846 = vpack.c.b16 %v9656, %v9654
    %v9847 = vpack.c.b16 %v9657, %v9655
    %v9848 = vpack.c.b16 %v9660, %v9658
    %v9849 = vpack.c.b16 %v9661, %v9659
    %v9850 = vpack.c.b16 %v9664, %v9662
    %v9851 = vpack.c.b16 %v9665, %v9663
    %v9852 = vpack.c.b16 %v9668, %v9666
    %v9853 = vpack.c.b16 %v9669, %v9667
    %v9854 = vpack.c.b16 %v9672, %v9670
    %v9855 = vpack.c.b16 %v9673, %v9671
    %v9856 = vpack.c.b16 %v9676, %v9674
    %v9857 = vpack.c.b16 %v9677, %v9675
    %v9858 = vpack.c.b16 %v9680, %v9678
    %v9859 = vpack.c.b16 %v9681, %v9679
    %v9860 = vpack.c.b16 %v9684, %v9682
    %v9861 = vpack.c.b16 %v9685, %v9683
    %v9862 = vpack.c.b16 %v9688, %v9686
    %v9863 = vpack.c.b16 %v9689, %v9687
    %v9864 = vpack.c.b16 %v9692, %v9690
    %v9865 = vpack.c.b16 %v9693, %v9691
    %v9866 = vpack.c.b16 %v9696, %v9694
    %v9867 = vpack.c.b16 %v9697, %v9695
    %v9868 = vpack.c.b16 %v9700, %v9698
    %v9869 = vpack.c.b16 %v9701, %v9699
    %v9870 = vpack.c.b16 %v9704, %v9702
    %v9871 = vpack.c.b16 %v9705, %v9703
    %v9872 = vpack.c.b16 %v9708, %v9706
    %v9873 = vpack.c.b16 %v9709, %v9707
    %v9874 = vpack.c.b16 %v9712, %v9710
    %v9875 = vpack.c.b16 %v9713, %v9711
    %v9876 = vpack.c.b16 %v9716, %v9714
    %v9877 = vpack.c.b16 %v9717, %v9715
    %v9878 = vpack.c.b16 %v9720, %v9718
    %v9879 = vpack.c.b16 %v9721, %v9719
    %v9880 = vpack.c.b16 %v9724, %v9722
    %v9881 = vpack.c.b16 %v9725, %v9723
    %v9882 = vpack.c.b16 %v9728, %v9726
    %v9883 = vpack.c.b16 %v9729, %v9727
    %v9884 = vpack.c.b16 %v9732, %v9730
    %v9885 = vpack.c.b16 %v9733, %v9731
    %v9886 = vpack.c.b16 %v9736, %v9734
    %v9887 = vpack.c.b16 %v9737, %v9735
    %v9888 = vpack.c.b16 %v9740, %v9738
    %v9889 = vpack.c.b16 %v9741, %v9739
    %v9890 = vpack.c.b16 %v9744, %v9742
    %v9891 = vpack.c.b16 %v9745, %v9743
    %v9892 = vpack.c.b16 %v9748, %v9746
    %v9893 = vpack.c.b16 %v9749, %v9747
    %v9894 = vpack.c.b16 %v9752, %v9750
    %v9895 = vpack.c.b16 %v9753, %v9751
    %v9896 = vpack.c.b16 %v9756, %v9754
    %v9897 = vpack.c.b16 %v9757, %v9755
    %v9898 = vpack.c.b16 %v9760, %v9758
    %v9899 = vpack.c.b16 %v9761, %v9759
    %v9900 = vpack.c.b16 %v9764, %v9762
    %v9901 = vpack.c.b16 %v9765, %v9763
    %v9902 = vpack.c.b16 %v9768, %v9766
    %v9903 = vpack.c.b16 %v9769, %v9767
    %v9904 = vpack.c.b16 %v9772, %v9770
    %v9905 = vpack.c.b16 %v9773, %v9771
    %v9906 = vpack.c.b16 %v9776, %v9774
    %v9907 = vpack.c.b16 %v9777, %v9775
    %v9908 = vpack.c.b16 %v9780, %v9778
    %v9909 = vpack.c.b16 %v9781, %v9779
    %10038 = vmatprep.subr.bf16.mxu0 %v9797
    %10039 = vmatpush1.bf16.msra.mxu0 %v9796
    %10040 = vmatprep.subr.bf16.mxu0 %v9795
    %10041 = vmatpush1.bf16.msra.mxu0 %v9794
    %10042 = vmatprep.subr.bf16.mxu0 %v9793
    %10043 = vmatpush1.bf16.msra.mxu0 %v9792
    %10044 = vmatprep.subr.bf16.mxu0 %v9791
    %10045 = vmatpush1.bf16.msra.mxu0 %v9790
    %10046 = vmatprep.subr.bf16.mxu0 %v9789
    %10047 = vmatpush1.bf16.msra.mxu0 %v9788
    %10048 = vmatprep.subr.bf16.mxu0 %v9787
    %10049 = vmatpush1.bf16.msra.mxu0 %v9786
    %10050 = vmatprep.subr.bf16.mxu0 %v9785
    %10051 = vmatpush1.bf16.msra.mxu0 %v9784
    %10052 = vmatprep.subr.bf16.mxu0 %v9783
    %10053 = vmatpush1.bf16.msra.mxu0 %v9782
    %10054 = vmatprep.subr.bf16.mxu0 %v9813
    %10055 = vmatpush2.bf16.msra.mxu0 %v9812
    %10056 = vmatprep.subr.bf16.mxu0 %v9811
    %10057 = vmatpush2.bf16.msra.mxu0 %v9810
    %10058 = vmatprep.subr.bf16.mxu0 %v9809
    %10059 = vmatpush2.bf16.msra.mxu0 %v9808
    %10060 = vmatprep.subr.bf16.mxu0 %v9807
    %10061 = vmatpush2.bf16.msra.mxu0 %v9806
    %10062 = vmatprep.subr.bf16.mxu0 %v9805
    %10063 = vmatpush2.bf16.msra.mxu0 %v9804
    %10064 = vmatprep.subr.bf16.mxu0 %v9803
    %10065 = vmatpush2.bf16.msra.mxu0 %v9802
    %10066 = vmatprep.subr.bf16.mxu0 %v9801
    %10067 = vmatpush2.bf16.msra.mxu0 %v9800
    %10068 = vmatprep.subr.bf16.mxu0 %v9799
    %10069 = vmatpush2.bf16.msra.mxu0 %v9798
    %10070 = vmatprep.mubr.bf16.mxu0 %v9263
    %10071 = vmatmul.mubr.bf16.gmra.mxu0 %v9262
    %v10072 = vpop.f32.mrf.mxu0
    %v10073 = vadd.f32 0.0, %v10072
    %v10074 = vpop.f32.mrf.mxu0
    %v10075 = vadd.f32 0.0, %v10074
    %v10076 = vpop.f32.mrf.mxu0
    %v10077 = vpop.f32.mrf.mxu0
    %10078 = vdwg.mxu0
    %10079 = vmatprep.subr.bf16.mxu0 %v9829
    %10080 = vmatpush1.bf16.msra.mxu0 %v9828
    %10081 = vmatprep.subr.bf16.mxu0 %v9827
    %10082 = vmatpush1.bf16.msra.mxu0 %v9826
    %10083 = vmatprep.subr.bf16.mxu0 %v9825
    %10084 = vmatpush1.bf16.msra.mxu0 %v9824
    %10085 = vmatprep.subr.bf16.mxu0 %v9823
    %10086 = vmatpush1.bf16.msra.mxu0 %v9822
    %10087 = vmatprep.subr.bf16.mxu0 %v9821
    %10088 = vmatpush1.bf16.msra.mxu0 %v9820
    %10089 = vmatprep.subr.bf16.mxu0 %v9819
    %10090 = vmatpush1.bf16.msra.mxu0 %v9818
    %10091 = vmatprep.subr.bf16.mxu0 %v9817
    %10092 = vmatpush1.bf16.msra.mxu0 %v9816
    %10093 = vmatprep.subr.bf16.mxu0 %v9815
    %10094 = vmatpush1.bf16.msra.mxu0 %v9814
    %10095 = vmatprep.subr.bf16.mxu0 %v9845
    %10096 = vmatpush2.bf16.msra.mxu0 %v9844
    %10097 = vmatprep.subr.bf16.mxu0 %v9843
    %10098 = vmatpush2.bf16.msra.mxu0 %v9842
    %10099 = vmatprep.subr.bf16.mxu0 %v9841
    %10100 = vmatpush2.bf16.msra.mxu0 %v9840
    %10101 = vmatprep.subr.bf16.mxu0 %v9839
    %10102 = vmatpush2.bf16.msra.mxu0 %v9838
    %10103 = vmatprep.subr.bf16.mxu0 %v9837
    %10104 = vmatpush2.bf16.msra.mxu0 %v9836
    %10105 = vmatprep.subr.bf16.mxu0 %v9835
    %10106 = vmatpush2.bf16.msra.mxu0 %v9834
    %10107 = vmatprep.subr.bf16.mxu0 %v9833
    %10108 = vmatpush2.bf16.msra.mxu0 %v9832
    %10109 = vmatprep.subr.bf16.mxu0 %v9831
    %10110 = vmatpush2.bf16.msra.mxu0 %v9830
    %10111 = vmatprep.mubr.bf16.mxu0 %v9265
    %10112 = vmatmul.mubr.bf16.gmra.mxu0 %v9264
    %v10113 = vpop.f32.mrf.mxu0
    %v10114 = vadd.f32 %v10073, %v10113
    %v10115 = vpop.f32.mrf.mxu0
    %v10116 = vadd.f32 %v10075, %v10115
    %v10117 = vpop.f32.mrf.mxu0
    %v10118 = vpop.f32.mrf.mxu0
    %10119 = vdwg.mxu0
    %10120 = vmatprep.subr.bf16.mxu0 %v9861
    %10121 = vmatpush1.bf16.msra.mxu0 %v9860
    %10122 = vmatprep.subr.bf16.mxu0 %v9859
    %10123 = vmatpush1.bf16.msra.mxu0 %v9858
    %10124 = vmatprep.subr.bf16.mxu0 %v9857
    %10125 = vmatpush1.bf16.msra.mxu0 %v9856
    %10126 = vmatprep.subr.bf16.mxu0 %v9855
    %10127 = vmatpush1.bf16.msra.mxu0 %v9854
    %10128 = vmatprep.subr.bf16.mxu0 %v9853
    %10129 = vmatpush1.bf16.msra.mxu0 %v9852
    %10130 = vmatprep.subr.bf16.mxu0 %v9851
    %10131 = vmatpush1.bf16.msra.mxu0 %v9850
    %10132 = vmatprep.subr.bf16.mxu0 %v9849
    %10133 = vmatpush1.bf16.msra.mxu0 %v9848
    %10134 = vmatprep.subr.bf16.mxu0 %v9847
    %10135 = vmatpush1.bf16.msra.mxu0 %v9846
    %10136 = vmatprep.subr.bf16.mxu0 %v9877
    %10137 = vmatpush2.bf16.msra.mxu0 %v9876
    %10138 = vmatprep.subr.bf16.mxu0 %v9875
    %10139 = vmatpush2.bf16.msra.mxu0 %v9874
    %10140 = vmatprep.subr.bf16.mxu0 %v9873
    %10141 = vmatpush2.bf16.msra.mxu0 %v9872
    %10142 = vmatprep.subr.bf16.mxu0 %v9871
    %10143 = vmatpush2.bf16.msra.mxu0 %v9870
    %10144 = vmatprep.subr.bf16.mxu0 %v9869
    %10145 = vmatpush2.bf16.msra.mxu0 %v9868
    %10146 = vmatprep.subr.bf16.mxu0 %v9867
    %10147 = vmatpush2.bf16.msra.mxu0 %v9866
    %10148 = vmatprep.subr.bf16.mxu0 %v9865
    %10149 = vmatpush2.bf16.msra.mxu0 %v9864
    %10150 = vmatprep.subr.bf16.mxu0 %v9863
    %10151 = vmatpush2.bf16.msra.mxu0 %v9862
    %10152 = vmatprep.mubr.bf16.mxu0 %v9267
    %10153 = vmatmul.mubr.bf16.gmra.mxu0 %v9266
    %v10154 = vpop.f32.mrf.mxu0
    %v10155 = vadd.f32 %v10114, %v10154
    %v10156 = vpop.f32.mrf.mxu0
    %v10157 = vadd.f32 %v10116, %v10156
    %v10158 = vpop.f32.mrf.mxu0
    %v10159 = vpop.f32.mrf.mxu0
    %10160 = vdwg.mxu0
    %10161 = vmatprep.subr.bf16.mxu0 %v9893
    %10162 = vmatpush1.bf16.msra.mxu0 %v9892
    %10163 = vmatprep.subr.bf16.mxu0 %v9891
    %10164 = vmatpush1.bf16.msra.mxu0 %v9890
    %10165 = vmatprep.subr.bf16.mxu0 %v9889
    %10166 = vmatpush1.bf16.msra.mxu0 %v9888
    %10167 = vmatprep.subr.bf16.mxu0 %v9887
    %10168 = vmatpush1.bf16.msra.mxu0 %v9886
    %10169 = vmatprep.subr.bf16.mxu0 %v9885
    %10170 = vmatpush1.bf16.msra.mxu0 %v9884
    %10171 = vmatprep.subr.bf16.mxu0 %v9883
    %10172 = vmatpush1.bf16.msra.mxu0 %v9882
    %10173 = vmatprep.subr.bf16.mxu0 %v9881
    %10174 = vmatpush1.bf16.msra.mxu0 %v9880
    %10175 = vmatprep.subr.bf16.mxu0 %v9879
    %10176 = vmatpush1.bf16.msra.mxu0 %v9878
    %10177 = vmatprep.subr.bf16.mxu0 %v9909
    %10178 = vmatpush2.bf16.msra.mxu0 %v9908
    %10179 = vmatprep.subr.bf16.mxu0 %v9907
    %10180 = vmatpush2.bf16.msra.mxu0 %v9906
    %10181 = vmatprep.subr.bf16.mxu0 %v9905
    %10182 = vmatpush2.bf16.msra.mxu0 %v9904
    %10183 = vmatprep.subr.bf16.mxu0 %v9903
    %10184 = vmatpush2.bf16.msra.mxu0 %v9902
    %10185 = vmatprep.subr.bf16.mxu0 %v9901
    %10186 = vmatpush2.bf16.msra.mxu0 %v9900
    %10187 = vmatprep.subr.bf16.mxu0 %v9899
    %10188 = vmatpush2.bf16.msra.mxu0 %v9898
    %10189 = vmatprep.subr.bf16.mxu0 %v9897
    %10190 = vmatpush2.bf16.msra.mxu0 %v9896
    %10191 = vmatprep.subr.bf16.mxu0 %v9895
    %10192 = vmatpush2.bf16.msra.mxu0 %v9894
    %10193 = vmatprep.mubr.bf16.mxu0 %v9269
    %10194 = vmatmul.mubr.bf16.gmra.mxu0 %v9268
    %v10195 = vpop.f32.mrf.mxu0
    %v10196 = vadd.f32 %v10155, %v10195
    %v10197 = vpop.f32.mrf.mxu0
    %v10198 = vadd.f32 %v10157, %v10197
    %v10199 = vpop.f32.mrf.mxu0
    %v10200 = vpop.f32.mrf.mxu0
    %10201 = vdwg.mxu0
    %v10202 = vrot.slane %v10196, 4
    %v10203 = vadd.f32 %v10196, %v10202
    %v10204 = vrot.slane %v10203, 2
    %v10205 = vadd.f32 %v10203, %v10204
    %v10206 = vrot.slane %v10205, 1
    %v10207 = vadd.f32 %v10205, %v10206
    %v10208 = vrot.slane %v10198, 4
    %v10209 = vadd.f32 %v10198, %v10208
    %v10210 = vrot.slane %v10209, 2
    %v10211 = vadd.f32 %v10209, %v10210
    %v10212 = vrot.slane %v10211, 1
    %v10213 = vadd.f32 %v10211, %v10212
    %v10214 = vmul.f32 %v10207, 0.125
    %v10215 = vmul.f32 %v10213, 0.125
    %v10216 = vsub.f32 %v10196, %v10214
    %v10217 = vsub.f32 %v10198, %v10215
    %v10218 = vmul.f32 %v10216, %v10216
    %v10219 = vmul.f32 %v10217, %v10217
    %v10220 = vrot.slane %v10218, 4
    %v10221 = vadd.f32 %v10218, %v10220
    %v10222 = vrot.slane %v10221, 2
    %v10223 = vadd.f32 %v10221, %v10222
    %v10224 = vrot.slane %v10223, 1
    %v10225 = vadd.f32 %v10223, %v10224
    %v10226 = vrot.slane %v10219, 4
    %v10227 = vadd.f32 %v10219, %v10226
    %v10228 = vrot.slane %v10227, 2
    %v10229 = vadd.f32 %v10227, %v10228
    %v10230 = vrot.slane %v10229, 1
    %v10231 = vadd.f32 %v10229, %v10230
    %v10232 = vmul.f32 %v10225, 0.125
    %v10233 = vmul.f32 %v10231, 0.125
    %v10234 = vld [vmem:[#allocation13] sm:$0x3]
    %v10235 = vadd.f32 %v10232, 1e-05
    %v10236 = vadd.f32 %v10233, 1e-05
    %v10237 = vrsqrt.pop %v10235
    %v10238 = vrsqrt.pop %v10236
    %v10241 = vcombine.low %v10237, %v10238
    %v10243 = vunpack.c.l.s4 1966171168
    %v10244 = vunpack.c.0.s8 %v10243
    %v10245 = vlaneseq
    %v10246 = vshrl.u32 %v10245, 7
    %v10247 = vsub.s32 %v10244, %v10246
    %v10248 = vrot.slane %v10241, %v10247
    %v10250 = vunpack.c.l.s4 1966171168
    %v10251 = vunpack.c.0.s8 %v10250
    %v10252 = vlaneseq
    %v10253 = vshrl.u32 %v10252, 7
    %v10254 = vsub.s32 %v10251, %v10253
    %v10255 = vrot.slane %v10248, %v10254
    %v10257 = vmul.f32 %v10234, %v10255
    %v10259 = vlaneseq
    %v10260 = vshrl.u32 %v10259, 7
    %v10261 = vsub.s32 0, %v10260
    %v10262 = vrot.slane %v10257, %v10261
    %v10263 = vlaneseq
    %v10264 = vshrl.u32 %v10263, 7
    %v10265 = vsub.s32 1, %v10264
    %v10266 = vrot.slane %v10257, %v10265
    %v10269 = vmul.f32 %v10216, %v10262
    %v10270 = vmul.f32 %v10217, %v10266
    %v10271 = vld [vmem:[#allocation15] sm:$0x3]
    %v10273 = vlaneseq
    %v10274 = vshrl.u32 %v10273, 7
    %v10275 = vsub.s32 0, %v10274
    %v10276 = vrot.slane %v10271, %v10275
    %v10277 = vlaneseq
    %v10278 = vshrl.u32 %v10277, 7
    %v10279 = vsub.s32 1, %v10278
    %v10280 = vrot.slane %v10271, %v10279
    %v10283 = vadd.f32 %v10269, %v10276
    %v10284 = vadd.f32 %v10270, %v10280
    %v10285 = vmax.f32 %v10283, 0.0
    %v10286 = vmax.f32 %v10284, 0.0
    %v10287 = vpack.c.bf16 %v10285, %v10285
    %v10288 = vpack.c.bf16 %v10286, %v10286
    %v10289 = vld [vmem:[%s11] sm:$0xf]
    %v10290 = vld [vmem:[%s11 + $0x4] sm:$0xf]
    %v10291 = vld [vmem:[%s11 + $0x8] sm:$0xf]
    %v10292 = vld [vmem:[%s11 + $0xc] sm:$0xf]
    %v10293 = vld [vmem:[%s11 + $0x10] sm:$0xf]
    %v10294 = vld [vmem:[%s11 + $0x14] sm:$0xf]
    %v10295 = vld [vmem:[%s11 + $0x18] sm:$0xf]
    %v10296 = vld [vmem:[%s11 + $0x1c] sm:$0xf]
    %v10297 = vld [vmem:[%s11 + $0x20] sm:$0xf]
    %v10298 = vld [vmem:[%s11 + $0x24] sm:$0xf]
    %v10299 = vld [vmem:[%s11 + $0x28] sm:$0xf]
    %v10300 = vld [vmem:[%s11 + $0x2c] sm:$0xf]
    %v10301 = vld [vmem:[%s11 + $0x30] sm:$0xf]
    %v10302 = vld [vmem:[%s11 + $0x34] sm:$0xf]
    %v10303 = vld [vmem:[%s11 + $0x38] sm:$0xf]
    %v10304 = vld [vmem:[%s11 + $0x3c] sm:$0xf]
    %v10305 = vld [vmem:[%s11 + $0x40] sm:$0xf]
    %v10306 = vld [vmem:[%s11 + $0x44] sm:$0xf]
    %v10307 = vld [vmem:[%s11 + $0x48] sm:$0xf]
    %v10308 = vld [vmem:[%s11 + $0x4c] sm:$0xf]
    %v10309 = vld [vmem:[%s11 + $0x50] sm:$0xf]
    %v10310 = vld [vmem:[%s11 + $0x54] sm:$0xf]
    %v10311 = vld [vmem:[%s11 + $0x58] sm:$0xf]
    %v10312 = vld [vmem:[%s11 + $0x5c] sm:$0xf]
    %v10313 = vld [vmem:[%s11 + $0x60] sm:$0xf]
    %v10314 = vld [vmem:[%s11 + $0x64] sm:$0xf]
    %v10315 = vld [vmem:[%s11 + $0x68] sm:$0xf]
    %v10316 = vld [vmem:[%s11 + $0x6c] sm:$0xf]
    %v10317 = vld [vmem:[%s11 + $0x70] sm:$0xf]
    %v10318 = vld [vmem:[%s11 + $0x74] sm:$0xf]
    %v10319 = vld [vmem:[%s11 + $0x78] sm:$0xf]
    %v10320 = vld [vmem:[%s11 + $0x7c] sm:$0xf]
    %v10353 = vunpack.c.l.b16 %v10289
    %v10354 = vunpack.c.l.b16 %v10290
    %v10355 = vunpack.c.l.b16 %v10291
    %v10356 = vunpack.c.l.b16 %v10292
    %v10357 = vunpack.c.l.b16 %v10293
    %v10358 = vunpack.c.l.b16 %v10294
    %v10359 = vunpack.c.l.b16 %v10295
    %v10360 = vunpack.c.l.b16 %v10296
    %v10361 = vunpack.c.l.b16 %v10297
    %v10362 = vunpack.c.l.b16 %v10298
    %v10363 = vunpack.c.l.b16 %v10299
    %v10364 = vunpack.c.l.b16 %v10300
    %v10365 = vunpack.c.l.b16 %v10301
    %v10366 = vunpack.c.l.b16 %v10302
    %v10367 = vunpack.c.l.b16 %v10303
    %v10368 = vunpack.c.l.b16 %v10304
    %v10369 = vunpack.c.l.b16 %v10305
    %v10370 = vunpack.c.l.b16 %v10306
    %v10371 = vunpack.c.l.b16 %v10307
    %v10372 = vunpack.c.l.b16 %v10308
    %v10373 = vunpack.c.l.b16 %v10309
    %v10374 = vunpack.c.l.b16 %v10310
    %v10375 = vunpack.c.l.b16 %v10311
    %v10376 = vunpack.c.l.b16 %v10312
    %v10377 = vunpack.c.l.b16 %v10313
    %v10378 = vunpack.c.l.b16 %v10314
    %v10379 = vunpack.c.l.b16 %v10315
    %v10380 = vunpack.c.l.b16 %v10316
    %v10381 = vunpack.c.l.b16 %v10317
    %v10382 = vunpack.c.l.b16 %v10318
    %v10383 = vunpack.c.l.b16 %v10319
    %v10384 = vunpack.c.l.b16 %v10320
    %v10385 = vpack.c.b16 %v10354, %v10353
    %v10386 = vpack.c.b16 %v10356, %v10355
    %v10387 = vpack.c.b16 %v10358, %v10357
    %v10388 = vpack.c.b16 %v10360, %v10359
    %v10389 = vpack.c.b16 %v10362, %v10361
    %v10390 = vpack.c.b16 %v10364, %v10363
    %v10391 = vpack.c.b16 %v10366, %v10365
    %v10392 = vpack.c.b16 %v10368, %v10367
    %v10393 = vpack.c.b16 %v10370, %v10369
    %v10394 = vpack.c.b16 %v10372, %v10371
    %v10395 = vpack.c.b16 %v10374, %v10373
    %v10396 = vpack.c.b16 %v10376, %v10375
    %v10397 = vpack.c.b16 %v10378, %v10377
    %v10398 = vpack.c.b16 %v10380, %v10379
    %v10399 = vpack.c.b16 %v10382, %v10381
    %v10400 = vpack.c.b16 %v10384, %v10383
    %10417 = vmatprep.subr.bf16.mxu0 0
    %10418 = vmatpush1.bf16.msra.mxu0 %v10392
    %10419 = vmatprep.subr.bf16.mxu0 0
    %10420 = vmatpush1.bf16.msra.mxu0 %v10391
    %10421 = vmatprep.subr.bf16.mxu0 0
    %10422 = vmatpush1.bf16.msra.mxu0 %v10390
    %10423 = vmatprep.subr.bf16.mxu0 0
    %10424 = vmatpush1.bf16.msra.mxu0 %v10389
    %10425 = vmatprep.subr.bf16.mxu0 0
    %10426 = vmatpush1.bf16.msra.mxu0 %v10388
    %10427 = vmatprep.subr.bf16.mxu0 0
    %10428 = vmatpush1.bf16.msra.mxu0 %v10387
    %10429 = vmatprep.subr.bf16.mxu0 0
    %10430 = vmatpush1.bf16.msra.mxu0 %v10386
    %10431 = vmatprep.subr.bf16.mxu0 0
    %10432 = vmatpush1.bf16.msra.mxu0 %v10385
    %10433 = vmatprep.subr.bf16.mxu0 0
    %10434 = vmatpush2.bf16.msra.mxu0 %v10400
    %10435 = vmatprep.subr.bf16.mxu0 0
    %10436 = vmatpush2.bf16.msra.mxu0 %v10399
    %10437 = vmatprep.subr.bf16.mxu0 0
    %10438 = vmatpush2.bf16.msra.mxu0 %v10398
    %10439 = vmatprep.subr.bf16.mxu0 0
    %10440 = vmatpush2.bf16.msra.mxu0 %v10397
    %10441 = vmatprep.subr.bf16.mxu0 0
    %10442 = vmatpush2.bf16.msra.mxu0 %v10396
    %10443 = vmatprep.subr.bf16.mxu0 0
    %10444 = vmatpush2.bf16.msra.mxu0 %v10395
    %10445 = vmatprep.subr.bf16.mxu0 0
    %10446 = vmatpush2.bf16.msra.mxu0 %v10394
    %10447 = vmatprep.subr.bf16.mxu0 0
    %10448 = vmatpush2.bf16.msra.mxu0 %v10393
    %10449 = vmatprep.mubr.bf16.mxu0 %v10288
    %10450 = vmatmul.mubr.bf16.gmra.mxu0 %v10287
    %v10451 = vpop.f32.mrf.mxu0
    %v10452 = vadd.f32 0.0, %v10451
    %v10453 = vpop.f32.mrf.mxu0
    %v10454 = vpop.f32.mrf.mxu0
    %v10455 = vpop.f32.mrf.mxu0
    %10456 = vdwg.mxu0
    %vm10457 = vcmask 523264
    %v10458 = vsel %vm10457, %v10452, 0.0
    %v10459 = vrot.slane %v10458, 4
    %v10460 = vadd.f32 %v10458, %v10459
    %v10461 = vrot.slane %v10460, 2
    %v10462 = vadd.f32 %v10460, %v10461
    %v10463 = vrot.slane %v10462, 1
    %v10464 = vadd.f32 %v10462, %v10463
    %v10465 = vmul.f32 %v10464, 0.125
    %v10466 = vsub.f32 %v10452, %v10465
    %v10467 = vmul.f32 %v10466, %v10466
    %v10468 = vsel %vm10457, %v10467, 0.0
    %v10469 = vrot.slane %v10468, 4
    %v10470 = vadd.f32 %v10468, %v10469
    %v10471 = vrot.slane %v10470, 2
    %v10472 = vadd.f32 %v10470, %v10471
    %v10473 = vrot.slane %v10472, 1
    %v10474 = vadd.f32 %v10472, %v10473
    %v10475 = vmul.f32 %v10474, 0.125
    %v10476 = vld [vmem:[#allocation16] sm:$0x1]
    %v10477 = vadd.f32 %v10475, 1e-05
    %v10478 = vrsqrt.pop %v10477
    %v10479 = vmul.f32 %v10476, %v10478
    %v10481 = vlaneseq
    %v10482 = vshrl.u32 %v10481, 7
    %v10483 = vsub.s32 0, %v10482
    %v10484 = vrot.slane %v10479, %v10483
    %v10486 = vmul.f32 %v10466, %v10484
    %v10487 = vld [vmem:[#allocation18] sm:$0x1]
    %v10489 = vlaneseq
    %v10490 = vshrl.u32 %v10489, 7
    %v10491 = vsub.s32 0, %v10490
    %v10492 = vrot.slane %v10487, %v10491
    %v10494 = vadd.f32 %v10486, %v10492
    %v10495 = vmax.f32 %v10494, 0.0
    %v10496 = vpack.c.bf16 %v10495, %v10495
    %v10497 = vld [vmem:[%s14] sm:$0xf]
    %v10498 = vld [vmem:[%s14 + $0x4] sm:$0xf]
    %v10499 = vld [vmem:[%s14 + $0x8] sm:$0xf]
    %v10500 = vld [vmem:[%s14 + $0xc] sm:$0xf]
    %v10501 = vld [vmem:[%s14 + $0x10] sm:$0xf]
    %v10502 = vld [vmem:[%s14 + $0x14] sm:$0xf]
    %v10503 = vld [vmem:[%s14 + $0x18] sm:$0xf]
    %v10504 = vld [vmem:[%s14 + $0x1c] sm:$0xf]
    %v10513 = vunpack.c.l.b16 %v10497
    %v10514 = vunpack.c.l.b16 %v10498
    %v10515 = vunpack.c.l.b16 %v10499
    %v10516 = vunpack.c.l.b16 %v10500
    %v10517 = vunpack.c.l.b16 %v10501
    %v10518 = vunpack.c.l.b16 %v10502
    %v10519 = vunpack.c.l.b16 %v10503
    %v10520 = vunpack.c.l.b16 %v10504
    %v10521 = vpack.c.b16 %v10514, %v10513
    %v10522 = vpack.c.b16 %v10516, %v10515
    %v10523 = vpack.c.b16 %v10518, %v10517
    %v10524 = vpack.c.b16 %v10520, %v10519
    %v10530 = vsel %vm10457, %v10496, 0
    %10532 = vmatprep.subr.bf16.mxu0 0
    %10533 = vmatpush1.bf16.msra.mxu0 0
    %10534 = vmatprep.subr.bf16.mxu0 0
    %10535 = vmatpush1.bf16.msra.mxu0 0
    %10536 = vmatprep.subr.bf16.mxu0 0
    %10537 = vmatpush1.bf16.msra.mxu0 0
    %10538 = vmatprep.subr.bf16.mxu0 0
    %10539 = vmatpush1.bf16.msra.mxu0 0
    %10540 = vmatprep.subr.bf16.mxu0 0
    %10541 = vmatpush1.bf16.msra.mxu0 %v10524
    %10542 = vmatprep.subr.bf16.mxu0 0
    %10543 = vmatpush1.bf16.msra.mxu0 %v10523
    %10544 = vmatprep.subr.bf16.mxu0 0
    %10545 = vmatpush1.bf16.msra.mxu0 %v10522
    %10546 = vmatprep.subr.bf16.mxu0 0
    %10547 = vmatpush1.bf16.msra.mxu0 %v10521
    %10548 = vmatprep.subr.bf16.mxu0 0
    %10549 = vmatpush2.bf16.msra.mxu0 0
    %10550 = vmatprep.subr.bf16.mxu0 0
    %10551 = vmatpush2.bf16.msra.mxu0 0
    %10552 = vmatprep.subr.bf16.mxu0 0
    %10553 = vmatpush2.bf16.msra.mxu0 0
    %10554 = vmatprep.subr.bf16.mxu0 0
    %10555 = vmatpush2.bf16.msra.mxu0 0
    %10556 = vmatprep.subr.bf16.mxu0 0
    %10557 = vmatpush2.bf16.msra.mxu0 0
    %10558 = vmatprep.subr.bf16.mxu0 0
    %10559 = vmatpush2.bf16.msra.mxu0 0
    %10560 = vmatprep.subr.bf16.mxu0 0
    %10561 = vmatpush2.bf16.msra.mxu0 0
    %10562 = vmatprep.subr.bf16.mxu0 0
    %10563 = vmatpush2.bf16.msra.mxu0 0
    %10564 = vmatprep.mubr.bf16.mxu0 0
    %10565 = vmatmul.mubr.bf16.gmra.mxu0 %v10530
    %v10566 = vpop.f32.mrf.mxu0
    %v10567 = vadd.f32 0.0, %v10566
    %v10568 = vpop.f32.mrf.mxu0
    %v10569 = vpop.f32.mrf.mxu0
    %v10570 = vpop.f32.mrf.mxu0
    %10571 = vdwg.mxu0
    %vm10572 = vcmask 15360
    %v10573 = vsel %vm10572, %v10567, 0.0
    %v10574 = vrot.slane %v10573, 4
    %v10575 = vadd.f32 %v10573, %v10574
    %v10576 = vrot.slane %v10575, 2
    %v10577 = vadd.f32 %v10575, %v10576
    %v10578 = vrot.slane %v10577, 1
    %v10579 = vadd.f32 %v10577, %v10578
    %v10580 = vmul.f32 %v10579, 0.125
    %v10581 = vsub.f32 %v10567, %v10580
    %v10582 = vmul.f32 %v10581, %v10581
    %v10583 = vsel %vm10572, %v10582, 0.0
    %v10584 = vrot.slane %v10583, 4
    %v10585 = vadd.f32 %v10583, %v10584
    %v10586 = vrot.slane %v10585, 2
    %v10587 = vadd.f32 %v10585, %v10586
    %v10588 = vrot.slane %v10587, 1
    %v10589 = vadd.f32 %v10587, %v10588
    %v10590 = vmul.f32 %v10589, 0.125
    %v10591 = vld [vmem:[#allocation19] sm:$0x1]
    %v10592 = vadd.f32 %v10590, 1e-05
    %v10593 = vrsqrt.pop %v10592
    %v10594 = vmul.f32 %v10591, %v10593
    %v10596 = vlaneseq
    %v10597 = vshrl.u32 %v10596, 7
    %v10598 = vsub.s32 0, %v10597
    %v10599 = vrot.slane %v10594, %v10598
    %v10601 = vmul.f32 %v10581, %v10599
    %v10602 = vld [vmem:[#allocation21] sm:$0x1]
    %v10604 = vlaneseq
    %v10605 = vshrl.u32 %v10604, 7
    %v10606 = vsub.s32 0, %v10605
    %v10607 = vrot.slane %v10602, %v10606
    %v10609 = vadd.f32 %v10601, %v10607
    %v10610 = vmax.f32 %v10609, 0.0
    %v10611 = vpack.c.bf16 %v10610, %v10610
    %v10612 = vld [vmem:[%s1] sm:$0xf]
    %v10613 = vld [vmem:[#allocation22] sm:$0x3]
    %vm10614 = vcmask 31744
    %v10616 = vsel %vm10614, %v10612, 0
    %vm10618 = vcmask 1041408
    %v10620 = vsel %vm10618, %v10613, 0
    %10622 = vmatprep.subr.bf16.mxu0 0
    %10623 = vmatpush1.bf16.msra.mxu0 0
    %10624 = vmatprep.subr.bf16.mxu0 0
    %10625 = vmatpush1.bf16.msra.mxu0 0
    %10626 = vmatprep.subr.bf16.mxu0 0
    %10627 = vmatpush1.bf16.msra.mxu0 0
    %10628 = vmatprep.subr.bf16.mxu0 0
    %10629 = vmatpush1.bf16.msra.mxu0 0
    %10630 = vmatprep.subr.bf16.mxu0 0
    %10631 = vmatpush1.bf16.msra.mxu0 0
    %10632 = vmatprep.subr.bf16.mxu0 0
    %10633 = vmatpush1.bf16.msra.mxu0 0
    %10634 = vmatprep.subr.bf16.mxu0 0
    %10635 = vmatpush1.bf16.msra.mxu0 0
    %10636 = vmatprep.subr.bf16.mxu0 0
    %10637 = vmatpush1.bf16.msra.mxu0 %v10620
    %10638 = vmatprep.subr.bf16.mxu0 0
    %10639 = vmatpush2.bf16.msra.mxu0 0
    %10640 = vmatprep.subr.bf16.mxu0 0
    %10641 = vmatpush2.bf16.msra.mxu0 0
    %10642 = vmatprep.subr.bf16.mxu0 0
    %10643 = vmatpush2.bf16.msra.mxu0 0
    %10644 = vmatprep.subr.bf16.mxu0 0
    %10645 = vmatpush2.bf16.msra.mxu0 0
    %10646 = vmatprep.subr.bf16.mxu0 0
    %10647 = vmatpush2.bf16.msra.mxu0 0
    %10648 = vmatprep.subr.bf16.mxu0 0
    %10649 = vmatpush2.bf16.msra.mxu0 0
    %10650 = vmatprep.subr.bf16.mxu0 0
    %10651 = vmatpush2.bf16.msra.mxu0 0
    %10652 = vmatprep.subr.bf16.mxu0 0
    %10653 = vmatpush2.bf16.msra.mxu0 0
    %10654 = vmatprep.mubr.bf16.mxu0 0
    %10655 = vmatmul.mubr.bf16.gmra.mxu0 %v10616
    %v10656 = vpop.f32.mrf.mxu0
    %v10657 = vadd.f32 0.0, %v10656
    %v10658 = vpop.f32.mrf.mxu0
    %v10659 = vpop.f32.mrf.mxu0
    %v10660 = vpop.f32.mrf.mxu0
    %10661 = vdwg.mxu0
    %vm10662 = vcmask 39936
    %v10663 = vsel %vm10662, %v10657, 0.0
    %v10664 = vrot.slane %v10663, 4
    %v10665 = vadd.f32 %v10663, %v10664
    %v10666 = vrot.slane %v10665, 2
    %v10667 = vadd.f32 %v10665, %v10666
    %v10668 = vrot.slane %v10667, 1
    %v10669 = vadd.f32 %v10667, %v10668
    %v10670 = vmul.f32 %v10669, 0.125
    %v10671 = vsub.f32 %v10657, %v10670
    %v10672 = vmul.f32 %v10671, %v10671
    %v10673 = vsel %vm10662, %v10672, 0.0
    %v10674 = vrot.slane %v10673, 4
    %v10675 = vadd.f32 %v10673, %v10674
    %v10676 = vrot.slane %v10675, 2
    %v10677 = vadd.f32 %v10675, %v10676
    %v10678 = vrot.slane %v10677, 1
    %v10679 = vadd.f32 %v10677, %v10678
    %v10680 = vmul.f32 %v10679, 0.125
    %v10681 = vld [vmem:[#allocation24] sm:$0x1]
    %v10682 = vadd.f32 %v10680, 1e-05
    %v10683 = vrsqrt.pop %v10682
    %v10684 = vmul.f32 %v10681, %v10683
    %v10686 = vlaneseq
    %v10687 = vshrl.u32 %v10686, 7
    %v10688 = vsub.s32 0, %v10687
    %v10689 = vrot.slane %v10684, %v10688
    %v10691 = vmul.f32 %v10671, %v10689
    %v10692 = vld [vmem:[#allocation25] sm:$0x1]
    %v10694 = vlaneseq
    %v10695 = vshrl.u32 %v10694, 7
    %v10696 = vsub.s32 0, %v10695
    %v10697 = vrot.slane %v10692, %v10696
    %v10699 = vadd.f32 %v10691, %v10697
    %v10700 = vmax.f32 %v10699, 0.0
    %v10701 = vpack.c.bf16 %v10700, %v10700
    %v10702 = vld [vmem:[%s20] sm:$0x7]
    %v10704 = vsel %vm10662, %v10701, 0
    %vm10706 = vcmask 1042432
    %v10707 = vsel %vm10618, 4294967295, 65535
    %v10708 = vsel %vm10706, %v10707, 0
    %v10710 = vand.u32 %v10702, %v10708
    %10712 = vmatprep.subr.bf16.mxu0 0
    %10713 = vmatpush1.bf16.msra.mxu0 0
    %10714 = vmatprep.subr.bf16.mxu0 0
    %10715 = vmatpush1.bf16.msra.mxu0 0
    %10716 = vmatprep.subr.bf16.mxu0 0
    %10717 = vmatpush1.bf16.msra.mxu0 0
    %10718 = vmatprep.subr.bf16.mxu0 0
    %10719 = vmatpush1.bf16.msra.mxu0 0
    %10720 = vmatprep.subr.bf16.mxu0 0
    %10721 = vmatpush1.bf16.msra.mxu0 0
    %10722 = vmatprep.subr.bf16.mxu0 0
    %10723 = vmatpush1.bf16.msra.mxu0 0
    %10724 = vmatprep.subr.bf16.mxu0 0
    %10725 = vmatpush1.bf16.msra.mxu0 0
    %10726 = vmatprep.subr.bf16.mxu0 0
    %10727 = vmatpush1.bf16.msra.mxu0 %v10710
    %10728 = vmatprep.subr.bf16.mxu0 0
    %10729 = vmatpush2.bf16.msra.mxu0 0
    %10730 = vmatprep.subr.bf16.mxu0 0
    %10731 = vmatpush2.bf16.msra.mxu0 0
    %10732 = vmatprep.subr.bf16.mxu0 0
    %10733 = vmatpush2.bf16.msra.mxu0 0
    %10734 = vmatprep.subr.bf16.mxu0 0
    %10735 = vmatpush2.bf16.msra.mxu0 0
    %10736 = vmatprep.subr.bf16.mxu0 0
    %10737 = vmatpush2.bf16.msra.mxu0 0
    %10738 = vmatprep.subr.bf16.mxu0 0
    %10739 = vmatpush2.bf16.msra.mxu0 0
    %10740 = vmatprep.subr.bf16.mxu0 0
    %10741 = vmatpush2.bf16.msra.mxu0 0
    %10742 = vmatprep.subr.bf16.mxu0 0
    %10743 = vmatpush2.bf16.msra.mxu0 0
    %10744 = vmatprep.mubr.bf16.mxu0 0
    %10745 = vmatmul.mubr.bf16.gmra.mxu0 %v10704
    %v10746 = vpop.f32.mrf.mxu0
    %v10747 = vadd.f32 0.0, %v10746
    %v10748 = vpop.f32.mrf.mxu0
    %v10749 = vpop.f32.mrf.mxu0
    %v10750 = vpop.f32.mrf.mxu0
    %10751 = vdwg.mxu0
    %v10752 = vsel %vm10572, %v10747, 0.0
    %v10753 = vrot.slane %v10752, 4
    %v10754 = vadd.f32 %v10752, %v10753
    %v10755 = vrot.slane %v10754, 2
    %v10756 = vadd.f32 %v10754, %v10755
    %v10757 = vrot.slane %v10756, 1
    %v10758 = vadd.f32 %v10756, %v10757
    %v10759 = vmul.f32 %v10758, 0.125
    %v10760 = vsub.f32 %v10747, %v10759
    %v10761 = vmul.f32 %v10760, %v10760
    %v10762 = vsel %vm10572, %v10761, 0.0
    %v10763 = vrot.slane %v10762, 4
    %v10764 = vadd.f32 %v10762, %v10763
    %v10765 = vrot.slane %v10764, 2
    %v10766 = vadd.f32 %v10764, %v10765
    %v10767 = vrot.slane %v10766, 1
    %v10768 = vadd.f32 %v10766, %v10767
    %v10769 = vmul.f32 %v10768, 0.125
    %v10770 = vld [vmem:[#allocation27] sm:$0x1]
    %v10771 = vadd.f32 %v10769, 1e-05
    %v10772 = vrsqrt.pop %v10771
    %v10773 = vmul.f32 %v10770, %v10772
    %v10775 = vlaneseq
    %v10776 = vshrl.u32 %v10775, 7
    %v10777 = vsub.s32 0, %v10776
    %v10778 = vrot.slane %v10773, %v10777
    %v10780 = vmul.f32 %v10760, %v10778
    %v10781 = vld [vmem:[#allocation28] sm:$0x1]
    %v10783 = vlaneseq
    %v10784 = vshrl.u32 %v10783, 7
    %v10785 = vsub.s32 0, %v10784
    %v10786 = vrot.slane %v10781, %v10785
    %v10788 = vadd.f32 %v10780, %v10786
    %v10789 = vmax.f32 %v10788, 0.0
    %v10790 = vpack.c.bf16 %v10789, %v10789
    %v10791 = vld [vmem:[#allocation30] sm:$0x1]
    %v10792 = vld [vmem:[#allocation31] sm:$0x1]
    %v10794 = vsel %vm10572, %v10790, 0
    %vm10796 = vcmask 1040384
    %v10798 = vsel %vm10796, %v10792, 0
    %10800 = vmatprep.subr.bf16.mxu0 0
    %10801 = vmatpush1.bf16.msra.mxu0 0
    %10802 = vmatprep.subr.bf16.mxu0 0
    %10803 = vmatpush1.bf16.msra.mxu0 0
    %10804 = vmatprep.subr.bf16.mxu0 0
    %10805 = vmatpush1.bf16.msra.mxu0 0
    %10806 = vmatprep.subr.bf16.mxu0 0
    %10807 = vmatpush1.bf16.msra.mxu0 0
    %10808 = vmatprep.subr.bf16.mxu0 0
    %10809 = vmatpush1.bf16.msra.mxu0 0
    %10810 = vmatprep.subr.bf16.mxu0 0
    %10811 = vmatpush1.bf16.msra.mxu0 0
    %10812 = vmatprep.subr.bf16.mxu0 0
    %10813 = vmatpush1.bf16.msra.mxu0 0
    %10814 = vmatprep.subr.bf16.mxu0 0
    %10815 = vmatpush1.bf16.msra.mxu0 %v10798
    %10816 = vmatprep.subr.bf16.mxu0 0
    %10817 = vmatpush2.bf16.msra.mxu0 0
    %10818 = vmatprep.subr.bf16.mxu0 0
    %10819 = vmatpush2.bf16.msra.mxu0 0
    %10820 = vmatprep.subr.bf16.mxu0 0
    %10821 = vmatpush2.bf16.msra.mxu0 0
    %10822 = vmatprep.subr.bf16.mxu0 0
    %10823 = vmatpush2.bf16.msra.mxu0 0
    %10824 = vmatprep.subr.bf16.mxu0 0
    %10825 = vmatpush2.bf16.msra.mxu0 0
    %10826 = vmatprep.subr.bf16.mxu0 0
    %10827 = vmatpush2.bf16.msra.mxu0 0
    %10828 = vmatprep.subr.bf16.mxu0 0
    %10829 = vmatpush2.bf16.msra.mxu0 0
    %10830 = vmatprep.subr.bf16.mxu0 0
    %10831 = vmatpush2.bf16.msra.mxu0 0
    %10832 = vmatprep.mubr.bf16.mxu0 0
    %10833 = vmatmul.mubr.bf16.gmra.mxu0 %v10794
    %v10834 = vpop.f32.mrf.mxu0
    %v10835 = vadd.f32 0.0, %v10834
    %v10836 = vpop.f32.mrf.mxu0
    %v10837 = vpop.f32.mrf.mxu0
    %v10838 = vpop.f32.mrf.mxu0
    %10839 = vdwg.mxu0
    %v10841 = vsel %vm10572, %v10611, 0
    %v10844 = vsel %vm10796, %v10791, 0
    %10846 = vmatprep.subr.bf16.mxu0 0
    %10847 = vmatpush1.bf16.msra.mxu0 0
    %10848 = vmatprep.subr.bf16.mxu0 0
    %10849 = vmatpush1.bf16.msra.mxu0 0
    %10850 = vmatprep.subr.bf16.mxu0 0
    %10851 = vmatpush1.bf16.msra.mxu0 0
    %10852 = vmatprep.subr.bf16.mxu0 0
    %10853 = vmatpush1.bf16.msra.mxu0 0
    %10854 = vmatprep.subr.bf16.mxu0 0
    %10855 = vmatpush1.bf16.msra.mxu0 0
    %10856 = vmatprep.subr.bf16.mxu0 0
    %10857 = vmatpush1.bf16.msra.mxu0 0
    %10858 = vmatprep.subr.bf16.mxu0 0
    %10859 = vmatpush1.bf16.msra.mxu0 0
    %10860 = vmatprep.subr.bf16.mxu0 0
    %10861 = vmatpush1.bf16.msra.mxu0 %v10844
    %10862 = vmatprep.subr.bf16.mxu0 0
    %10863 = vmatpush2.bf16.msra.mxu0 0
    %10864 = vmatprep.subr.bf16.mxu0 0
    %10865 = vmatpush2.bf16.msra.mxu0 0
    %10866 = vmatprep.subr.bf16.mxu0 0
    %10867 = vmatpush2.bf16.msra.mxu0 0
    %10868 = vmatprep.subr.bf16.mxu0 0
    %10869 = vmatpush2.bf16.msra.mxu0 0
    %10870 = vmatprep.subr.bf16.mxu0 0
    %10871 = vmatpush2.bf16.msra.mxu0 0
    %10872 = vmatprep.subr.bf16.mxu0 0
    %10873 = vmatpush2.bf16.msra.mxu0 0
    %10874 = vmatprep.subr.bf16.mxu0 0
    %10875 = vmatpush2.bf16.msra.mxu0 0
    %10876 = vmatprep.subr.bf16.mxu0 0
    %10877 = vmatpush2.bf16.msra.mxu0 0
    %10878 = vmatprep.mubr.bf16.mxu0 0
    %10879 = vmatmul.mubr.bf16.gmra.mxu0 %v10841
    %v10880 = vpop.f32.mrf.mxu0
    %v10881 = vadd.f32 %v10835, %v10880
    %v10882 = vpop.f32.mrf.mxu0
    %v10883 = vpop.f32.mrf.mxu0
    %v10884 = vpop.f32.mrf.mxu0
    %10885 = vdwg.mxu0
    %v10886 = vld [vmem:[#allocation33] sm:$0x1]
    %v10888 = vlaneseq
    %v10889 = vshrl.u32 %v10888, 7
    %v10890 = vsub.s32 0, %v10889
    %v10891 = vrot.slane %v10886, %v10890
    %v10893 = vadd.f32 %v10881, %v10891
    %10894 = vst.msk [vmem:[%s26] sm:$0xff] %vm10572, %v10893
    // Predicated region
    $region190: #{mct_forward.1} parent=1 // pred_check
      _
    $region191: #{mct_forward.1} parent=1 // pred_check_branch
      %10896 = sbr.rel (0) target = $region193
    $region192: #{mct_forward.1} parent=1 // pred_region
      _
    $region193: #{mct_forward.1} parent=1 // pred_fallthru
      _
    // Predicated region
    $region194: #{mct_forward.1} parent=1 // pred_check
      _
    $region195: #{mct_forward.1} parent=1 // pred_check_branch
      %10898 = sbr.rel (0) target = $region197
    $region196: #{mct_forward.1} parent=1 // pred_region
      _
    $region197: #{mct_forward.1} parent=1 // pred_fallthru
      _
    %10899 = vsyncpa [#allocation3], 1
    %10900 = vsyncpa [#allocation5], 1
    %10901 = vsyncpa [#allocation8], 1
    %10902 = vsyncpa [#allocation11], 1
    %10903 = vsyncpa [#allocation14], 1
    %10904 = vsyncpa [#allocation17], 1
    %10905 = vsyncpa [#allocation20], 1
    %10906 = vsyncpa [#allocation23], 1
    %10907 = vsyncpa [#allocation26], 1
    %10908 = vsyncpa [#allocation29], 1
    %10909 = vsyncpa [#allocation32], 1

</llo_original>
